<compile_context>
chip_gen: v7x
topology: tpu7x:2x2x1
jax: 0.10.0
libtpu: 0.0.40
codegen_flags: <defaults>
</compile_context>

<pallas_src>
import math

import jax
import jax.numpy as jnp
from jax.experimental import pallas as pl
from jax.experimental.pallas import tpu as pltpu

# ---------------- synthetic config (small but lane-dense) ----------------
HIDDEN = 256
NUM_HEADS = 2
NUM_KV_HEADS = 1
HEAD_DIM = HIDDEN // NUM_HEADS          # 128 (lane-dense per head)
GROUP = NUM_HEADS // NUM_KV_HEADS       # 2
INTERMEDIATE = 512
NUM_LAYERS = 2
VOCAB = 512
RMS_EPS = 1e-6
ROPE_THETA = 10000.0

BATCH = 2
SEQ = 128
ROW_TILE = 128                          # token-row tile (keep 128: grid >= 2)
MLP_CHUNK = 128                         # INTERMEDIATE chunk width


# ------- Kernel A: add+RMSNorm -> wqkv -> RoPE -> causal GQA attn -> wo -------
def fused_attention_block(x, residual, norm_w, wqkv, wo, cos, sin_rot,
                          batch, seq):
    """x, residual: (T, H) f32; wqkv (H, (nH+2nKV)*D) bf16; wo (nH*D, H) bf16;
    cos/sin_rot (T, D) f32 (rotate_half sign folded into sin_rot).
    Returns (attn_out (T, H), new_residual (T, H))."""
    T, H = x.shape
    nH, nKV, D, G = NUM_HEADS, NUM_KV_HEADS, HEAD_DIM, GROUP
    QKV = wqkv.shape[1]
    S = seq
    scale = 1.0 / math.sqrt(D)

    def kernel(x_ref, r_ref, nw_ref, w_ref, wo_ref, cos_ref, sin_ref,
               o_ref, res_ref):
        # ---- add + RMSNorm (f32 elementwise) ----
        s = x_ref[...].astype(jnp.float32) + r_ref[...].astype(jnp.float32)
        res_ref[...] = s.astype(res_ref.dtype)
        var = jnp.mean(s * s, axis=-1, keepdims=True)
        hs = (s * jax.lax.rsqrt(var + RMS_EPS)
              * nw_ref[...].astype(jnp.float32)).astype(jnp.bfloat16)

        c = cos_ref[...].astype(jnp.float32)        # (S, D)
        sr = sin_ref[...].astype(jnp.float32)       # (S, D), sign pre-folded

        def rope(xh):
            # rotate_half(x) == roll(x, D//2, lane) * [-1..-1,+1..+1]; the sign
            # lives in sr, so: x*cos + roll(x, D//2)*sin_signed
            return xh * c + pltpu.roll(xh, shift=D // 2, axis=1) * sr

        # causal mask built once per grid step (reused across all heads)
        row = jax.lax.broadcasted_iota(jnp.int32, (S, S), 0)
        col = jax.lax.broadcasted_iota(jnp.int32, (S, S), 1)
        causal = col <= row

        acc = jnp.zeros((S, H), jnp.float32)
        for j in range(nKV):
            # K / V for this kv head (one (S, D) tile live at a time)
            k = rope(jnp.dot(hs, w_ref[:, (nH + j) * D:(nH + j + 1) * D],
                             preferred_element_type=jnp.float32))
            v = jnp.dot(hs, w_ref[:, (nH + nKV + j) * D:(nH + nKV + j + 1) * D],
                        preferred_element_type=jnp.float32)
            kb = k.astype(jnp.bfloat16)
            vb = v.astype(jnp.bfloat16)
            for g in range(G):
                h = j * G + g                        # query head index
                q = rope(jnp.dot(hs, w_ref[:, h * D:(h + 1) * D],
                                 preferred_element_type=jnp.float32))
                scores = jax.lax.dot_general(
                    q.astype(jnp.bfloat16), kb, (((1,), (1,)), ((), ())),
                    preferred_element_type=jnp.float32) * scale      # (S, S)
                scores = jnp.where(causal, scores, jnp.float32(-1e30))
                m = jnp.max(scores, axis=-1, keepdims=True)
                p = jnp.exp(scores - m)
                l = jnp.sum(p, axis=-1, keepdims=True)
                og = jnp.dot(p.astype(jnp.bfloat16), vb,
                             preferred_element_type=jnp.float32)      # (S, D)
                og = og * pl.reciprocal(l, approx=True)
                acc = acc + jnp.dot(og.astype(jnp.bfloat16),
                                    wo_ref[h * D:(h + 1) * D, :],
                                    preferred_element_type=jnp.float32)
        o_ref[...] = acc.astype(o_ref.dtype)

    return pl.pallas_call(
        kernel,
        out_shape=(jax.ShapeDtypeStruct((T, H), x.dtype),
                   jax.ShapeDtypeStruct((T, H), x.dtype)),
        grid=(batch,),
        in_specs=[pl.BlockSpec((S, H), lambda b: (b, 0)),
                  pl.BlockSpec((S, H), lambda b: (b, 0)),
                  pl.BlockSpec((1, H), lambda b: (0, 0)),
                  pl.BlockSpec((H, QKV), lambda b: (0, 0)),
                  pl.BlockSpec((nH * D, H), lambda b: (0, 0)),
                  pl.BlockSpec((S, D), lambda b: (b, 0)),
                  pl.BlockSpec((S, D), lambda b: (b, 0))],
        out_specs=(pl.BlockSpec((S, H), lambda b: (b, 0)),
                   pl.BlockSpec((S, H), lambda b: (b, 0))),
        compiler_params=pltpu.CompilerParams(
            dimension_semantics=("parallel",)),
    )(x, residual, norm_w.reshape(1, H), wqkv, wo, cos, sin_rot)


# ------- Kernel B: add+RMSNorm -> chunked MLP (-> optional final RMSNorm) ----
def fused_norm_mlp(x, residual, norm_w, w1, w3, w2, final_norm_w=None):
    """If final_norm_w is None: returns (mlp_out (T,H), new_residual (T,H)).
    Otherwise (last layer): folds the model's final add+RMSNorm into the
    epilogue and returns only the normed hidden states (T, H)."""
    T, H = x.shape
    I = w1.shape[1]
    TM = ROW_TILE
    IC = MLP_CHUNK
    has_final = final_norm_w is not None

    def kernel(*refs):
        if has_final:
            x_ref, r_ref, nw_ref, w1_ref, w3_ref, w2_ref, fn_ref, o_ref = refs
        else:
            x_ref, r_ref, nw_ref, w1_ref, w3_ref, w2_ref, o_ref, res_ref = refs

        s = x_ref[...].astype(jnp.float32) + r_ref[...].astype(jnp.float32)
        if not has_final:
            res_ref[...] = s.astype(res_ref.dtype)
        var = jnp.mean(s * s, axis=-1, keepdims=True)
        hs = (s * jax.lax.rsqrt(var + RMS_EPS)
              * nw_ref[...].astype(jnp.float32)).astype(jnp.bfloat16)

        # chunk the intermediate dim: only (TM, IC) intermediates are ever live
        acc = jnp.zeros((TM, H), jnp.float32)
        for cidx in range(I // IC):
            lo, hi = cidx * IC, (cidx + 1) * IC
            gate = jnp.dot(hs, w1_ref[:, lo:hi],
                           preferred_element_type=jnp.float32)
            up = jnp.dot(hs, w3_ref[:, lo:hi],
                         preferred_element_type=jnp.float32)
            act = (gate * jax.nn.sigmoid(gate) * up).astype(jnp.bfloat16)
            acc = acc + jnp.dot(act, w2_ref[lo:hi, :],
                                preferred_element_type=jnp.float32)

        if has_final:
            # model-final add+RMSNorm fused into the last layer's epilogue
            s2 = acc + s
            var2 = jnp.mean(s2 * s2, axis=-1, keepdims=True)
            o_ref[...] = (s2 * jax.lax.rsqrt(var2 + RMS_EPS)
                          * fn_ref[...].astype(jnp.float32)).astype(o_ref.dtype)
        else:
            o_ref[...] = acc.astype(o_ref.dtype)

    in_specs = [pl.BlockSpec((TM, H), lambda i: (i, 0)),
                pl.BlockSpec((TM, H), lambda i: (i, 0)),
                pl.BlockSpec((1, H), lambda i: (0, 0)),
                pl.BlockSpec((H, I), lambda i: (0, 0)),
                pl.BlockSpec((H, I), lambda i: (0, 0)),
                pl.BlockSpec((I, H), lambda i: (0, 0))]
    args = [x, residual, norm_w.reshape(1, H), w1, w3, w2]
    if has_final:
        in_specs.append(pl.BlockSpec((1, H), lambda i: (0, 0)))
        args.append(final_norm_w.reshape(1, H))
        out_shape = jax.ShapeDtypeStruct((T, H), x.dtype)
        out_specs = pl.BlockSpec((TM, H), lambda i: (i, 0))
    else:
        out_shape = (jax.ShapeDtypeStruct((T, H), x.dtype),
                     jax.ShapeDtypeStruct((T, H), x.dtype))
        out_specs = (pl.BlockSpec((TM, H), lambda i: (i, 0)),
                     pl.BlockSpec((TM, H), lambda i: (i, 0)))

    return pl.pallas_call(
        kernel,
        out_shape=out_shape,
        grid=(T // TM,),
        in_specs=in_specs,
        out_specs=out_specs,
        compiler_params=pltpu.CompilerParams(
            dimension_semantics=("parallel",)),
    )(*args)


# ---------------- parameters (deterministic, synthetic; weights bf16) --------
def init_params(key):
    keys = jax.random.split(key, 2 + NUM_LAYERS)
    qkv_out = (NUM_HEADS + 2 * NUM_KV_HEADS) * HEAD_DIM

    def w(k, shape):
        return (jax.random.normal(k, shape, jnp.float32) * 0.02).astype(
            jnp.bfloat16)

    params = {
        'tok_embeddings': jax.random.normal(keys[0], (VOCAB, HIDDEN),
                                            jnp.float32) * 0.02,
        'norm': jnp.ones((HIDDEN,), jnp.float32),
        'layers': [],
    }
    for li in range(NUM_LAYERS):
        lk = jax.random.split(keys[2 + li], 5)
        params['layers'].append(dict(
            attention_norm=jnp.ones((HIDDEN,), jnp.float32),
            ffn_norm=jnp.ones((HIDDEN,), jnp.float32),
            # weights stored as (in, out) so activations @ W; qkv laid out as
            # [Q | K | V] along the output axis, q head h uses kv head h//GROUP
            wqkv=w(lk[0], (HIDDEN, qkv_out)),
            wo=w(lk[1], (NUM_HEADS * HEAD_DIM, HIDDEN)),
            w1=w(lk[2], (HIDDEN, INTERMEDIATE)),    # gate proj
            w3=w(lk[3], (HIDDEN, INTERMEDIATE)),    # up proj
            w2=w(lk[4], (INTERMEDIATE, HIDDEN)),    # down proj
        ))
    return params


# ---------------- model forward ----------------
def internlm2_forward(params, input_ids, position_ids):
    B, S = input_ids.shape
    T = B * S
    D = HEAD_DIM

    # token embedding (gather, glue)
    hidden = params['tok_embeddings'][input_ids].reshape(T, HIDDEN)

    # rotary cos/sin from position ids (glue); rotate_half sign folded into sin
    pos = position_ids.reshape(-1).astype(jnp.float32)                 # (T,)
    inv_freq = 1.0 / (ROPE_THETA ** (jnp.arange(0, D, 2, dtype=jnp.float32) / D))
    freqs = pos[:, None] * inv_freq[None, :]                           # (T, D/2)
    cos = jnp.concatenate([jnp.cos(freqs), jnp.cos(freqs)], axis=-1)   # (T, D)
    sin_half = jnp.sin(freqs)
    sin_rot = jnp.concatenate([-sin_half, sin_half], axis=-1)          # (T, D)

    # first layer: residual==None  <=>  residual := zeros (add is identity)
    residual = jnp.zeros_like(hidden)
    out = None
    n_layers = len(params['layers'])
    for li, layer in enumerate(params['layers']):
        attn_out, residual = fused_attention_block(
            hidden, residual, layer['attention_norm'], layer['wqkv'],
            layer['wo'], cos, sin_rot, B, S)
        if li < n_layers - 1:
            hidden, residual = fused_norm_mlp(
                attn_out, residual, layer['ffn_norm'],
                layer['w1'], layer['w3'], layer['w2'])
        else:
            out = fused_norm_mlp(
                attn_out, residual, layer['ffn_norm'],
                layer['w1'], layer['w3'], layer['w2'],
                final_norm_w=params['norm'])
    return out.reshape(B, S, HIDDEN)


if __name__ == "__main__":
    key = jax.random.PRNGKey(0)
    pkey, ikey = jax.random.split(key)

    params = init_params(pkey)
    input_ids = jax.random.randint(ikey, (BATCH, SEQ), 0, VOCAB, dtype=jnp.int32)
    position_ids = jnp.broadcast_to(jnp.arange(SEQ, dtype=jnp.int32)[None, :],
                                    (BATCH, SEQ))

    fwd = jax.jit(internlm2_forward)
    out = fwd(params, input_ids, position_ids)
    out = jax.block_until_ready(out)

    assert out.shape == (BATCH, SEQ, HIDDEN)
    assert bool(jnp.all(jnp.isfinite(out)))
    print("KERNEL_OK")
</pallas_src>

<mosaic_0001>
module attributes {stable_mosaic.version = 11 : i64} {
  func.func @kernel(%arg0: i32, %arg1: memref<128x256xf32, #tpu.memory_space<vmem>>, %arg2: memref<128x256xf32, #tpu.memory_space<vmem>>, %arg3: memref<1x256xf32, #tpu.memory_space<vmem>>, %arg4: memref<256x512xbf16, #tpu.memory_space<vmem>>, %arg5: memref<256x256xbf16, #tpu.memory_space<vmem>>, %arg6: memref<128x128xf32, #tpu.memory_space<vmem>>, %arg7: memref<128x128xf32, #tpu.memory_space<vmem>>, %arg8: memref<128x256xf32, #tpu.memory_space<vmem>>, %arg9: memref<128x256xf32, #tpu.memory_space<vmem>>) attributes {dimension_semantics = [#tpu.dimension_semantics<parallel>], iteration_bounds = array<i64: 2>, scalar_prefetch = 0 : i64, scratch_operands = 0 : i64, tpu.core_type = #tpu.core_type<tc>, window_params = [{transform_indices = @transform_0, window_bounds = array<i64: 128, 256>}, {transform_indices = @transform_1, window_bounds = array<i64: 128, 256>}, {pipeline_mode = #tpu.pipeline_mode<synchronous>, transform_indices = @transform_2, window_bounds = array<i64: 1, 256>}, {pipeline_mode = #tpu.pipeline_mode<synchronous>, transform_indices = @transform_3, window_bounds = array<i64: 256, 512>}, {pipeline_mode = #tpu.pipeline_mode<synchronous>, transform_indices = @transform_4, window_bounds = array<i64: 256, 256>}, {transform_indices = @transform_5, window_bounds = array<i64: 128, 128>}, {transform_indices = @transform_6, window_bounds = array<i64: 128, 128>}, {transform_indices = @transform_7, window_bounds = array<i64: 128, 256>}, {transform_indices = @transform_8, window_bounds = array<i64: 128, 256>}]} {
    %c0 = arith.constant 0 : index
    %c0_0 = arith.constant 0 : index
    %0 = vector.load %arg1[%c0, %c0_0] : memref<128x256xf32, #tpu.memory_space<vmem>>, vector<128x256xf32>
    %c0_1 = arith.constant 0 : index
    %c0_2 = arith.constant 0 : index
    %1 = vector.load %arg2[%c0_1, %c0_2] : memref<128x256xf32, #tpu.memory_space<vmem>>, vector<128x256xf32>
    %2 = arith.addf %0, %1 : vector<128x256xf32>
    %c0_3 = arith.constant 0 : index
    %c0_4 = arith.constant 0 : index
    %3 = vector.load %arg9[%c0_3, %c0_4] : memref<128x256xf32, #tpu.memory_space<vmem>>, vector<128x256xf32>
    tpu.vector_store %arg9[%c0_3, %c0_4], %2 {strides = array<i32>} : memref<128x256xf32, #tpu.memory_space<vmem>>, vector<128x256xf32>,
    %4 = arith.mulf %2, %2 : vector<128x256xf32>
    %cst = arith.constant dense<0.000000e+00> : vector<128xf32>
    %5 = vector.multi_reduction <add>, %4, %cst [1] : vector<128x256xf32> to vector<128xf32>
    %6 = vector.shape_cast %5 : vector<128xf32> to vector<128x1xf32>
    %cst_5 = arith.constant 2.560000e+02 : f32
    %7 = vector.broadcast %cst_5 : f32 to vector<128x1xf32>
    %8 = arith.divf %6, %7 : vector<128x1xf32>
    %cst_6 = arith.constant 9.99999997E-7 : f32
    %9 = vector.broadcast %cst_6 : f32 to vector<128x1xf32>
    %10 = arith.addf %8, %9 : vector<128x1xf32>
    %11 = math.rsqrt %10 : vector<128x1xf32>
    %12 = vector.broadcast %11 : vector<128x1xf32> to vector<128x256xf32>
    %13 = arith.mulf %2, %12 : vector<128x256xf32>
    %c0_7 = arith.constant 0 : index
    %c0_8 = arith.constant 0 : index
    %14 = vector.load %arg3[%c0_7, %c0_8] : memref<1x256xf32, #tpu.memory_space<vmem>>, vector<1x256xf32>
    %15 = vector.broadcast %14 : vector<1x256xf32> to vector<128x256xf32>
    %16 = arith.mulf %13, %15 : vector<128x256xf32>
    %17 = arith.truncf %16 : vector<128x256xf32> to vector<128x256xbf16>
    %c0_9 = arith.constant 0 : index
    %c0_10 = arith.constant 0 : index
    %18 = vector.load %arg6[%c0_9, %c0_10] : memref<128x128xf32, #tpu.memory_space<vmem>>, vector<128x128xf32>
    %c0_11 = arith.constant 0 : index
    %c0_12 = arith.constant 0 : index
    %19 = vector.load %arg7[%c0_11, %c0_12] : memref<128x128xf32, #tpu.memory_space<vmem>>, vector<128x128xf32>
    %20 = tpu.iota {dimensions = array<i32: 0>} : vector<128x128xi32>
    %21 = tpu.iota {dimensions = array<i32: 1>} : vector<128x128xi32>
    %22 = arith.cmpi sle, %21, %20 : vector<128x128xi32>
    %cst_13 = arith.constant 0.000000e+00 : f32
    %23 = vector.broadcast %cst_13 : f32 to vector<128x256xf32>
    %c0_14 = arith.constant 0 : index
    %c256 = arith.constant 256 : index
    %24 = vector.load %arg4[%c0_14, %c256] : memref<256x512xbf16, #tpu.memory_space<vmem>>, vector<256x128xbf16>
    %cst_15 = arith.constant dense<0.000000e+00> : vector<128x128xf32>
    %25 = tpu.matmul %17, %24, %cst_15 {dimension_numbers = #tpu.dot_dimension_numbers<[1], [0], [0], [1], [0, 0, 1, 1], [], []>} : vector<128x256xbf16>, vector<256x128xbf16>, vector<128x128xf32> -> vector<128x128xf32>
    %26 = arith.mulf %25, %18 : vector<128x128xf32>
    %c64_i32 = arith.constant 64 : i32
    %27 = tpu.dynamic_rotate %25 by %c64_i32 dim 1 : vector<128x128xf32>, i32 -> vector<128x128xf32>
    %28 = arith.mulf %27, %19 : vector<128x128xf32>
    %29 = arith.addf %26, %28 : vector<128x128xf32>
    %c0_16 = arith.constant 0 : index
    %c384 = arith.constant 384 : index
    %30 = vector.load %arg4[%c0_16, %c384] : memref<256x512xbf16, #tpu.memory_space<vmem>>, vector<256x128xbf16>
    %cst_17 = arith.constant dense<0.000000e+00> : vector<128x128xf32>
    %31 = tpu.matmul %17, %30, %cst_17 {dimension_numbers = #tpu.dot_dimension_numbers<[1], [0], [0], [1], [0, 0, 1, 1], [], []>} : vector<128x256xbf16>, vector<256x128xbf16>, vector<128x128xf32> -> vector<128x128xf32>
    %32 = arith.truncf %29 : vector<128x128xf32> to vector<128x128xbf16>
    %33 = arith.truncf %31 : vector<128x128xf32> to vector<128x128xbf16>
    %c0_18 = arith.constant 0 : index
    %c0_19 = arith.constant 0 : index
    %34 = vector.load %arg4[%c0_18, %c0_19] : memref<256x512xbf16, #tpu.memory_space<vmem>>, vector<256x128xbf16>
    %cst_20 = arith.constant dense<0.000000e+00> : vector<128x128xf32>
    %35 = tpu.matmul %17, %34, %cst_20 {dimension_numbers = #tpu.dot_dimension_numbers<[1], [0], [0], [1], [0, 0, 1, 1], [], []>} : vector<128x256xbf16>, vector<256x128xbf16>, vector<128x128xf32> -> vector<128x128xf32>
    %36 = arith.mulf %35, %18 : vector<128x128xf32>
    %c64_i32_21 = arith.constant 64 : i32
    %37 = tpu.dynamic_rotate %35 by %c64_i32_21 dim 1 : vector<128x128xf32>, i32 -> vector<128x128xf32>
    %38 = arith.mulf %37, %19 : vector<128x128xf32>
    %39 = arith.addf %36, %38 : vector<128x128xf32>
    %40 = arith.truncf %39 : vector<128x128xf32> to vector<128x128xbf16>
    %cst_22 = arith.constant dense<0.000000e+00> : vector<128x128xf32>
    %41 = tpu.matmul %40, %32, %cst_22 {dimension_numbers = #tpu.dot_dimension_numbers<[1], [1], [0], [0], [0, 0, 1, 0], [], []>} : vector<128x128xbf16>, vector<128x128xbf16>, vector<128x128xf32> -> vector<128x128xf32>
    %cst_23 = arith.constant 0.0883883461 : f32
    %42 = vector.broadcast %cst_23 : f32 to vector<128x128xf32>
    %43 = arith.mulf %41, %42 : vector<128x128xf32>
    %cst_24 = arith.constant -1.000000e+30 : f32
    %44 = vector.broadcast %cst_24 : f32 to vector<128x128xf32>
    %45 = arith.select %22, %43, %44 : vector<128x128xi1>, vector<128x128xf32>
    %cst_25 = arith.constant dense<0xFF800000> : vector<128xf32>
    %46 = vector.multi_reduction <maximumf>, %45, %cst_25 [1] : vector<128x128xf32> to vector<128xf32>
    %47 = vector.shape_cast %46 : vector<128xf32> to vector<128x1xf32>
    %48 = vector.broadcast %47 : vector<128x1xf32> to vector<128x128xf32>
    %49 = arith.subf %45, %48 : vector<128x128xf32>
    %50 = math.exp %49 : vector<128x128xf32>
    %cst_26 = arith.constant dense<0.000000e+00> : vector<128xf32>
    %51 = vector.multi_reduction <add>, %50, %cst_26 [1] : vector<128x128xf32> to vector<128xf32>
    %52 = vector.shape_cast %51 : vector<128xf32> to vector<128x1xf32>
    %53 = arith.truncf %50 : vector<128x128xf32> to vector<128x128xbf16>
    %cst_27 = arith.constant dense<0.000000e+00> : vector<128x128xf32>
    %54 = tpu.matmul %53, %33, %cst_27 {dimension_numbers = #tpu.dot_dimension_numbers<[1], [0], [0], [1], [0, 0, 1, 1], [], []>} : vector<128x128xbf16>, vector<128x128xbf16>, vector<128x128xf32> -> vector<128x128xf32>
    %55 = tpu.reciprocal %52 {approx = true} : vector<128x1xf32> -> vector<128x1xf32>
    %56 = vector.broadcast %55 : vector<128x1xf32> to vector<128x128xf32>
    %57 = arith.mulf %54, %56 : vector<128x128xf32>
    %58 = arith.truncf %57 : vector<128x128xf32> to vector<128x128xbf16>
    %c0_28 = arith.constant 0 : index
    %c0_29 = arith.constant 0 : index
    %59 = vector.load %arg5[%c0_28, %c0_29] : memref<256x256xbf16, #tpu.memory_space<vmem>>, vector<128x256xbf16>
    %cst_30 = arith.constant dense<0.000000e+00> : vector<128x256xf32>
    %60 = tpu.matmul %58, %59, %cst_30 {dimension_numbers = #tpu.dot_dimension_numbers<[1], [0], [0], [1], [0, 0, 1, 1], [], []>} : vector<128x128xbf16>, vector<128x256xbf16>, vector<128x256xf32> -> vector<128x256xf32>
    %61 = arith.addf %23, %60 : vector<128x256xf32>
    %c0_31 = arith.constant 0 : index
    %c128 = arith.constant 128 : index
    %62 = vector.load %arg4[%c0_31, %c128] : memref<256x512xbf16, #tpu.memory_space<vmem>>, vector<256x128xbf16>
    %cst_32 = arith.constant dense<0.000000e+00> : vector<128x128xf32>
    %63 = tpu.matmul %17, %62, %cst_32 {dimension_numbers = #tpu.dot_dimension_numbers<[1], [0], [0], [1], [0, 0, 1, 1], [], []>} : vector<128x256xbf16>, vector<256x128xbf16>, vector<128x128xf32> -> vector<128x128xf32>
    %64 = arith.mulf %63, %18 : vector<128x128xf32>
    %c64_i32_33 = arith.constant 64 : i32
    %65 = tpu.dynamic_rotate %63 by %c64_i32_33 dim 1 : vector<128x128xf32>, i32 -> vector<128x128xf32>
    %66 = arith.mulf %65, %19 : vector<128x128xf32>
    %67 = arith.addf %64, %66 : vector<128x128xf32>
    %68 = arith.truncf %67 : vector<128x128xf32> to vector<128x128xbf16>
    %cst_34 = arith.constant dense<0.000000e+00> : vector<128x128xf32>
    %69 = tpu.matmul %68, %32, %cst_34 {dimension_numbers = #tpu.dot_dimension_numbers<[1], [1], [0], [0], [0, 0, 1, 0], [], []>} : vector<128x128xbf16>, vector<128x128xbf16>, vector<128x128xf32> -> vector<128x128xf32>
    %cst_35 = arith.constant 0.0883883461 : f32
    %70 = vector.broadcast %cst_35 : f32 to vector<128x128xf32>
    %71 = arith.mulf %69, %70 : vector<128x128xf32>
    %cst_36 = arith.constant -1.000000e+30 : f32
    %72 = vector.broadcast %cst_36 : f32 to vector<128x128xf32>
    %73 = arith.select %22, %71, %72 : vector<128x128xi1>, vector<128x128xf32>
    %cst_37 = arith.constant dense<0xFF800000> : vector<128xf32>
    %74 = vector.multi_reduction <maximumf>, %73, %cst_37 [1] : vector<128x128xf32> to vector<128xf32>
    %75 = vector.shape_cast %74 : vector<128xf32> to vector<128x1xf32>
    %76 = vector.broadcast %75 : vector<128x1xf32> to vector<128x128xf32>
    %77 = arith.subf %73, %76 : vector<128x128xf32>
    %78 = math.exp %77 : vector<128x128xf32>
    %cst_38 = arith.constant dense<0.000000e+00> : vector<128xf32>
    %79 = vector.multi_reduction <add>, %78, %cst_38 [1] : vector<128x128xf32> to vector<128xf32>
    %80 = vector.shape_cast %79 : vector<128xf32> to vector<128x1xf32>
    %81 = arith.truncf %78 : vector<128x128xf32> to vector<128x128xbf16>
    %cst_39 = arith.constant dense<0.000000e+00> : vector<128x128xf32>
    %82 = tpu.matmul %81, %33, %cst_39 {dimension_numbers = #tpu.dot_dimension_numbers<[1], [0], [0], [1], [0, 0, 1, 1], [], []>} : vector<128x128xbf16>, vector<128x128xbf16>, vector<128x128xf32> -> vector<128x128xf32>
    %83 = tpu.reciprocal %80 {approx = true} : vector<128x1xf32> -> vector<128x1xf32>
    %84 = vector.broadcast %83 : vector<128x1xf32> to vector<128x128xf32>
    %85 = arith.mulf %82, %84 : vector<128x128xf32>
    %86 = arith.truncf %85 : vector<128x128xf32> to vector<128x128xbf16>
    %c128_40 = arith.constant 128 : index
    %c0_41 = arith.constant 0 : index
    %87 = vector.load %arg5[%c128_40, %c0_41] : memref<256x256xbf16, #tpu.memory_space<vmem>>, vector<128x256xbf16>
    %cst_42 = arith.constant dense<0.000000e+00> : vector<128x256xf32>
    %88 = tpu.matmul %86, %87, %cst_42 {dimension_numbers = #tpu.dot_dimension_numbers<[1], [0], [0], [1], [0, 0, 1, 1], [], []>} : vector<128x128xbf16>, vector<128x256xbf16>, vector<128x256xf32> -> vector<128x256xf32>
    %89 = arith.addf %61, %88 : vector<128x256xf32>
    %c0_43 = arith.constant 0 : index
    %c0_44 = arith.constant 0 : index
    %90 = vector.load %arg8[%c0_43, %c0_44] : memref<128x256xf32, #tpu.memory_space<vmem>>, vector<128x256xf32>
    tpu.vector_store %arg8[%c0_43, %c0_44], %89 {strides = array<i32>} : memref<128x256xf32, #tpu.memory_space<vmem>>, vector<128x256xf32>,
    return
  }
  func.func @transform_0(%arg0: i32) -> (i32, i32) {
    %c0_i32 = arith.constant 0 : i32
    %c0_i32_0 = arith.constant 0 : i32
    return %arg0, %c0_i32 : i32, i32
  }
  func.func @transform_1(%arg0: i32) -> (i32, i32) {
    %c0_i32 = arith.constant 0 : i32
    %c0_i32_0 = arith.constant 0 : i32
    return %arg0, %c0_i32 : i32, i32
  }
  func.func @transform_2(%arg0: i32) -> (i32, i32) {
    %c0_i32 = arith.constant 0 : i32
    %c0_i32_0 = arith.constant 0 : i32
    %c0_i32_1 = arith.constant 0 : i32
    return %c0_i32, %c0_i32_0 : i32, i32
  }
  func.func @transform_3(%arg0: i32) -> (i32, i32) {
    %c0_i32 = arith.constant 0 : i32
    %c0_i32_0 = arith.constant 0 : i32
    %c0_i32_1 = arith.constant 0 : i32
    return %c0_i32, %c0_i32_0 : i32, i32
  }
  func.func @transform_4(%arg0: i32) -> (i32, i32) {
    %c0_i32 = arith.constant 0 : i32
    %c0_i32_0 = arith.constant 0 : i32
    %c0_i32_1 = arith.constant 0 : i32
    return %c0_i32, %c0_i32_0 : i32, i32
  }
  func.func @transform_5(%arg0: i32) -> (i32, i32) {
    %c0_i32 = arith.constant 0 : i32
    %c0_i32_0 = arith.constant 0 : i32
    return %arg0, %c0_i32 : i32, i32
  }
  func.func @transform_6(%arg0: i32) -> (i32, i32) {
    %c0_i32 = arith.constant 0 : i32
    %c0_i32_0 = arith.constant 0 : i32
    return %arg0, %c0_i32 : i32, i32
  }
  func.func @transform_7(%arg0: i32) -> (i32, i32) {
    %c0_i32 = arith.constant 0 : i32
    %c0_i32_0 = arith.constant 0 : i32
    return %arg0, %c0_i32 : i32, i32
  }
  func.func @transform_8(%arg0: i32) -> (i32, i32) {
    %c0_i32 = arith.constant 0 : i32
    %c0_i32_0 = arith.constant 0 : i32
    return %arg0, %c0_i32 : i32, i32
  }
}

module attributes {stable_mosaic.version = 11 : i64} {
  func.func @kernel(%arg0: i32, %arg1: memref<128x256xf32, #tpu.memory_space<vmem>>, %arg2: memref<128x256xf32, #tpu.memory_space<vmem>>, %arg3: memref<1x256xf32, #tpu.memory_space<vmem>>, %arg4: memref<256x512xbf16, #tpu.memory_space<vmem>>, %arg5: memref<256x512xbf16, #tpu.memory_space<vmem>>, %arg6: memref<512x256xbf16, #tpu.memory_space<vmem>>, %arg7: memref<128x256xf32, #tpu.memory_space<vmem>>, %arg8: memref<128x256xf32, #tpu.memory_space<vmem>>) attributes {dimension_semantics = [#tpu.dimension_semantics<parallel>], iteration_bounds = array<i64: 2>, scalar_prefetch = 0 : i64, scratch_operands = 0 : i64, tpu.core_type = #tpu.core_type<tc>, window_params = [{transform_indices = @transform_0, window_bounds = array<i64: 128, 256>}, {transform_indices = @transform_1, window_bounds = array<i64: 128, 256>}, {pipeline_mode = #tpu.pipeline_mode<synchronous>, transform_indices = @transform_2, window_bounds = array<i64: 1, 256>}, {pipeline_mode = #tpu.pipeline_mode<synchronous>, transform_indices = @transform_3, window_bounds = array<i64: 256, 512>}, {pipeline_mode = #tpu.pipeline_mode<synchronous>, transform_indices = @transform_4, window_bounds = array<i64: 256, 512>}, {pipeline_mode = #tpu.pipeline_mode<synchronous>, transform_indices = @transform_5, window_bounds = array<i64: 512, 256>}, {transform_indices = @transform_6, window_bounds = array<i64: 128, 256>}, {transform_indices = @transform_7, window_bounds = array<i64: 128, 256>}]} {
    %c0 = arith.constant 0 : index
    %c0_0 = arith.constant 0 : index
    %0 = vector.load %arg1[%c0, %c0_0] : memref<128x256xf32, #tpu.memory_space<vmem>>, vector<128x256xf32>
    %c0_1 = arith.constant 0 : index
    %c0_2 = arith.constant 0 : index
    %1 = vector.load %arg2[%c0_1, %c0_2] : memref<128x256xf32, #tpu.memory_space<vmem>>, vector<128x256xf32>
    %2 = arith.addf %0, %1 : vector<128x256xf32>
    %c0_3 = arith.constant 0 : index
    %c0_4 = arith.constant 0 : index
    %3 = vector.load %arg8[%c0_3, %c0_4] : memref<128x256xf32, #tpu.memory_space<vmem>>, vector<128x256xf32>
    tpu.vector_store %arg8[%c0_3, %c0_4], %2 {strides = array<i32>} : memref<128x256xf32, #tpu.memory_space<vmem>>, vector<128x256xf32>,
    %4 = arith.mulf %2, %2 : vector<128x256xf32>
    %cst = arith.constant dense<0.000000e+00> : vector<128xf32>
    %5 = vector.multi_reduction <add>, %4, %cst [1] : vector<128x256xf32> to vector<128xf32>
    %6 = vector.shape_cast %5 : vector<128xf32> to vector<128x1xf32>
    %cst_5 = arith.constant 2.560000e+02 : f32
    %7 = vector.broadcast %cst_5 : f32 to vector<128x1xf32>
    %8 = arith.divf %6, %7 : vector<128x1xf32>
    %cst_6 = arith.constant 9.99999997E-7 : f32
    %9 = vector.broadcast %cst_6 : f32 to vector<128x1xf32>
    %10 = arith.addf %8, %9 : vector<128x1xf32>
    %11 = math.rsqrt %10 : vector<128x1xf32>
    %12 = vector.broadcast %11 : vector<128x1xf32> to vector<128x256xf32>
    %13 = arith.mulf %2, %12 : vector<128x256xf32>
    %c0_7 = arith.constant 0 : index
    %c0_8 = arith.constant 0 : index
    %14 = vector.load %arg3[%c0_7, %c0_8] : memref<1x256xf32, #tpu.memory_space<vmem>>, vector<1x256xf32>
    %15 = vector.broadcast %14 : vector<1x256xf32> to vector<128x256xf32>
    %16 = arith.mulf %13, %15 : vector<128x256xf32>
    %17 = arith.truncf %16 : vector<128x256xf32> to vector<128x256xbf16>
    %cst_9 = arith.constant 0.000000e+00 : f32
    %18 = vector.broadcast %cst_9 : f32 to vector<128x256xf32>
    %c0_10 = arith.constant 0 : index
    %c0_11 = arith.constant 0 : index
    %19 = vector.load %arg4[%c0_10, %c0_11] : memref<256x512xbf16, #tpu.memory_space<vmem>>, vector<256x128xbf16>
    %cst_12 = arith.constant dense<0.000000e+00> : vector<128x128xf32>
    %20 = tpu.matmul %17, %19, %cst_12 {dimension_numbers = #tpu.dot_dimension_numbers<[1], [0], [0], [1], [0, 0, 1, 1], [], []>} : vector<128x256xbf16>, vector<256x128xbf16>, vector<128x128xf32> -> vector<128x128xf32>
    %c0_13 = arith.constant 0 : index
    %c0_14 = arith.constant 0 : index
    %21 = vector.load %arg5[%c0_13, %c0_14] : memref<256x512xbf16, #tpu.memory_space<vmem>>, vector<256x128xbf16>
    %cst_15 = arith.constant dense<0.000000e+00> : vector<128x128xf32>
    %22 = tpu.matmul %17, %21, %cst_15 {dimension_numbers = #tpu.dot_dimension_numbers<[1], [0], [0], [1], [0, 0, 1, 1], [], []>} : vector<128x256xbf16>, vector<256x128xbf16>, vector<128x128xf32> -> vector<128x128xf32>
    %23 = arith.negf %20 : vector<128x128xf32>
    %24 = math.exp %23 : vector<128x128xf32>
    %cst_16 = arith.constant 1.000000e+00 : f32
    %25 = vector.broadcast %cst_16 : f32 to vector<128x128xf32>
    %26 = arith.addf %25, %24 : vector<128x128xf32>
    %27 = arith.divf %25, %26 : vector<128x128xf32>
    %28 = arith.mulf %20, %27 : vector<128x128xf32>
    %29 = arith.mulf %28, %22 : vector<128x128xf32>
    %30 = arith.truncf %29 : vector<128x128xf32> to vector<128x128xbf16>
    %c0_17 = arith.constant 0 : index
    %c0_18 = arith.constant 0 : index
    %31 = vector.load %arg6[%c0_17, %c0_18] : memref<512x256xbf16, #tpu.memory_space<vmem>>, vector<128x256xbf16>
    %cst_19 = arith.constant dense<0.000000e+00> : vector<128x256xf32>
    %32 = tpu.matmul %30, %31, %cst_19 {dimension_numbers = #tpu.dot_dimension_numbers<[1], [0], [0], [1], [0, 0, 1, 1], [], []>} : vector<128x128xbf16>, vector<128x256xbf16>, vector<128x256xf32> -> vector<128x256xf32>
    %33 = arith.addf %18, %32 : vector<128x256xf32>
    %c0_20 = arith.constant 0 : index
    %c128 = arith.constant 128 : index
    %34 = vector.load %arg4[%c0_20, %c128] : memref<256x512xbf16, #tpu.memory_space<vmem>>, vector<256x128xbf16>
    %cst_21 = arith.constant dense<0.000000e+00> : vector<128x128xf32>
    %35 = tpu.matmul %17, %34, %cst_21 {dimension_numbers = #tpu.dot_dimension_numbers<[1], [0], [0], [1], [0, 0, 1, 1], [], []>} : vector<128x256xbf16>, vector<256x128xbf16>, vector<128x128xf32> -> vector<128x128xf32>
    %c0_22 = arith.constant 0 : index
    %c128_23 = arith.constant 128 : index
    %36 = vector.load %arg5[%c0_22, %c128_23] : memref<256x512xbf16, #tpu.memory_space<vmem>>, vector<256x128xbf16>
    %cst_24 = arith.constant dense<0.000000e+00> : vector<128x128xf32>
    %37 = tpu.matmul %17, %36, %cst_24 {dimension_numbers = #tpu.dot_dimension_numbers<[1], [0], [0], [1], [0, 0, 1, 1], [], []>} : vector<128x256xbf16>, vector<256x128xbf16>, vector<128x128xf32> -> vector<128x128xf32>
    %38 = arith.negf %35 : vector<128x128xf32>
    %39 = math.exp %38 : vector<128x128xf32>
    %cst_25 = arith.constant 1.000000e+00 : f32
    %40 = vector.broadcast %cst_25 : f32 to vector<128x128xf32>
    %41 = arith.addf %40, %39 : vector<128x128xf32>
    %42 = arith.divf %40, %41 : vector<128x128xf32>
    %43 = arith.mulf %35, %42 : vector<128x128xf32>
    %44 = arith.mulf %43, %37 : vector<128x128xf32>
    %45 = arith.truncf %44 : vector<128x128xf32> to vector<128x128xbf16>
    %c128_26 = arith.constant 128 : index
    %c0_27 = arith.constant 0 : index
    %46 = vector.load %arg6[%c128_26, %c0_27] : memref<512x256xbf16, #tpu.memory_space<vmem>>, vector<128x256xbf16>
    %cst_28 = arith.constant dense<0.000000e+00> : vector<128x256xf32>
    %47 = tpu.matmul %45, %46, %cst_28 {dimension_numbers = #tpu.dot_dimension_numbers<[1], [0], [0], [1], [0, 0, 1, 1], [], []>} : vector<128x128xbf16>, vector<128x256xbf16>, vector<128x256xf32> -> vector<128x256xf32>
    %48 = arith.addf %33, %47 : vector<128x256xf32>
    %c0_29 = arith.constant 0 : index
    %c256 = arith.constant 256 : index
    %49 = vector.load %arg4[%c0_29, %c256] : memref<256x512xbf16, #tpu.memory_space<vmem>>, vector<256x128xbf16>
    %cst_30 = arith.constant dense<0.000000e+00> : vector<128x128xf32>
    %50 = tpu.matmul %17, %49, %cst_30 {dimension_numbers = #tpu.dot_dimension_numbers<[1], [0], [0], [1], [0, 0, 1, 1], [], []>} : vector<128x256xbf16>, vector<256x128xbf16>, vector<128x128xf32> -> vector<128x128xf32>
    %c0_31 = arith.constant 0 : index
    %c256_32 = arith.constant 256 : index
    %51 = vector.load %arg5[%c0_31, %c256_32] : memref<256x512xbf16, #tpu.memory_space<vmem>>, vector<256x128xbf16>
    %cst_33 = arith.constant dense<0.000000e+00> : vector<128x128xf32>
    %52 = tpu.matmul %17, %51, %cst_33 {dimension_numbers = #tpu.dot_dimension_numbers<[1], [0], [0], [1], [0, 0, 1, 1], [], []>} : vector<128x256xbf16>, vector<256x128xbf16>, vector<128x128xf32> -> vector<128x128xf32>
    %53 = arith.negf %50 : vector<128x128xf32>
    %54 = math.exp %53 : vector<128x128xf32>
    %cst_34 = arith.constant 1.000000e+00 : f32
    %55 = vector.broadcast %cst_34 : f32 to vector<128x128xf32>
    %56 = arith.addf %55, %54 : vector<128x128xf32>
    %57 = arith.divf %55, %56 : vector<128x128xf32>
    %58 = arith.mulf %50, %57 : vector<128x128xf32>
    %59 = arith.mulf %58, %52 : vector<128x128xf32>
    %60 = arith.truncf %59 : vector<128x128xf32> to vector<128x128xbf16>
    %c256_35 = arith.constant 256 : index
    %c0_36 = arith.constant 0 : index
    %61 = vector.load %arg6[%c256_35, %c0_36] : memref<512x256xbf16, #tpu.memory_space<vmem>>, vector<128x256xbf16>
    %cst_37 = arith.constant dense<0.000000e+00> : vector<128x256xf32>
    %62 = tpu.matmul %60, %61, %cst_37 {dimension_numbers = #tpu.dot_dimension_numbers<[1], [0], [0], [1], [0, 0, 1, 1], [], []>} : vector<128x128xbf16>, vector<128x256xbf16>, vector<128x256xf32> -> vector<128x256xf32>
    %63 = arith.addf %48, %62 : vector<128x256xf32>
    %c0_38 = arith.constant 0 : index
    %c384 = arith.constant 384 : index
    %64 = vector.load %arg4[%c0_38, %c384] : memref<256x512xbf16, #tpu.memory_space<vmem>>, vector<256x128xbf16>
    %cst_39 = arith.constant dense<0.000000e+00> : vector<128x128xf32>
    %65 = tpu.matmul %17, %64, %cst_39 {dimension_numbers = #tpu.dot_dimension_numbers<[1], [0], [0], [1], [0, 0, 1, 1], [], []>} : vector<128x256xbf16>, vector<256x128xbf16>, vector<128x128xf32> -> vector<128x128xf32>
    %c0_40 = arith.constant 0 : index
    %c384_41 = arith.constant 384 : index
    %66 = vector.load %arg5[%c0_40, %c384_41] : memref<256x512xbf16, #tpu.memory_space<vmem>>, vector<256x128xbf16>
    %cst_42 = arith.constant dense<0.000000e+00> : vector<128x128xf32>
    %67 = tpu.matmul %17, %66, %cst_42 {dimension_numbers = #tpu.dot_dimension_numbers<[1], [0], [0], [1], [0, 0, 1, 1], [], []>} : vector<128x256xbf16>, vector<256x128xbf16>, vector<128x128xf32> -> vector<128x128xf32>
    %68 = arith.negf %65 : vector<128x128xf32>
    %69 = math.exp %68 : vector<128x128xf32>
    %cst_43 = arith.constant 1.000000e+00 : f32
    %70 = vector.broadcast %cst_43 : f32 to vector<128x128xf32>
    %71 = arith.addf %70, %69 : vector<128x128xf32>
    %72 = arith.divf %70, %71 : vector<128x128xf32>
    %73 = arith.mulf %65, %72 : vector<128x128xf32>
    %74 = arith.mulf %73, %67 : vector<128x128xf32>
    %75 = arith.truncf %74 : vector<128x128xf32> to vector<128x128xbf16>
    %c384_44 = arith.constant 384 : index
    %c0_45 = arith.constant 0 : index
    %76 = vector.load %arg6[%c384_44, %c0_45] : memref<512x256xbf16, #tpu.memory_space<vmem>>, vector<128x256xbf16>
    %cst_46 = arith.constant dense<0.000000e+00> : vector<128x256xf32>
    %77 = tpu.matmul %75, %76, %cst_46 {dimension_numbers = #tpu.dot_dimension_numbers<[1], [0], [0], [1], [0, 0, 1, 1], [], []>} : vector<128x128xbf16>, vector<128x256xbf16>, vector<128x256xf32> -> vector<128x256xf32>
    %78 = arith.addf %63, %77 : vector<128x256xf32>
    %c0_47 = arith.constant 0 : index
    %c0_48 = arith.constant 0 : index
    %79 = vector.load %arg7[%c0_47, %c0_48] : memref<128x256xf32, #tpu.memory_space<vmem>>, vector<128x256xf32>
    tpu.vector_store %arg7[%c0_47, %c0_48], %78 {strides = array<i32>} : memref<128x256xf32, #tpu.memory_space<vmem>>, vector<128x256xf32>,
    return
  }
  func.func @transform_0(%arg0: i32) -> (i32, i32) {
    %c0_i32 = arith.constant 0 : i32
    %c0_i32_0 = arith.constant 0 : i32
    return %arg0, %c0_i32 : i32, i32
  }
  func.func @transform_1(%arg0: i32) -> (i32, i32) {
    %c0_i32 = arith.constant 0 : i32
    %c0_i32_0 = arith.constant 0 : i32
    return %arg0, %c0_i32 : i32, i32
  }
  func.func @transform_2(%arg0: i32) -> (i32, i32) {
    %c0_i32 = arith.constant 0 : i32
    %c0_i32_0 = arith.constant 0 : i32
    %c0_i32_1 = arith.constant 0 : i32
    return %c0_i32, %c0_i32_0 : i32, i32
  }
  func.func @transform_3(%arg0: i32) -> (i32, i32) {
    %c0_i32 = arith.constant 0 : i32
    %c0_i32_0 = arith.constant 0 : i32
    %c0_i32_1 = arith.constant 0 : i32
    return %c0_i32, %c0_i32_0 : i32, i32
  }
  func.func @transform_4(%arg0: i32) -> (i32, i32) {
    %c0_i32 = arith.constant 0 : i32
    %c0_i32_0 = arith.constant 0 : i32
    %c0_i32_1 = arith.constant 0 : i32
    return %c0_i32, %c0_i32_0 : i32, i32
  }
  func.func @transform_5(%arg0: i32) -> (i32, i32) {
    %c0_i32 = arith.constant 0 : i32
    %c0_i32_0 = arith.constant 0 : i32
    %c0_i32_1 = arith.constant 0 : i32
    return %c0_i32, %c0_i32_0 : i32, i32
  }
  func.func @transform_6(%arg0: i32) -> (i32, i32) {
    %c0_i32 = arith.constant 0 : i32
    %c0_i32_0 = arith.constant 0 : i32
    return %arg0, %c0_i32 : i32, i32
  }
  func.func @transform_7(%arg0: i32) -> (i32, i32) {
    %c0_i32 = arith.constant 0 : i32
    %c0_i32_0 = arith.constant 0 : i32
    return %arg0, %c0_i32 : i32, i32
  }
}

module attributes {stable_mosaic.version = 11 : i64} {
  func.func @kernel(%arg0: i32, %arg1: memref<128x256xf32, #tpu.memory_space<vmem>>, %arg2: memref<128x256xf32, #tpu.memory_space<vmem>>, %arg3: memref<1x256xf32, #tpu.memory_space<vmem>>, %arg4: memref<256x512xbf16, #tpu.memory_space<vmem>>, %arg5: memref<256x512xbf16, #tpu.memory_space<vmem>>, %arg6: memref<512x256xbf16, #tpu.memory_space<vmem>>, %arg7: memref<1x256xf32, #tpu.memory_space<vmem>>, %arg8: memref<128x256xf32, #tpu.memory_space<vmem>>) attributes {dimension_semantics = [#tpu.dimension_semantics<parallel>], iteration_bounds = array<i64: 2>, scalar_prefetch = 0 : i64, scratch_operands = 0 : i64, tpu.core_type = #tpu.core_type<tc>, window_params = [{transform_indices = @transform_0, window_bounds = array<i64: 128, 256>}, {transform_indices = @transform_1, window_bounds = array<i64: 128, 256>}, {pipeline_mode = #tpu.pipeline_mode<synchronous>, transform_indices = @transform_2, window_bounds = array<i64: 1, 256>}, {pipeline_mode = #tpu.pipeline_mode<synchronous>, transform_indices = @transform_3, window_bounds = array<i64: 256, 512>}, {pipeline_mode = #tpu.pipeline_mode<synchronous>, transform_indices = @transform_4, window_bounds = array<i64: 256, 512>}, {pipeline_mode = #tpu.pipeline_mode<synchronous>, transform_indices = @transform_5, window_bounds = array<i64: 512, 256>}, {pipeline_mode = #tpu.pipeline_mode<synchronous>, transform_indices = @transform_6, window_bounds = array<i64: 1, 256>}, {transform_indices = @transform_7, window_bounds = array<i64: 128, 256>}]} {
    %c0 = arith.constant 0 : index
    %c0_0 = arith.constant 0 : index
    %0 = vector.load %arg1[%c0, %c0_0] : memref<128x256xf32, #tpu.memory_space<vmem>>, vector<128x256xf32>
    %c0_1 = arith.constant 0 : index
    %c0_2 = arith.constant 0 : index
    %1 = vector.load %arg2[%c0_1, %c0_2] : memref<128x256xf32, #tpu.memory_space<vmem>>, vector<128x256xf32>
    %2 = arith.addf %0, %1 : vector<128x256xf32>
    %3 = arith.mulf %2, %2 : vector<128x256xf32>
    %cst = arith.constant dense<0.000000e+00> : vector<128xf32>
    %4 = vector.multi_reduction <add>, %3, %cst [1] : vector<128x256xf32> to vector<128xf32>
    %5 = vector.shape_cast %4 : vector<128xf32> to vector<128x1xf32>
    %cst_3 = arith.constant 2.560000e+02 : f32
    %6 = vector.broadcast %cst_3 : f32 to vector<128x1xf32>
    %7 = arith.divf %5, %6 : vector<128x1xf32>
    %cst_4 = arith.constant 9.99999997E-7 : f32
    %8 = vector.broadcast %cst_4 : f32 to vector<128x1xf32>
    %9 = arith.addf %7, %8 : vector<128x1xf32>
    %10 = math.rsqrt %9 : vector<128x1xf32>
    %11 = vector.broadcast %10 : vector<128x1xf32> to vector<128x256xf32>
    %12 = arith.mulf %2, %11 : vector<128x256xf32>
    %c0_5 = arith.constant 0 : index
    %c0_6 = arith.constant 0 : index
    %13 = vector.load %arg3[%c0_5, %c0_6] : memref<1x256xf32, #tpu.memory_space<vmem>>, vector<1x256xf32>
    %14 = vector.broadcast %13 : vector<1x256xf32> to vector<128x256xf32>
    %15 = arith.mulf %12, %14 : vector<128x256xf32>
    %16 = arith.truncf %15 : vector<128x256xf32> to vector<128x256xbf16>
    %cst_7 = arith.constant 0.000000e+00 : f32
    %17 = vector.broadcast %cst_7 : f32 to vector<128x256xf32>
    %c0_8 = arith.constant 0 : index
    %c0_9 = arith.constant 0 : index
    %18 = vector.load %arg4[%c0_8, %c0_9] : memref<256x512xbf16, #tpu.memory_space<vmem>>, vector<256x128xbf16>
    %cst_10 = arith.constant dense<0.000000e+00> : vector<128x128xf32>
    %19 = tpu.matmul %16, %18, %cst_10 {dimension_numbers = #tpu.dot_dimension_numbers<[1], [0], [0], [1], [0, 0, 1, 1], [], []>} : vector<128x256xbf16>, vector<256x128xbf16>, vector<128x128xf32> -> vector<128x128xf32>
    %c0_11 = arith.constant 0 : index
    %c0_12 = arith.constant 0 : index
    %20 = vector.load %arg5[%c0_11, %c0_12] : memref<256x512xbf16, #tpu.memory_space<vmem>>, vector<256x128xbf16>
    %cst_13 = arith.constant dense<0.000000e+00> : vector<128x128xf32>
    %21 = tpu.matmul %16, %20, %cst_13 {dimension_numbers = #tpu.dot_dimension_numbers<[1], [0], [0], [1], [0, 0, 1, 1], [], []>} : vector<128x256xbf16>, vector<256x128xbf16>, vector<128x128xf32> -> vector<128x128xf32>
    %22 = arith.negf %19 : vector<128x128xf32>
    %23 = math.exp %22 : vector<128x128xf32>
    %cst_14 = arith.constant 1.000000e+00 : f32
    %24 = vector.broadcast %cst_14 : f32 to vector<128x128xf32>
    %25 = arith.addf %24, %23 : vector<128x128xf32>
    %26 = arith.divf %24, %25 : vector<128x128xf32>
    %27 = arith.mulf %19, %26 : vector<128x128xf32>
    %28 = arith.mulf %27, %21 : vector<128x128xf32>
    %29 = arith.truncf %28 : vector<128x128xf32> to vector<128x128xbf16>
    %c0_15 = arith.constant 0 : index
    %c0_16 = arith.constant 0 : index
    %30 = vector.load %arg6[%c0_15, %c0_16] : memref<512x256xbf16, #tpu.memory_space<vmem>>, vector<128x256xbf16>
    %cst_17 = arith.constant dense<0.000000e+00> : vector<128x256xf32>
    %31 = tpu.matmul %29, %30, %cst_17 {dimension_numbers = #tpu.dot_dimension_numbers<[1], [0], [0], [1], [0, 0, 1, 1], [], []>} : vector<128x128xbf16>, vector<128x256xbf16>, vector<128x256xf32> -> vector<128x256xf32>
    %32 = arith.addf %17, %31 : vector<128x256xf32>
    %c0_18 = arith.constant 0 : index
    %c128 = arith.constant 128 : index
    %33 = vector.load %arg4[%c0_18, %c128] : memref<256x512xbf16, #tpu.memory_space<vmem>>, vector<256x128xbf16>
    %cst_19 = arith.constant dense<0.000000e+00> : vector<128x128xf32>
    %34 = tpu.matmul %16, %33, %cst_19 {dimension_numbers = #tpu.dot_dimension_numbers<[1], [0], [0], [1], [0, 0, 1, 1], [], []>} : vector<128x256xbf16>, vector<256x128xbf16>, vector<128x128xf32> -> vector<128x128xf32>
    %c0_20 = arith.constant 0 : index
    %c128_21 = arith.constant 128 : index
    %35 = vector.load %arg5[%c0_20, %c128_21] : memref<256x512xbf16, #tpu.memory_space<vmem>>, vector<256x128xbf16>
    %cst_22 = arith.constant dense<0.000000e+00> : vector<128x128xf32>
    %36 = tpu.matmul %16, %35, %cst_22 {dimension_numbers = #tpu.dot_dimension_numbers<[1], [0], [0], [1], [0, 0, 1, 1], [], []>} : vector<128x256xbf16>, vector<256x128xbf16>, vector<128x128xf32> -> vector<128x128xf32>
    %37 = arith.negf %34 : vector<128x128xf32>
    %38 = math.exp %37 : vector<128x128xf32>
    %cst_23 = arith.constant 1.000000e+00 : f32
    %39 = vector.broadcast %cst_23 : f32 to vector<128x128xf32>
    %40 = arith.addf %39, %38 : vector<128x128xf32>
    %41 = arith.divf %39, %40 : vector<128x128xf32>
    %42 = arith.mulf %34, %41 : vector<128x128xf32>
    %43 = arith.mulf %42, %36 : vector<128x128xf32>
    %44 = arith.truncf %43 : vector<128x128xf32> to vector<128x128xbf16>
    %c128_24 = arith.constant 128 : index
    %c0_25 = arith.constant 0 : index
    %45 = vector.load %arg6[%c128_24, %c0_25] : memref<512x256xbf16, #tpu.memory_space<vmem>>, vector<128x256xbf16>
    %cst_26 = arith.constant dense<0.000000e+00> : vector<128x256xf32>
    %46 = tpu.matmul %44, %45, %cst_26 {dimension_numbers = #tpu.dot_dimension_numbers<[1], [0], [0], [1], [0, 0, 1, 1], [], []>} : vector<128x128xbf16>, vector<128x256xbf16>, vector<128x256xf32> -> vector<128x256xf32>
    %47 = arith.addf %32, %46 : vector<128x256xf32>
    %c0_27 = arith.constant 0 : index
    %c256 = arith.constant 256 : index
    %48 = vector.load %arg4[%c0_27, %c256] : memref<256x512xbf16, #tpu.memory_space<vmem>>, vector<256x128xbf16>
    %cst_28 = arith.constant dense<0.000000e+00> : vector<128x128xf32>
    %49 = tpu.matmul %16, %48, %cst_28 {dimension_numbers = #tpu.dot_dimension_numbers<[1], [0], [0], [1], [0, 0, 1, 1], [], []>} : vector<128x256xbf16>, vector<256x128xbf16>, vector<128x128xf32> -> vector<128x128xf32>
    %c0_29 = arith.constant 0 : index
    %c256_30 = arith.constant 256 : index
    %50 = vector.load %arg5[%c0_29, %c256_30] : memref<256x512xbf16, #tpu.memory_space<vmem>>, vector<256x128xbf16>
    %cst_31 = arith.constant dense<0.000000e+00> : vector<128x128xf32>
    %51 = tpu.matmul %16, %50, %cst_31 {dimension_numbers = #tpu.dot_dimension_numbers<[1], [0], [0], [1], [0, 0, 1, 1], [], []>} : vector<128x256xbf16>, vector<256x128xbf16>, vector<128x128xf32> -> vector<128x128xf32>
    %52 = arith.negf %49 : vector<128x128xf32>
    %53 = math.exp %52 : vector<128x128xf32>
    %cst_32 = arith.constant 1.000000e+00 : f32
    %54 = vector.broadcast %cst_32 : f32 to vector<128x128xf32>
    %55 = arith.addf %54, %53 : vector<128x128xf32>
    %56 = arith.divf %54, %55 : vector<128x128xf32>
    %57 = arith.mulf %49, %56 : vector<128x128xf32>
    %58 = arith.mulf %57, %51 : vector<128x128xf32>
    %59 = arith.truncf %58 : vector<128x128xf32> to vector<128x128xbf16>
    %c256_33 = arith.constant 256 : index
    %c0_34 = arith.constant 0 : index
    %60 = vector.load %arg6[%c256_33, %c0_34] : memref<512x256xbf16, #tpu.memory_space<vmem>>, vector<128x256xbf16>
    %cst_35 = arith.constant dense<0.000000e+00> : vector<128x256xf32>
    %61 = tpu.matmul %59, %60, %cst_35 {dimension_numbers = #tpu.dot_dimension_numbers<[1], [0], [0], [1], [0, 0, 1, 1], [], []>} : vector<128x128xbf16>, vector<128x256xbf16>, vector<128x256xf32> -> vector<128x256xf32>
    %62 = arith.addf %47, %61 : vector<128x256xf32>
    %c0_36 = arith.constant 0 : index
    %c384 = arith.constant 384 : index
    %63 = vector.load %arg4[%c0_36, %c384] : memref<256x512xbf16, #tpu.memory_space<vmem>>, vector<256x128xbf16>
    %cst_37 = arith.constant dense<0.000000e+00> : vector<128x128xf32>
    %64 = tpu.matmul %16, %63, %cst_37 {dimension_numbers = #tpu.dot_dimension_numbers<[1], [0], [0], [1], [0, 0, 1, 1], [], []>} : vector<128x256xbf16>, vector<256x128xbf16>, vector<128x128xf32> -> vector<128x128xf32>
    %c0_38 = arith.constant 0 : index
    %c384_39 = arith.constant 384 : index
    %65 = vector.load %arg5[%c0_38, %c384_39] : memref<256x512xbf16, #tpu.memory_space<vmem>>, vector<256x128xbf16>
    %cst_40 = arith.constant dense<0.000000e+00> : vector<128x128xf32>
    %66 = tpu.matmul %16, %65, %cst_40 {dimension_numbers = #tpu.dot_dimension_numbers<[1], [0], [0], [1], [0, 0, 1, 1], [], []>} : vector<128x256xbf16>, vector<256x128xbf16>, vector<128x128xf32> -> vector<128x128xf32>
    %67 = arith.negf %64 : vector<128x128xf32>
    %68 = math.exp %67 : vector<128x128xf32>
    %cst_41 = arith.constant 1.000000e+00 : f32
    %69 = vector.broadcast %cst_41 : f32 to vector<128x128xf32>
    %70 = arith.addf %69, %68 : vector<128x128xf32>
    %71 = arith.divf %69, %70 : vector<128x128xf32>
    %72 = arith.mulf %64, %71 : vector<128x128xf32>
    %73 = arith.mulf %72, %66 : vector<128x128xf32>
    %74 = arith.truncf %73 : vector<128x128xf32> to vector<128x128xbf16>
    %c384_42 = arith.constant 384 : index
    %c0_43 = arith.constant 0 : index
    %75 = vector.load %arg6[%c384_42, %c0_43] : memref<512x256xbf16, #tpu.memory_space<vmem>>, vector<128x256xbf16>
    %cst_44 = arith.constant dense<0.000000e+00> : vector<128x256xf32>
    %76 = tpu.matmul %74, %75, %cst_44 {dimension_numbers = #tpu.dot_dimension_numbers<[1], [0], [0], [1], [0, 0, 1, 1], [], []>} : vector<128x128xbf16>, vector<128x256xbf16>, vector<128x256xf32> -> vector<128x256xf32>
    %77 = arith.addf %62, %76 : vector<128x256xf32>
    %78 = arith.addf %77, %2 : vector<128x256xf32>
    %79 = arith.mulf %78, %78 : vector<128x256xf32>
    %cst_45 = arith.constant dense<0.000000e+00> : vector<128xf32>
    %80 = vector.multi_reduction <add>, %79, %cst_45 [1] : vector<128x256xf32> to vector<128xf32>
    %81 = vector.shape_cast %80 : vector<128xf32> to vector<128x1xf32>
    %cst_46 = arith.constant 2.560000e+02 : f32
    %82 = vector.broadcast %cst_46 : f32 to vector<128x1xf32>
    %83 = arith.divf %81, %82 : vector<128x1xf32>
    %cst_47 = arith.constant 9.99999997E-7 : f32
    %84 = vector.broadcast %cst_47 : f32 to vector<128x1xf32>
    %85 = arith.addf %83, %84 : vector<128x1xf32>
    %86 = math.rsqrt %85 : vector<128x1xf32>
    %87 = vector.broadcast %86 : vector<128x1xf32> to vector<128x256xf32>
    %88 = arith.mulf %78, %87 : vector<128x256xf32>
    %c0_48 = arith.constant 0 : index
    %c0_49 = arith.constant 0 : index
    %89 = vector.load %arg7[%c0_48, %c0_49] : memref<1x256xf32, #tpu.memory_space<vmem>>, vector<1x256xf32>
    %90 = vector.broadcast %89 : vector<1x256xf32> to vector<128x256xf32>
    %91 = arith.mulf %88, %90 : vector<128x256xf32>
    %c0_50 = arith.constant 0 : index
    %c0_51 = arith.constant 0 : index
    %92 = vector.load %arg8[%c0_50, %c0_51] : memref<128x256xf32, #tpu.memory_space<vmem>>, vector<128x256xf32>
    tpu.vector_store %arg8[%c0_50, %c0_51], %91 {strides = array<i32>} : memref<128x256xf32, #tpu.memory_space<vmem>>, vector<128x256xf32>,
    return
  }
  func.func @transform_0(%arg0: i32) -> (i32, i32) {
    %c0_i32 = arith.constant 0 : i32
    %c0_i32_0 = arith.constant 0 : i32
    return %arg0, %c0_i32 : i32, i32
  }
  func.func @transform_1(%arg0: i32) -> (i32, i32) {
    %c0_i32 = arith.constant 0 : i32
    %c0_i32_0 = arith.constant 0 : i32
    return %arg0, %c0_i32 : i32, i32
  }
  func.func @transform_2(%arg0: i32) -> (i32, i32) {
    %c0_i32 = arith.constant 0 : i32
    %c0_i32_0 = arith.constant 0 : i32
    %c0_i32_1 = arith.constant 0 : i32
    return %c0_i32, %c0_i32_0 : i32, i32
  }
  func.func @transform_3(%arg0: i32) -> (i32, i32) {
    %c0_i32 = arith.constant 0 : i32
    %c0_i32_0 = arith.constant 0 : i32
    %c0_i32_1 = arith.constant 0 : i32
    return %c0_i32, %c0_i32_0 : i32, i32
  }
  func.func @transform_4(%arg0: i32) -> (i32, i32) {
    %c0_i32 = arith.constant 0 : i32
    %c0_i32_0 = arith.constant 0 : i32
    %c0_i32_1 = arith.constant 0 : i32
    return %c0_i32, %c0_i32_0 : i32, i32
  }
  func.func @transform_5(%arg0: i32) -> (i32, i32) {
    %c0_i32 = arith.constant 0 : i32
    %c0_i32_0 = arith.constant 0 : i32
    %c0_i32_1 = arith.constant 0 : i32
    return %c0_i32, %c0_i32_0 : i32, i32
  }
  func.func @transform_6(%arg0: i32) -> (i32, i32) {
    %c0_i32 = arith.constant 0 : i32
    %c0_i32_0 = arith.constant 0 : i32
    %c0_i32_1 = arith.constant 0 : i32
    return %c0_i32, %c0_i32_0 : i32, i32
  }
  func.func @transform_7(%arg0: i32) -> (i32, i32) {
    %c0_i32 = arith.constant 0 : i32
    %c0_i32_0 = arith.constant 0 : i32
    return %arg0, %c0_i32 : i32, i32
  }
}

</mosaic_0001>

<llo_original>
// kernel: internlm2_forward.4
$region0: #{internlm2_forward.4}
  #allocation0 [shape = 'u32[]', space=smem, size = 0x4, offset = 0x4, fixed_abs, tag = 'smem constant byte address 0x4 - core index']
  #allocation1 [shape = 'u32[144,128]{1,0:T(1,128)}', space=vmem, size = 0x12000, scoped, tag = 'internal scratch']
  %s0 = inlined_call_operand.vmem [shape: f32[256,256], index: 0, kind: input, shape index: {}]
  %s1 = inlined_call_operand.vmem [shape: f32[256,256], index: 1, kind: input, shape index: {}]
  %s2 = inlined_call_operand.vmem [shape: f32[1,256], index: 2, kind: input, shape index: {}]
  %s3 = inlined_call_operand.vmem [shape: bf16[256,512], index: 3, kind: input, shape index: {}]
  %s4 = inlined_call_operand.vmem [shape: bf16[256,256], index: 4, kind: input, shape index: {}]
  %s5 = inlined_call_operand.vmem [shape: f32[256,128], index: 5, kind: input, shape index: {}]
  %s6 = inlined_call_operand.vmem [shape: f32[256,128], index: 6, kind: input, shape index: {}]
  %s7 = inlined_call_operand.vmem [shape: f32[256,256], index: 7, kind: output, shape index: {0}]
  %s8 = inlined_call_operand.vmem [shape: f32[256,256], index: 8, kind: output, shape index: {1}]
  %9 = xla_tuple %s7, %s8
  %s10 = sld [smem:[#allocation0]]
  $region69: #{internlm2_forward.4} parent=0
    _
  %s12 = ssub.s32 1, %s10
  %s13 = scalar_select 0, %s12, %s10
  loop: start=0, step=1, limit=4
  $region2: #{internlm2_forward.4} parent=0 // loop_pre_header
    _
  $region3: #{internlm2_forward.4} parent=0 // loop_header
    %s15 = sphi 0, %s19
    %p16 = scmp.ge.s32.totalorder %s15, 4
    %s25 = sphi 0, %s27
    %s28 = sphi 0, %s25
    %s29 = sphi 0, %s28
    %s45 = sphi 0, %s29
    %s51 = sphi 0, %s53
    %s54 = sphi 0, %s51
    %s55 = sphi 0, %s54
    %s71 = sphi 0, %s55
    %s75 = sphi 0, %s75
    %s77 = sphi 0, %s75
    %s78 = sphi 0, %s77
    %s92 = sphi 0, %s78
    %s96 = sphi 0, %s96
    %s98 = sphi 0, %s96
    %s99 = sphi 0, %s98
    %s113 = sphi 0, %s99
    %s117 = sphi 0, %s117
    %s119 = sphi 0, %s117
    %s120 = sphi 0, %s119
    %s134 = sphi 0, %s120
    %s140 = sphi 0, %s142
    %s143 = sphi 0, %s140
    %s144 = sphi 0, %s143
    %s160 = sphi 0, %s144
    %s166 = sphi 0, %s168
    %s169 = sphi 0, %s166
    %s170 = sphi 0, %s169
    %s186 = sphi 0, %s170
    %s192 = sphi 0, %s194
    %s195 = sphi 0, %s192
    %s196 = sphi 0, %s195
    %s212 = sphi 0, %s196
    %s218 = sphi 0, %s220
    %s221 = sphi 0, %s218
    %s222 = sphi 0, %s221
    %s238 = sphi 0, %s222
  $region4: #{internlm2_forward.4} parent=0 // loop_header_branch
    %18 = sbr.rel (%p16) target = $region8
  $region5: #{internlm2_forward.4} parent=0 // loop_body
    %s20 = ssub.s32 %s15, 1
    %s21 = ssub.s32 %s15, 2
    %s22 = sadd.s32 %s15, 1
    %s23 = ssub.s32 %s15, %s22
    %p24 = scmp.eq.s32.totalorder %s23, 0
    %s26 = sadd.s32 %s25, 1
    %s27 = scalar_select %p24, %s25, %s26
    %p30 = pneg %p24
    %p31 = scmp.eq.s32.totalorder %s15, 1
    %p32 = por %p30, %p31
    %p33 = scmp.ne.s32.totalorder %s25, %s28
    %p34 = scmp.eq.s32.totalorder %s15, 0
    %p35 = por %p33, %p34
    %p36 = scmp.ne.s32.totalorder %s25, %s28
    %p37 = scmp.eq.s32.totalorder %s20, 1
    %p38 = por %p36, %p37
    %p39 = scmp.ne.s32.totalorder %s28, %s29
    %p40 = scmp.eq.s32.totalorder %s20, 0
    %p41 = por %p39, %p40
    %p42 = scmp.ne.s32.totalorder %s28, %s29
    %p43 = scmp.eq.s32.totalorder %s21, 1
    %p44 = por %p42, %p43
    %p46 = scmp.ne.s32.totalorder %s29, %s45
    %p47 = scmp.eq.s32.totalorder %s21, 0
    %p48 = por %p46, %p47
    %s49 = ssub.s32 %s15, %s22
    %p50 = scmp.eq.s32.totalorder %s49, 0
    %s52 = sadd.s32 %s51, 1
    %s53 = scalar_select %p50, %s51, %s52
    %p56 = pneg %p50
    %p57 = scmp.eq.s32.totalorder %s15, 1
    %p58 = por %p56, %p57
    %p59 = scmp.ne.s32.totalorder %s51, %s54
    %p60 = scmp.eq.s32.totalorder %s15, 0
    %p61 = por %p59, %p60
    %p62 = scmp.ne.s32.totalorder %s51, %s54
    %p63 = scmp.eq.s32.totalorder %s20, 1
    %p64 = por %p62, %p63
    %p65 = scmp.ne.s32.totalorder %s54, %s55
    %p66 = scmp.eq.s32.totalorder %s20, 0
    %p67 = por %p65, %p66
    %p68 = scmp.ne.s32.totalorder %s54, %s55
    %p69 = scmp.eq.s32.totalorder %s21, 1
    %p70 = por %p68, %p69
    %p72 = scmp.ne.s32.totalorder %s55, %s71
    %p73 = scmp.eq.s32.totalorder %s21, 0
    %p74 = por %p72, %p73
    %s76 = sadd.s32 %s75, 1
    %p79 = scmp.eq.s32.totalorder %s15, 1
    %p80 = scmp.ne.s32.totalorder %s75, %s77
    %p81 = scmp.eq.s32.totalorder %s15, 0
    %p82 = por %p80, %p81
    %p83 = scmp.ne.s32.totalorder %s75, %s77
    %p84 = scmp.eq.s32.totalorder %s20, 1
    %p85 = por %p83, %p84
    %p86 = scmp.ne.s32.totalorder %s77, %s78
    %p87 = scmp.eq.s32.totalorder %s20, 0
    %p88 = por %p86, %p87
    %p89 = scmp.ne.s32.totalorder %s77, %s78
    %p90 = scmp.eq.s32.totalorder %s21, 1
    %p91 = por %p89, %p90
    %p93 = scmp.ne.s32.totalorder %s78, %s92
    %p94 = scmp.eq.s32.totalorder %s21, 0
    %p95 = por %p93, %p94
    %s97 = sadd.s32 %s96, 1
    %p100 = scmp.eq.s32.totalorder %s15, 1
    %p101 = scmp.ne.s32.totalorder %s96, %s98
    %p102 = scmp.eq.s32.totalorder %s15, 0
    %p103 = por %p101, %p102
    %p104 = scmp.ne.s32.totalorder %s96, %s98
    %p105 = scmp.eq.s32.totalorder %s20, 1
    %p106 = por %p104, %p105
    %p107 = scmp.ne.s32.totalorder %s98, %s99
    %p108 = scmp.eq.s32.totalorder %s20, 0
    %p109 = por %p107, %p108
    %p110 = scmp.ne.s32.totalorder %s98, %s99
    %p111 = scmp.eq.s32.totalorder %s21, 1
    %p112 = por %p110, %p111
    %p114 = scmp.ne.s32.totalorder %s99, %s113
    %p115 = scmp.eq.s32.totalorder %s21, 0
    %p116 = por %p114, %p115
    %s118 = sadd.s32 %s117, 1
    %p121 = scmp.eq.s32.totalorder %s15, 1
    %p122 = scmp.ne.s32.totalorder %s117, %s119
    %p123 = scmp.eq.s32.totalorder %s15, 0
    %p124 = por %p122, %p123
    %p125 = scmp.ne.s32.totalorder %s117, %s119
    %p126 = scmp.eq.s32.totalorder %s20, 1
    %p127 = por %p125, %p126
    %p128 = scmp.ne.s32.totalorder %s119, %s120
    %p129 = scmp.eq.s32.totalorder %s20, 0
    %p130 = por %p128, %p129
    %p131 = scmp.ne.s32.totalorder %s119, %s120
    %p132 = scmp.eq.s32.totalorder %s21, 1
    %p133 = por %p131, %p132
    %p135 = scmp.ne.s32.totalorder %s120, %s134
    %p136 = scmp.eq.s32.totalorder %s21, 0
    %p137 = por %p135, %p136
    %s138 = ssub.s32 %s15, %s22
    %p139 = scmp.eq.s32.totalorder %s138, 0
    %s141 = sadd.s32 %s140, 1
    %s142 = scalar_select %p139, %s140, %s141
    %p145 = pneg %p139
    %p146 = scmp.eq.s32.totalorder %s15, 1
    %p147 = por %p145, %p146
    %p148 = scmp.ne.s32.totalorder %s140, %s143
    %p149 = scmp.eq.s32.totalorder %s15, 0
    %p150 = por %p148, %p149
    %p151 = scmp.ne.s32.totalorder %s140, %s143
    %p152 = scmp.eq.s32.totalorder %s20, 1
    %p153 = por %p151, %p152
    %p154 = scmp.ne.s32.totalorder %s143, %s144
    %p155 = scmp.eq.s32.totalorder %s20, 0
    %p156 = por %p154, %p155
    %p157 = scmp.ne.s32.totalorder %s143, %s144
    %p158 = scmp.eq.s32.totalorder %s21, 1
    %p159 = por %p157, %p158
    %p161 = scmp.ne.s32.totalorder %s144, %s160
    %p162 = scmp.eq.s32.totalorder %s21, 0
    %p163 = por %p161, %p162
    %s164 = ssub.s32 %s15, %s22
    %p165 = scmp.eq.s32.totalorder %s164, 0
    %s167 = sadd.s32 %s166, 1
    %s168 = scalar_select %p165, %s166, %s167
    %p171 = pneg %p165
    %p172 = scmp.eq.s32.totalorder %s15, 1
    %p173 = por %p171, %p172
    %p174 = scmp.ne.s32.totalorder %s166, %s169
    %p175 = scmp.eq.s32.totalorder %s15, 0
    %p176 = por %p174, %p175
    %p177 = scmp.ne.s32.totalorder %s166, %s169
    %p178 = scmp.eq.s32.totalorder %s20, 1
    %p179 = por %p177, %p178
    %p180 = scmp.ne.s32.totalorder %s169, %s170
    %p181 = scmp.eq.s32.totalorder %s20, 0
    %p182 = por %p180, %p181
    %p183 = scmp.ne.s32.totalorder %s169, %s170
    %p184 = scmp.eq.s32.totalorder %s21, 1
    %p185 = por %p183, %p184
    %p187 = scmp.ne.s32.totalorder %s170, %s186
    %p188 = scmp.eq.s32.totalorder %s21, 0
    %p189 = por %p187, %p188
    %s190 = ssub.s32 %s15, %s22
    %p191 = scmp.eq.s32.totalorder %s190, 0
    %s193 = sadd.s32 %s192, 1
    %s194 = scalar_select %p191, %s192, %s193
    %p197 = pneg %p191
    %p198 = scmp.eq.s32.totalorder %s15, 1
    %p199 = por %p197, %p198
    %p200 = scmp.ne.s32.totalorder %s192, %s195
    %p201 = scmp.eq.s32.totalorder %s15, 0
    %p202 = por %p200, %p201
    %p203 = scmp.ne.s32.totalorder %s192, %s195
    %p204 = scmp.eq.s32.totalorder %s20, 1
    %p205 = por %p203, %p204
    %p206 = scmp.ne.s32.totalorder %s195, %s196
    %p207 = scmp.eq.s32.totalorder %s20, 0
    %p208 = por %p206, %p207
    %p209 = scmp.ne.s32.totalorder %s195, %s196
    %p210 = scmp.eq.s32.totalorder %s21, 1
    %p211 = por %p209, %p210
    %p213 = scmp.ne.s32.totalorder %s196, %s212
    %p214 = scmp.eq.s32.totalorder %s21, 0
    %p215 = por %p213, %p214
    %s216 = ssub.s32 %s15, %s22
    %p217 = scmp.eq.s32.totalorder %s216, 0
    %s219 = sadd.s32 %s218, 1
    %s220 = scalar_select %p217, %s218, %s219
    %p223 = pneg %p217
    %p224 = scmp.eq.s32.totalorder %s15, 1
    %p225 = por %p223, %p224
    %p226 = scmp.ne.s32.totalorder %s218, %s221
    %p227 = scmp.eq.s32.totalorder %s15, 0
    %p228 = por %p226, %p227
    %p229 = scmp.ne.s32.totalorder %s218, %s221
    %p230 = scmp.eq.s32.totalorder %s20, 1
    %p231 = por %p229, %p230
    %p232 = scmp.ne.s32.totalorder %s221, %s222
    %p233 = scmp.eq.s32.totalorder %s20, 0
    %p234 = por %p232, %p233
    %p235 = scmp.ne.s32.totalorder %s221, %s222
    %p236 = scmp.eq.s32.totalorder %s21, 1
    %p237 = por %p235, %p236
    %p239 = scmp.ne.s32.totalorder %s222, %s238
    %p240 = scmp.eq.s32.totalorder %s21, 0
    %p241 = por %p239, %p240
    %p242 = scmp.le.s32.totalorder 1, %s15
    %p243 = scmp.lt.s32.totalorder %s15, 3
    %p244 = pnand %p242, %p243
    %p245 = pneg %p244
    // Predicated region
    $region9: #{internlm2_forward.4} parent=5 // pred_check
      _
    $region10: #{internlm2_forward.4} parent=5 // pred_check_branch
      %247 = sbr.rel (%p244) target = $region12
    $region11: #{internlm2_forward.4} parent=5 // pred_region
      %s248 = ssub.s32 %s15, 1
      // Predicated region
      $region13: #{internlm2_forward.4} parent=11 // pred_check
        %p249 = pneg %p88
      $region14: #{internlm2_forward.4} parent=11 // pred_check_branch
        %251 = sbr.rel (%p249) target = $region16
      $region15: #{internlm2_forward.4} parent=11 // pred_region
        _
      $region16: #{internlm2_forward.4} parent=11 // pred_fallthru
        _
      // Predicated region
      $region17: #{internlm2_forward.4} parent=11 // pred_check
        %p252 = pneg %p109
      $region18: #{internlm2_forward.4} parent=11 // pred_check_branch
        %254 = sbr.rel (%p252) target = $region20
      $region19: #{internlm2_forward.4} parent=11 // pred_region
        _
      $region20: #{internlm2_forward.4} parent=11 // pred_fallthru
        _
      // Predicated region
      $region21: #{internlm2_forward.4} parent=11 // pred_check
        %p255 = pneg %p130
      $region22: #{internlm2_forward.4} parent=11 // pred_check_branch
        %257 = sbr.rel (%p255) target = $region24
      $region23: #{internlm2_forward.4} parent=11 // pred_region
        _
      $region24: #{internlm2_forward.4} parent=11 // pred_fallthru
        _
    $region12: #{internlm2_forward.4} parent=5 // pred_fallthru
      _
    %p258 = scmp.lt.s32.totalorder %s15, 2
    // Predicated region
    $region25: #{internlm2_forward.4} parent=5 // pred_check
      %p259 = pneg %p258
    $region26: #{internlm2_forward.4} parent=5 // pred_check_branch
      %261 = sbr.rel (%p259) target = $region28
    $region27: #{internlm2_forward.4} parent=5 // pred_region
      // Predicated region
      $region29: #{internlm2_forward.4} parent=27 // pred_check
        %p262 = pneg %p35
      $region30: #{internlm2_forward.4} parent=27 // pred_check_branch
        %264 = sbr.rel (%p262) target = $region32
      $region31: #{internlm2_forward.4} parent=27 // pred_region
        %s265 = smul.u32 16, %s15
        %p266 = scmp.lt.s32.totalorder %s265, 31
        %s267 = scalar_select %p266, %s265, 31
        %s268 = smul.addr %s267, 2
        %s269 = smul.addr %s268, 8
        %s270 = scalar_lea.vmem %s0, %s269
        %s271 = smul.u32 16, %s15
      $region32: #{internlm2_forward.4} parent=27 // pred_fallthru
        _
      // Predicated region
      $region33: #{internlm2_forward.4} parent=27 // pred_check
        %p272 = pneg %p61
      $region34: #{internlm2_forward.4} parent=27 // pred_check_branch
        %274 = sbr.rel (%p272) target = $region36
      $region35: #{internlm2_forward.4} parent=27 // pred_region
        %s275 = smul.u32 16, %s15
        %p276 = scmp.lt.s32.totalorder %s275, 31
        %s277 = scalar_select %p276, %s275, 31
        %s278 = smul.addr %s277, 2
        %s279 = smul.addr %s278, 8
        %s280 = scalar_lea.vmem %s1, %s279
        %s281 = smul.u32 16, %s15
      $region36: #{internlm2_forward.4} parent=27 // pred_fallthru
        _
      // Predicated region
      $region37: #{internlm2_forward.4} parent=27 // pred_check
        %p282 = pneg %p150
      $region38: #{internlm2_forward.4} parent=27 // pred_check_branch
        %284 = sbr.rel (%p282) target = $region40
      $region39: #{internlm2_forward.4} parent=27 // pred_region
        %s285 = smul.u32 16, %s15
        %p286 = scmp.lt.s32.totalorder %s285, 31
        %s287 = scalar_select %p286, %s285, 31
        %s288 = smul.addr %s287, 8
        %s289 = scalar_lea.vmem %s5, %s288
        %s290 = smul.u32 16, %s15
      $region40: #{internlm2_forward.4} parent=27 // pred_fallthru
        _
      // Predicated region
      $region41: #{internlm2_forward.4} parent=27 // pred_check
        %p291 = pneg %p176
      $region42: #{internlm2_forward.4} parent=27 // pred_check_branch
        %293 = sbr.rel (%p291) target = $region44
      $region43: #{internlm2_forward.4} parent=27 // pred_region
        %s294 = smul.u32 16, %s15
        %p295 = scmp.lt.s32.totalorder %s294, 31
        %s296 = scalar_select %p295, %s294, 31
        %s297 = smul.addr %s296, 8
        %s298 = scalar_lea.vmem %s6, %s297
        %s299 = smul.u32 16, %s15
      $region44: #{internlm2_forward.4} parent=27 // pred_fallthru
        _
    $region28: #{internlm2_forward.4} parent=5 // pred_fallthru
      _
    %p300 = scmp.le.s32.totalorder 1, %s15
    %p301 = scmp.lt.s32.totalorder %s15, 3
    %p302 = pnand %p300, %p301
    %p303 = pneg %p302
    // Predicated region
    $region45: #{internlm2_forward.4} parent=5 // pred_check
      _
    $region46: #{internlm2_forward.4} parent=5 // pred_check_branch
      %305 = sbr.rel (%p302) target = $region48
    $region47: #{internlm2_forward.4} parent=5 // pred_region
      %s306 = ssub.s32 %s15, 1
      %s307 = smul.u32 16, %s20
      %p308 = scmp.lt.s32.totalorder %s307, 31
      %s309 = scalar_select %p308, %s307, 31
      %s310 = smul.addr %s309, 2
      %s311 = smul.addr %s310, 8
      %s312 = scalar_lea.vmem %s0, %s311
      %p313 = pneg %p41
      %p314 = pneg %p38
      %s315 = smul.u32 16, %s20
      %p316 = scmp.lt.s32.totalorder %s315, 31
      %s317 = scalar_select %p316, %s315, 31
      %s318 = smul.addr %s317, 2
      %s319 = smul.addr %s318, 8
      %s320 = scalar_lea.vmem %s1, %s319
      %p321 = pneg %p67
      %p322 = pneg %p64
      %p323 = pneg %p88
      %p324 = pneg %p85
      %p325 = pneg %p109
      %p326 = pneg %p106
      %p327 = pneg %p130
      %p328 = pneg %p127
      %s329 = smul.u32 16, %s20
      %p330 = scmp.lt.s32.totalorder %s329, 31
      %s331 = scalar_select %p330, %s329, 31
      %s332 = smul.addr %s331, 8
      %s333 = scalar_lea.vmem %s5, %s332
      %p334 = pneg %p156
      %p335 = pneg %p153
      %s336 = smul.u32 16, %s20
      %p337 = scmp.lt.s32.totalorder %s336, 31
      %s338 = scalar_select %p337, %s336, 31
      %s339 = smul.addr %s338, 8
      %s340 = scalar_lea.vmem %s6, %s339
      %p341 = pneg %p182
      %p342 = pneg %p179
      %p343 = pneg %p208
      %p344 = pneg %p205
      %s345 = smul.u32 16, %s20
      %p346 = scmp.lt.s32.totalorder %s345, 31
      %s347 = scalar_select %p346, %s345, 31
      %s348 = smul.addr %s347, 2
      %s349 = smul.addr %s348, 8
      %s350 = scalar_lea.vmem %s7, %s349
      %p351 = pneg %p234
      %p352 = pneg %p231
      %s353 = smul.u32 16, %s20
      %p354 = scmp.lt.s32.totalorder %s353, 31
      %s355 = scalar_select %p354, %s353, 31
      %s356 = smul.addr %s355, 2
      %s357 = smul.addr %s356, 8
      %s358 = scalar_lea.vmem %s8, %s357
      %s359 = smul.u32 16, %s20
      %p360 = scmp.lt.s32.totalorder %s359, 31
      %s361 = scalar_select %p360, %s359, 31
      %s362 = smul.addr %s361, 2
      %s363 = smul.addr %s362, 8
      %s364 = scalar_lea.vmem %s0, %s363
      %s365 = smul.u32 16, %s20
      %s366 = smul.u32 16, %s20
      %p367 = scmp.lt.s32.totalorder %s366, 31
      %s368 = scalar_select %p367, %s366, 31
      %s369 = smul.addr %s368, 2
      %s370 = smul.addr %s369, 8
      %s371 = scalar_lea.vmem %s1, %s370
      %s372 = smul.u32 16, %s20
      %s373 = smul.u32 16, %s20
      %p374 = scmp.lt.s32.totalorder %s373, 31
      %s375 = scalar_select %p374, %s373, 31
      %s376 = smul.addr %s375, 8
      %s377 = scalar_lea.vmem %s5, %s376
      %s378 = smul.u32 16, %s20
      %s379 = smul.u32 16, %s20
      %p380 = scmp.lt.s32.totalorder %s379, 31
      %s381 = scalar_select %p380, %s379, 31
      %s382 = smul.addr %s381, 8
      %s383 = scalar_lea.vmem %s6, %s382
      %s384 = smul.u32 16, %s20
      %s385 = smul.u32 16, %s20
      %p386 = scmp.lt.s32.totalorder %s385, 31
      %s387 = scalar_select %p386, %s385, 31
      %s388 = smul.addr %s387, 2
      %s389 = smul.addr %s388, 8
      %s390 = scalar_lea.vmem %s7, %s389
      %s391 = smul.u32 16, %s20
      %s392 = smul.u32 16, %s20
      %p393 = scmp.lt.s32.totalorder %s392, 31
      %s394 = scalar_select %p393, %s392, 31
      %s395 = smul.addr %s394, 2
      %s396 = smul.addr %s395, 8
      %s397 = scalar_lea.vmem %s8, %s396
      %s398 = smul.u32 16, %s20
      %v400 = vld [vmem:[%s364] sm:$0xff]
      %v401 = vld [vmem:[%s364 + $0x8] sm:$0xff]
      %v402 = vld [vmem:[%s364 + $0x10] sm:$0xff]
      %v403 = vld [vmem:[%s364 + $0x18] sm:$0xff]
      %v404 = vld [vmem:[%s364 + $0x20] sm:$0xff]
      %v405 = vld [vmem:[%s364 + $0x28] sm:$0xff]
      %v406 = vld [vmem:[%s364 + $0x30] sm:$0xff]
      %v407 = vld [vmem:[%s364 + $0x38] sm:$0xff]
      %v408 = vld [vmem:[%s364 + $0x40] sm:$0xff]
      %v409 = vld [vmem:[%s364 + $0x48] sm:$0xff]
      %v410 = vld [vmem:[%s364 + $0x50] sm:$0xff]
      %v411 = vld [vmem:[%s364 + $0x58] sm:$0xff]
      %v412 = vld [vmem:[%s364 + $0x60] sm:$0xff]
      %v413 = vld [vmem:[%s364 + $0x68] sm:$0xff]
      %v414 = vld [vmem:[%s364 + $0x70] sm:$0xff]
      %v415 = vld [vmem:[%s364 + $0x78] sm:$0xff]
      %v416 = vld [vmem:[%s364 + $0x80] sm:$0xff]
      %v417 = vld [vmem:[%s364 + $0x88] sm:$0xff]
      %v418 = vld [vmem:[%s364 + $0x90] sm:$0xff]
      %v419 = vld [vmem:[%s364 + $0x98] sm:$0xff]
      %v420 = vld [vmem:[%s364 + $0xa0] sm:$0xff]
      %v421 = vld [vmem:[%s364 + $0xa8] sm:$0xff]
      %v422 = vld [vmem:[%s364 + $0xb0] sm:$0xff]
      %v423 = vld [vmem:[%s364 + $0xb8] sm:$0xff]
      %v424 = vld [vmem:[%s364 + $0xc0] sm:$0xff]
      %v425 = vld [vmem:[%s364 + $0xc8] sm:$0xff]
      %v426 = vld [vmem:[%s364 + $0xd0] sm:$0xff]
      %v427 = vld [vmem:[%s364 + $0xd8] sm:$0xff]
      %v428 = vld [vmem:[%s364 + $0xe0] sm:$0xff]
      %v429 = vld [vmem:[%s364 + $0xe8] sm:$0xff]
      %v430 = vld [vmem:[%s364 + $0xf0] sm:$0xff]
      %v431 = vld [vmem:[%s364 + $0xf8] sm:$0xff]
      %v432 = vld [vmem:[%s371] sm:$0xff]
      %v433 = vld [vmem:[%s371 + $0x8] sm:$0xff]
      %v434 = vld [vmem:[%s371 + $0x10] sm:$0xff]
      %v435 = vld [vmem:[%s371 + $0x18] sm:$0xff]
      %v436 = vld [vmem:[%s371 + $0x20] sm:$0xff]
      %v437 = vld [vmem:[%s371 + $0x28] sm:$0xff]
      %v438 = vld [vmem:[%s371 + $0x30] sm:$0xff]
      %v439 = vld [vmem:[%s371 + $0x38] sm:$0xff]
      %v440 = vld [vmem:[%s371 + $0x40] sm:$0xff]
      %v441 = vld [vmem:[%s371 + $0x48] sm:$0xff]
      %v442 = vld [vmem:[%s371 + $0x50] sm:$0xff]
      %v443 = vld [vmem:[%s371 + $0x58] sm:$0xff]
      %v444 = vld [vmem:[%s371 + $0x60] sm:$0xff]
      %v445 = vld [vmem:[%s371 + $0x68] sm:$0xff]
      %v446 = vld [vmem:[%s371 + $0x70] sm:$0xff]
      %v447 = vld [vmem:[%s371 + $0x78] sm:$0xff]
      %v448 = vld [vmem:[%s371 + $0x80] sm:$0xff]
      %v449 = vld [vmem:[%s371 + $0x88] sm:$0xff]
      %v450 = vld [vmem:[%s371 + $0x90] sm:$0xff]
      %v451 = vld [vmem:[%s371 + $0x98] sm:$0xff]
      %v452 = vld [vmem:[%s371 + $0xa0] sm:$0xff]
      %v453 = vld [vmem:[%s371 + $0xa8] sm:$0xff]
      %v454 = vld [vmem:[%s371 + $0xb0] sm:$0xff]
      %v455 = vld [vmem:[%s371 + $0xb8] sm:$0xff]
      %v456 = vld [vmem:[%s371 + $0xc0] sm:$0xff]
      %v457 = vld [vmem:[%s371 + $0xc8] sm:$0xff]
      %v458 = vld [vmem:[%s371 + $0xd0] sm:$0xff]
      %v459 = vld [vmem:[%s371 + $0xd8] sm:$0xff]
      %v460 = vld [vmem:[%s371 + $0xe0] sm:$0xff]
      %v461 = vld [vmem:[%s371 + $0xe8] sm:$0xff]
      %v462 = vld [vmem:[%s371 + $0xf0] sm:$0xff]
      %v463 = vld [vmem:[%s371 + $0xf8] sm:$0xff]
      %v464 = vadd.f32 %v400, %v432
      %v465 = vadd.f32 %v401, %v433
      %v466 = vadd.f32 %v402, %v434
      %v467 = vadd.f32 %v403, %v435
      %v468 = vadd.f32 %v404, %v436
      %v469 = vadd.f32 %v405, %v437
      %v470 = vadd.f32 %v406, %v438
      %v471 = vadd.f32 %v407, %v439
      %v472 = vadd.f32 %v408, %v440
      %v473 = vadd.f32 %v409, %v441
      %v474 = vadd.f32 %v410, %v442
      %v475 = vadd.f32 %v411, %v443
      %v476 = vadd.f32 %v412, %v444
      %v477 = vadd.f32 %v413, %v445
      %v478 = vadd.f32 %v414, %v446
      %v479 = vadd.f32 %v415, %v447
      %v480 = vadd.f32 %v416, %v448
      %v481 = vadd.f32 %v417, %v449
      %v482 = vadd.f32 %v418, %v450
      %v483 = vadd.f32 %v419, %v451
      %v484 = vadd.f32 %v420, %v452
      %v485 = vadd.f32 %v421, %v453
      %v486 = vadd.f32 %v422, %v454
      %v487 = vadd.f32 %v423, %v455
      %v488 = vadd.f32 %v424, %v456
      %v489 = vadd.f32 %v425, %v457
      %v490 = vadd.f32 %v426, %v458
      %v491 = vadd.f32 %v427, %v459
      %v492 = vadd.f32 %v428, %v460
      %v493 = vadd.f32 %v429, %v461
      %v494 = vadd.f32 %v430, %v462
      %v495 = vadd.f32 %v431, %v463
      %496 = vst [vmem:[%s397] sm:$0xff] %v464
      %497 = vst [vmem:[%s397 + $0x8] sm:$0xff] %v465
      %498 = vst [vmem:[%s397 + $0x10] sm:$0xff] %v466
      %499 = vst [vmem:[%s397 + $0x18] sm:$0xff] %v467
      %500 = vst [vmem:[%s397 + $0x20] sm:$0xff] %v468
      %501 = vst [vmem:[%s397 + $0x28] sm:$0xff] %v469
      %502 = vst [vmem:[%s397 + $0x30] sm:$0xff] %v470
      %503 = vst [vmem:[%s397 + $0x38] sm:$0xff] %v471
      %504 = vst [vmem:[%s397 + $0x40] sm:$0xff] %v472
      %505 = vst [vmem:[%s397 + $0x48] sm:$0xff] %v473
      %506 = vst [vmem:[%s397 + $0x50] sm:$0xff] %v474
      %507 = vst [vmem:[%s397 + $0x58] sm:$0xff] %v475
      %508 = vst [vmem:[%s397 + $0x60] sm:$0xff] %v476
      %509 = vst [vmem:[%s397 + $0x68] sm:$0xff] %v477
      %510 = vst [vmem:[%s397 + $0x70] sm:$0xff] %v478
      %511 = vst [vmem:[%s397 + $0x78] sm:$0xff] %v479
      %512 = vst [vmem:[%s397 + $0x80] sm:$0xff] %v480
      %513 = vst [vmem:[%s397 + $0x88] sm:$0xff] %v481
      %514 = vst [vmem:[%s397 + $0x90] sm:$0xff] %v482
      %515 = vst [vmem:[%s397 + $0x98] sm:$0xff] %v483
      %516 = vst [vmem:[%s397 + $0xa0] sm:$0xff] %v484
      %517 = vst [vmem:[%s397 + $0xa8] sm:$0xff] %v485
      %518 = vst [vmem:[%s397 + $0xb0] sm:$0xff] %v486
      %519 = vst [vmem:[%s397 + $0xb8] sm:$0xff] %v487
      %520 = vst [vmem:[%s397 + $0xc0] sm:$0xff] %v488
      %521 = vst [vmem:[%s397 + $0xc8] sm:$0xff] %v489
      %522 = vst [vmem:[%s397 + $0xd0] sm:$0xff] %v490
      %523 = vst [vmem:[%s397 + $0xd8] sm:$0xff] %v491
      %524 = vst [vmem:[%s397 + $0xe0] sm:$0xff] %v492
      %525 = vst [vmem:[%s397 + $0xe8] sm:$0xff] %v493
      %526 = vst [vmem:[%s397 + $0xf0] sm:$0xff] %v494
      %527 = vst [vmem:[%s397 + $0xf8] sm:$0xff] %v495
      %v528 = vmul.f32 %v464, %v464
      %v529 = vmul.f32 %v465, %v465
      %v530 = vmul.f32 %v466, %v466
      %v531 = vmul.f32 %v467, %v467
      %v532 = vmul.f32 %v468, %v468
      %v533 = vmul.f32 %v469, %v469
      %v534 = vmul.f32 %v470, %v470
      %v535 = vmul.f32 %v471, %v471
      %v536 = vmul.f32 %v472, %v472
      %v537 = vmul.f32 %v473, %v473
      %v538 = vmul.f32 %v474, %v474
      %v539 = vmul.f32 %v475, %v475
      %v540 = vmul.f32 %v476, %v476
      %v541 = vmul.f32 %v477, %v477
      %v542 = vmul.f32 %v478, %v478
      %v543 = vmul.f32 %v479, %v479
      %v544 = vmul.f32 %v480, %v480
      %v545 = vmul.f32 %v481, %v481
      %v546 = vmul.f32 %v482, %v482
      %v547 = vmul.f32 %v483, %v483
      %v548 = vmul.f32 %v484, %v484
      %v549 = vmul.f32 %v485, %v485
      %v550 = vmul.f32 %v486, %v486
      %v551 = vmul.f32 %v487, %v487
      %v552 = vmul.f32 %v488, %v488
      %v553 = vmul.f32 %v489, %v489
      %v554 = vmul.f32 %v490, %v490
      %v555 = vmul.f32 %v491, %v491
      %v556 = vmul.f32 %v492, %v492
      %v557 = vmul.f32 %v493, %v493
      %v558 = vmul.f32 %v494, %v494
      %v559 = vmul.f32 %v495, %v495
      %v560 = vadd.f32 %v528, %v529
      %561 = vadd.xlane.f32.xlu0 %v560
      %v562 = vpop.xlane.xlu0 %561
      %v563 = vadd.f32 %v530, %v531
      %564 = vadd.xlane.f32.xlu0 %v563
      %v565 = vpop.xlane.xlu0 %564
      %v566 = vadd.f32 %v532, %v533
      %567 = vadd.xlane.f32.xlu0 %v566
      %v568 = vpop.xlane.xlu0 %567
      %v569 = vadd.f32 %v534, %v535
      %570 = vadd.xlane.f32.xlu0 %v569
      %v571 = vpop.xlane.xlu0 %570
      %v572 = vadd.f32 %v536, %v537
      %573 = vadd.xlane.f32.xlu0 %v572
      %v574 = vpop.xlane.xlu0 %573
      %v575 = vadd.f32 %v538, %v539
      %576 = vadd.xlane.f32.xlu0 %v575
      %v577 = vpop.xlane.xlu0 %576
      %v578 = vadd.f32 %v540, %v541
      %579 = vadd.xlane.f32.xlu0 %v578
      %v580 = vpop.xlane.xlu0 %579
      %v581 = vadd.f32 %v542, %v543
      %582 = vadd.xlane.f32.xlu0 %v581
      %v583 = vpop.xlane.xlu0 %582
      %v584 = vadd.f32 %v544, %v545
      %585 = vadd.xlane.f32.xlu0 %v584
      %v586 = vpop.xlane.xlu0 %585
      %v587 = vadd.f32 %v546, %v547
      %588 = vadd.xlane.f32.xlu0 %v587
      %v589 = vpop.xlane.xlu0 %588
      %v590 = vadd.f32 %v548, %v549
      %591 = vadd.xlane.f32.xlu0 %v590
      %v592 = vpop.xlane.xlu0 %591
      %v593 = vadd.f32 %v550, %v551
      %594 = vadd.xlane.f32.xlu0 %v593
      %v595 = vpop.xlane.xlu0 %594
      %v596 = vadd.f32 %v552, %v553
      %597 = vadd.xlane.f32.xlu0 %v596
      %v598 = vpop.xlane.xlu0 %597
      %v599 = vadd.f32 %v554, %v555
      %600 = vadd.xlane.f32.xlu0 %v599
      %v601 = vpop.xlane.xlu0 %600
      %v602 = vadd.f32 %v556, %v557
      %603 = vadd.xlane.f32.xlu0 %v602
      %v604 = vpop.xlane.xlu0 %603
      %v605 = vadd.f32 %v558, %v559
      %606 = vadd.xlane.f32.xlu0 %v605
      %v607 = vpop.xlane.xlu0 %606
      %v608 = vrcp.pop 256.0
      %v609 = vmul.f32 %v562, %v608
      %v610 = vmul.f32 %v565, %v608
      %v611 = vmul.f32 %v568, %v608
      %v612 = vmul.f32 %v571, %v608
      %v613 = vmul.f32 %v574, %v608
      %v614 = vmul.f32 %v577, %v608
      %v615 = vmul.f32 %v580, %v608
      %v616 = vmul.f32 %v583, %v608
      %v617 = vmul.f32 %v586, %v608
      %v618 = vmul.f32 %v589, %v608
      %v619 = vmul.f32 %v592, %v608
      %v620 = vmul.f32 %v595, %v608
      %v621 = vmul.f32 %v598, %v608
      %v622 = vmul.f32 %v601, %v608
      %v623 = vmul.f32 %v604, %v608
      %v624 = vmul.f32 %v607, %v608
      %v625 = vadd.f32 %v609, 1e-06
      %v626 = vadd.f32 %v610, 1e-06
      %v627 = vadd.f32 %v611, 1e-06
      %v628 = vadd.f32 %v612, 1e-06
      %v629 = vadd.f32 %v613, 1e-06
      %v630 = vadd.f32 %v614, 1e-06
      %v631 = vadd.f32 %v615, 1e-06
      %v632 = vadd.f32 %v616, 1e-06
      %v633 = vadd.f32 %v617, 1e-06
      %v634 = vadd.f32 %v618, 1e-06
      %v635 = vadd.f32 %v619, 1e-06
      %v636 = vadd.f32 %v620, 1e-06
      %v637 = vadd.f32 %v621, 1e-06
      %v638 = vadd.f32 %v622, 1e-06
      %v639 = vadd.f32 %v623, 1e-06
      %v640 = vadd.f32 %v624, 1e-06
      %v641 = vrsqrt.pop %v625
      %v642 = vrsqrt.pop %v626
      %v643 = vrsqrt.pop %v627
      %v644 = vrsqrt.pop %v628
      %v645 = vrsqrt.pop %v629
      %v646 = vrsqrt.pop %v630
      %v647 = vrsqrt.pop %v631
      %v648 = vrsqrt.pop %v632
      %v649 = vrsqrt.pop %v633
      %v650 = vrsqrt.pop %v634
      %v651 = vrsqrt.pop %v635
      %v652 = vrsqrt.pop %v636
      %v653 = vrsqrt.pop %v637
      %v654 = vrsqrt.pop %v638
      %v655 = vrsqrt.pop %v639
      %v656 = vrsqrt.pop %v640
      %v657 = vmul.f32 %v464, %v641
      %v658 = vmul.f32 %v465, %v641
      %v659 = vmul.f32 %v466, %v642
      %v660 = vmul.f32 %v467, %v642
      %v661 = vmul.f32 %v468, %v643
      %v662 = vmul.f32 %v469, %v643
      %v663 = vmul.f32 %v470, %v644
      %v664 = vmul.f32 %v471, %v644
      %v665 = vmul.f32 %v472, %v645
      %v666 = vmul.f32 %v473, %v645
      %v667 = vmul.f32 %v474, %v646
      %v668 = vmul.f32 %v475, %v646
      %v669 = vmul.f32 %v476, %v647
      %v670 = vmul.f32 %v477, %v647
      %v671 = vmul.f32 %v478, %v648
      %v672 = vmul.f32 %v479, %v648
      %v673 = vmul.f32 %v480, %v649
      %v674 = vmul.f32 %v481, %v649
      %v675 = vmul.f32 %v482, %v650
      %v676 = vmul.f32 %v483, %v650
      %v677 = vmul.f32 %v484, %v651
      %v678 = vmul.f32 %v485, %v651
      %v679 = vmul.f32 %v486, %v652
      %v680 = vmul.f32 %v487, %v652
      %v681 = vmul.f32 %v488, %v653
      %v682 = vmul.f32 %v489, %v653
      %v683 = vmul.f32 %v490, %v654
      %v684 = vmul.f32 %v491, %v654
      %v685 = vmul.f32 %v492, %v655
      %v686 = vmul.f32 %v493, %v655
      %v687 = vmul.f32 %v494, %v656
      %v688 = vmul.f32 %v495, %v656
      %v689 = vld [vmem:[%s2] sm:$0x3]
      %v691 = vlaneseq
      %v692 = vshrl.u32 %v691, 7
      %v693 = vsub.s32 0, %v692
      %v694 = vrot.slane %v689, %v693
      %v695 = vlaneseq
      %v696 = vshrl.u32 %v695, 7
      %v697 = vsub.s32 1, %v696
      %v698 = vrot.slane %v689, %v697
      %v701 = vmul.f32 %v657, %v694
      %v702 = vmul.f32 %v658, %v698
      %v703 = vmul.f32 %v659, %v694
      %v704 = vmul.f32 %v660, %v698
      %v705 = vmul.f32 %v661, %v694
      %v706 = vmul.f32 %v662, %v698
      %v707 = vmul.f32 %v663, %v694
      %v708 = vmul.f32 %v664, %v698
      %v709 = vmul.f32 %v665, %v694
      %v710 = vmul.f32 %v666, %v698
      %v711 = vmul.f32 %v667, %v694
      %v712 = vmul.f32 %v668, %v698
      %v713 = vmul.f32 %v669, %v694
      %v714 = vmul.f32 %v670, %v698
      %v715 = vmul.f32 %v671, %v694
      %v716 = vmul.f32 %v672, %v698
      %v717 = vmul.f32 %v673, %v694
      %v718 = vmul.f32 %v674, %v698
      %v719 = vmul.f32 %v675, %v694
      %v720 = vmul.f32 %v676, %v698
      %v721 = vmul.f32 %v677, %v694
      %v722 = vmul.f32 %v678, %v698
      %v723 = vmul.f32 %v679, %v694
      %v724 = vmul.f32 %v680, %v698
      %v725 = vmul.f32 %v681, %v694
      %v726 = vmul.f32 %v682, %v698
      %v727 = vmul.f32 %v683, %v694
      %v728 = vmul.f32 %v684, %v698
      %v729 = vmul.f32 %v685, %v694
      %v730 = vmul.f32 %v686, %v698
      %v731 = vmul.f32 %v687, %v694
      %v732 = vmul.f32 %v688, %v698
      %v733 = vpack.c.bf16 %v703, %v701
      %v734 = vpack.c.bf16 %v704, %v702
      %v735 = vpack.c.bf16 %v707, %v705
      %v736 = vpack.c.bf16 %v708, %v706
      %v737 = vpack.c.bf16 %v711, %v709
      %v738 = vpack.c.bf16 %v712, %v710
      %v739 = vpack.c.bf16 %v715, %v713
      %v740 = vpack.c.bf16 %v716, %v714
      %v741 = vpack.c.bf16 %v719, %v717
      %v742 = vpack.c.bf16 %v720, %v718
      %v743 = vpack.c.bf16 %v723, %v721
      %v744 = vpack.c.bf16 %v724, %v722
      %v745 = vpack.c.bf16 %v727, %v725
      %v746 = vpack.c.bf16 %v728, %v726
      %v747 = vpack.c.bf16 %v731, %v729
      %v748 = vpack.c.bf16 %v732, %v730
      %v749 = vld [vmem:[%s377] sm:$0xff]
      %v750 = vld [vmem:[%s377 + $0x8] sm:$0xff]
      %v751 = vld [vmem:[%s377 + $0x10] sm:$0xff]
      %v752 = vld [vmem:[%s377 + $0x18] sm:$0xff]
      %v753 = vld [vmem:[%s377 + $0x20] sm:$0xff]
      %v754 = vld [vmem:[%s377 + $0x28] sm:$0xff]
      %v755 = vld [vmem:[%s377 + $0x30] sm:$0xff]
      %v756 = vld [vmem:[%s377 + $0x38] sm:$0xff]
      %v757 = vld [vmem:[%s377 + $0x40] sm:$0xff]
      %v758 = vld [vmem:[%s377 + $0x48] sm:$0xff]
      %v759 = vld [vmem:[%s377 + $0x50] sm:$0xff]
      %v760 = vld [vmem:[%s377 + $0x58] sm:$0xff]
      %v761 = vld [vmem:[%s377 + $0x60] sm:$0xff]
      %v762 = vld [vmem:[%s377 + $0x68] sm:$0xff]
      %v763 = vld [vmem:[%s377 + $0x70] sm:$0xff]
      %v764 = vld [vmem:[%s377 + $0x78] sm:$0xff]
      %v765 = vld [vmem:[%s383] sm:$0xff]
      %v766 = vld [vmem:[%s383 + $0x8] sm:$0xff]
      %v767 = vld [vmem:[%s383 + $0x10] sm:$0xff]
      %v768 = vld [vmem:[%s383 + $0x18] sm:$0xff]
      %v769 = vld [vmem:[%s383 + $0x20] sm:$0xff]
      %v770 = vld [vmem:[%s383 + $0x28] sm:$0xff]
      %v771 = vld [vmem:[%s383 + $0x30] sm:$0xff]
      %v772 = vld [vmem:[%s383 + $0x38] sm:$0xff]
      %v773 = vld [vmem:[%s383 + $0x40] sm:$0xff]
      %v774 = vld [vmem:[%s383 + $0x48] sm:$0xff]
      %v775 = vld [vmem:[%s383 + $0x50] sm:$0xff]
      %v776 = vld [vmem:[%s383 + $0x58] sm:$0xff]
      %v777 = vld [vmem:[%s383 + $0x60] sm:$0xff]
      %v778 = vld [vmem:[%s383 + $0x68] sm:$0xff]
      %v779 = vld [vmem:[%s383 + $0x70] sm:$0xff]
      %v780 = vld [vmem:[%s383 + $0x78] sm:$0xff]
      %v781 = vlaneseq
      %v782 = vshrl.u32 %v781, 7
      %v783 = vadd.s32 %v782, 8
      %v784 = vadd.s32 %v782, 16
      %v785 = vadd.s32 %v782, 24
      %v786 = vadd.s32 %v782, 32
      %v787 = vadd.s32 %v782, 40
      %v788 = vadd.s32 %v782, 48
      %v789 = vadd.s32 %v782, 56
      %v790 = vadd.s32 %v782, 64
      %v791 = vadd.s32 %v782, 72
      %v792 = vadd.s32 %v782, 80
      %v793 = vadd.s32 %v782, 88
      %v794 = vadd.s32 %v782, 96
      %v795 = vadd.s32 %v782, 104
      %v796 = vadd.s32 %v782, 112
      %v797 = vadd.s32 %v782, 120
      %v798 = vlaneseq
      %v799 = vand.u32 %v798, 127
      %vm800 = vcmp.le.s32.totalorder %v799, %v782
      %vm801 = vcmp.le.s32.totalorder %v799, %v783
      %vm802 = vcmp.le.s32.totalorder %v799, %v784
      %vm803 = vcmp.le.s32.totalorder %v799, %v785
      %vm804 = vcmp.le.s32.totalorder %v799, %v786
      %vm805 = vcmp.le.s32.totalorder %v799, %v787
      %vm806 = vcmp.le.s32.totalorder %v799, %v788
      %vm807 = vcmp.le.s32.totalorder %v799, %v789
      %vm808 = vcmp.le.s32.totalorder %v799, %v790
      %vm809 = vcmp.le.s32.totalorder %v799, %v791
      %vm810 = vcmp.le.s32.totalorder %v799, %v792
      %vm811 = vcmp.le.s32.totalorder %v799, %v793
      %vm812 = vcmp.le.s32.totalorder %v799, %v794
      %vm813 = vcmp.le.s32.totalorder %v799, %v795
      %vm814 = vcmp.le.s32.totalorder %v799, %v796
      %vm815 = vcmp.le.s32.totalorder %v799, %v797
      %v816 = vld [vmem:[%s3 + $0x8] sm:$0xf]
      %v817 = vld [vmem:[%s3 + $0x18] sm:$0xf]
      %v818 = vld [vmem:[%s3 + $0x28] sm:$0xf]
      %v819 = vld [vmem:[%s3 + $0x38] sm:$0xf]
      %v820 = vld [vmem:[%s3 + $0x48] sm:$0xf]
      %v821 = vld [vmem:[%s3 + $0x58] sm:$0xf]
      %v822 = vld [vmem:[%s3 + $0x68] sm:$0xf]
      %v823 = vld [vmem:[%s3 + $0x78] sm:$0xf]
      %v824 = vld [vmem:[%s3 + $0x88] sm:$0xf]
      %v825 = vld [vmem:[%s3 + $0x98] sm:$0xf]
      %v826 = vld [vmem:[%s3 + $0xa8] sm:$0xf]
      %v827 = vld [vmem:[%s3 + $0xb8] sm:$0xf]
      %v828 = vld [vmem:[%s3 + $0xc8] sm:$0xf]
      %v829 = vld [vmem:[%s3 + $0xd8] sm:$0xf]
      %v830 = vld [vmem:[%s3 + $0xe8] sm:$0xf]
      %v831 = vld [vmem:[%s3 + $0xf8] sm:$0xf]
      %v832 = vld [vmem:[%s3 + $0x108] sm:$0xf]
      %v833 = vld [vmem:[%s3 + $0x118] sm:$0xf]
      %v834 = vld [vmem:[%s3 + $0x128] sm:$0xf]
      %v835 = vld [vmem:[%s3 + $0x138] sm:$0xf]
      %v836 = vld [vmem:[%s3 + $0x148] sm:$0xf]
      %v837 = vld [vmem:[%s3 + $0x158] sm:$0xf]
      %v838 = vld [vmem:[%s3 + $0x168] sm:$0xf]
      %v839 = vld [vmem:[%s3 + $0x178] sm:$0xf]
      %v840 = vld [vmem:[%s3 + $0x188] sm:$0xf]
      %v841 = vld [vmem:[%s3 + $0x198] sm:$0xf]
      %v842 = vld [vmem:[%s3 + $0x1a8] sm:$0xf]
      %v843 = vld [vmem:[%s3 + $0x1b8] sm:$0xf]
      %v844 = vld [vmem:[%s3 + $0x1c8] sm:$0xf]
      %v845 = vld [vmem:[%s3 + $0x1d8] sm:$0xf]
      %v846 = vld [vmem:[%s3 + $0x1e8] sm:$0xf]
      %v847 = vld [vmem:[%s3 + $0x1f8] sm:$0xf]
      %v880 = vunpack.c.l.b16 %v816
      %v881 = vunpack.c.l.b16 %v817
      %v882 = vunpack.c.l.b16 %v818
      %v883 = vunpack.c.l.b16 %v819
      %v884 = vunpack.c.l.b16 %v820
      %v885 = vunpack.c.l.b16 %v821
      %v886 = vunpack.c.l.b16 %v822
      %v887 = vunpack.c.l.b16 %v823
      %v888 = vunpack.c.l.b16 %v824
      %v889 = vunpack.c.l.b16 %v825
      %v890 = vunpack.c.l.b16 %v826
      %v891 = vunpack.c.l.b16 %v827
      %v892 = vunpack.c.l.b16 %v828
      %v893 = vunpack.c.l.b16 %v829
      %v894 = vunpack.c.l.b16 %v830
      %v895 = vunpack.c.l.b16 %v831
      %v896 = vunpack.c.l.b16 %v832
      %v897 = vunpack.c.l.b16 %v833
      %v898 = vunpack.c.l.b16 %v834
      %v899 = vunpack.c.l.b16 %v835
      %v900 = vunpack.c.l.b16 %v836
      %v901 = vunpack.c.l.b16 %v837
      %v902 = vunpack.c.l.b16 %v838
      %v903 = vunpack.c.l.b16 %v839
      %v904 = vunpack.c.l.b16 %v840
      %v905 = vunpack.c.l.b16 %v841
      %v906 = vunpack.c.l.b16 %v842
      %v907 = vunpack.c.l.b16 %v843
      %v908 = vunpack.c.l.b16 %v844
      %v909 = vunpack.c.l.b16 %v845
      %v910 = vunpack.c.l.b16 %v846
      %v911 = vunpack.c.l.b16 %v847
      %v912 = vpack.c.b16 %v881, %v880
      %v913 = vpack.c.b16 %v883, %v882
      %v914 = vpack.c.b16 %v885, %v884
      %v915 = vpack.c.b16 %v887, %v886
      %v916 = vpack.c.b16 %v889, %v888
      %v917 = vpack.c.b16 %v891, %v890
      %v918 = vpack.c.b16 %v893, %v892
      %v919 = vpack.c.b16 %v895, %v894
      %v920 = vpack.c.b16 %v897, %v896
      %v921 = vpack.c.b16 %v899, %v898
      %v922 = vpack.c.b16 %v901, %v900
      %v923 = vpack.c.b16 %v903, %v902
      %v924 = vpack.c.b16 %v905, %v904
      %v925 = vpack.c.b16 %v907, %v906
      %v926 = vpack.c.b16 %v909, %v908
      %v927 = vpack.c.b16 %v911, %v910
      %944 = vmatprep.subr.bf16.mxu0 0
      %945 = vmatpush1.bf16.msra.mxu0 %v912
      %946 = vmatprep.subr.bf16.mxu0 0
      %947 = vmatpush1.bf16.msra.mxu0 %v913
      %948 = vmatprep.subr.bf16.mxu0 0
      %949 = vmatpush1.bf16.msra.mxu0 %v914
      %950 = vmatprep.subr.bf16.mxu0 0
      %951 = vmatpush1.bf16.msra.mxu0 %v915
      %952 = vmatprep.subr.bf16.mxu0 0
      %953 = vmatpush1.bf16.msra.mxu0 %v916
      %954 = vmatprep.subr.bf16.mxu0 0
      %955 = vmatpush1.bf16.msra.mxu0 %v917
      %956 = vmatprep.subr.bf16.mxu0 0
      %957 = vmatpush1.bf16.msra.mxu0 %v918
      %958 = vmatprep.subr.bf16.mxu0 0
      %959 = vmatpush1.bf16.msra.mxu0 %v919
      %960 = vmatprep.subr.bf16.mxu0 0
      %961 = vmatpush1.bf16.msra.mxu0 %v920
      %962 = vmatprep.subr.bf16.mxu0 0
      %963 = vmatpush1.bf16.msra.mxu0 %v921
      %964 = vmatprep.subr.bf16.mxu0 0
      %965 = vmatpush1.bf16.msra.mxu0 %v922
      %966 = vmatprep.subr.bf16.mxu0 0
      %967 = vmatpush1.bf16.msra.mxu0 %v923
      %968 = vmatprep.subr.bf16.mxu0 0
      %969 = vmatpush1.bf16.msra.mxu0 %v924
      %970 = vmatprep.subr.bf16.mxu0 0
      %971 = vmatpush1.bf16.msra.mxu0 %v925
      %972 = vmatprep.subr.bf16.mxu0 0
      %973 = vmatpush1.bf16.msra.mxu0 %v926
      %974 = vmatprep.subr.bf16.mxu0 0
      %975 = vmatpush1.bf16.msra.mxu0 %v927
      %976 = vmatprep.mubr.bf16.mxu0 %v734
      %977 = vmatmul.mubr.bf16.gmra.mrb[0].mxu0 %v733
      %v978 = vpop.f32.mrb[0].mxu0
      %v979 = vadd.f32 0.0, %v978
      %v980 = vpop.f32.mrb[0].mxu0
      %v981 = vpop.f32.mrb[0].mxu0
      %v982 = vadd.f32 0.0, %v981
      %v983 = vpop.f32.mrb[0].mxu0
      %984 = vmatprep.mubr.bf16.mxu0 %v736
      %985 = vmatmul.mubr.bf16.gmra.mrb[0].mxu0 %v735
      %v986 = vpop.f32.mrb[0].mxu0
      %v987 = vadd.f32 0.0, %v986
      %v988 = vpop.f32.mrb[0].mxu0
      %v989 = vpop.f32.mrb[0].mxu0
      %v990 = vadd.f32 0.0, %v989
      %v991 = vpop.f32.mrb[0].mxu0
      %992 = vmatprep.mubr.bf16.mxu0 %v738
      %993 = vmatmul.mubr.bf16.gmra.mrb[0].mxu0 %v737
      %v994 = vpop.f32.mrb[0].mxu0
      %v995 = vadd.f32 0.0, %v994
      %v996 = vpop.f32.mrb[0].mxu0
      %v997 = vpop.f32.mrb[0].mxu0
      %v998 = vadd.f32 0.0, %v997
      %v999 = vpop.f32.mrb[0].mxu0
      %1000 = vmatprep.mubr.bf16.mxu0 %v740
      %1001 = vmatmul.mubr.bf16.gmra.mrb[0].mxu0 %v739
      %v1002 = vpop.f32.mrb[0].mxu0
      %v1003 = vadd.f32 0.0, %v1002
      %v1004 = vpop.f32.mrb[0].mxu0
      %v1005 = vpop.f32.mrb[0].mxu0
      %v1006 = vadd.f32 0.0, %v1005
      %v1007 = vpop.f32.mrb[0].mxu0
      %1008 = vmatprep.mubr.bf16.mxu0 %v742
      %1009 = vmatmul.mubr.bf16.gmra.mrb[0].mxu0 %v741
      %v1010 = vpop.f32.mrb[0].mxu0
      %v1011 = vadd.f32 0.0, %v1010
      %v1012 = vpop.f32.mrb[0].mxu0
      %v1013 = vpop.f32.mrb[0].mxu0
      %v1014 = vadd.f32 0.0, %v1013
      %v1015 = vpop.f32.mrb[0].mxu0
      %1016 = vmatprep.mubr.bf16.mxu0 %v744
      %1017 = vmatmul.mubr.bf16.gmra.mrb[0].mxu0 %v743
      %v1018 = vpop.f32.mrb[0].mxu0
      %v1019 = vadd.f32 0.0, %v1018
      %v1020 = vpop.f32.mrb[0].mxu0
      %v1021 = vpop.f32.mrb[0].mxu0
      %v1022 = vadd.f32 0.0, %v1021
      %v1023 = vpop.f32.mrb[0].mxu0
      %1024 = vmatprep.mubr.bf16.mxu0 %v746
      %1025 = vmatmul.mubr.bf16.gmra.mrb[0].mxu0 %v745
      %v1026 = vpop.f32.mrb[0].mxu0
      %v1027 = vadd.f32 0.0, %v1026
      %v1028 = vpop.f32.mrb[0].mxu0
      %v1029 = vpop.f32.mrb[0].mxu0
      %v1030 = vadd.f32 0.0, %v1029
      %v1031 = vpop.f32.mrb[0].mxu0
      %1032 = vmatprep.mubr.bf16.mxu0 %v748
      %1033 = vmatmul.mubr.bf16.gmra.mrb[0].mxu0 %v747
      %v1034 = vpop.f32.mrb[0].mxu0
      %v1035 = vadd.f32 0.0, %v1034
      %v1036 = vpop.f32.mrb[0].mxu0
      %v1037 = vpop.f32.mrb[0].mxu0
      %v1038 = vadd.f32 0.0, %v1037
      %v1039 = vpop.f32.mrb[0].mxu0
      %1040 = vdwg.mxu0
      %v1041 = vmul.f32 %v979, %v749
      %v1042 = vmul.f32 %v982, %v750
      %v1043 = vmul.f32 %v987, %v751
      %v1044 = vmul.f32 %v990, %v752
      %v1045 = vmul.f32 %v995, %v753
      %v1046 = vmul.f32 %v998, %v754
      %v1047 = vmul.f32 %v1003, %v755
      %v1048 = vmul.f32 %v1006, %v756
      %v1049 = vmul.f32 %v1011, %v757
      %v1050 = vmul.f32 %v1014, %v758
      %v1051 = vmul.f32 %v1019, %v759
      %v1052 = vmul.f32 %v1022, %v760
      %v1053 = vmul.f32 %v1027, %v761
      %v1054 = vmul.f32 %v1030, %v762
      %v1055 = vmul.f32 %v1035, %v763
      %v1056 = vmul.f32 %v1038, %v764
      %1057 = vrot.lane.b32.xlu0 %v979, 64
      %v1058 = vpop.permute.xlu0 %1057
      %1059 = vrot.lane.b32.xlu0 %v982, 64
      %v1060 = vpop.permute.xlu0 %1059
      %1061 = vrot.lane.b32.xlu0 %v987, 64
      %v1062 = vpop.permute.xlu0 %1061
      %1063 = vrot.lane.b32.xlu0 %v990, 64
      %v1064 = vpop.permute.xlu0 %1063
      %1065 = vrot.lane.b32.xlu0 %v995, 64
      %v1066 = vpop.permute.xlu0 %1065
      %1067 = vrot.lane.b32.xlu0 %v998, 64
      %v1068 = vpop.permute.xlu0 %1067
      %1069 = vrot.lane.b32.xlu0 %v1003, 64
      %v1070 = vpop.permute.xlu0 %1069
      %1071 = vrot.lane.b32.xlu0 %v1006, 64
      %v1072 = vpop.permute.xlu0 %1071
      %1073 = vrot.lane.b32.xlu0 %v1011, 64
      %v1074 = vpop.permute.xlu0 %1073
      %1075 = vrot.lane.b32.xlu0 %v1014, 64
      %v1076 = vpop.permute.xlu0 %1075
      %1077 = vrot.lane.b32.xlu0 %v1019, 64
      %v1078 = vpop.permute.xlu0 %1077
      %1079 = vrot.lane.b32.xlu0 %v1022, 64
      %v1080 = vpop.permute.xlu0 %1079
      %1081 = vrot.lane.b32.xlu0 %v1027, 64
      %v1082 = vpop.permute.xlu0 %1081
      %1083 = vrot.lane.b32.xlu0 %v1030, 64
      %v1084 = vpop.permute.xlu0 %1083
      %1085 = vrot.lane.b32.xlu0 %v1035, 64
      %v1086 = vpop.permute.xlu0 %1085
      %1087 = vrot.lane.b32.xlu0 %v1038, 64
      %v1088 = vpop.permute.xlu0 %1087
      %v1089 = vmul.f32 %v1058, %v765
      %v1090 = vmul.f32 %v1060, %v766
      %v1091 = vmul.f32 %v1062, %v767
      %v1092 = vmul.f32 %v1064, %v768
      %v1093 = vmul.f32 %v1066, %v769
      %v1094 = vmul.f32 %v1068, %v770
      %v1095 = vmul.f32 %v1070, %v771
      %v1096 = vmul.f32 %v1072, %v772
      %v1097 = vmul.f32 %v1074, %v773
      %v1098 = vmul.f32 %v1076, %v774
      %v1099 = vmul.f32 %v1078, %v775
      %v1100 = vmul.f32 %v1080, %v776
      %v1101 = vmul.f32 %v1082, %v777
      %v1102 = vmul.f32 %v1084, %v778
      %v1103 = vmul.f32 %v1086, %v779
      %v1104 = vmul.f32 %v1088, %v780
      %v1105 = vadd.f32 %v1041, %v1089
      %v1106 = vadd.f32 %v1042, %v1090
      %v1107 = vadd.f32 %v1043, %v1091
      %v1108 = vadd.f32 %v1044, %v1092
      %v1109 = vadd.f32 %v1045, %v1093
      %v1110 = vadd.f32 %v1046, %v1094
      %v1111 = vadd.f32 %v1047, %v1095
      %v1112 = vadd.f32 %v1048, %v1096
      %v1113 = vadd.f32 %v1049, %v1097
      %v1114 = vadd.f32 %v1050, %v1098
      %v1115 = vadd.f32 %v1051, %v1099
      %v1116 = vadd.f32 %v1052, %v1100
      %v1117 = vadd.f32 %v1053, %v1101
      %v1118 = vadd.f32 %v1054, %v1102
      %v1119 = vadd.f32 %v1055, %v1103
      %v1120 = vadd.f32 %v1056, %v1104
      %v1121 = vld [vmem:[%s3 + $0xc] sm:$0xf]
      %v1122 = vld [vmem:[%s3 + $0x1c] sm:$0xf]
      %v1123 = vld [vmem:[%s3 + $0x2c] sm:$0xf]
      %v1124 = vld [vmem:[%s3 + $0x3c] sm:$0xf]
      %v1125 = vld [vmem:[%s3 + $0x4c] sm:$0xf]
      %v1126 = vld [vmem:[%s3 + $0x5c] sm:$0xf]
      %v1127 = vld [vmem:[%s3 + $0x6c] sm:$0xf]
      %v1128 = vld [vmem:[%s3 + $0x7c] sm:$0xf]
      %v1129 = vld [vmem:[%s3 + $0x8c] sm:$0xf]
      %v1130 = vld [vmem:[%s3 + $0x9c] sm:$0xf]
      %v1131 = vld [vmem:[%s3 + $0xac] sm:$0xf]
      %v1132 = vld [vmem:[%s3 + $0xbc] sm:$0xf]
      %v1133 = vld [vmem:[%s3 + $0xcc] sm:$0xf]
      %v1134 = vld [vmem:[%s3 + $0xdc] sm:$0xf]
      %v1135 = vld [vmem:[%s3 + $0xec] sm:$0xf]
      %v1136 = vld [vmem:[%s3 + $0xfc] sm:$0xf]
      %v1137 = vld [vmem:[%s3 + $0x10c] sm:$0xf]
      %v1138 = vld [vmem:[%s3 + $0x11c] sm:$0xf]
      %v1139 = vld [vmem:[%s3 + $0x12c] sm:$0xf]
      %v1140 = vld [vmem:[%s3 + $0x13c] sm:$0xf]
      %v1141 = vld [vmem:[%s3 + $0x14c] sm:$0xf]
      %v1142 = vld [vmem:[%s3 + $0x15c] sm:$0xf]
      %v1143 = vld [vmem:[%s3 + $0x16c] sm:$0xf]
      %v1144 = vld [vmem:[%s3 + $0x17c] sm:$0xf]
      %v1145 = vld [vmem:[%s3 + $0x18c] sm:$0xf]
      %v1146 = vld [vmem:[%s3 + $0x19c] sm:$0xf]
      %v1147 = vld [vmem:[%s3 + $0x1ac] sm:$0xf]
      %v1148 = vld [vmem:[%s3 + $0x1bc] sm:$0xf]
      %v1149 = vld [vmem:[%s3 + $0x1cc] sm:$0xf]
      %v1150 = vld [vmem:[%s3 + $0x1dc] sm:$0xf]
      %v1151 = vld [vmem:[%s3 + $0x1ec] sm:$0xf]
      %v1152 = vld [vmem:[%s3 + $0x1fc] sm:$0xf]
      %v1185 = vunpack.c.l.b16 %v1121
      %v1186 = vunpack.c.l.b16 %v1122
      %v1187 = vunpack.c.l.b16 %v1123
      %v1188 = vunpack.c.l.b16 %v1124
      %v1189 = vunpack.c.l.b16 %v1125
      %v1190 = vunpack.c.l.b16 %v1126
      %v1191 = vunpack.c.l.b16 %v1127
      %v1192 = vunpack.c.l.b16 %v1128
      %v1193 = vunpack.c.l.b16 %v1129
      %v1194 = vunpack.c.l.b16 %v1130
      %v1195 = vunpack.c.l.b16 %v1131
      %v1196 = vunpack.c.l.b16 %v1132
      %v1197 = vunpack.c.l.b16 %v1133
      %v1198 = vunpack.c.l.b16 %v1134
      %v1199 = vunpack.c.l.b16 %v1135
      %v1200 = vunpack.c.l.b16 %v1136
      %v1201 = vunpack.c.l.b16 %v1137
      %v1202 = vunpack.c.l.b16 %v1138
      %v1203 = vunpack.c.l.b16 %v1139
      %v1204 = vunpack.c.l.b16 %v1140
      %v1205 = vunpack.c.l.b16 %v1141
      %v1206 = vunpack.c.l.b16 %v1142
      %v1207 = vunpack.c.l.b16 %v1143
      %v1208 = vunpack.c.l.b16 %v1144
      %v1209 = vunpack.c.l.b16 %v1145
      %v1210 = vunpack.c.l.b16 %v1146
      %v1211 = vunpack.c.l.b16 %v1147
      %v1212 = vunpack.c.l.b16 %v1148
      %v1213 = vunpack.c.l.b16 %v1149
      %v1214 = vunpack.c.l.b16 %v1150
      %v1215 = vunpack.c.l.b16 %v1151
      %v1216 = vunpack.c.l.b16 %v1152
      %v1217 = vpack.c.b16 %v1186, %v1185
      %v1218 = vpack.c.b16 %v1188, %v1187
      %v1219 = vpack.c.b16 %v1190, %v1189
      %v1220 = vpack.c.b16 %v1192, %v1191
      %v1221 = vpack.c.b16 %v1194, %v1193
      %v1222 = vpack.c.b16 %v1196, %v1195
      %v1223 = vpack.c.b16 %v1198, %v1197
      %v1224 = vpack.c.b16 %v1200, %v1199
      %v1225 = vpack.c.b16 %v1202, %v1201
      %v1226 = vpack.c.b16 %v1204, %v1203
      %v1227 = vpack.c.b16 %v1206, %v1205
      %v1228 = vpack.c.b16 %v1208, %v1207
      %v1229 = vpack.c.b16 %v1210, %v1209
      %v1230 = vpack.c.b16 %v1212, %v1211
      %v1231 = vpack.c.b16 %v1214, %v1213
      %v1232 = vpack.c.b16 %v1216, %v1215
      %1249 = vmatprep.subr.bf16.mxu0 0
      %1250 = vmatpush1.bf16.msra.mxu0 %v1217
      %1251 = vmatprep.subr.bf16.mxu0 0
      %1252 = vmatpush1.bf16.msra.mxu0 %v1218
      %1253 = vmatprep.subr.bf16.mxu0 0
      %1254 = vmatpush1.bf16.msra.mxu0 %v1219
      %1255 = vmatprep.subr.bf16.mxu0 0
      %1256 = vmatpush1.bf16.msra.mxu0 %v1220
      %1257 = vmatprep.subr.bf16.mxu0 0
      %1258 = vmatpush1.bf16.msra.mxu0 %v1221
      %1259 = vmatprep.subr.bf16.mxu0 0
      %1260 = vmatpush1.bf16.msra.mxu0 %v1222
      %1261 = vmatprep.subr.bf16.mxu0 0
      %1262 = vmatpush1.bf16.msra.mxu0 %v1223
      %1263 = vmatprep.subr.bf16.mxu0 0
      %1264 = vmatpush1.bf16.msra.mxu0 %v1224
      %1265 = vmatprep.subr.bf16.mxu0 0
      %1266 = vmatpush1.bf16.msra.mxu0 %v1225
      %1267 = vmatprep.subr.bf16.mxu0 0
      %1268 = vmatpush1.bf16.msra.mxu0 %v1226
      %1269 = vmatprep.subr.bf16.mxu0 0
      %1270 = vmatpush1.bf16.msra.mxu0 %v1227
      %1271 = vmatprep.subr.bf16.mxu0 0
      %1272 = vmatpush1.bf16.msra.mxu0 %v1228
      %1273 = vmatprep.subr.bf16.mxu0 0
      %1274 = vmatpush1.bf16.msra.mxu0 %v1229
      %1275 = vmatprep.subr.bf16.mxu0 0
      %1276 = vmatpush1.bf16.msra.mxu0 %v1230
      %1277 = vmatprep.subr.bf16.mxu0 0
      %1278 = vmatpush1.bf16.msra.mxu0 %v1231
      %1279 = vmatprep.subr.bf16.mxu0 0
      %1280 = vmatpush1.bf16.msra.mxu0 %v1232
      %1281 = vmatprep.mubr.bf16.mxu0 %v734
      %1282 = vmatmul.mubr.bf16.gmra.mrb[0].mxu0 %v733
      %v1283 = vpop.f32.mrb[0].mxu0
      %v1284 = vadd.f32 0.0, %v1283
      %v1285 = vpop.f32.mrb[0].mxu0
      %v1286 = vpop.f32.mrb[0].mxu0
      %v1287 = vadd.f32 0.0, %v1286
      %v1288 = vpop.f32.mrb[0].mxu0
      %1289 = vmatprep.mubr.bf16.mxu0 %v736
      %1290 = vmatmul.mubr.bf16.gmra.mrb[0].mxu0 %v735
      %v1291 = vpop.f32.mrb[0].mxu0
      %v1292 = vadd.f32 0.0, %v1291
      %v1293 = vpop.f32.mrb[0].mxu0
      %v1294 = vpop.f32.mrb[0].mxu0
      %v1295 = vadd.f32 0.0, %v1294
      %v1296 = vpop.f32.mrb[0].mxu0
      %1297 = vmatprep.mubr.bf16.mxu0 %v738
      %1298 = vmatmul.mubr.bf16.gmra.mrb[0].mxu0 %v737
      %v1299 = vpop.f32.mrb[0].mxu0
      %v1300 = vadd.f32 0.0, %v1299
      %v1301 = vpop.f32.mrb[0].mxu0
      %v1302 = vpop.f32.mrb[0].mxu0
      %v1303 = vadd.f32 0.0, %v1302
      %v1304 = vpop.f32.mrb[0].mxu0
      %1305 = vmatprep.mubr.bf16.mxu0 %v740
      %1306 = vmatmul.mubr.bf16.gmra.mrb[0].mxu0 %v739
      %v1307 = vpop.f32.mrb[0].mxu0
      %v1308 = vadd.f32 0.0, %v1307
      %v1309 = vpop.f32.mrb[0].mxu0
      %v1310 = vpop.f32.mrb[0].mxu0
      %v1311 = vadd.f32 0.0, %v1310
      %v1312 = vpop.f32.mrb[0].mxu0
      %1313 = vmatprep.mubr.bf16.mxu0 %v742
      %1314 = vmatmul.mubr.bf16.gmra.mrb[0].mxu0 %v741
      %v1315 = vpop.f32.mrb[0].mxu0
      %v1316 = vadd.f32 0.0, %v1315
      %v1317 = vpop.f32.mrb[0].mxu0
      %v1318 = vpop.f32.mrb[0].mxu0
      %v1319 = vadd.f32 0.0, %v1318
      %v1320 = vpop.f32.mrb[0].mxu0
      %1321 = vmatprep.mubr.bf16.mxu0 %v744
      %1322 = vmatmul.mubr.bf16.gmra.mrb[0].mxu0 %v743
      %v1323 = vpop.f32.mrb[0].mxu0
      %v1324 = vadd.f32 0.0, %v1323
      %v1325 = vpop.f32.mrb[0].mxu0
      %v1326 = vpop.f32.mrb[0].mxu0
      %v1327 = vadd.f32 0.0, %v1326
      %v1328 = vpop.f32.mrb[0].mxu0
      %1329 = vmatprep.mubr.bf16.mxu0 %v746
      %1330 = vmatmul.mubr.bf16.gmra.mrb[0].mxu0 %v745
      %v1331 = vpop.f32.mrb[0].mxu0
      %v1332 = vadd.f32 0.0, %v1331
      %v1333 = vpop.f32.mrb[0].mxu0
      %v1334 = vpop.f32.mrb[0].mxu0
      %v1335 = vadd.f32 0.0, %v1334
      %v1336 = vpop.f32.mrb[0].mxu0
      %1337 = vmatprep.mubr.bf16.mxu0 %v748
      %1338 = vmatmul.mubr.bf16.gmra.mrb[0].mxu0 %v747
      %v1339 = vpop.f32.mrb[0].mxu0
      %v1340 = vadd.f32 0.0, %v1339
      %v1341 = vpop.f32.mrb[0].mxu0
      %v1342 = vpop.f32.mrb[0].mxu0
      %v1343 = vadd.f32 0.0, %v1342
      %v1344 = vpop.f32.mrb[0].mxu0
      %1345 = vdwg.mxu0
      %v1346 = vpack.c.bf16 %v1106, %v1105
      %v1347 = vpack.c.bf16 %v1108, %v1107
      %v1348 = vpack.c.bf16 %v1110, %v1109
      %v1349 = vpack.c.bf16 %v1112, %v1111
      %v1350 = vpack.c.bf16 %v1114, %v1113
      %v1351 = vpack.c.bf16 %v1116, %v1115
      %v1352 = vpack.c.bf16 %v1118, %v1117
      %v1353 = vpack.c.bf16 %v1120, %v1119
      %v1354 = vpack.c.bf16 %v1287, %v1284
      %v1355 = vpack.c.bf16 %v1295, %v1292
      %v1356 = vpack.c.bf16 %v1303, %v1300
      %v1357 = vpack.c.bf16 %v1311, %v1308
      %v1358 = vpack.c.bf16 %v1319, %v1316
      %v1359 = vpack.c.bf16 %v1327, %v1324
      %v1360 = vpack.c.bf16 %v1335, %v1332
      %v1361 = vpack.c.bf16 %v1343, %v1340
      %v1362 = vld [vmem:[%s3] sm:$0xf]
      %v1363 = vld [vmem:[%s3 + $0x10] sm:$0xf]
      %v1364 = vld [vmem:[%s3 + $0x20] sm:$0xf]
      %v1365 = vld [vmem:[%s3 + $0x30] sm:$0xf]
      %v1366 = vld [vmem:[%s3 + $0x40] sm:$0xf]
      %v1367 = vld [vmem:[%s3 + $0x50] sm:$0xf]
      %v1368 = vld [vmem:[%s3 + $0x60] sm:$0xf]
      %v1369 = vld [vmem:[%s3 + $0x70] sm:$0xf]
      %v1370 = vld [vmem:[%s3 + $0x80] sm:$0xf]
      %v1371 = vld [vmem:[%s3 + $0x90] sm:$0xf]
      %v1372 = vld [vmem:[%s3 + $0xa0] sm:$0xf]
      %v1373 = vld [vmem:[%s3 + $0xb0] sm:$0xf]
      %v1374 = vld [vmem:[%s3 + $0xc0] sm:$0xf]
      %v1375 = vld [vmem:[%s3 + $0xd0] sm:$0xf]
      %v1376 = vld [vmem:[%s3 + $0xe0] sm:$0xf]
      %v1377 = vld [vmem:[%s3 + $0xf0] sm:$0xf]
      %v1378 = vld [vmem:[%s3 + $0x100] sm:$0xf]
      %v1379 = vld [vmem:[%s3 + $0x110] sm:$0xf]
      %v1380 = vld [vmem:[%s3 + $0x120] sm:$0xf]
      %v1381 = vld [vmem:[%s3 + $0x130] sm:$0xf]
      %v1382 = vld [vmem:[%s3 + $0x140] sm:$0xf]
      %v1383 = vld [vmem:[%s3 + $0x150] sm:$0xf]
      %v1384 = vld [vmem:[%s3 + $0x160] sm:$0xf]
      %v1385 = vld [vmem:[%s3 + $0x170] sm:$0xf]
      %v1386 = vld [vmem:[%s3 + $0x180] sm:$0xf]
      %v1387 = vld [vmem:[%s3 + $0x190] sm:$0xf]
      %v1388 = vld [vmem:[%s3 + $0x1a0] sm:$0xf]
      %v1389 = vld [vmem:[%s3 + $0x1b0] sm:$0xf]
      %v1390 = vld [vmem:[%s3 + $0x1c0] sm:$0xf]
      %v1391 = vld [vmem:[%s3 + $0x1d0] sm:$0xf]
      %v1392 = vld [vmem:[%s3 + $0x1e0] sm:$0xf]
      %v1393 = vld [vmem:[%s3 + $0x1f0] sm:$0xf]
      %v1426 = vunpack.c.l.b16 %v1362
      %v1427 = vunpack.c.l.b16 %v1363
      %v1428 = vunpack.c.l.b16 %v1364
      %v1429 = vunpack.c.l.b16 %v1365
      %v1430 = vunpack.c.l.b16 %v1366
      %v1431 = vunpack.c.l.b16 %v1367
      %v1432 = vunpack.c.l.b16 %v1368
      %v1433 = vunpack.c.l.b16 %v1369
      %v1434 = vunpack.c.l.b16 %v1370
      %v1435 = vunpack.c.l.b16 %v1371
      %v1436 = vunpack.c.l.b16 %v1372
      %v1437 = vunpack.c.l.b16 %v1373
      %v1438 = vunpack.c.l.b16 %v1374
      %v1439 = vunpack.c.l.b16 %v1375
      %v1440 = vunpack.c.l.b16 %v1376
      %v1441 = vunpack.c.l.b16 %v1377
      %v1442 = vunpack.c.l.b16 %v1378
      %v1443 = vunpack.c.l.b16 %v1379
      %v1444 = vunpack.c.l.b16 %v1380
      %v1445 = vunpack.c.l.b16 %v1381
      %v1446 = vunpack.c.l.b16 %v1382
      %v1447 = vunpack.c.l.b16 %v1383
      %v1448 = vunpack.c.l.b16 %v1384
      %v1449 = vunpack.c.l.b16 %v1385
      %v1450 = vunpack.c.l.b16 %v1386
      %v1451 = vunpack.c.l.b16 %v1387
      %v1452 = vunpack.c.l.b16 %v1388
      %v1453 = vunpack.c.l.b16 %v1389
      %v1454 = vunpack.c.l.b16 %v1390
      %v1455 = vunpack.c.l.b16 %v1391
      %v1456 = vunpack.c.l.b16 %v1392
      %v1457 = vunpack.c.l.b16 %v1393
      %v1458 = vpack.c.b16 %v1427, %v1426
      %v1459 = vpack.c.b16 %v1429, %v1428
      %v1460 = vpack.c.b16 %v1431, %v1430
      %v1461 = vpack.c.b16 %v1433, %v1432
      %v1462 = vpack.c.b16 %v1435, %v1434
      %v1463 = vpack.c.b16 %v1437, %v1436
      %v1464 = vpack.c.b16 %v1439, %v1438
      %v1465 = vpack.c.b16 %v1441, %v1440
      %v1466 = vpack.c.b16 %v1443, %v1442
      %v1467 = vpack.c.b16 %v1445, %v1444
      %v1468 = vpack.c.b16 %v1447, %v1446
      %v1469 = vpack.c.b16 %v1449, %v1448
      %v1470 = vpack.c.b16 %v1451, %v1450
      %v1471 = vpack.c.b16 %v1453, %v1452
      %v1472 = vpack.c.b16 %v1455, %v1454
      %v1473 = vpack.c.b16 %v1457, %v1456
      %1490 = vmatprep.subr.bf16.mxu0 0
      %1491 = vmatpush1.bf16.msra.mxu0 %v1458
      %1492 = vmatprep.subr.bf16.mxu0 0
      %1493 = vmatpush1.bf16.msra.mxu0 %v1459
      %1494 = vmatprep.subr.bf16.mxu0 0
      %1495 = vmatpush1.bf16.msra.mxu0 %v1460
      %1496 = vmatprep.subr.bf16.mxu0 0
      %1497 = vmatpush1.bf16.msra.mxu0 %v1461
      %1498 = vmatprep.subr.bf16.mxu0 0
      %1499 = vmatpush1.bf16.msra.mxu0 %v1462
      %1500 = vmatprep.subr.bf16.mxu0 0
      %1501 = vmatpush1.bf16.msra.mxu0 %v1463
      %1502 = vmatprep.subr.bf16.mxu0 0
      %1503 = vmatpush1.bf16.msra.mxu0 %v1464
      %1504 = vmatprep.subr.bf16.mxu0 0
      %1505 = vmatpush1.bf16.msra.mxu0 %v1465
      %1506 = vmatprep.subr.bf16.mxu0 0
      %1507 = vmatpush1.bf16.msra.mxu0 %v1466
      %1508 = vmatprep.subr.bf16.mxu0 0
      %1509 = vmatpush1.bf16.msra.mxu0 %v1467
      %1510 = vmatprep.subr.bf16.mxu0 0
      %1511 = vmatpush1.bf16.msra.mxu0 %v1468
      %1512 = vmatprep.subr.bf16.mxu0 0
      %1513 = vmatpush1.bf16.msra.mxu0 %v1469
      %1514 = vmatprep.subr.bf16.mxu0 0
      %1515 = vmatpush1.bf16.msra.mxu0 %v1470
      %1516 = vmatprep.subr.bf16.mxu0 0
      %1517 = vmatpush1.bf16.msra.mxu0 %v1471
      %1518 = vmatprep.subr.bf16.mxu0 0
      %1519 = vmatpush1.bf16.msra.mxu0 %v1472
      %1520 = vmatprep.subr.bf16.mxu0 0
      %1521 = vmatpush1.bf16.msra.mxu0 %v1473
      %1522 = vmatprep.mubr.bf16.mxu0 %v734
      %1523 = vmatmul.mubr.bf16.gmra.mrb[0].mxu0 %v733
      %v1524 = vpop.f32.mrb[0].mxu0
      %v1525 = vadd.f32 0.0, %v1524
      %v1526 = vpop.f32.mrb[0].mxu0
      %v1527 = vpop.f32.mrb[0].mxu0
      %v1528 = vadd.f32 0.0, %v1527
      %v1529 = vpop.f32.mrb[0].mxu0
      %1530 = vmatprep.mubr.bf16.mxu0 %v736
      %1531 = vmatmul.mubr.bf16.gmra.mrb[0].mxu0 %v735
      %v1532 = vpop.f32.mrb[0].mxu0
      %v1533 = vadd.f32 0.0, %v1532
      %v1534 = vpop.f32.mrb[0].mxu0
      %v1535 = vpop.f32.mrb[0].mxu0
      %v1536 = vadd.f32 0.0, %v1535
      %v1537 = vpop.f32.mrb[0].mxu0
      %1538 = vmatprep.mubr.bf16.mxu0 %v738
      %1539 = vmatmul.mubr.bf16.gmra.mrb[0].mxu0 %v737
      %v1540 = vpop.f32.mrb[0].mxu0
      %v1541 = vadd.f32 0.0, %v1540
      %v1542 = vpop.f32.mrb[0].mxu0
      %v1543 = vpop.f32.mrb[0].mxu0
      %v1544 = vadd.f32 0.0, %v1543
      %v1545 = vpop.f32.mrb[0].mxu0
      %1546 = vmatprep.mubr.bf16.mxu0 %v740
      %1547 = vmatmul.mubr.bf16.gmra.mrb[0].mxu0 %v739
      %v1548 = vpop.f32.mrb[0].mxu0
      %v1549 = vadd.f32 0.0, %v1548
      %v1550 = vpop.f32.mrb[0].mxu0
      %v1551 = vpop.f32.mrb[0].mxu0
      %v1552 = vadd.f32 0.0, %v1551
      %v1553 = vpop.f32.mrb[0].mxu0
      %1554 = vmatprep.mubr.bf16.mxu0 %v742
      %1555 = vmatmul.mubr.bf16.gmra.mrb[0].mxu0 %v741
      %v1556 = vpop.f32.mrb[0].mxu0
      %v1557 = vadd.f32 0.0, %v1556
      %v1558 = vpop.f32.mrb[0].mxu0
      %v1559 = vpop.f32.mrb[0].mxu0
      %v1560 = vadd.f32 0.0, %v1559
      %v1561 = vpop.f32.mrb[0].mxu0
      %1562 = vmatprep.mubr.bf16.mxu0 %v744
      %1563 = vmatmul.mubr.bf16.gmra.mrb[0].mxu0 %v743
      %v1564 = vpop.f32.mrb[0].mxu0
      %v1565 = vadd.f32 0.0, %v1564
      %v1566 = vpop.f32.mrb[0].mxu0
      %v1567 = vpop.f32.mrb[0].mxu0
      %v1568 = vadd.f32 0.0, %v1567
      %v1569 = vpop.f32.mrb[0].mxu0
      %1570 = vmatprep.mubr.bf16.mxu0 %v746
      %1571 = vmatmul.mubr.bf16.gmra.mrb[0].mxu0 %v745
      %v1572 = vpop.f32.mrb[0].mxu0
      %v1573 = vadd.f32 0.0, %v1572
      %v1574 = vpop.f32.mrb[0].mxu0
      %v1575 = vpop.f32.mrb[0].mxu0
      %v1576 = vadd.f32 0.0, %v1575
      %v1577 = vpop.f32.mrb[0].mxu0
      %1578 = vmatprep.mubr.bf16.mxu0 %v748
      %1579 = vmatmul.mubr.bf16.gmra.mrb[0].mxu0 %v747
      %v1580 = vpop.f32.mrb[0].mxu0
      %v1581 = vadd.f32 0.0, %v1580
      %v1582 = vpop.f32.mrb[0].mxu0
      %v1583 = vpop.f32.mrb[0].mxu0
      %v1584 = vadd.f32 0.0, %v1583
      %v1585 = vpop.f32.mrb[0].mxu0
      %1586 = vdwg.mxu0
      %v1587 = vmul.f32 %v1525, %v749
      %v1588 = vmul.f32 %v1528, %v750
      %v1589 = vmul.f32 %v1533, %v751
      %v1590 = vmul.f32 %v1536, %v752
      %v1591 = vmul.f32 %v1541, %v753
      %v1592 = vmul.f32 %v1544, %v754
      %v1593 = vmul.f32 %v1549, %v755
      %v1594 = vmul.f32 %v1552, %v756
      %v1595 = vmul.f32 %v1557, %v757
      %v1596 = vmul.f32 %v1560, %v758
      %v1597 = vmul.f32 %v1565, %v759
      %v1598 = vmul.f32 %v1568, %v760
      %v1599 = vmul.f32 %v1573, %v761
      %v1600 = vmul.f32 %v1576, %v762
      %v1601 = vmul.f32 %v1581, %v763
      %v1602 = vmul.f32 %v1584, %v764
      %1603 = vrot.lane.b32.xlu0 %v1525, 64
      %v1604 = vpop.permute.xlu0 %1603
      %1605 = vrot.lane.b32.xlu0 %v1528, 64
      %v1606 = vpop.permute.xlu0 %1605
      %1607 = vrot.lane.b32.xlu0 %v1533, 64
      %v1608 = vpop.permute.xlu0 %1607
      %1609 = vrot.lane.b32.xlu0 %v1536, 64
      %v1610 = vpop.permute.xlu0 %1609
      %1611 = vrot.lane.b32.xlu0 %v1541, 64
      %v1612 = vpop.permute.xlu0 %1611
      %1613 = vrot.lane.b32.xlu0 %v1544, 64
      %v1614 = vpop.permute.xlu0 %1613
      %1615 = vrot.lane.b32.xlu0 %v1549, 64
      %v1616 = vpop.permute.xlu0 %1615
      %1617 = vrot.lane.b32.xlu0 %v1552, 64
      %v1618 = vpop.permute.xlu0 %1617
      %1619 = vrot.lane.b32.xlu0 %v1557, 64
      %v1620 = vpop.permute.xlu0 %1619
      %1621 = vrot.lane.b32.xlu0 %v1560, 64
      %v1622 = vpop.permute.xlu0 %1621
      %1623 = vrot.lane.b32.xlu0 %v1565, 64
      %v1624 = vpop.permute.xlu0 %1623
      %1625 = vrot.lane.b32.xlu0 %v1568, 64
      %v1626 = vpop.permute.xlu0 %1625
      %1627 = vrot.lane.b32.xlu0 %v1573, 64
      %v1628 = vpop.permute.xlu0 %1627
      %1629 = vrot.lane.b32.xlu0 %v1576, 64
      %v1630 = vpop.permute.xlu0 %1629
      %1631 = vrot.lane.b32.xlu0 %v1581, 64
      %v1632 = vpop.permute.xlu0 %1631
      %1633 = vrot.lane.b32.xlu0 %v1584, 64
      %v1634 = vpop.permute.xlu0 %1633
      %v1635 = vmul.f32 %v1604, %v765
      %v1636 = vmul.f32 %v1606, %v766
      %v1637 = vmul.f32 %v1608, %v767
      %v1638 = vmul.f32 %v1610, %v768
      %v1639 = vmul.f32 %v1612, %v769
      %v1640 = vmul.f32 %v1614, %v770
      %v1641 = vmul.f32 %v1616, %v771
      %v1642 = vmul.f32 %v1618, %v772
      %v1643 = vmul.f32 %v1620, %v773
      %v1644 = vmul.f32 %v1622, %v774
      %v1645 = vmul.f32 %v1624, %v775
      %v1646 = vmul.f32 %v1626, %v776
      %v1647 = vmul.f32 %v1628, %v777
      %v1648 = vmul.f32 %v1630, %v778
      %v1649 = vmul.f32 %v1632, %v779
      %v1650 = vmul.f32 %v1634, %v780
      %v1651 = vadd.f32 %v1587, %v1635
      %v1652 = vadd.f32 %v1588, %v1636
      %v1653 = vadd.f32 %v1589, %v1637
      %v1654 = vadd.f32 %v1590, %v1638
      %v1655 = vadd.f32 %v1591, %v1639
      %v1656 = vadd.f32 %v1592, %v1640
      %v1657 = vadd.f32 %v1593, %v1641
      %v1658 = vadd.f32 %v1594, %v1642
      %v1659 = vadd.f32 %v1595, %v1643
      %v1660 = vadd.f32 %v1596, %v1644
      %v1661 = vadd.f32 %v1597, %v1645
      %v1662 = vadd.f32 %v1598, %v1646
      %v1663 = vadd.f32 %v1599, %v1647
      %v1664 = vadd.f32 %v1600, %v1648
      %v1665 = vadd.f32 %v1601, %v1649
      %v1666 = vadd.f32 %v1602, %v1650
      %v1667 = vpack.c.bf16 %v1652, %v1651
      %v1668 = vpack.c.bf16 %v1654, %v1653
      %v1669 = vpack.c.bf16 %v1656, %v1655
      %v1670 = vpack.c.bf16 %v1658, %v1657
      %v1671 = vpack.c.bf16 %v1660, %v1659
      %v1672 = vpack.c.bf16 %v1662, %v1661
      %v1673 = vpack.c.bf16 %v1664, %v1663
      %v1674 = vpack.c.bf16 %v1666, %v1665
      %1675 = vmatprep.subr.bf16.mxu0 0
      %1676 = vmatpush1.bf16.xpose.msra.mxu0 %v1346
      %1677 = vmatprep.subr.bf16.mxu0 0
      %1678 = vmatpush1.bf16.xpose.msra.mxu0 %v1347
      %1679 = vmatprep.subr.bf16.mxu0 0
      %1680 = vmatpush1.bf16.xpose.msra.mxu0 %v1348
      %1681 = vmatprep.subr.bf16.mxu0 0
      %1682 = vmatpush1.bf16.xpose.msra.mxu0 %v1349
      %1683 = vmatprep.subr.bf16.mxu0 0
      %1684 = vmatpush1.bf16.xpose.msra.mxu0 %v1350
      %1685 = vmatprep.subr.bf16.mxu0 0
      %1686 = vmatpush1.bf16.xpose.msra.mxu0 %v1351
      %1687 = vmatprep.subr.bf16.mxu0 0
      %1688 = vmatpush1.bf16.xpose.msra.mxu0 %v1352
      %1689 = vmatprep.subr.bf16.mxu0 0
      %1690 = vmatpush1.bf16.xpose.msra.mxu0 %v1353
      %1691 = vmatprep.subr.bf16.mxu0 0
      %1692 = vmatpush1.bf16.xpose.msra.mxu0 0
      %1693 = vmatprep.subr.bf16.mxu0 0
      %1694 = vmatpush1.bf16.xpose.msra.mxu0 0
      %1695 = vmatprep.subr.bf16.mxu0 0
      %1696 = vmatpush1.bf16.xpose.msra.mxu0 0
      %1697 = vmatprep.subr.bf16.mxu0 0
      %1698 = vmatpush1.bf16.xpose.msra.mxu0 0
      %1699 = vmatprep.subr.bf16.mxu0 0
      %1700 = vmatpush1.bf16.xpose.msra.mxu0 0
      %1701 = vmatprep.subr.bf16.mxu0 0
      %1702 = vmatpush1.bf16.xpose.msra.mxu0 0
      %1703 = vmatprep.subr.bf16.mxu0 0
      %1704 = vmatpush1.bf16.xpose.msra.mxu0 0
      %1705 = vmatprep.subr.bf16.mxu0 0
      %1706 = vmatpush1.bf16.xpose.msra.mxu0 0
      %1707 = vmatprep.mubr.bf16.mxu0 0
      %1708 = vmatmul.mubr.bf16.gmra.mrb[0].mxu0 %v1667
      %v1709 = vpop.f32.mrb[0].mxu0
      %v1710 = vadd.f32 0.0, %v1709
      %v1711 = vpop.f32.mrb[0].mxu0
      %v1712 = vpop.f32.mrb[0].mxu0
      %v1713 = vadd.f32 0.0, %v1712
      %v1714 = vpop.f32.mrb[0].mxu0
      %1715 = vmatprep.mubr.bf16.mxu0 0
      %1716 = vmatmul.mubr.bf16.gmra.mrb[0].mxu0 %v1668
      %v1717 = vpop.f32.mrb[0].mxu0
      %v1718 = vadd.f32 0.0, %v1717
      %v1719 = vpop.f32.mrb[0].mxu0
      %v1720 = vpop.f32.mrb[0].mxu0
      %v1721 = vadd.f32 0.0, %v1720
      %v1722 = vpop.f32.mrb[0].mxu0
      %1723 = vmatprep.mubr.bf16.mxu0 0
      %1724 = vmatmul.mubr.bf16.gmra.mrb[0].mxu0 %v1669
      %v1725 = vpop.f32.mrb[0].mxu0
      %v1726 = vadd.f32 0.0, %v1725
      %v1727 = vpop.f32.mrb[0].mxu0
      %v1728 = vpop.f32.mrb[0].mxu0
      %v1729 = vadd.f32 0.0, %v1728
      %v1730 = vpop.f32.mrb[0].mxu0
      %1731 = vmatprep.mubr.bf16.mxu0 0
      %1732 = vmatmul.mubr.bf16.gmra.mrb[0].mxu0 %v1670
      %v1733 = vpop.f32.mrb[0].mxu0
      %v1734 = vadd.f32 0.0, %v1733
      %v1735 = vpop.f32.mrb[0].mxu0
      %v1736 = vpop.f32.mrb[0].mxu0
      %v1737 = vadd.f32 0.0, %v1736
      %v1738 = vpop.f32.mrb[0].mxu0
      %1739 = vmatprep.mubr.bf16.mxu0 0
      %1740 = vmatmul.mubr.bf16.gmra.mrb[0].mxu0 %v1671
      %v1741 = vpop.f32.mrb[0].mxu0
      %v1742 = vadd.f32 0.0, %v1741
      %v1743 = vpop.f32.mrb[0].mxu0
      %v1744 = vpop.f32.mrb[0].mxu0
      %v1745 = vadd.f32 0.0, %v1744
      %v1746 = vpop.f32.mrb[0].mxu0
      %1747 = vmatprep.mubr.bf16.mxu0 0
      %1748 = vmatmul.mubr.bf16.gmra.mrb[0].mxu0 %v1672
      %v1749 = vpop.f32.mrb[0].mxu0
      %v1750 = vadd.f32 0.0, %v1749
      %v1751 = vpop.f32.mrb[0].mxu0
      %v1752 = vpop.f32.mrb[0].mxu0
      %v1753 = vadd.f32 0.0, %v1752
      %v1754 = vpop.f32.mrb[0].mxu0
      %1755 = vmatprep.mubr.bf16.mxu0 0
      %1756 = vmatmul.mubr.bf16.gmra.mrb[0].mxu0 %v1673
      %v1757 = vpop.f32.mrb[0].mxu0
      %v1758 = vadd.f32 0.0, %v1757
      %v1759 = vpop.f32.mrb[0].mxu0
      %v1760 = vpop.f32.mrb[0].mxu0
      %v1761 = vadd.f32 0.0, %v1760
      %v1762 = vpop.f32.mrb[0].mxu0
      %1763 = vmatprep.mubr.bf16.mxu0 0
      %1764 = vmatmul.mubr.bf16.gmra.mrb[0].mxu0 %v1674
      %v1765 = vpop.f32.mrb[0].mxu0
      %v1766 = vadd.f32 0.0, %v1765
      %v1767 = vpop.f32.mrb[0].mxu0
      %v1768 = vpop.f32.mrb[0].mxu0
      %v1769 = vadd.f32 0.0, %v1768
      %v1770 = vpop.f32.mrb[0].mxu0
      %1771 = vdwg.mxu0
      %v1772 = vmul.f32 %v1710, 0.088388346
      %v1773 = vmul.f32 %v1713, 0.088388346
      %v1774 = vmul.f32 %v1718, 0.088388346
      %v1775 = vmul.f32 %v1721, 0.088388346
      %v1776 = vmul.f32 %v1726, 0.088388346
      %v1777 = vmul.f32 %v1729, 0.088388346
      %v1778 = vmul.f32 %v1734, 0.088388346
      %v1779 = vmul.f32 %v1737, 0.088388346
      %v1780 = vmul.f32 %v1742, 0.088388346
      %v1781 = vmul.f32 %v1745, 0.088388346
      %v1782 = vmul.f32 %v1750, 0.088388346
      %v1783 = vmul.f32 %v1753, 0.088388346
      %v1784 = vmul.f32 %v1758, 0.088388346
      %v1785 = vmul.f32 %v1761, 0.088388346
      %v1786 = vmul.f32 %v1766, 0.088388346
      %v1787 = vmul.f32 %v1769, 0.088388346
      %v1788 = vsel %vm800, %v1772, -1e+30
      %v1789 = vsel %vm801, %v1773, -1e+30
      %v1790 = vsel %vm802, %v1774, -1e+30
      %v1791 = vsel %vm803, %v1775, -1e+30
      %v1792 = vsel %vm804, %v1776, -1e+30
      %v1793 = vsel %vm805, %v1777, -1e+30
      %v1794 = vsel %vm806, %v1778, -1e+30
      %v1795 = vsel %vm807, %v1779, -1e+30
      %v1796 = vsel %vm808, %v1780, -1e+30
      %v1797 = vsel %vm809, %v1781, -1e+30
      %v1798 = vsel %vm810, %v1782, -1e+30
      %v1799 = vsel %vm811, %v1783, -1e+30
      %v1800 = vsel %vm812, %v1784, -1e+30
      %v1801 = vsel %vm813, %v1785, -1e+30
      %v1802 = vsel %vm814, %v1786, -1e+30
      %v1803 = vsel %vm815, %v1787, -1e+30
      %1804 = vmax.xlane.f32.xlu0 %v1788
      %v1805 = vpop.xlane.xlu0 %1804
      %1806 = vmax.xlane.f32.xlu0 %v1789
      %v1807 = vpop.xlane.xlu0 %1806
      %1808 = vmax.xlane.f32.xlu0 %v1790
      %v1809 = vpop.xlane.xlu0 %1808
      %1810 = vmax.xlane.f32.xlu0 %v1791
      %v1811 = vpop.xlane.xlu0 %1810
      %1812 = vmax.xlane.f32.xlu0 %v1792
      %v1813 = vpop.xlane.xlu0 %1812
      %1814 = vmax.xlane.f32.xlu0 %v1793
      %v1815 = vpop.xlane.xlu0 %1814
      %1816 = vmax.xlane.f32.xlu0 %v1794
      %v1817 = vpop.xlane.xlu0 %1816
      %1818 = vmax.xlane.f32.xlu0 %v1795
      %v1819 = vpop.xlane.xlu0 %1818
      %1820 = vmax.xlane.f32.xlu0 %v1796
      %v1821 = vpop.xlane.xlu0 %1820
      %1822 = vmax.xlane.f32.xlu0 %v1797
      %v1823 = vpop.xlane.xlu0 %1822
      %1824 = vmax.xlane.f32.xlu0 %v1798
      %v1825 = vpop.xlane.xlu0 %1824
      %1826 = vmax.xlane.f32.xlu0 %v1799
      %v1827 = vpop.xlane.xlu0 %1826
      %1828 = vmax.xlane.f32.xlu0 %v1800
      %v1829 = vpop.xlane.xlu0 %1828
      %1830 = vmax.xlane.f32.xlu0 %v1801
      %v1831 = vpop.xlane.xlu0 %1830
      %1832 = vmax.xlane.f32.xlu0 %v1802
      %v1833 = vpop.xlane.xlu0 %1832
      %1834 = vmax.xlane.f32.xlu0 %v1803
      %v1835 = vpop.xlane.xlu0 %1834
      %v1836 = vsub.f32 %v1788, %v1805
      %v1837 = vsub.f32 %v1789, %v1807
      %v1838 = vsub.f32 %v1790, %v1809
      %v1839 = vsub.f32 %v1791, %v1811
      %v1840 = vsub.f32 %v1792, %v1813
      %v1841 = vsub.f32 %v1793, %v1815
      %v1842 = vsub.f32 %v1794, %v1817
      %v1843 = vsub.f32 %v1795, %v1819
      %v1844 = vsub.f32 %v1796, %v1821
      %v1845 = vsub.f32 %v1797, %v1823
      %v1846 = vsub.f32 %v1798, %v1825
      %v1847 = vsub.f32 %v1799, %v1827
      %v1848 = vsub.f32 %v1800, %v1829
      %v1849 = vsub.f32 %v1801, %v1831
      %v1850 = vsub.f32 %v1802, %v1833
      %v1851 = vsub.f32 %v1803, %v1835
      %v1852 = vmul.f32 %v1836, 1.442695
      %v1853 = vpow.pop %v1852
      %v1854 = vmul.f32 %v1837, 1.442695
      %v1855 = vpow.pop %v1854
      %v1856 = vmul.f32 %v1838, 1.442695
      %v1857 = vpow.pop %v1856
      %v1858 = vmul.f32 %v1839, 1.442695
      %v1859 = vpow.pop %v1858
      %v1860 = vmul.f32 %v1840, 1.442695
      %v1861 = vpow.pop %v1860
      %v1862 = vmul.f32 %v1841, 1.442695
      %v1863 = vpow.pop %v1862
      %v1864 = vmul.f32 %v1842, 1.442695
      %v1865 = vpow.pop %v1864
      %v1866 = vmul.f32 %v1843, 1.442695
      %v1867 = vpow.pop %v1866
      %v1868 = vmul.f32 %v1844, 1.442695
      %v1869 = vpow.pop %v1868
      %v1870 = vmul.f32 %v1845, 1.442695
      %v1871 = vpow.pop %v1870
      %v1872 = vmul.f32 %v1846, 1.442695
      %v1873 = vpow.pop %v1872
      %v1874 = vmul.f32 %v1847, 1.442695
      %v1875 = vpow.pop %v1874
      %v1876 = vmul.f32 %v1848, 1.442695
      %v1877 = vpow.pop %v1876
      %v1878 = vmul.f32 %v1849, 1.442695
      %v1879 = vpow.pop %v1878
      %v1880 = vmul.f32 %v1850, 1.442695
      %v1881 = vpow.pop %v1880
      %v1882 = vmul.f32 %v1851, 1.442695
      %v1883 = vpow.pop %v1882
      %1884 = vadd.xlane.f32.xlu0 %v1853
      %v1885 = vpop.xlane.xlu0 %1884
      %1886 = vadd.xlane.f32.xlu0 %v1855
      %v1887 = vpop.xlane.xlu0 %1886
      %1888 = vadd.xlane.f32.xlu0 %v1857
      %v1889 = vpop.xlane.xlu0 %1888
      %1890 = vadd.xlane.f32.xlu0 %v1859
      %v1891 = vpop.xlane.xlu0 %1890
      %1892 = vadd.xlane.f32.xlu0 %v1861
      %v1893 = vpop.xlane.xlu0 %1892
      %1894 = vadd.xlane.f32.xlu0 %v1863
      %v1895 = vpop.xlane.xlu0 %1894
      %1896 = vadd.xlane.f32.xlu0 %v1865
      %v1897 = vpop.xlane.xlu0 %1896
      %1898 = vadd.xlane.f32.xlu0 %v1867
      %v1899 = vpop.xlane.xlu0 %1898
      %1900 = vadd.xlane.f32.xlu0 %v1869
      %v1901 = vpop.xlane.xlu0 %1900
      %1902 = vadd.xlane.f32.xlu0 %v1871
      %v1903 = vpop.xlane.xlu0 %1902
      %1904 = vadd.xlane.f32.xlu0 %v1873
      %v1905 = vpop.xlane.xlu0 %1904
      %1906 = vadd.xlane.f32.xlu0 %v1875
      %v1907 = vpop.xlane.xlu0 %1906
      %1908 = vadd.xlane.f32.xlu0 %v1877
      %v1909 = vpop.xlane.xlu0 %1908
      %1910 = vadd.xlane.f32.xlu0 %v1879
      %v1911 = vpop.xlane.xlu0 %1910
      %1912 = vadd.xlane.f32.xlu0 %v1881
      %v1913 = vpop.xlane.xlu0 %1912
      %1914 = vadd.xlane.f32.xlu0 %v1883
      %v1915 = vpop.xlane.xlu0 %1914
      %v1916 = vpack.c.bf16 %v1855, %v1853
      %v1917 = vpack.c.bf16 %v1859, %v1857
      %v1918 = vpack.c.bf16 %v1863, %v1861
      %v1919 = vpack.c.bf16 %v1867, %v1865
      %v1920 = vpack.c.bf16 %v1871, %v1869
      %v1921 = vpack.c.bf16 %v1875, %v1873
      %v1922 = vpack.c.bf16 %v1879, %v1877
      %v1923 = vpack.c.bf16 %v1883, %v1881
      %1924 = vmatprep.subr.bf16.mxu0 0
      %1925 = vmatpush1.bf16.msra.mxu0 %v1354
      %1926 = vmatprep.subr.bf16.mxu0 0
      %1927 = vmatpush1.bf16.msra.mxu0 %v1355
      %1928 = vmatprep.subr.bf16.mxu0 0
      %1929 = vmatpush1.bf16.msra.mxu0 %v1356
      %1930 = vmatprep.subr.bf16.mxu0 0
      %1931 = vmatpush1.bf16.msra.mxu0 %v1357
      %1932 = vmatprep.subr.bf16.mxu0 0
      %1933 = vmatpush1.bf16.msra.mxu0 %v1358
      %1934 = vmatprep.subr.bf16.mxu0 0
      %1935 = vmatpush1.bf16.msra.mxu0 %v1359
      %1936 = vmatprep.subr.bf16.mxu0 0
      %1937 = vmatpush1.bf16.msra.mxu0 %v1360
      %1938 = vmatprep.subr.bf16.mxu0 0
      %1939 = vmatpush1.bf16.msra.mxu0 %v1361
      %1940 = vmatprep.subr.bf16.mxu0 0
      %1941 = vmatpush1.bf16.msra.mxu0 0
      %1942 = vmatprep.subr.bf16.mxu0 0
      %1943 = vmatpush1.bf16.msra.mxu0 0
      %1944 = vmatprep.subr.bf16.mxu0 0
      %1945 = vmatpush1.bf16.msra.mxu0 0
      %1946 = vmatprep.subr.bf16.mxu0 0
      %1947 = vmatpush1.bf16.msra.mxu0 0
      %1948 = vmatprep.subr.bf16.mxu0 0
      %1949 = vmatpush1.bf16.msra.mxu0 0
      %1950 = vmatprep.subr.bf16.mxu0 0
      %1951 = vmatpush1.bf16.msra.mxu0 0
      %1952 = vmatprep.subr.bf16.mxu0 0
      %1953 = vmatpush1.bf16.msra.mxu0 0
      %1954 = vmatprep.subr.bf16.mxu0 0
      %1955 = vmatpush1.bf16.msra.mxu0 0
      %1956 = vmatprep.mubr.bf16.mxu0 0
      %1957 = vmatmul.mubr.bf16.gmra.mrb[0].mxu0 %v1916
      %v1958 = vpop.f32.mrb[0].mxu0
      %v1959 = vadd.f32 0.0, %v1958
      %v1960 = vpop.f32.mrb[0].mxu0
      %v1961 = vpop.f32.mrb[0].mxu0
      %v1962 = vadd.f32 0.0, %v1961
      %v1963 = vpop.f32.mrb[0].mxu0
      %1964 = vmatprep.mubr.bf16.mxu0 0
      %1965 = vmatmul.mubr.bf16.gmra.mrb[0].mxu0 %v1917
      %v1966 = vpop.f32.mrb[0].mxu0
      %v1967 = vadd.f32 0.0, %v1966
      %v1968 = vpop.f32.mrb[0].mxu0
      %v1969 = vpop.f32.mrb[0].mxu0
      %v1970 = vadd.f32 0.0, %v1969
      %v1971 = vpop.f32.mrb[0].mxu0
      %1972 = vmatprep.mubr.bf16.mxu0 0
      %1973 = vmatmul.mubr.bf16.gmra.mrb[0].mxu0 %v1918
      %v1974 = vpop.f32.mrb[0].mxu0
      %v1975 = vadd.f32 0.0, %v1974
      %v1976 = vpop.f32.mrb[0].mxu0
      %v1977 = vpop.f32.mrb[0].mxu0
      %v1978 = vadd.f32 0.0, %v1977
      %v1979 = vpop.f32.mrb[0].mxu0
      %1980 = vmatprep.mubr.bf16.mxu0 0
      %1981 = vmatmul.mubr.bf16.gmra.mrb[0].mxu0 %v1919
      %v1982 = vpop.f32.mrb[0].mxu0
      %v1983 = vadd.f32 0.0, %v1982
      %v1984 = vpop.f32.mrb[0].mxu0
      %v1985 = vpop.f32.mrb[0].mxu0
      %v1986 = vadd.f32 0.0, %v1985
      %v1987 = vpop.f32.mrb[0].mxu0
      %1988 = vmatprep.mubr.bf16.mxu0 0
      %1989 = vmatmul.mubr.bf16.gmra.mrb[0].mxu0 %v1920
      %v1990 = vpop.f32.mrb[0].mxu0
      %v1991 = vadd.f32 0.0, %v1990
      %v1992 = vpop.f32.mrb[0].mxu0
      %v1993 = vpop.f32.mrb[0].mxu0
      %v1994 = vadd.f32 0.0, %v1993
      %v1995 = vpop.f32.mrb[0].mxu0
      %1996 = vmatprep.mubr.bf16.mxu0 0
      %1997 = vmatmul.mubr.bf16.gmra.mrb[0].mxu0 %v1921
      %v1998 = vpop.f32.mrb[0].mxu0
      %v1999 = vadd.f32 0.0, %v1998
      %v2000 = vpop.f32.mrb[0].mxu0
      %v2001 = vpop.f32.mrb[0].mxu0
      %v2002 = vadd.f32 0.0, %v2001
      %v2003 = vpop.f32.mrb[0].mxu0
      %2004 = vmatprep.mubr.bf16.mxu0 0
      %2005 = vmatmul.mubr.bf16.gmra.mrb[0].mxu0 %v1922
      %v2006 = vpop.f32.mrb[0].mxu0
      %v2007 = vadd.f32 0.0, %v2006
      %v2008 = vpop.f32.mrb[0].mxu0
      %v2009 = vpop.f32.mrb[0].mxu0
      %v2010 = vadd.f32 0.0, %v2009
      %v2011 = vpop.f32.mrb[0].mxu0
      %2012 = vmatprep.mubr.bf16.mxu0 0
      %2013 = vmatmul.mubr.bf16.gmra.mrb[0].mxu0 %v1923
      %v2014 = vpop.f32.mrb[0].mxu0
      %v2015 = vadd.f32 0.0, %v2014
      %v2016 = vpop.f32.mrb[0].mxu0
      %v2017 = vpop.f32.mrb[0].mxu0
      %v2018 = vadd.f32 0.0, %v2017
      %v2019 = vpop.f32.mrb[0].mxu0
      %2020 = vdwg.mxu0
      %v2021 = vrcp.pop %v1885
      %v2022 = vrcp.pop %v1887
      %v2023 = vrcp.pop %v1889
      %v2024 = vrcp.pop %v1891
      %v2025 = vrcp.pop %v1893
      %v2026 = vrcp.pop %v1895
      %v2027 = vrcp.pop %v1897
      %v2028 = vrcp.pop %v1899
      %v2029 = vrcp.pop %v1901
      %v2030 = vrcp.pop %v1903
      %v2031 = vrcp.pop %v1905
      %v2032 = vrcp.pop %v1907
      %v2033 = vrcp.pop %v1909
      %v2034 = vrcp.pop %v1911
      %v2035 = vrcp.pop %v1913
      %v2036 = vrcp.pop %v1915
      %v2037 = vmul.f32 %v1959, %v2021
      %v2038 = vmul.f32 %v1962, %v2022
      %v2039 = vmul.f32 %v1967, %v2023
      %v2040 = vmul.f32 %v1970, %v2024
      %v2041 = vmul.f32 %v1975, %v2025
      %v2042 = vmul.f32 %v1978, %v2026
      %v2043 = vmul.f32 %v1983, %v2027
      %v2044 = vmul.f32 %v1986, %v2028
      %v2045 = vmul.f32 %v1991, %v2029
      %v2046 = vmul.f32 %v1994, %v2030
      %v2047 = vmul.f32 %v1999, %v2031
      %v2048 = vmul.f32 %v2002, %v2032
      %v2049 = vmul.f32 %v2007, %v2033
      %v2050 = vmul.f32 %v2010, %v2034
      %v2051 = vmul.f32 %v2015, %v2035
      %v2052 = vmul.f32 %v2018, %v2036
      %v2053 = vpack.c.bf16 %v2038, %v2037
      %v2054 = vpack.c.bf16 %v2040, %v2039
      %v2055 = vpack.c.bf16 %v2042, %v2041
      %v2056 = vpack.c.bf16 %v2044, %v2043
      %v2057 = vpack.c.bf16 %v2046, %v2045
      %v2058 = vpack.c.bf16 %v2048, %v2047
      %v2059 = vpack.c.bf16 %v2050, %v2049
      %v2060 = vpack.c.bf16 %v2052, %v2051
      %v2061 = vld [vmem:[%s4] sm:$0xff]
      %v2062 = vld [vmem:[%s4 + $0x8] sm:$0xff]
      %v2063 = vld [vmem:[%s4 + $0x10] sm:$0xff]
      %v2064 = vld [vmem:[%s4 + $0x18] sm:$0xff]
      %v2065 = vld [vmem:[%s4 + $0x20] sm:$0xff]
      %v2066 = vld [vmem:[%s4 + $0x28] sm:$0xff]
      %v2067 = vld [vmem:[%s4 + $0x30] sm:$0xff]
      %v2068 = vld [vmem:[%s4 + $0x38] sm:$0xff]
      %v2069 = vld [vmem:[%s4 + $0x40] sm:$0xff]
      %v2070 = vld [vmem:[%s4 + $0x48] sm:$0xff]
      %v2071 = vld [vmem:[%s4 + $0x50] sm:$0xff]
      %v2072 = vld [vmem:[%s4 + $0x58] sm:$0xff]
      %v2073 = vld [vmem:[%s4 + $0x60] sm:$0xff]
      %v2074 = vld [vmem:[%s4 + $0x68] sm:$0xff]
      %v2075 = vld [vmem:[%s4 + $0x70] sm:$0xff]
      %v2076 = vld [vmem:[%s4 + $0x78] sm:$0xff]
      %v2077 = vld [vmem:[%s3 + $0x4] sm:$0xf]
      %v2078 = vld [vmem:[%s3 + $0x14] sm:$0xf]
      %v2079 = vld [vmem:[%s3 + $0x24] sm:$0xf]
      %v2080 = vld [vmem:[%s3 + $0x34] sm:$0xf]
      %v2081 = vld [vmem:[%s3 + $0x44] sm:$0xf]
      %v2082 = vld [vmem:[%s3 + $0x54] sm:$0xf]
      %v2083 = vld [vmem:[%s3 + $0x64] sm:$0xf]
      %v2084 = vld [vmem:[%s3 + $0x74] sm:$0xf]
      %v2085 = vld [vmem:[%s3 + $0x84] sm:$0xf]
      %v2086 = vld [vmem:[%s3 + $0x94] sm:$0xf]
      %v2087 = vld [vmem:[%s3 + $0xa4] sm:$0xf]
      %v2088 = vld [vmem:[%s3 + $0xb4] sm:$0xf]
      %v2089 = vld [vmem:[%s3 + $0xc4] sm:$0xf]
      %v2090 = vld [vmem:[%s3 + $0xd4] sm:$0xf]
      %v2091 = vld [vmem:[%s3 + $0xe4] sm:$0xf]
      %v2092 = vld [vmem:[%s3 + $0xf4] sm:$0xf]
      %v2093 = vld [vmem:[%s3 + $0x104] sm:$0xf]
      %v2094 = vld [vmem:[%s3 + $0x114] sm:$0xf]
      %v2095 = vld [vmem:[%s3 + $0x124] sm:$0xf]
      %v2096 = vld [vmem:[%s3 + $0x134] sm:$0xf]
      %v2097 = vld [vmem:[%s3 + $0x144] sm:$0xf]
      %v2098 = vld [vmem:[%s3 + $0x154] sm:$0xf]
      %v2099 = vld [vmem:[%s3 + $0x164] sm:$0xf]
      %v2100 = vld [vmem:[%s3 + $0x174] sm:$0xf]
      %v2101 = vld [vmem:[%s3 + $0x184] sm:$0xf]
      %v2102 = vld [vmem:[%s3 + $0x194] sm:$0xf]
      %v2103 = vld [vmem:[%s3 + $0x1a4] sm:$0xf]
      %v2104 = vld [vmem:[%s3 + $0x1b4] sm:$0xf]
      %v2105 = vld [vmem:[%s3 + $0x1c4] sm:$0xf]
      %v2106 = vld [vmem:[%s3 + $0x1d4] sm:$0xf]
      %v2107 = vld [vmem:[%s3 + $0x1e4] sm:$0xf]
      %v2108 = vld [vmem:[%s3 + $0x1f4] sm:$0xf]
      %v2141 = vunpack.c.l.b16 %v2077
      %v2142 = vunpack.c.l.b16 %v2078
      %v2143 = vunpack.c.l.b16 %v2079
      %v2144 = vunpack.c.l.b16 %v2080
      %v2145 = vunpack.c.l.b16 %v2081
      %v2146 = vunpack.c.l.b16 %v2082
      %v2147 = vunpack.c.l.b16 %v2083
      %v2148 = vunpack.c.l.b16 %v2084
      %v2149 = vunpack.c.l.b16 %v2085
      %v2150 = vunpack.c.l.b16 %v2086
      %v2151 = vunpack.c.l.b16 %v2087
      %v2152 = vunpack.c.l.b16 %v2088
      %v2153 = vunpack.c.l.b16 %v2089
      %v2154 = vunpack.c.l.b16 %v2090
      %v2155 = vunpack.c.l.b16 %v2091
      %v2156 = vunpack.c.l.b16 %v2092
      %v2157 = vunpack.c.l.b16 %v2093
      %v2158 = vunpack.c.l.b16 %v2094
      %v2159 = vunpack.c.l.b16 %v2095
      %v2160 = vunpack.c.l.b16 %v2096
      %v2161 = vunpack.c.l.b16 %v2097
      %v2162 = vunpack.c.l.b16 %v2098
      %v2163 = vunpack.c.l.b16 %v2099
      %v2164 = vunpack.c.l.b16 %v2100
      %v2165 = vunpack.c.l.b16 %v2101
      %v2166 = vunpack.c.l.b16 %v2102
      %v2167 = vunpack.c.l.b16 %v2103
      %v2168 = vunpack.c.l.b16 %v2104
      %v2169 = vunpack.c.l.b16 %v2105
      %v2170 = vunpack.c.l.b16 %v2106
      %v2171 = vunpack.c.l.b16 %v2107
      %v2172 = vunpack.c.l.b16 %v2108
      %v2173 = vpack.c.b16 %v2142, %v2141
      %v2174 = vpack.c.b16 %v2144, %v2143
      %v2175 = vpack.c.b16 %v2146, %v2145
      %v2176 = vpack.c.b16 %v2148, %v2147
      %v2177 = vpack.c.b16 %v2150, %v2149
      %v2178 = vpack.c.b16 %v2152, %v2151
      %v2179 = vpack.c.b16 %v2154, %v2153
      %v2180 = vpack.c.b16 %v2156, %v2155
      %v2181 = vpack.c.b16 %v2158, %v2157
      %v2182 = vpack.c.b16 %v2160, %v2159
      %v2183 = vpack.c.b16 %v2162, %v2161
      %v2184 = vpack.c.b16 %v2164, %v2163
      %v2185 = vpack.c.b16 %v2166, %v2165
      %v2186 = vpack.c.b16 %v2168, %v2167
      %v2187 = vpack.c.b16 %v2170, %v2169
      %v2188 = vpack.c.b16 %v2172, %v2171
      %2205 = vmatprep.subr.bf16.mxu0 0
      %2206 = vmatpush1.bf16.msra.mxu0 %v2173
      %2207 = vmatprep.subr.bf16.mxu0 0
      %2208 = vmatpush1.bf16.msra.mxu0 %v2174
      %2209 = vmatprep.subr.bf16.mxu0 0
      %2210 = vmatpush1.bf16.msra.mxu0 %v2175
      %2211 = vmatprep.subr.bf16.mxu0 0
      %2212 = vmatpush1.bf16.msra.mxu0 %v2176
      %2213 = vmatprep.subr.bf16.mxu0 0
      %2214 = vmatpush1.bf16.msra.mxu0 %v2177
      %2215 = vmatprep.subr.bf16.mxu0 0
      %2216 = vmatpush1.bf16.msra.mxu0 %v2178
      %2217 = vmatprep.subr.bf16.mxu0 0
      %2218 = vmatpush1.bf16.msra.mxu0 %v2179
      %2219 = vmatprep.subr.bf16.mxu0 0
      %2220 = vmatpush1.bf16.msra.mxu0 %v2180
      %2221 = vmatprep.subr.bf16.mxu0 0
      %2222 = vmatpush1.bf16.msra.mxu0 %v2181
      %2223 = vmatprep.subr.bf16.mxu0 0
      %2224 = vmatpush1.bf16.msra.mxu0 %v2182
      %2225 = vmatprep.subr.bf16.mxu0 0
      %2226 = vmatpush1.bf16.msra.mxu0 %v2183
      %2227 = vmatprep.subr.bf16.mxu0 0
      %2228 = vmatpush1.bf16.msra.mxu0 %v2184
      %2229 = vmatprep.subr.bf16.mxu0 0
      %2230 = vmatpush1.bf16.msra.mxu0 %v2185
      %2231 = vmatprep.subr.bf16.mxu0 0
      %2232 = vmatpush1.bf16.msra.mxu0 %v2186
      %2233 = vmatprep.subr.bf16.mxu0 0
      %2234 = vmatpush1.bf16.msra.mxu0 %v2187
      %2235 = vmatprep.subr.bf16.mxu0 0
      %2236 = vmatpush1.bf16.msra.mxu0 %v2188
      %2237 = vmatprep.mubr.bf16.mxu0 %v734
      %2238 = vmatmul.mubr.bf16.gmra.mrb[0].mxu0 %v733
      %v2239 = vpop.f32.mrb[0].mxu0
      %v2240 = vadd.f32 0.0, %v2239
      %v2241 = vpop.f32.mrb[0].mxu0
      %v2242 = vpop.f32.mrb[0].mxu0
      %v2243 = vadd.f32 0.0, %v2242
      %v2244 = vpop.f32.mrb[0].mxu0
      %2245 = vmatprep.mubr.bf16.mxu0 %v736
      %2246 = vmatmul.mubr.bf16.gmra.mrb[0].mxu0 %v735
      %v2247 = vpop.f32.mrb[0].mxu0
      %v2248 = vadd.f32 0.0, %v2247
      %v2249 = vpop.f32.mrb[0].mxu0
      %v2250 = vpop.f32.mrb[0].mxu0
      %v2251 = vadd.f32 0.0, %v2250
      %v2252 = vpop.f32.mrb[0].mxu0
      %2253 = vmatprep.mubr.bf16.mxu0 %v738
      %2254 = vmatmul.mubr.bf16.gmra.mrb[0].mxu0 %v737
      %v2255 = vpop.f32.mrb[0].mxu0
      %v2256 = vadd.f32 0.0, %v2255
      %v2257 = vpop.f32.mrb[0].mxu0
      %v2258 = vpop.f32.mrb[0].mxu0
      %v2259 = vadd.f32 0.0, %v2258
      %v2260 = vpop.f32.mrb[0].mxu0
      %2261 = vmatprep.mubr.bf16.mxu0 %v740
      %2262 = vmatmul.mubr.bf16.gmra.mrb[0].mxu0 %v739
      %v2263 = vpop.f32.mrb[0].mxu0
      %v2264 = vadd.f32 0.0, %v2263
      %v2265 = vpop.f32.mrb[0].mxu0
      %v2266 = vpop.f32.mrb[0].mxu0
      %v2267 = vadd.f32 0.0, %v2266
      %v2268 = vpop.f32.mrb[0].mxu0
      %2269 = vmatprep.mubr.bf16.mxu0 %v742
      %2270 = vmatmul.mubr.bf16.gmra.mrb[0].mxu0 %v741
      %v2271 = vpop.f32.mrb[0].mxu0
      %v2272 = vadd.f32 0.0, %v2271
      %v2273 = vpop.f32.mrb[0].mxu0
      %v2274 = vpop.f32.mrb[0].mxu0
      %v2275 = vadd.f32 0.0, %v2274
      %v2276 = vpop.f32.mrb[0].mxu0
      %2277 = vmatprep.mubr.bf16.mxu0 %v744
      %2278 = vmatmul.mubr.bf16.gmra.mrb[0].mxu0 %v743
      %v2279 = vpop.f32.mrb[0].mxu0
      %v2280 = vadd.f32 0.0, %v2279
      %v2281 = vpop.f32.mrb[0].mxu0
      %v2282 = vpop.f32.mrb[0].mxu0
      %v2283 = vadd.f32 0.0, %v2282
      %v2284 = vpop.f32.mrb[0].mxu0
      %2285 = vmatprep.mubr.bf16.mxu0 %v746
      %2286 = vmatmul.mubr.bf16.gmra.mrb[0].mxu0 %v745
      %v2287 = vpop.f32.mrb[0].mxu0
      %v2288 = vadd.f32 0.0, %v2287
      %v2289 = vpop.f32.mrb[0].mxu0
      %v2290 = vpop.f32.mrb[0].mxu0
      %v2291 = vadd.f32 0.0, %v2290
      %v2292 = vpop.f32.mrb[0].mxu0
      %2293 = vmatprep.mubr.bf16.mxu0 %v748
      %2294 = vmatmul.mubr.bf16.gmra.mrb[0].mxu0 %v747
      %v2295 = vpop.f32.mrb[0].mxu0
      %v2296 = vadd.f32 0.0, %v2295
      %v2297 = vpop.f32.mrb[0].mxu0
      %v2298 = vpop.f32.mrb[0].mxu0
      %v2299 = vadd.f32 0.0, %v2298
      %v2300 = vpop.f32.mrb[0].mxu0
      %2301 = vdwg.mxu0
      %v2302 = vmul.f32 %v2240, %v749
      %v2303 = vmul.f32 %v2243, %v750
      %v2304 = vmul.f32 %v2248, %v751
      %v2305 = vmul.f32 %v2251, %v752
      %v2306 = vmul.f32 %v2256, %v753
      %v2307 = vmul.f32 %v2259, %v754
      %v2308 = vmul.f32 %v2264, %v755
      %v2309 = vmul.f32 %v2267, %v756
      %v2310 = vmul.f32 %v2272, %v757
      %v2311 = vmul.f32 %v2275, %v758
      %v2312 = vmul.f32 %v2280, %v759
      %v2313 = vmul.f32 %v2283, %v760
      %v2314 = vmul.f32 %v2288, %v761
      %v2315 = vmul.f32 %v2291, %v762
      %v2316 = vmul.f32 %v2296, %v763
      %v2317 = vmul.f32 %v2299, %v764
      %2318 = vrot.lane.b32.xlu0 %v2240, 64
      %v2319 = vpop.permute.xlu0 %2318
      %2320 = vrot.lane.b32.xlu0 %v2243, 64
      %v2321 = vpop.permute.xlu0 %2320
      %2322 = vrot.lane.b32.xlu0 %v2248, 64
      %v2323 = vpop.permute.xlu0 %2322
      %2324 = vrot.lane.b32.xlu0 %v2251, 64
      %v2325 = vpop.permute.xlu0 %2324
      %2326 = vrot.lane.b32.xlu0 %v2256, 64
      %v2327 = vpop.permute.xlu0 %2326
      %2328 = vrot.lane.b32.xlu0 %v2259, 64
      %v2329 = vpop.permute.xlu0 %2328
      %2330 = vrot.lane.b32.xlu0 %v2264, 64
      %v2331 = vpop.permute.xlu0 %2330
      %2332 = vrot.lane.b32.xlu0 %v2267, 64
      %v2333 = vpop.permute.xlu0 %2332
      %2334 = vrot.lane.b32.xlu0 %v2272, 64
      %v2335 = vpop.permute.xlu0 %2334
      %2336 = vrot.lane.b32.xlu0 %v2275, 64
      %v2337 = vpop.permute.xlu0 %2336
      %2338 = vrot.lane.b32.xlu0 %v2280, 64
      %v2339 = vpop.permute.xlu0 %2338
      %2340 = vrot.lane.b32.xlu0 %v2283, 64
      %v2341 = vpop.permute.xlu0 %2340
      %2342 = vrot.lane.b32.xlu0 %v2288, 64
      %v2343 = vpop.permute.xlu0 %2342
      %2344 = vrot.lane.b32.xlu0 %v2291, 64
      %v2345 = vpop.permute.xlu0 %2344
      %2346 = vrot.lane.b32.xlu0 %v2296, 64
      %v2347 = vpop.permute.xlu0 %2346
      %2348 = vrot.lane.b32.xlu0 %v2299, 64
      %v2349 = vpop.permute.xlu0 %2348
      %v2350 = vmul.f32 %v2319, %v765
      %v2351 = vmul.f32 %v2321, %v766
      %v2352 = vmul.f32 %v2323, %v767
      %v2353 = vmul.f32 %v2325, %v768
      %v2354 = vmul.f32 %v2327, %v769
      %v2355 = vmul.f32 %v2329, %v770
      %v2356 = vmul.f32 %v2331, %v771
      %v2357 = vmul.f32 %v2333, %v772
      %v2358 = vmul.f32 %v2335, %v773
      %v2359 = vmul.f32 %v2337, %v774
      %v2360 = vmul.f32 %v2339, %v775
      %v2361 = vmul.f32 %v2341, %v776
      %v2362 = vmul.f32 %v2343, %v777
      %v2363 = vmul.f32 %v2345, %v778
      %v2364 = vmul.f32 %v2347, %v779
      %v2365 = vmul.f32 %v2349, %v780
      %v2366 = vadd.f32 %v2302, %v2350
      %v2367 = vadd.f32 %v2303, %v2351
      %v2368 = vadd.f32 %v2304, %v2352
      %v2369 = vadd.f32 %v2305, %v2353
      %v2370 = vadd.f32 %v2306, %v2354
      %v2371 = vadd.f32 %v2307, %v2355
      %v2372 = vadd.f32 %v2308, %v2356
      %v2373 = vadd.f32 %v2309, %v2357
      %v2374 = vadd.f32 %v2310, %v2358
      %v2375 = vadd.f32 %v2311, %v2359
      %v2376 = vadd.f32 %v2312, %v2360
      %v2377 = vadd.f32 %v2313, %v2361
      %v2378 = vadd.f32 %v2314, %v2362
      %v2379 = vadd.f32 %v2315, %v2363
      %v2380 = vadd.f32 %v2316, %v2364
      %v2381 = vadd.f32 %v2317, %v2365
      %v2382 = vpack.c.bf16 %v2367, %v2366
      %v2383 = vpack.c.bf16 %v2369, %v2368
      %v2384 = vpack.c.bf16 %v2371, %v2370
      %v2385 = vpack.c.bf16 %v2373, %v2372
      %v2386 = vpack.c.bf16 %v2375, %v2374
      %v2387 = vpack.c.bf16 %v2377, %v2376
      %v2388 = vpack.c.bf16 %v2379, %v2378
      %v2389 = vpack.c.bf16 %v2381, %v2380
      %2390 = vmatprep.subr.bf16.mxu0 0
      %2391 = vmatpush1.bf16.xpose.msra.mxu0 %v1346
      %2392 = vmatprep.subr.bf16.mxu0 0
      %2393 = vmatpush1.bf16.xpose.msra.mxu0 %v1347
      %2394 = vmatprep.subr.bf16.mxu0 0
      %2395 = vmatpush1.bf16.xpose.msra.mxu0 %v1348
      %2396 = vmatprep.subr.bf16.mxu0 0
      %2397 = vmatpush1.bf16.xpose.msra.mxu0 %v1349
      %2398 = vmatprep.subr.bf16.mxu0 0
      %2399 = vmatpush1.bf16.xpose.msra.mxu0 %v1350
      %2400 = vmatprep.subr.bf16.mxu0 0
      %2401 = vmatpush1.bf16.xpose.msra.mxu0 %v1351
      %2402 = vmatprep.subr.bf16.mxu0 0
      %2403 = vmatpush1.bf16.xpose.msra.mxu0 %v1352
      %2404 = vmatprep.subr.bf16.mxu0 0
      %2405 = vmatpush1.bf16.xpose.msra.mxu0 %v1353
      %2406 = vmatprep.subr.bf16.mxu0 0
      %2407 = vmatpush1.bf16.xpose.msra.mxu0 0
      %2408 = vmatprep.subr.bf16.mxu0 0
      %2409 = vmatpush1.bf16.xpose.msra.mxu0 0
      %2410 = vmatprep.subr.bf16.mxu0 0
      %2411 = vmatpush1.bf16.xpose.msra.mxu0 0
      %2412 = vmatprep.subr.bf16.mxu0 0
      %2413 = vmatpush1.bf16.xpose.msra.mxu0 0
      %2414 = vmatprep.subr.bf16.mxu0 0
      %2415 = vmatpush1.bf16.xpose.msra.mxu0 0
      %2416 = vmatprep.subr.bf16.mxu0 0
      %2417 = vmatpush1.bf16.xpose.msra.mxu0 0
      %2418 = vmatprep.subr.bf16.mxu0 0
      %2419 = vmatpush1.bf16.xpose.msra.mxu0 0
      %2420 = vmatprep.subr.bf16.mxu0 0
      %2421 = vmatpush1.bf16.xpose.msra.mxu0 0
      %2422 = vmatprep.mubr.bf16.mxu0 0
      %2423 = vmatmul.mubr.bf16.gmra.mrb[0].mxu0 %v2382
      %v2424 = vpop.f32.mrb[0].mxu0
      %v2425 = vadd.f32 0.0, %v2424
      %v2426 = vpop.f32.mrb[0].mxu0
      %v2427 = vpop.f32.mrb[0].mxu0
      %v2428 = vadd.f32 0.0, %v2427
      %v2429 = vpop.f32.mrb[0].mxu0
      %2430 = vmatprep.mubr.bf16.mxu0 0
      %2431 = vmatmul.mubr.bf16.gmra.mrb[0].mxu0 %v2383
      %v2432 = vpop.f32.mrb[0].mxu0
      %v2433 = vadd.f32 0.0, %v2432
      %v2434 = vpop.f32.mrb[0].mxu0
      %v2435 = vpop.f32.mrb[0].mxu0
      %v2436 = vadd.f32 0.0, %v2435
      %v2437 = vpop.f32.mrb[0].mxu0
      %2438 = vmatprep.mubr.bf16.mxu0 0
      %2439 = vmatmul.mubr.bf16.gmra.mrb[0].mxu0 %v2384
      %v2440 = vpop.f32.mrb[0].mxu0
      %v2441 = vadd.f32 0.0, %v2440
      %v2442 = vpop.f32.mrb[0].mxu0
      %v2443 = vpop.f32.mrb[0].mxu0
      %v2444 = vadd.f32 0.0, %v2443
      %v2445 = vpop.f32.mrb[0].mxu0
      %2446 = vmatprep.mubr.bf16.mxu0 0
      %2447 = vmatmul.mubr.bf16.gmra.mrb[0].mxu0 %v2385
      %v2448 = vpop.f32.mrb[0].mxu0
      %v2449 = vadd.f32 0.0, %v2448
      %v2450 = vpop.f32.mrb[0].mxu0
      %v2451 = vpop.f32.mrb[0].mxu0
      %v2452 = vadd.f32 0.0, %v2451
      %v2453 = vpop.f32.mrb[0].mxu0
      %2454 = vmatprep.mubr.bf16.mxu0 0
      %2455 = vmatmul.mubr.bf16.gmra.mrb[0].mxu0 %v2386
      %v2456 = vpop.f32.mrb[0].mxu0
      %v2457 = vadd.f32 0.0, %v2456
      %v2458 = vpop.f32.mrb[0].mxu0
      %v2459 = vpop.f32.mrb[0].mxu0
      %v2460 = vadd.f32 0.0, %v2459
      %v2461 = vpop.f32.mrb[0].mxu0
      %2462 = vmatprep.mubr.bf16.mxu0 0
      %2463 = vmatmul.mubr.bf16.gmra.mrb[0].mxu0 %v2387
      %v2464 = vpop.f32.mrb[0].mxu0
      %v2465 = vadd.f32 0.0, %v2464
      %v2466 = vpop.f32.mrb[0].mxu0
      %v2467 = vpop.f32.mrb[0].mxu0
      %v2468 = vadd.f32 0.0, %v2467
      %v2469 = vpop.f32.mrb[0].mxu0
      %2470 = vmatprep.mubr.bf16.mxu0 0
      %2471 = vmatmul.mubr.bf16.gmra.mrb[0].mxu0 %v2388
      %v2472 = vpop.f32.mrb[0].mxu0
      %v2473 = vadd.f32 0.0, %v2472
      %v2474 = vpop.f32.mrb[0].mxu0
      %v2475 = vpop.f32.mrb[0].mxu0
      %v2476 = vadd.f32 0.0, %v2475
      %v2477 = vpop.f32.mrb[0].mxu0
      %2478 = vmatprep.mubr.bf16.mxu0 0
      %2479 = vmatmul.mubr.bf16.gmra.mrb[0].mxu0 %v2389
      %v2480 = vpop.f32.mrb[0].mxu0
      %v2481 = vadd.f32 0.0, %v2480
      %v2482 = vpop.f32.mrb[0].mxu0
      %v2483 = vpop.f32.mrb[0].mxu0
      %v2484 = vadd.f32 0.0, %v2483
      %v2485 = vpop.f32.mrb[0].mxu0
      %2486 = vdwg.mxu0
      %v2487 = vmul.f32 %v2425, 0.088388346
      %v2488 = vmul.f32 %v2428, 0.088388346
      %v2489 = vmul.f32 %v2433, 0.088388346
      %v2490 = vmul.f32 %v2436, 0.088388346
      %v2491 = vmul.f32 %v2441, 0.088388346
      %v2492 = vmul.f32 %v2444, 0.088388346
      %v2493 = vmul.f32 %v2449, 0.088388346
      %v2494 = vmul.f32 %v2452, 0.088388346
      %v2495 = vmul.f32 %v2457, 0.088388346
      %v2496 = vmul.f32 %v2460, 0.088388346
      %v2497 = vmul.f32 %v2465, 0.088388346
      %v2498 = vmul.f32 %v2468, 0.088388346
      %v2499 = vmul.f32 %v2473, 0.088388346
      %v2500 = vmul.f32 %v2476, 0.088388346
      %v2501 = vmul.f32 %v2481, 0.088388346
      %v2502 = vmul.f32 %v2484, 0.088388346
      %v2503 = vsel %vm800, %v2487, -1e+30
      %v2504 = vsel %vm801, %v2488, -1e+30
      %v2505 = vsel %vm802, %v2489, -1e+30
      %v2506 = vsel %vm803, %v2490, -1e+30
      %v2507 = vsel %vm804, %v2491, -1e+30
      %v2508 = vsel %vm805, %v2492, -1e+30
      %v2509 = vsel %vm806, %v2493, -1e+30
      %v2510 = vsel %vm807, %v2494, -1e+30
      %v2511 = vsel %vm808, %v2495, -1e+30
      %v2512 = vsel %vm809, %v2496, -1e+30
      %v2513 = vsel %vm810, %v2497, -1e+30
      %v2514 = vsel %vm811, %v2498, -1e+30
      %v2515 = vsel %vm812, %v2499, -1e+30
      %v2516 = vsel %vm813, %v2500, -1e+30
      %v2517 = vsel %vm814, %v2501, -1e+30
      %v2518 = vsel %vm815, %v2502, -1e+30
      %2519 = vmax.xlane.f32.xlu0 %v2503
      %v2520 = vpop.xlane.xlu0 %2519
      %2521 = vmax.xlane.f32.xlu0 %v2504
      %v2522 = vpop.xlane.xlu0 %2521
      %2523 = vmax.xlane.f32.xlu0 %v2505
      %v2524 = vpop.xlane.xlu0 %2523
      %2525 = vmax.xlane.f32.xlu0 %v2506
      %v2526 = vpop.xlane.xlu0 %2525
      %2527 = vmax.xlane.f32.xlu0 %v2507
      %v2528 = vpop.xlane.xlu0 %2527
      %2529 = vmax.xlane.f32.xlu0 %v2508
      %v2530 = vpop.xlane.xlu0 %2529
      %2531 = vmax.xlane.f32.xlu0 %v2509
      %v2532 = vpop.xlane.xlu0 %2531
      %2533 = vmax.xlane.f32.xlu0 %v2510
      %v2534 = vpop.xlane.xlu0 %2533
      %2535 = vmax.xlane.f32.xlu0 %v2511
      %v2536 = vpop.xlane.xlu0 %2535
      %2537 = vmax.xlane.f32.xlu0 %v2512
      %v2538 = vpop.xlane.xlu0 %2537
      %2539 = vmax.xlane.f32.xlu0 %v2513
      %v2540 = vpop.xlane.xlu0 %2539
      %2541 = vmax.xlane.f32.xlu0 %v2514
      %v2542 = vpop.xlane.xlu0 %2541
      %2543 = vmax.xlane.f32.xlu0 %v2515
      %v2544 = vpop.xlane.xlu0 %2543
      %2545 = vmax.xlane.f32.xlu0 %v2516
      %v2546 = vpop.xlane.xlu0 %2545
      %2547 = vmax.xlane.f32.xlu0 %v2517
      %v2548 = vpop.xlane.xlu0 %2547
      %2549 = vmax.xlane.f32.xlu0 %v2518
      %v2550 = vpop.xlane.xlu0 %2549
      %v2551 = vsub.f32 %v2503, %v2520
      %v2552 = vsub.f32 %v2504, %v2522
      %v2553 = vsub.f32 %v2505, %v2524
      %v2554 = vsub.f32 %v2506, %v2526
      %v2555 = vsub.f32 %v2507, %v2528
      %v2556 = vsub.f32 %v2508, %v2530
      %v2557 = vsub.f32 %v2509, %v2532
      %v2558 = vsub.f32 %v2510, %v2534
      %v2559 = vsub.f32 %v2511, %v2536
      %v2560 = vsub.f32 %v2512, %v2538
      %v2561 = vsub.f32 %v2513, %v2540
      %v2562 = vsub.f32 %v2514, %v2542
      %v2563 = vsub.f32 %v2515, %v2544
      %v2564 = vsub.f32 %v2516, %v2546
      %v2565 = vsub.f32 %v2517, %v2548
      %v2566 = vsub.f32 %v2518, %v2550
      %v2567 = vmul.f32 %v2551, 1.442695
      %v2568 = vpow.pop %v2567
      %v2569 = vmul.f32 %v2552, 1.442695
      %v2570 = vpow.pop %v2569
      %v2571 = vmul.f32 %v2553, 1.442695
      %v2572 = vpow.pop %v2571
      %v2573 = vmul.f32 %v2554, 1.442695
      %v2574 = vpow.pop %v2573
      %v2575 = vmul.f32 %v2555, 1.442695
      %v2576 = vpow.pop %v2575
      %v2577 = vmul.f32 %v2556, 1.442695
      %v2578 = vpow.pop %v2577
      %v2579 = vmul.f32 %v2557, 1.442695
      %v2580 = vpow.pop %v2579
      %v2581 = vmul.f32 %v2558, 1.442695
      %v2582 = vpow.pop %v2581
      %v2583 = vmul.f32 %v2559, 1.442695
      %v2584 = vpow.pop %v2583
      %v2585 = vmul.f32 %v2560, 1.442695
      %v2586 = vpow.pop %v2585
      %v2587 = vmul.f32 %v2561, 1.442695
      %v2588 = vpow.pop %v2587
      %v2589 = vmul.f32 %v2562, 1.442695
      %v2590 = vpow.pop %v2589
      %v2591 = vmul.f32 %v2563, 1.442695
      %v2592 = vpow.pop %v2591
      %v2593 = vmul.f32 %v2564, 1.442695
      %v2594 = vpow.pop %v2593
      %v2595 = vmul.f32 %v2565, 1.442695
      %v2596 = vpow.pop %v2595
      %v2597 = vmul.f32 %v2566, 1.442695
      %v2598 = vpow.pop %v2597
      %2599 = vadd.xlane.f32.xlu0 %v2568
      %v2600 = vpop.xlane.xlu0 %2599
      %2601 = vadd.xlane.f32.xlu0 %v2570
      %v2602 = vpop.xlane.xlu0 %2601
      %2603 = vadd.xlane.f32.xlu0 %v2572
      %v2604 = vpop.xlane.xlu0 %2603
      %2605 = vadd.xlane.f32.xlu0 %v2574
      %v2606 = vpop.xlane.xlu0 %2605
      %2607 = vadd.xlane.f32.xlu0 %v2576
      %v2608 = vpop.xlane.xlu0 %2607
      %2609 = vadd.xlane.f32.xlu0 %v2578
      %v2610 = vpop.xlane.xlu0 %2609
      %2611 = vadd.xlane.f32.xlu0 %v2580
      %v2612 = vpop.xlane.xlu0 %2611
      %2613 = vadd.xlane.f32.xlu0 %v2582
      %v2614 = vpop.xlane.xlu0 %2613
      %2615 = vadd.xlane.f32.xlu0 %v2584
      %v2616 = vpop.xlane.xlu0 %2615
      %2617 = vadd.xlane.f32.xlu0 %v2586
      %v2618 = vpop.xlane.xlu0 %2617
      %2619 = vadd.xlane.f32.xlu0 %v2588
      %v2620 = vpop.xlane.xlu0 %2619
      %2621 = vadd.xlane.f32.xlu0 %v2590
      %v2622 = vpop.xlane.xlu0 %2621
      %2623 = vadd.xlane.f32.xlu0 %v2592
      %v2624 = vpop.xlane.xlu0 %2623
      %2625 = vadd.xlane.f32.xlu0 %v2594
      %v2626 = vpop.xlane.xlu0 %2625
      %2627 = vadd.xlane.f32.xlu0 %v2596
      %v2628 = vpop.xlane.xlu0 %2627
      %2629 = vadd.xlane.f32.xlu0 %v2598
      %v2630 = vpop.xlane.xlu0 %2629
      %v2631 = vpack.c.bf16 %v2570, %v2568
      %v2632 = vpack.c.bf16 %v2574, %v2572
      %v2633 = vpack.c.bf16 %v2578, %v2576
      %v2634 = vpack.c.bf16 %v2582, %v2580
      %v2635 = vpack.c.bf16 %v2586, %v2584
      %v2636 = vpack.c.bf16 %v2590, %v2588
      %v2637 = vpack.c.bf16 %v2594, %v2592
      %v2638 = vpack.c.bf16 %v2598, %v2596
      %2639 = vmatprep.subr.bf16.mxu0 0
      %2640 = vmatpush1.bf16.msra.mxu0 %v1354
      %2641 = vmatprep.subr.bf16.mxu0 0
      %2642 = vmatpush1.bf16.msra.mxu0 %v1355
      %2643 = vmatprep.subr.bf16.mxu0 0
      %2644 = vmatpush1.bf16.msra.mxu0 %v1356
      %2645 = vmatprep.subr.bf16.mxu0 0
      %2646 = vmatpush1.bf16.msra.mxu0 %v1357
      %2647 = vmatprep.subr.bf16.mxu0 0
      %2648 = vmatpush1.bf16.msra.mxu0 %v1358
      %2649 = vmatprep.subr.bf16.mxu0 0
      %2650 = vmatpush1.bf16.msra.mxu0 %v1359
      %2651 = vmatprep.subr.bf16.mxu0 0
      %2652 = vmatpush1.bf16.msra.mxu0 %v1360
      %2653 = vmatprep.subr.bf16.mxu0 0
      %2654 = vmatpush1.bf16.msra.mxu0 %v1361
      %2655 = vmatprep.subr.bf16.mxu0 0
      %2656 = vmatpush1.bf16.msra.mxu0 0
      %2657 = vmatprep.subr.bf16.mxu0 0
      %2658 = vmatpush1.bf16.msra.mxu0 0
      %2659 = vmatprep.subr.bf16.mxu0 0
      %2660 = vmatpush1.bf16.msra.mxu0 0
      %2661 = vmatprep.subr.bf16.mxu0 0
      %2662 = vmatpush1.bf16.msra.mxu0 0
      %2663 = vmatprep.subr.bf16.mxu0 0
      %2664 = vmatpush1.bf16.msra.mxu0 0
      %2665 = vmatprep.subr.bf16.mxu0 0
      %2666 = vmatpush1.bf16.msra.mxu0 0
      %2667 = vmatprep.subr.bf16.mxu0 0
      %2668 = vmatpush1.bf16.msra.mxu0 0
      %2669 = vmatprep.subr.bf16.mxu0 0
      %2670 = vmatpush1.bf16.msra.mxu0 0
      %2671 = vmatprep.mubr.bf16.mxu0 0
      %2672 = vmatmul.mubr.bf16.gmra.mrb[0].mxu0 %v2631
      %v2673 = vpop.f32.mrb[0].mxu0
      %v2674 = vadd.f32 0.0, %v2673
      %v2675 = vpop.f32.mrb[0].mxu0
      %v2676 = vpop.f32.mrb[0].mxu0
      %v2677 = vadd.f32 0.0, %v2676
      %v2678 = vpop.f32.mrb[0].mxu0
      %2679 = vmatprep.mubr.bf16.mxu0 0
      %2680 = vmatmul.mubr.bf16.gmra.mrb[0].mxu0 %v2632
      %v2681 = vpop.f32.mrb[0].mxu0
      %v2682 = vadd.f32 0.0, %v2681
      %v2683 = vpop.f32.mrb[0].mxu0
      %v2684 = vpop.f32.mrb[0].mxu0
      %v2685 = vadd.f32 0.0, %v2684
      %v2686 = vpop.f32.mrb[0].mxu0
      %2687 = vmatprep.mubr.bf16.mxu0 0
      %2688 = vmatmul.mubr.bf16.gmra.mrb[0].mxu0 %v2633
      %v2689 = vpop.f32.mrb[0].mxu0
      %v2690 = vadd.f32 0.0, %v2689
      %v2691 = vpop.f32.mrb[0].mxu0
      %v2692 = vpop.f32.mrb[0].mxu0
      %v2693 = vadd.f32 0.0, %v2692
      %v2694 = vpop.f32.mrb[0].mxu0
      %2695 = vmatprep.mubr.bf16.mxu0 0
      %2696 = vmatmul.mubr.bf16.gmra.mrb[0].mxu0 %v2634
      %v2697 = vpop.f32.mrb[0].mxu0
      %v2698 = vadd.f32 0.0, %v2697
      %v2699 = vpop.f32.mrb[0].mxu0
      %v2700 = vpop.f32.mrb[0].mxu0
      %v2701 = vadd.f32 0.0, %v2700
      %v2702 = vpop.f32.mrb[0].mxu0
      %2703 = vmatprep.mubr.bf16.mxu0 0
      %2704 = vmatmul.mubr.bf16.gmra.mrb[0].mxu0 %v2635
      %v2705 = vpop.f32.mrb[0].mxu0
      %v2706 = vadd.f32 0.0, %v2705
      %v2707 = vpop.f32.mrb[0].mxu0
      %v2708 = vpop.f32.mrb[0].mxu0
      %v2709 = vadd.f32 0.0, %v2708
      %v2710 = vpop.f32.mrb[0].mxu0
      %2711 = vmatprep.mubr.bf16.mxu0 0
      %2712 = vmatmul.mubr.bf16.gmra.mrb[0].mxu0 %v2636
      %v2713 = vpop.f32.mrb[0].mxu0
      %v2714 = vadd.f32 0.0, %v2713
      %v2715 = vpop.f32.mrb[0].mxu0
      %v2716 = vpop.f32.mrb[0].mxu0
      %v2717 = vadd.f32 0.0, %v2716
      %v2718 = vpop.f32.mrb[0].mxu0
      %2719 = vmatprep.mubr.bf16.mxu0 0
      %2720 = vmatmul.mubr.bf16.gmra.mrb[0].mxu0 %v2637
      %v2721 = vpop.f32.mrb[0].mxu0
      %v2722 = vadd.f32 0.0, %v2721
      %v2723 = vpop.f32.mrb[0].mxu0
      %v2724 = vpop.f32.mrb[0].mxu0
      %v2725 = vadd.f32 0.0, %v2724
      %v2726 = vpop.f32.mrb[0].mxu0
      %2727 = vmatprep.mubr.bf16.mxu0 0
      %2728 = vmatmul.mubr.bf16.gmra.mrb[0].mxu0 %v2638
      %v2729 = vpop.f32.mrb[0].mxu0
      %v2730 = vadd.f32 0.0, %v2729
      %v2731 = vpop.f32.mrb[0].mxu0
      %v2732 = vpop.f32.mrb[0].mxu0
      %v2733 = vadd.f32 0.0, %v2732
      %v2734 = vpop.f32.mrb[0].mxu0
      %2735 = vdwg.mxu0
      %v2736 = vrcp.pop %v2600
      %v2737 = vrcp.pop %v2602
      %v2738 = vrcp.pop %v2604
      %v2739 = vrcp.pop %v2606
      %v2740 = vrcp.pop %v2608
      %v2741 = vrcp.pop %v2610
      %v2742 = vrcp.pop %v2612
      %v2743 = vrcp.pop %v2614
      %v2744 = vrcp.pop %v2616
      %v2745 = vrcp.pop %v2618
      %v2746 = vrcp.pop %v2620
      %v2747 = vrcp.pop %v2622
      %v2748 = vrcp.pop %v2624
      %v2749 = vrcp.pop %v2626
      %v2750 = vrcp.pop %v2628
      %v2751 = vrcp.pop %v2630
      %v2752 = vmul.f32 %v2674, %v2736
      %v2753 = vmul.f32 %v2677, %v2737
      %v2754 = vmul.f32 %v2682, %v2738
      %v2755 = vmul.f32 %v2685, %v2739
      %v2756 = vmul.f32 %v2690, %v2740
      %v2757 = vmul.f32 %v2693, %v2741
      %v2758 = vmul.f32 %v2698, %v2742
      %v2759 = vmul.f32 %v2701, %v2743
      %v2760 = vmul.f32 %v2706, %v2744
      %v2761 = vmul.f32 %v2709, %v2745
      %v2762 = vmul.f32 %v2714, %v2746
      %v2763 = vmul.f32 %v2717, %v2747
      %v2764 = vmul.f32 %v2722, %v2748
      %v2765 = vmul.f32 %v2725, %v2749
      %v2766 = vmul.f32 %v2730, %v2750
      %v2767 = vmul.f32 %v2733, %v2751
      %v2768 = vpack.c.bf16 %v2753, %v2752
      %v2769 = vpack.c.bf16 %v2755, %v2754
      %v2770 = vpack.c.bf16 %v2757, %v2756
      %v2771 = vpack.c.bf16 %v2759, %v2758
      %v2772 = vpack.c.bf16 %v2761, %v2760
      %v2773 = vpack.c.bf16 %v2763, %v2762
      %v2774 = vpack.c.bf16 %v2765, %v2764
      %v2775 = vpack.c.bf16 %v2767, %v2766
      %v2776 = vld [vmem:[%s4 + $0x80] sm:$0xff]
      %v2777 = vld [vmem:[%s4 + $0x88] sm:$0xff]
      %v2778 = vld [vmem:[%s4 + $0x90] sm:$0xff]
      %v2779 = vld [vmem:[%s4 + $0x98] sm:$0xff]
      %v2780 = vld [vmem:[%s4 + $0xa0] sm:$0xff]
      %v2781 = vld [vmem:[%s4 + $0xa8] sm:$0xff]
      %v2782 = vld [vmem:[%s4 + $0xb0] sm:$0xff]
      %v2783 = vld [vmem:[%s4 + $0xb8] sm:$0xff]
      %v2784 = vld [vmem:[%s4 + $0xc0] sm:$0xff]
      %v2785 = vld [vmem:[%s4 + $0xc8] sm:$0xff]
      %v2786 = vld [vmem:[%s4 + $0xd0] sm:$0xff]
      %v2787 = vld [vmem:[%s4 + $0xd8] sm:$0xff]
      %v2788 = vld [vmem:[%s4 + $0xe0] sm:$0xff]
      %v2789 = vld [vmem:[%s4 + $0xe8] sm:$0xff]
      %v2790 = vld [vmem:[%s4 + $0xf0] sm:$0xff]
      %v2791 = vld [vmem:[%s4 + $0xf8] sm:$0xff]
      %v2808 = vunpack.c.l.b16 %v2776
      %v2809 = vunpack.c.h.b16 %v2776
      %v2810 = vunpack.c.l.b16 %v2777
      %v2811 = vunpack.c.h.b16 %v2777
      %v2812 = vunpack.c.l.b16 %v2778
      %v2813 = vunpack.c.h.b16 %v2778
      %v2814 = vunpack.c.l.b16 %v2779
      %v2815 = vunpack.c.h.b16 %v2779
      %v2816 = vunpack.c.l.b16 %v2780
      %v2817 = vunpack.c.h.b16 %v2780
      %v2818 = vunpack.c.l.b16 %v2781
      %v2819 = vunpack.c.h.b16 %v2781
      %v2820 = vunpack.c.l.b16 %v2782
      %v2821 = vunpack.c.h.b16 %v2782
      %v2822 = vunpack.c.l.b16 %v2783
      %v2823 = vunpack.c.h.b16 %v2783
      %v2824 = vunpack.c.l.b16 %v2784
      %v2825 = vunpack.c.h.b16 %v2784
      %v2826 = vunpack.c.l.b16 %v2785
      %v2827 = vunpack.c.h.b16 %v2785
      %v2828 = vunpack.c.l.b16 %v2786
      %v2829 = vunpack.c.h.b16 %v2786
      %v2830 = vunpack.c.l.b16 %v2787
      %v2831 = vunpack.c.h.b16 %v2787
      %v2832 = vunpack.c.l.b16 %v2788
      %v2833 = vunpack.c.h.b16 %v2788
      %v2834 = vunpack.c.l.b16 %v2789
      %v2835 = vunpack.c.h.b16 %v2789
      %v2836 = vunpack.c.l.b16 %v2790
      %v2837 = vunpack.c.h.b16 %v2790
      %v2838 = vunpack.c.l.b16 %v2791
      %v2839 = vunpack.c.h.b16 %v2791
      %v2840 = vpack.c.b16 %v2810, %v2808
      %v2841 = vpack.c.b16 %v2811, %v2809
      %v2842 = vpack.c.b16 %v2814, %v2812
      %v2843 = vpack.c.b16 %v2815, %v2813
      %v2844 = vpack.c.b16 %v2818, %v2816
      %v2845 = vpack.c.b16 %v2819, %v2817
      %v2846 = vpack.c.b16 %v2822, %v2820
      %v2847 = vpack.c.b16 %v2823, %v2821
      %v2848 = vpack.c.b16 %v2826, %v2824
      %v2849 = vpack.c.b16 %v2827, %v2825
      %v2850 = vpack.c.b16 %v2830, %v2828
      %v2851 = vpack.c.b16 %v2831, %v2829
      %v2852 = vpack.c.b16 %v2834, %v2832
      %v2853 = vpack.c.b16 %v2835, %v2833
      %v2854 = vpack.c.b16 %v2838, %v2836
      %v2855 = vpack.c.b16 %v2839, %v2837
      %2872 = vmatprep.subr.bf16.mxu0 %v2841
      %2873 = vmatpush1.bf16.msra.mxu0 %v2840
      %2874 = vmatprep.subr.bf16.mxu0 %v2843
      %2875 = vmatpush1.bf16.msra.mxu0 %v2842
      %2876 = vmatprep.subr.bf16.mxu0 %v2845
      %2877 = vmatpush1.bf16.msra.mxu0 %v2844
      %2878 = vmatprep.subr.bf16.mxu0 %v2847
      %2879 = vmatpush1.bf16.msra.mxu0 %v2846
      %2880 = vmatprep.subr.bf16.mxu0 %v2849
      %2881 = vmatpush1.bf16.msra.mxu0 %v2848
      %2882 = vmatprep.subr.bf16.mxu0 %v2851
      %2883 = vmatpush1.bf16.msra.mxu0 %v2850
      %2884 = vmatprep.subr.bf16.mxu0 %v2853
      %2885 = vmatpush1.bf16.msra.mxu0 %v2852
      %2886 = vmatprep.subr.bf16.mxu0 %v2855
      %2887 = vmatpush1.bf16.msra.mxu0 %v2854
      %2888 = vmatprep.subr.bf16.mxu0 0
      %2889 = vmatpush1.bf16.msra.mxu0 0
      %2890 = vmatprep.subr.bf16.mxu0 0
      %2891 = vmatpush1.bf16.msra.mxu0 0
      %2892 = vmatprep.subr.bf16.mxu0 0
      %2893 = vmatpush1.bf16.msra.mxu0 0
      %2894 = vmatprep.subr.bf16.mxu0 0
      %2895 = vmatpush1.bf16.msra.mxu0 0
      %2896 = vmatprep.subr.bf16.mxu0 0
      %2897 = vmatpush1.bf16.msra.mxu0 0
      %2898 = vmatprep.subr.bf16.mxu0 0
      %2899 = vmatpush1.bf16.msra.mxu0 0
      %2900 = vmatprep.subr.bf16.mxu0 0
      %2901 = vmatpush1.bf16.msra.mxu0 0
      %2902 = vmatprep.subr.bf16.mxu0 0
      %2903 = vmatpush1.bf16.msra.mxu0 0
      %2904 = vmatprep.mubr.bf16.mxu0 0
      %2905 = vmatmul.mubr.bf16.gmra.mrb[0].mxu0 %v2768
      %v2906 = vpop.f32.mrb[0].mxu0
      %v2907 = vadd.f32 0.0, %v2906
      %v2908 = vpop.f32.mrb[0].mxu0
      %v2909 = vadd.f32 0.0, %v2908
      %v2910 = vpop.f32.mrb[0].mxu0
      %v2911 = vadd.f32 0.0, %v2910
      %v2912 = vpop.f32.mrb[0].mxu0
      %v2913 = vadd.f32 0.0, %v2912
      %2914 = vmatprep.mubr.bf16.mxu0 0
      %2915 = vmatmul.mubr.bf16.gmra.mrb[0].mxu0 %v2769
      %v2916 = vpop.f32.mrb[0].mxu0
      %v2917 = vadd.f32 0.0, %v2916
      %v2918 = vpop.f32.mrb[0].mxu0
      %v2919 = vadd.f32 0.0, %v2918
      %v2920 = vpop.f32.mrb[0].mxu0
      %v2921 = vadd.f32 0.0, %v2920
      %v2922 = vpop.f32.mrb[0].mxu0
      %v2923 = vadd.f32 0.0, %v2922
      %2924 = vmatprep.mubr.bf16.mxu0 0
      %2925 = vmatmul.mubr.bf16.gmra.mrb[0].mxu0 %v2770
      %v2926 = vpop.f32.mrb[0].mxu0
      %v2927 = vadd.f32 0.0, %v2926
      %v2928 = vpop.f32.mrb[0].mxu0
      %v2929 = vadd.f32 0.0, %v2928
      %v2930 = vpop.f32.mrb[0].mxu0
      %v2931 = vadd.f32 0.0, %v2930
      %v2932 = vpop.f32.mrb[0].mxu0
      %v2933 = vadd.f32 0.0, %v2932
      %2934 = vmatprep.mubr.bf16.mxu0 0
      %2935 = vmatmul.mubr.bf16.gmra.mrb[0].mxu0 %v2771
      %v2936 = vpop.f32.mrb[0].mxu0
      %v2937 = vadd.f32 0.0, %v2936
      %v2938 = vpop.f32.mrb[0].mxu0
      %v2939 = vadd.f32 0.0, %v2938
      %v2940 = vpop.f32.mrb[0].mxu0
      %v2941 = vadd.f32 0.0, %v2940
      %v2942 = vpop.f32.mrb[0].mxu0
      %v2943 = vadd.f32 0.0, %v2942
      %2944 = vmatprep.mubr.bf16.mxu0 0
      %2945 = vmatmul.mubr.bf16.gmra.mrb[0].mxu0 %v2772
      %v2946 = vpop.f32.mrb[0].mxu0
      %v2947 = vadd.f32 0.0, %v2946
      %v2948 = vpop.f32.mrb[0].mxu0
      %v2949 = vadd.f32 0.0, %v2948
      %v2950 = vpop.f32.mrb[0].mxu0
      %v2951 = vadd.f32 0.0, %v2950
      %v2952 = vpop.f32.mrb[0].mxu0
      %v2953 = vadd.f32 0.0, %v2952
      %2954 = vmatprep.mubr.bf16.mxu0 0
      %2955 = vmatmul.mubr.bf16.gmra.mrb[0].mxu0 %v2773
      %v2956 = vpop.f32.mrb[0].mxu0
      %v2957 = vadd.f32 0.0, %v2956
      %v2958 = vpop.f32.mrb[0].mxu0
      %v2959 = vadd.f32 0.0, %v2958
      %v2960 = vpop.f32.mrb[0].mxu0
      %v2961 = vadd.f32 0.0, %v2960
      %v2962 = vpop.f32.mrb[0].mxu0
      %v2963 = vadd.f32 0.0, %v2962
      %2964 = vmatprep.mubr.bf16.mxu0 0
      %2965 = vmatmul.mubr.bf16.gmra.mrb[0].mxu0 %v2774
      %v2966 = vpop.f32.mrb[0].mxu0
      %v2967 = vadd.f32 0.0, %v2966
      %v2968 = vpop.f32.mrb[0].mxu0
      %v2969 = vadd.f32 0.0, %v2968
      %v2970 = vpop.f32.mrb[0].mxu0
      %v2971 = vadd.f32 0.0, %v2970
      %v2972 = vpop.f32.mrb[0].mxu0
      %v2973 = vadd.f32 0.0, %v2972
      %2974 = vmatprep.mubr.bf16.mxu0 0
      %2975 = vmatmul.mubr.bf16.gmra.mrb[0].mxu0 %v2775
      %v2976 = vpop.f32.mrb[0].mxu0
      %v2977 = vadd.f32 0.0, %v2976
      %v2978 = vpop.f32.mrb[0].mxu0
      %v2979 = vadd.f32 0.0, %v2978
      %v2980 = vpop.f32.mrb[0].mxu0
      %v2981 = vadd.f32 0.0, %v2980
      %v2982 = vpop.f32.mrb[0].mxu0
      %v2983 = vadd.f32 0.0, %v2982
      %2984 = vdwg.mxu0
      %v3001 = vunpack.c.l.b16 %v2061
      %v3002 = vunpack.c.h.b16 %v2061
      %v3003 = vunpack.c.l.b16 %v2062
      %v3004 = vunpack.c.h.b16 %v2062
      %v3005 = vunpack.c.l.b16 %v2063
      %v3006 = vunpack.c.h.b16 %v2063
      %v3007 = vunpack.c.l.b16 %v2064
      %v3008 = vunpack.c.h.b16 %v2064
      %v3009 = vunpack.c.l.b16 %v2065
      %v3010 = vunpack.c.h.b16 %v2065
      %v3011 = vunpack.c.l.b16 %v2066
      %v3012 = vunpack.c.h.b16 %v2066
      %v3013 = vunpack.c.l.b16 %v2067
      %v3014 = vunpack.c.h.b16 %v2067
      %v3015 = vunpack.c.l.b16 %v2068
      %v3016 = vunpack.c.h.b16 %v2068
      %v3017 = vunpack.c.l.b16 %v2069
      %v3018 = vunpack.c.h.b16 %v2069
      %v3019 = vunpack.c.l.b16 %v2070
      %v3020 = vunpack.c.h.b16 %v2070
      %v3021 = vunpack.c.l.b16 %v2071
      %v3022 = vunpack.c.h.b16 %v2071
      %v3023 = vunpack.c.l.b16 %v2072
      %v3024 = vunpack.c.h.b16 %v2072
      %v3025 = vunpack.c.l.b16 %v2073
      %v3026 = vunpack.c.h.b16 %v2073
      %v3027 = vunpack.c.l.b16 %v2074
      %v3028 = vunpack.c.h.b16 %v2074
      %v3029 = vunpack.c.l.b16 %v2075
      %v3030 = vunpack.c.h.b16 %v2075
      %v3031 = vunpack.c.l.b16 %v2076
      %v3032 = vunpack.c.h.b16 %v2076
      %v3033 = vpack.c.b16 %v3003, %v3001
      %v3034 = vpack.c.b16 %v3004, %v3002
      %v3035 = vpack.c.b16 %v3007, %v3005
      %v3036 = vpack.c.b16 %v3008, %v3006
      %v3037 = vpack.c.b16 %v3011, %v3009
      %v3038 = vpack.c.b16 %v3012, %v3010
      %v3039 = vpack.c.b16 %v3015, %v3013
      %v3040 = vpack.c.b16 %v3016, %v3014
      %v3041 = vpack.c.b16 %v3019, %v3017
      %v3042 = vpack.c.b16 %v3020, %v3018
      %v3043 = vpack.c.b16 %v3023, %v3021
      %v3044 = vpack.c.b16 %v3024, %v3022
      %v3045 = vpack.c.b16 %v3027, %v3025
      %v3046 = vpack.c.b16 %v3028, %v3026
      %v3047 = vpack.c.b16 %v3031, %v3029
      %v3048 = vpack.c.b16 %v3032, %v3030
      %3065 = vmatprep.subr.bf16.mxu0 %v3034
      %3066 = vmatpush1.bf16.msra.mxu0 %v3033
      %3067 = vmatprep.subr.bf16.mxu0 %v3036
      %3068 = vmatpush1.bf16.msra.mxu0 %v3035
      %3069 = vmatprep.subr.bf16.mxu0 %v3038
      %3070 = vmatpush1.bf16.msra.mxu0 %v3037
      %3071 = vmatprep.subr.bf16.mxu0 %v3040
      %3072 = vmatpush1.bf16.msra.mxu0 %v3039
      %3073 = vmatprep.subr.bf16.mxu0 %v3042
      %3074 = vmatpush1.bf16.msra.mxu0 %v3041
      %3075 = vmatprep.subr.bf16.mxu0 %v3044
      %3076 = vmatpush1.bf16.msra.mxu0 %v3043
      %3077 = vmatprep.subr.bf16.mxu0 %v3046
      %3078 = vmatpush1.bf16.msra.mxu0 %v3045
      %3079 = vmatprep.subr.bf16.mxu0 %v3048
      %3080 = vmatpush1.bf16.msra.mxu0 %v3047
      %3081 = vmatprep.subr.bf16.mxu0 0
      %3082 = vmatpush1.bf16.msra.mxu0 0
      %3083 = vmatprep.subr.bf16.mxu0 0
      %3084 = vmatpush1.bf16.msra.mxu0 0
      %3085 = vmatprep.subr.bf16.mxu0 0
      %3086 = vmatpush1.bf16.msra.mxu0 0
      %3087 = vmatprep.subr.bf16.mxu0 0
      %3088 = vmatpush1.bf16.msra.mxu0 0
      %3089 = vmatprep.subr.bf16.mxu0 0
      %3090 = vmatpush1.bf16.msra.mxu0 0
      %3091 = vmatprep.subr.bf16.mxu0 0
      %3092 = vmatpush1.bf16.msra.mxu0 0
      %3093 = vmatprep.subr.bf16.mxu0 0
      %3094 = vmatpush1.bf16.msra.mxu0 0
      %3095 = vmatprep.subr.bf16.mxu0 0
      %3096 = vmatpush1.bf16.msra.mxu0 0
      %3097 = vmatprep.mubr.bf16.mxu0 0
      %3098 = vmatmul.mubr.bf16.gmra.mrb[0].mxu0 %v2053
      %v3099 = vpop.f32.mrb[0].mxu0
      %v3100 = vadd.f32 %v2907, %v3099
      %v3101 = vpop.f32.mrb[0].mxu0
      %v3102 = vadd.f32 %v2909, %v3101
      %v3103 = vpop.f32.mrb[0].mxu0
      %v3104 = vadd.f32 %v2911, %v3103
      %v3105 = vpop.f32.mrb[0].mxu0
      %v3106 = vadd.f32 %v2913, %v3105
      %3107 = vmatprep.mubr.bf16.mxu0 0
      %3108 = vmatmul.mubr.bf16.gmra.mrb[0].mxu0 %v2054
      %v3109 = vpop.f32.mrb[0].mxu0
      %v3110 = vadd.f32 %v2917, %v3109
      %v3111 = vpop.f32.mrb[0].mxu0
      %v3112 = vadd.f32 %v2919, %v3111
      %v3113 = vpop.f32.mrb[0].mxu0
      %v3114 = vadd.f32 %v2921, %v3113
      %v3115 = vpop.f32.mrb[0].mxu0
      %v3116 = vadd.f32 %v2923, %v3115
      %3117 = vmatprep.mubr.bf16.mxu0 0
      %3118 = vmatmul.mubr.bf16.gmra.mrb[0].mxu0 %v2055
      %v3119 = vpop.f32.mrb[0].mxu0
      %v3120 = vadd.f32 %v2927, %v3119
      %v3121 = vpop.f32.mrb[0].mxu0
      %v3122 = vadd.f32 %v2929, %v3121
      %v3123 = vpop.f32.mrb[0].mxu0
      %v3124 = vadd.f32 %v2931, %v3123
      %v3125 = vpop.f32.mrb[0].mxu0
      %v3126 = vadd.f32 %v2933, %v3125
      %3127 = vmatprep.mubr.bf16.mxu0 0
      %3128 = vmatmul.mubr.bf16.gmra.mrb[0].mxu0 %v2056
      %v3129 = vpop.f32.mrb[0].mxu0
      %v3130 = vadd.f32 %v2937, %v3129
      %v3131 = vpop.f32.mrb[0].mxu0
      %v3132 = vadd.f32 %v2939, %v3131
      %v3133 = vpop.f32.mrb[0].mxu0
      %v3134 = vadd.f32 %v2941, %v3133
      %v3135 = vpop.f32.mrb[0].mxu0
      %v3136 = vadd.f32 %v2943, %v3135
      %3137 = vmatprep.mubr.bf16.mxu0 0
      %3138 = vmatmul.mubr.bf16.gmra.mrb[0].mxu0 %v2057
      %v3139 = vpop.f32.mrb[0].mxu0
      %v3140 = vadd.f32 %v2947, %v3139
      %v3141 = vpop.f32.mrb[0].mxu0
      %v3142 = vadd.f32 %v2949, %v3141
      %v3143 = vpop.f32.mrb[0].mxu0
      %v3144 = vadd.f32 %v2951, %v3143
      %v3145 = vpop.f32.mrb[0].mxu0
      %v3146 = vadd.f32 %v2953, %v3145
      %3147 = vmatprep.mubr.bf16.mxu0 0
      %3148 = vmatmul.mubr.bf16.gmra.mrb[0].mxu0 %v2058
      %v3149 = vpop.f32.mrb[0].mxu0
      %v3150 = vadd.f32 %v2957, %v3149
      %v3151 = vpop.f32.mrb[0].mxu0
      %v3152 = vadd.f32 %v2959, %v3151
      %v3153 = vpop.f32.mrb[0].mxu0
      %v3154 = vadd.f32 %v2961, %v3153
      %v3155 = vpop.f32.mrb[0].mxu0
      %v3156 = vadd.f32 %v2963, %v3155
      %3157 = vmatprep.mubr.bf16.mxu0 0
      %3158 = vmatmul.mubr.bf16.gmra.mrb[0].mxu0 %v2059
      %v3159 = vpop.f32.mrb[0].mxu0
      %v3160 = vadd.f32 %v2967, %v3159
      %v3161 = vpop.f32.mrb[0].mxu0
      %v3162 = vadd.f32 %v2969, %v3161
      %v3163 = vpop.f32.mrb[0].mxu0
      %v3164 = vadd.f32 %v2971, %v3163
      %v3165 = vpop.f32.mrb[0].mxu0
      %v3166 = vadd.f32 %v2973, %v3165
      %3167 = vmatprep.mubr.bf16.mxu0 0
      %3168 = vmatmul.mubr.bf16.gmra.mrb[0].mxu0 %v2060
      %v3169 = vpop.f32.mrb[0].mxu0
      %v3170 = vadd.f32 %v2977, %v3169
      %v3171 = vpop.f32.mrb[0].mxu0
      %v3172 = vadd.f32 %v2979, %v3171
      %v3173 = vpop.f32.mrb[0].mxu0
      %v3174 = vadd.f32 %v2981, %v3173
      %v3175 = vpop.f32.mrb[0].mxu0
      %v3176 = vadd.f32 %v2983, %v3175
      %3177 = vdwg.mxu0
      %3178 = vst [vmem:[%s390] sm:$0xff] %v3100
      %3179 = vst [vmem:[%s390 + $0x8] sm:$0xff] %v3102
      %3180 = vst [vmem:[%s390 + $0x10] sm:$0xff] %v3104
      %3181 = vst [vmem:[%s390 + $0x18] sm:$0xff] %v3106
      %3182 = vst [vmem:[%s390 + $0x20] sm:$0xff] %v3110
      %3183 = vst [vmem:[%s390 + $0x28] sm:$0xff] %v3112
      %3184 = vst [vmem:[%s390 + $0x30] sm:$0xff] %v3114
      %3185 = vst [vmem:[%s390 + $0x38] sm:$0xff] %v3116
      %3186 = vst [vmem:[%s390 + $0x40] sm:$0xff] %v3120
      %3187 = vst [vmem:[%s390 + $0x48] sm:$0xff] %v3122
      %3188 = vst [vmem:[%s390 + $0x50] sm:$0xff] %v3124
      %3189 = vst [vmem:[%s390 + $0x58] sm:$0xff] %v3126
      %3190 = vst [vmem:[%s390 + $0x60] sm:$0xff] %v3130
      %3191 = vst [vmem:[%s390 + $0x68] sm:$0xff] %v3132
      %3192 = vst [vmem:[%s390 + $0x70] sm:$0xff] %v3134
      %3193 = vst [vmem:[%s390 + $0x78] sm:$0xff] %v3136
      %3194 = vst [vmem:[%s390 + $0x80] sm:$0xff] %v3140
      %3195 = vst [vmem:[%s390 + $0x88] sm:$0xff] %v3142
      %3196 = vst [vmem:[%s390 + $0x90] sm:$0xff] %v3144
      %3197 = vst [vmem:[%s390 + $0x98] sm:$0xff] %v3146
      %3198 = vst [vmem:[%s390 + $0xa0] sm:$0xff] %v3150
      %3199 = vst [vmem:[%s390 + $0xa8] sm:$0xff] %v3152
      %3200 = vst [vmem:[%s390 + $0xb0] sm:$0xff] %v3154
      %3201 = vst [vmem:[%s390 + $0xb8] sm:$0xff] %v3156
      %3202 = vst [vmem:[%s390 + $0xc0] sm:$0xff] %v3160
      %3203 = vst [vmem:[%s390 + $0xc8] sm:$0xff] %v3162
      %3204 = vst [vmem:[%s390 + $0xd0] sm:$0xff] %v3164
      %3205 = vst [vmem:[%s390 + $0xd8] sm:$0xff] %v3166
      %3206 = vst [vmem:[%s390 + $0xe0] sm:$0xff] %v3170
      %3207 = vst [vmem:[%s390 + $0xe8] sm:$0xff] %v3172
      %3208 = vst [vmem:[%s390 + $0xf0] sm:$0xff] %v3174
      %3209 = vst [vmem:[%s390 + $0xf8] sm:$0xff] %v3176
      %s3210 = smul.u32 16, %s20
      %p3211 = scmp.lt.s32.totalorder %s3210, 31
      %s3212 = scalar_select %p3211, %s3210, 31
      %s3213 = smul.addr %s3212, 2
      %s3214 = smul.addr %s3213, 8
      %s3215 = scalar_lea.vmem %s7, %s3214
      %s3216 = smul.u32 16, %s20
      %p3217 = scmp.lt.s32.totalorder %s3216, 31
      %s3218 = scalar_select %p3217, %s3216, 31
      %s3219 = smul.addr %s3218, 2
      %s3220 = smul.addr %s3219, 8
      %s3221 = scalar_lea.vmem %s8, %s3220
      // Predicated region
      $region49: #{internlm2_forward.4} parent=47 // pred_check
        %p3222 = pneg %p205
      $region50: #{internlm2_forward.4} parent=47 // pred_check_branch
        %3224 = sbr.rel (%p3222) target = $region52
      $region51: #{internlm2_forward.4} parent=47 // pred_region
        %s3225 = smul.u32 16, %s20
      $region52: #{internlm2_forward.4} parent=47 // pred_fallthru
        _
      // Predicated region
      $region53: #{internlm2_forward.4} parent=47 // pred_check
        %p3226 = pneg %p231
      $region54: #{internlm2_forward.4} parent=47 // pred_check_branch
        %3228 = sbr.rel (%p3226) target = $region56
      $region55: #{internlm2_forward.4} parent=47 // pred_region
        %s3229 = smul.u32 16, %s20
      $region56: #{internlm2_forward.4} parent=47 // pred_fallthru
        _
    $region48: #{internlm2_forward.4} parent=5 // pred_fallthru
      _
    %p3230 = scmp.le.s32.totalorder 2, %s15
    // Predicated region
    $region57: #{internlm2_forward.4} parent=5 // pred_check
      %p3231 = pneg %p3230
    $region58: #{internlm2_forward.4} parent=5 // pred_check_branch
      %3233 = sbr.rel (%p3231) target = $region60
    $region59: #{internlm2_forward.4} parent=5 // pred_region
      %s3234 = ssub.s32 %s15, 2
      // Predicated region
      $region61: #{internlm2_forward.4} parent=59 // pred_check
        %p3235 = pneg %p211
      $region62: #{internlm2_forward.4} parent=59 // pred_check_branch
        %3237 = sbr.rel (%p3235) target = $region64
      $region63: #{internlm2_forward.4} parent=59 // pred_region
        %s3238 = smul.u32 16, %s21
        %p3239 = scmp.lt.s32.totalorder %s3238, 31
        %s3240 = scalar_select %p3239, %s3238, 31
        %s3241 = smul.addr %s3240, 2
        %s3242 = smul.addr %s3241, 8
        %s3243 = scalar_lea.vmem %s7, %s3242
      $region64: #{internlm2_forward.4} parent=59 // pred_fallthru
        _
      // Predicated region
      $region65: #{internlm2_forward.4} parent=59 // pred_check
        %p3244 = pneg %p237
      $region66: #{internlm2_forward.4} parent=59 // pred_check_branch
        %3246 = sbr.rel (%p3244) target = $region68
      $region67: #{internlm2_forward.4} parent=59 // pred_region
        %s3247 = smul.u32 16, %s21
        %p3248 = scmp.lt.s32.totalorder %s3247, 31
        %s3249 = scalar_select %p3248, %s3247, 31
        %s3250 = smul.addr %s3249, 2
        %s3251 = smul.addr %s3250, 8
        %s3252 = scalar_lea.vmem %s8, %s3251
      $region68: #{internlm2_forward.4} parent=59 // pred_fallthru
        _
    $region60: #{internlm2_forward.4} parent=5 // pred_fallthru
      _
  $region6: #{internlm2_forward.4} parent=0 // loop_footer
    %s19 = sadd.s32 1, %s15
  $region7: #{internlm2_forward.4} parent=0 // loop_footer_branch
    %14 = sbr.rel target = $region3
  $region8: #{internlm2_forward.4} parent=0 // loop_exit
    _

// kernel: internlm2_forward.5
$region0: #{internlm2_forward.5}
  #allocation0 [shape = 'u32[]', space=smem, size = 0x4, offset = 0x4, fixed_abs, tag = 'smem constant byte address 0x4 - core index']
  #allocation1 [shape = 'u32[144,128]{1,0:T(1,128)}', space=vmem, size = 0x12000, scoped, tag = 'internal scratch']
  %s0 = inlined_call_operand.vmem [shape: f32[256,256], index: 0, kind: input, shape index: {}]
  %s1 = inlined_call_operand.vmem [shape: f32[256,256], index: 1, kind: input, shape index: {}]
  %s2 = inlined_call_operand.vmem [shape: f32[1,256], index: 2, kind: input, shape index: {}]
  %s3 = inlined_call_operand.vmem [shape: bf16[256,512], index: 3, kind: input, shape index: {}]
  %s4 = inlined_call_operand.vmem [shape: bf16[256,512], index: 4, kind: input, shape index: {}]
  %s5 = inlined_call_operand.vmem [shape: bf16[512,256], index: 5, kind: input, shape index: {}]
  %s6 = inlined_call_operand.vmem [shape: f32[256,256], index: 6, kind: output, shape index: {0}]
  %s7 = inlined_call_operand.vmem [shape: f32[256,256], index: 7, kind: output, shape index: {1}]
  %8 = xla_tuple %s6, %s7
  %s9 = sld [smem:[#allocation0]]
  $region65: #{internlm2_forward.5} parent=0
    _
  %s11 = ssub.s32 1, %s9
  %s12 = scalar_select 0, %s11, %s9
  loop: start=0, step=1, limit=4
  $region2: #{internlm2_forward.5} parent=0 // loop_pre_header
    _
  $region3: #{internlm2_forward.5} parent=0 // loop_header
    %s14 = sphi 0, %s18
    %p15 = scmp.ge.s32.totalorder %s14, 4
    %s24 = sphi 0, %s26
    %s27 = sphi 0, %s24
    %s28 = sphi 0, %s27
    %s44 = sphi 0, %s28
    %s50 = sphi 0, %s52
    %s53 = sphi 0, %s50
    %s54 = sphi 0, %s53
    %s70 = sphi 0, %s54
    %s74 = sphi 0, %s74
    %s76 = sphi 0, %s74
    %s77 = sphi 0, %s76
    %s91 = sphi 0, %s77
    %s95 = sphi 0, %s95
    %s97 = sphi 0, %s95
    %s98 = sphi 0, %s97
    %s112 = sphi 0, %s98
    %s116 = sphi 0, %s116
    %s118 = sphi 0, %s116
    %s119 = sphi 0, %s118
    %s133 = sphi 0, %s119
    %s137 = sphi 0, %s137
    %s139 = sphi 0, %s137
    %s140 = sphi 0, %s139
    %s154 = sphi 0, %s140
    %s160 = sphi 0, %s162
    %s163 = sphi 0, %s160
    %s164 = sphi 0, %s163
    %s180 = sphi 0, %s164
    %s186 = sphi 0, %s188
    %s189 = sphi 0, %s186
    %s190 = sphi 0, %s189
    %s206 = sphi 0, %s190
  $region4: #{internlm2_forward.5} parent=0 // loop_header_branch
    %17 = sbr.rel (%p15) target = $region8
  $region5: #{internlm2_forward.5} parent=0 // loop_body
    %s19 = ssub.s32 %s14, 1
    %s20 = ssub.s32 %s14, 2
    %s21 = sadd.s32 %s14, 1
    %s22 = ssub.s32 %s14, %s21
    %p23 = scmp.eq.s32.totalorder %s22, 0
    %s25 = sadd.s32 %s24, 1
    %s26 = scalar_select %p23, %s24, %s25
    %p29 = pneg %p23
    %p30 = scmp.eq.s32.totalorder %s14, 1
    %p31 = por %p29, %p30
    %p32 = scmp.ne.s32.totalorder %s24, %s27
    %p33 = scmp.eq.s32.totalorder %s14, 0
    %p34 = por %p32, %p33
    %p35 = scmp.ne.s32.totalorder %s24, %s27
    %p36 = scmp.eq.s32.totalorder %s19, 1
    %p37 = por %p35, %p36
    %p38 = scmp.ne.s32.totalorder %s27, %s28
    %p39 = scmp.eq.s32.totalorder %s19, 0
    %p40 = por %p38, %p39
    %p41 = scmp.ne.s32.totalorder %s27, %s28
    %p42 = scmp.eq.s32.totalorder %s20, 1
    %p43 = por %p41, %p42
    %p45 = scmp.ne.s32.totalorder %s28, %s44
    %p46 = scmp.eq.s32.totalorder %s20, 0
    %p47 = por %p45, %p46
    %s48 = ssub.s32 %s14, %s21
    %p49 = scmp.eq.s32.totalorder %s48, 0
    %s51 = sadd.s32 %s50, 1
    %s52 = scalar_select %p49, %s50, %s51
    %p55 = pneg %p49
    %p56 = scmp.eq.s32.totalorder %s14, 1
    %p57 = por %p55, %p56
    %p58 = scmp.ne.s32.totalorder %s50, %s53
    %p59 = scmp.eq.s32.totalorder %s14, 0
    %p60 = por %p58, %p59
    %p61 = scmp.ne.s32.totalorder %s50, %s53
    %p62 = scmp.eq.s32.totalorder %s19, 1
    %p63 = por %p61, %p62
    %p64 = scmp.ne.s32.totalorder %s53, %s54
    %p65 = scmp.eq.s32.totalorder %s19, 0
    %p66 = por %p64, %p65
    %p67 = scmp.ne.s32.totalorder %s53, %s54
    %p68 = scmp.eq.s32.totalorder %s20, 1
    %p69 = por %p67, %p68
    %p71 = scmp.ne.s32.totalorder %s54, %s70
    %p72 = scmp.eq.s32.totalorder %s20, 0
    %p73 = por %p71, %p72
    %s75 = sadd.s32 %s74, 1
    %p78 = scmp.eq.s32.totalorder %s14, 1
    %p79 = scmp.ne.s32.totalorder %s74, %s76
    %p80 = scmp.eq.s32.totalorder %s14, 0
    %p81 = por %p79, %p80
    %p82 = scmp.ne.s32.totalorder %s74, %s76
    %p83 = scmp.eq.s32.totalorder %s19, 1
    %p84 = por %p82, %p83
    %p85 = scmp.ne.s32.totalorder %s76, %s77
    %p86 = scmp.eq.s32.totalorder %s19, 0
    %p87 = por %p85, %p86
    %p88 = scmp.ne.s32.totalorder %s76, %s77
    %p89 = scmp.eq.s32.totalorder %s20, 1
    %p90 = por %p88, %p89
    %p92 = scmp.ne.s32.totalorder %s77, %s91
    %p93 = scmp.eq.s32.totalorder %s20, 0
    %p94 = por %p92, %p93
    %s96 = sadd.s32 %s95, 1
    %p99 = scmp.eq.s32.totalorder %s14, 1
    %p100 = scmp.ne.s32.totalorder %s95, %s97
    %p101 = scmp.eq.s32.totalorder %s14, 0
    %p102 = por %p100, %p101
    %p103 = scmp.ne.s32.totalorder %s95, %s97
    %p104 = scmp.eq.s32.totalorder %s19, 1
    %p105 = por %p103, %p104
    %p106 = scmp.ne.s32.totalorder %s97, %s98
    %p107 = scmp.eq.s32.totalorder %s19, 0
    %p108 = por %p106, %p107
    %p109 = scmp.ne.s32.totalorder %s97, %s98
    %p110 = scmp.eq.s32.totalorder %s20, 1
    %p111 = por %p109, %p110
    %p113 = scmp.ne.s32.totalorder %s98, %s112
    %p114 = scmp.eq.s32.totalorder %s20, 0
    %p115 = por %p113, %p114
    %s117 = sadd.s32 %s116, 1
    %p120 = scmp.eq.s32.totalorder %s14, 1
    %p121 = scmp.ne.s32.totalorder %s116, %s118
    %p122 = scmp.eq.s32.totalorder %s14, 0
    %p123 = por %p121, %p122
    %p124 = scmp.ne.s32.totalorder %s116, %s118
    %p125 = scmp.eq.s32.totalorder %s19, 1
    %p126 = por %p124, %p125
    %p127 = scmp.ne.s32.totalorder %s118, %s119
    %p128 = scmp.eq.s32.totalorder %s19, 0
    %p129 = por %p127, %p128
    %p130 = scmp.ne.s32.totalorder %s118, %s119
    %p131 = scmp.eq.s32.totalorder %s20, 1
    %p132 = por %p130, %p131
    %p134 = scmp.ne.s32.totalorder %s119, %s133
    %p135 = scmp.eq.s32.totalorder %s20, 0
    %p136 = por %p134, %p135
    %s138 = sadd.s32 %s137, 1
    %p141 = scmp.eq.s32.totalorder %s14, 1
    %p142 = scmp.ne.s32.totalorder %s137, %s139
    %p143 = scmp.eq.s32.totalorder %s14, 0
    %p144 = por %p142, %p143
    %p145 = scmp.ne.s32.totalorder %s137, %s139
    %p146 = scmp.eq.s32.totalorder %s19, 1
    %p147 = por %p145, %p146
    %p148 = scmp.ne.s32.totalorder %s139, %s140
    %p149 = scmp.eq.s32.totalorder %s19, 0
    %p150 = por %p148, %p149
    %p151 = scmp.ne.s32.totalorder %s139, %s140
    %p152 = scmp.eq.s32.totalorder %s20, 1
    %p153 = por %p151, %p152
    %p155 = scmp.ne.s32.totalorder %s140, %s154
    %p156 = scmp.eq.s32.totalorder %s20, 0
    %p157 = por %p155, %p156
    %s158 = ssub.s32 %s14, %s21
    %p159 = scmp.eq.s32.totalorder %s158, 0
    %s161 = sadd.s32 %s160, 1
    %s162 = scalar_select %p159, %s160, %s161
    %p165 = pneg %p159
    %p166 = scmp.eq.s32.totalorder %s14, 1
    %p167 = por %p165, %p166
    %p168 = scmp.ne.s32.totalorder %s160, %s163
    %p169 = scmp.eq.s32.totalorder %s14, 0
    %p170 = por %p168, %p169
    %p171 = scmp.ne.s32.totalorder %s160, %s163
    %p172 = scmp.eq.s32.totalorder %s19, 1
    %p173 = por %p171, %p172
    %p174 = scmp.ne.s32.totalorder %s163, %s164
    %p175 = scmp.eq.s32.totalorder %s19, 0
    %p176 = por %p174, %p175
    %p177 = scmp.ne.s32.totalorder %s163, %s164
    %p178 = scmp.eq.s32.totalorder %s20, 1
    %p179 = por %p177, %p178
    %p181 = scmp.ne.s32.totalorder %s164, %s180
    %p182 = scmp.eq.s32.totalorder %s20, 0
    %p183 = por %p181, %p182
    %s184 = ssub.s32 %s14, %s21
    %p185 = scmp.eq.s32.totalorder %s184, 0
    %s187 = sadd.s32 %s186, 1
    %s188 = scalar_select %p185, %s186, %s187
    %p191 = pneg %p185
    %p192 = scmp.eq.s32.totalorder %s14, 1
    %p193 = por %p191, %p192
    %p194 = scmp.ne.s32.totalorder %s186, %s189
    %p195 = scmp.eq.s32.totalorder %s14, 0
    %p196 = por %p194, %p195
    %p197 = scmp.ne.s32.totalorder %s186, %s189
    %p198 = scmp.eq.s32.totalorder %s19, 1
    %p199 = por %p197, %p198
    %p200 = scmp.ne.s32.totalorder %s189, %s190
    %p201 = scmp.eq.s32.totalorder %s19, 0
    %p202 = por %p200, %p201
    %p203 = scmp.ne.s32.totalorder %s189, %s190
    %p204 = scmp.eq.s32.totalorder %s20, 1
    %p205 = por %p203, %p204
    %p207 = scmp.ne.s32.totalorder %s190, %s206
    %p208 = scmp.eq.s32.totalorder %s20, 0
    %p209 = por %p207, %p208
    %p210 = scmp.le.s32.totalorder 1, %s14
    %p211 = scmp.lt.s32.totalorder %s14, 3
    %p212 = pnand %p210, %p211
    %p213 = pneg %p212
    // Predicated region
    $region9: #{internlm2_forward.5} parent=5 // pred_check
      _
    $region10: #{internlm2_forward.5} parent=5 // pred_check_branch
      %215 = sbr.rel (%p212) target = $region12
    $region11: #{internlm2_forward.5} parent=5 // pred_region
      %s216 = ssub.s32 %s14, 1
      // Predicated region
      $region13: #{internlm2_forward.5} parent=11 // pred_check
        %p217 = pneg %p87
      $region14: #{internlm2_forward.5} parent=11 // pred_check_branch
        %219 = sbr.rel (%p217) target = $region16
      $region15: #{internlm2_forward.5} parent=11 // pred_region
        _
      $region16: #{internlm2_forward.5} parent=11 // pred_fallthru
        _
      // Predicated region
      $region17: #{internlm2_forward.5} parent=11 // pred_check
        %p220 = pneg %p108
      $region18: #{internlm2_forward.5} parent=11 // pred_check_branch
        %222 = sbr.rel (%p220) target = $region20
      $region19: #{internlm2_forward.5} parent=11 // pred_region
        _
      $region20: #{internlm2_forward.5} parent=11 // pred_fallthru
        _
      // Predicated region
      $region21: #{internlm2_forward.5} parent=11 // pred_check
        %p223 = pneg %p129
      $region22: #{internlm2_forward.5} parent=11 // pred_check_branch
        %225 = sbr.rel (%p223) target = $region24
      $region23: #{internlm2_forward.5} parent=11 // pred_region
        _
      $region24: #{internlm2_forward.5} parent=11 // pred_fallthru
        _
      // Predicated region
      $region25: #{internlm2_forward.5} parent=11 // pred_check
        %p226 = pneg %p150
      $region26: #{internlm2_forward.5} parent=11 // pred_check_branch
        %228 = sbr.rel (%p226) target = $region28
      $region27: #{internlm2_forward.5} parent=11 // pred_region
        _
      $region28: #{internlm2_forward.5} parent=11 // pred_fallthru
        _
    $region12: #{internlm2_forward.5} parent=5 // pred_fallthru
      _
    %p229 = scmp.lt.s32.totalorder %s14, 2
    // Predicated region
    $region29: #{internlm2_forward.5} parent=5 // pred_check
      %p230 = pneg %p229
    $region30: #{internlm2_forward.5} parent=5 // pred_check_branch
      %232 = sbr.rel (%p230) target = $region32
    $region31: #{internlm2_forward.5} parent=5 // pred_region
      // Predicated region
      $region33: #{internlm2_forward.5} parent=31 // pred_check
        %p233 = pneg %p34
      $region34: #{internlm2_forward.5} parent=31 // pred_check_branch
        %235 = sbr.rel (%p233) target = $region36
      $region35: #{internlm2_forward.5} parent=31 // pred_region
        %s236 = smul.u32 16, %s14
        %p237 = scmp.lt.s32.totalorder %s236, 31
        %s238 = scalar_select %p237, %s236, 31
        %s239 = smul.addr %s238, 2
        %s240 = smul.addr %s239, 8
        %s241 = scalar_lea.vmem %s0, %s240
        %s242 = smul.u32 16, %s14
      $region36: #{internlm2_forward.5} parent=31 // pred_fallthru
        _
      // Predicated region
      $region37: #{internlm2_forward.5} parent=31 // pred_check
        %p243 = pneg %p60
      $region38: #{internlm2_forward.5} parent=31 // pred_check_branch
        %245 = sbr.rel (%p243) target = $region40
      $region39: #{internlm2_forward.5} parent=31 // pred_region
        %s246 = smul.u32 16, %s14
        %p247 = scmp.lt.s32.totalorder %s246, 31
        %s248 = scalar_select %p247, %s246, 31
        %s249 = smul.addr %s248, 2
        %s250 = smul.addr %s249, 8
        %s251 = scalar_lea.vmem %s1, %s250
        %s252 = smul.u32 16, %s14
      $region40: #{internlm2_forward.5} parent=31 // pred_fallthru
        _
    $region32: #{internlm2_forward.5} parent=5 // pred_fallthru
      _
    %p253 = scmp.le.s32.totalorder 1, %s14
    %p254 = scmp.lt.s32.totalorder %s14, 3
    %p255 = pnand %p253, %p254
    %p256 = pneg %p255
    // Predicated region
    $region41: #{internlm2_forward.5} parent=5 // pred_check
      _
    $region42: #{internlm2_forward.5} parent=5 // pred_check_branch
      %258 = sbr.rel (%p255) target = $region44
    $region43: #{internlm2_forward.5} parent=5 // pred_region
      %s259 = ssub.s32 %s14, 1
      %s260 = smul.u32 16, %s19
      %p261 = scmp.lt.s32.totalorder %s260, 31
      %s262 = scalar_select %p261, %s260, 31
      %s263 = smul.addr %s262, 2
      %s264 = smul.addr %s263, 8
      %s265 = scalar_lea.vmem %s0, %s264
      %p266 = pneg %p40
      %p267 = pneg %p37
      %s268 = smul.u32 16, %s19
      %p269 = scmp.lt.s32.totalorder %s268, 31
      %s270 = scalar_select %p269, %s268, 31
      %s271 = smul.addr %s270, 2
      %s272 = smul.addr %s271, 8
      %s273 = scalar_lea.vmem %s1, %s272
      %p274 = pneg %p66
      %p275 = pneg %p63
      %p276 = pneg %p87
      %p277 = pneg %p84
      %p278 = pneg %p108
      %p279 = pneg %p105
      %p280 = pneg %p129
      %p281 = pneg %p126
      %p282 = pneg %p150
      %p283 = pneg %p147
      %p284 = pneg %p176
      %p285 = pneg %p173
      %s286 = smul.u32 16, %s19
      %p287 = scmp.lt.s32.totalorder %s286, 31
      %s288 = scalar_select %p287, %s286, 31
      %s289 = smul.addr %s288, 2
      %s290 = smul.addr %s289, 8
      %s291 = scalar_lea.vmem %s6, %s290
      %p292 = pneg %p202
      %p293 = pneg %p199
      %s294 = smul.u32 16, %s19
      %p295 = scmp.lt.s32.totalorder %s294, 31
      %s296 = scalar_select %p295, %s294, 31
      %s297 = smul.addr %s296, 2
      %s298 = smul.addr %s297, 8
      %s299 = scalar_lea.vmem %s7, %s298
      %s300 = smul.u32 16, %s19
      %p301 = scmp.lt.s32.totalorder %s300, 31
      %s302 = scalar_select %p301, %s300, 31
      %s303 = smul.addr %s302, 2
      %s304 = smul.addr %s303, 8
      %s305 = scalar_lea.vmem %s0, %s304
      %s306 = smul.u32 16, %s19
      %s307 = smul.u32 16, %s19
      %p308 = scmp.lt.s32.totalorder %s307, 31
      %s309 = scalar_select %p308, %s307, 31
      %s310 = smul.addr %s309, 2
      %s311 = smul.addr %s310, 8
      %s312 = scalar_lea.vmem %s1, %s311
      %s313 = smul.u32 16, %s19
      %s314 = smul.u32 16, %s19
      %p315 = scmp.lt.s32.totalorder %s314, 31
      %s316 = scalar_select %p315, %s314, 31
      %s317 = smul.addr %s316, 2
      %s318 = smul.addr %s317, 8
      %s319 = scalar_lea.vmem %s6, %s318
      %s320 = smul.u32 16, %s19
      %s321 = smul.u32 16, %s19
      %p322 = scmp.lt.s32.totalorder %s321, 31
      %s323 = scalar_select %p322, %s321, 31
      %s324 = smul.addr %s323, 2
      %s325 = smul.addr %s324, 8
      %s326 = scalar_lea.vmem %s7, %s325
      %s327 = smul.u32 16, %s19
      %v329 = vld [vmem:[%s305] sm:$0xff]
      %v330 = vld [vmem:[%s305 + $0x8] sm:$0xff]
      %v331 = vld [vmem:[%s305 + $0x10] sm:$0xff]
      %v332 = vld [vmem:[%s305 + $0x18] sm:$0xff]
      %v333 = vld [vmem:[%s305 + $0x20] sm:$0xff]
      %v334 = vld [vmem:[%s305 + $0x28] sm:$0xff]
      %v335 = vld [vmem:[%s305 + $0x30] sm:$0xff]
      %v336 = vld [vmem:[%s305 + $0x38] sm:$0xff]
      %v337 = vld [vmem:[%s305 + $0x40] sm:$0xff]
      %v338 = vld [vmem:[%s305 + $0x48] sm:$0xff]
      %v339 = vld [vmem:[%s305 + $0x50] sm:$0xff]
      %v340 = vld [vmem:[%s305 + $0x58] sm:$0xff]
      %v341 = vld [vmem:[%s305 + $0x60] sm:$0xff]
      %v342 = vld [vmem:[%s305 + $0x68] sm:$0xff]
      %v343 = vld [vmem:[%s305 + $0x70] sm:$0xff]
      %v344 = vld [vmem:[%s305 + $0x78] sm:$0xff]
      %v345 = vld [vmem:[%s305 + $0x80] sm:$0xff]
      %v346 = vld [vmem:[%s305 + $0x88] sm:$0xff]
      %v347 = vld [vmem:[%s305 + $0x90] sm:$0xff]
      %v348 = vld [vmem:[%s305 + $0x98] sm:$0xff]
      %v349 = vld [vmem:[%s305 + $0xa0] sm:$0xff]
      %v350 = vld [vmem:[%s305 + $0xa8] sm:$0xff]
      %v351 = vld [vmem:[%s305 + $0xb0] sm:$0xff]
      %v352 = vld [vmem:[%s305 + $0xb8] sm:$0xff]
      %v353 = vld [vmem:[%s305 + $0xc0] sm:$0xff]
      %v354 = vld [vmem:[%s305 + $0xc8] sm:$0xff]
      %v355 = vld [vmem:[%s305 + $0xd0] sm:$0xff]
      %v356 = vld [vmem:[%s305 + $0xd8] sm:$0xff]
      %v357 = vld [vmem:[%s305 + $0xe0] sm:$0xff]
      %v358 = vld [vmem:[%s305 + $0xe8] sm:$0xff]
      %v359 = vld [vmem:[%s305 + $0xf0] sm:$0xff]
      %v360 = vld [vmem:[%s305 + $0xf8] sm:$0xff]
      %v361 = vld [vmem:[%s312] sm:$0xff]
      %v362 = vld [vmem:[%s312 + $0x8] sm:$0xff]
      %v363 = vld [vmem:[%s312 + $0x10] sm:$0xff]
      %v364 = vld [vmem:[%s312 + $0x18] sm:$0xff]
      %v365 = vld [vmem:[%s312 + $0x20] sm:$0xff]
      %v366 = vld [vmem:[%s312 + $0x28] sm:$0xff]
      %v367 = vld [vmem:[%s312 + $0x30] sm:$0xff]
      %v368 = vld [vmem:[%s312 + $0x38] sm:$0xff]
      %v369 = vld [vmem:[%s312 + $0x40] sm:$0xff]
      %v370 = vld [vmem:[%s312 + $0x48] sm:$0xff]
      %v371 = vld [vmem:[%s312 + $0x50] sm:$0xff]
      %v372 = vld [vmem:[%s312 + $0x58] sm:$0xff]
      %v373 = vld [vmem:[%s312 + $0x60] sm:$0xff]
      %v374 = vld [vmem:[%s312 + $0x68] sm:$0xff]
      %v375 = vld [vmem:[%s312 + $0x70] sm:$0xff]
      %v376 = vld [vmem:[%s312 + $0x78] sm:$0xff]
      %v377 = vld [vmem:[%s312 + $0x80] sm:$0xff]
      %v378 = vld [vmem:[%s312 + $0x88] sm:$0xff]
      %v379 = vld [vmem:[%s312 + $0x90] sm:$0xff]
      %v380 = vld [vmem:[%s312 + $0x98] sm:$0xff]
      %v381 = vld [vmem:[%s312 + $0xa0] sm:$0xff]
      %v382 = vld [vmem:[%s312 + $0xa8] sm:$0xff]
      %v383 = vld [vmem:[%s312 + $0xb0] sm:$0xff]
      %v384 = vld [vmem:[%s312 + $0xb8] sm:$0xff]
      %v385 = vld [vmem:[%s312 + $0xc0] sm:$0xff]
      %v386 = vld [vmem:[%s312 + $0xc8] sm:$0xff]
      %v387 = vld [vmem:[%s312 + $0xd0] sm:$0xff]
      %v388 = vld [vmem:[%s312 + $0xd8] sm:$0xff]
      %v389 = vld [vmem:[%s312 + $0xe0] sm:$0xff]
      %v390 = vld [vmem:[%s312 + $0xe8] sm:$0xff]
      %v391 = vld [vmem:[%s312 + $0xf0] sm:$0xff]
      %v392 = vld [vmem:[%s312 + $0xf8] sm:$0xff]
      %v393 = vadd.f32 %v329, %v361
      %v394 = vadd.f32 %v330, %v362
      %v395 = vadd.f32 %v331, %v363
      %v396 = vadd.f32 %v332, %v364
      %v397 = vadd.f32 %v333, %v365
      %v398 = vadd.f32 %v334, %v366
      %v399 = vadd.f32 %v335, %v367
      %v400 = vadd.f32 %v336, %v368
      %v401 = vadd.f32 %v337, %v369
      %v402 = vadd.f32 %v338, %v370
      %v403 = vadd.f32 %v339, %v371
      %v404 = vadd.f32 %v340, %v372
      %v405 = vadd.f32 %v341, %v373
      %v406 = vadd.f32 %v342, %v374
      %v407 = vadd.f32 %v343, %v375
      %v408 = vadd.f32 %v344, %v376
      %v409 = vadd.f32 %v345, %v377
      %v410 = vadd.f32 %v346, %v378
      %v411 = vadd.f32 %v347, %v379
      %v412 = vadd.f32 %v348, %v380
      %v413 = vadd.f32 %v349, %v381
      %v414 = vadd.f32 %v350, %v382
      %v415 = vadd.f32 %v351, %v383
      %v416 = vadd.f32 %v352, %v384
      %v417 = vadd.f32 %v353, %v385
      %v418 = vadd.f32 %v354, %v386
      %v419 = vadd.f32 %v355, %v387
      %v420 = vadd.f32 %v356, %v388
      %v421 = vadd.f32 %v357, %v389
      %v422 = vadd.f32 %v358, %v390
      %v423 = vadd.f32 %v359, %v391
      %v424 = vadd.f32 %v360, %v392
      %425 = vst [vmem:[%s326] sm:$0xff] %v393
      %426 = vst [vmem:[%s326 + $0x8] sm:$0xff] %v394
      %427 = vst [vmem:[%s326 + $0x10] sm:$0xff] %v395
      %428 = vst [vmem:[%s326 + $0x18] sm:$0xff] %v396
      %429 = vst [vmem:[%s326 + $0x20] sm:$0xff] %v397
      %430 = vst [vmem:[%s326 + $0x28] sm:$0xff] %v398
      %431 = vst [vmem:[%s326 + $0x30] sm:$0xff] %v399
      %432 = vst [vmem:[%s326 + $0x38] sm:$0xff] %v400
      %433 = vst [vmem:[%s326 + $0x40] sm:$0xff] %v401
      %434 = vst [vmem:[%s326 + $0x48] sm:$0xff] %v402
      %435 = vst [vmem:[%s326 + $0x50] sm:$0xff] %v403
      %436 = vst [vmem:[%s326 + $0x58] sm:$0xff] %v404
      %437 = vst [vmem:[%s326 + $0x60] sm:$0xff] %v405
      %438 = vst [vmem:[%s326 + $0x68] sm:$0xff] %v406
      %439 = vst [vmem:[%s326 + $0x70] sm:$0xff] %v407
      %440 = vst [vmem:[%s326 + $0x78] sm:$0xff] %v408
      %441 = vst [vmem:[%s326 + $0x80] sm:$0xff] %v409
      %442 = vst [vmem:[%s326 + $0x88] sm:$0xff] %v410
      %443 = vst [vmem:[%s326 + $0x90] sm:$0xff] %v411
      %444 = vst [vmem:[%s326 + $0x98] sm:$0xff] %v412
      %445 = vst [vmem:[%s326 + $0xa0] sm:$0xff] %v413
      %446 = vst [vmem:[%s326 + $0xa8] sm:$0xff] %v414
      %447 = vst [vmem:[%s326 + $0xb0] sm:$0xff] %v415
      %448 = vst [vmem:[%s326 + $0xb8] sm:$0xff] %v416
      %449 = vst [vmem:[%s326 + $0xc0] sm:$0xff] %v417
      %450 = vst [vmem:[%s326 + $0xc8] sm:$0xff] %v418
      %451 = vst [vmem:[%s326 + $0xd0] sm:$0xff] %v419
      %452 = vst [vmem:[%s326 + $0xd8] sm:$0xff] %v420
      %453 = vst [vmem:[%s326 + $0xe0] sm:$0xff] %v421
      %454 = vst [vmem:[%s326 + $0xe8] sm:$0xff] %v422
      %455 = vst [vmem:[%s326 + $0xf0] sm:$0xff] %v423
      %456 = vst [vmem:[%s326 + $0xf8] sm:$0xff] %v424
      %v457 = vmul.f32 %v393, %v393
      %v458 = vmul.f32 %v394, %v394
      %v459 = vmul.f32 %v395, %v395
      %v460 = vmul.f32 %v396, %v396
      %v461 = vmul.f32 %v397, %v397
      %v462 = vmul.f32 %v398, %v398
      %v463 = vmul.f32 %v399, %v399
      %v464 = vmul.f32 %v400, %v400
      %v465 = vmul.f32 %v401, %v401
      %v466 = vmul.f32 %v402, %v402
      %v467 = vmul.f32 %v403, %v403
      %v468 = vmul.f32 %v404, %v404
      %v469 = vmul.f32 %v405, %v405
      %v470 = vmul.f32 %v406, %v406
      %v471 = vmul.f32 %v407, %v407
      %v472 = vmul.f32 %v408, %v408
      %v473 = vmul.f32 %v409, %v409
      %v474 = vmul.f32 %v410, %v410
      %v475 = vmul.f32 %v411, %v411
      %v476 = vmul.f32 %v412, %v412
      %v477 = vmul.f32 %v413, %v413
      %v478 = vmul.f32 %v414, %v414
      %v479 = vmul.f32 %v415, %v415
      %v480 = vmul.f32 %v416, %v416
      %v481 = vmul.f32 %v417, %v417
      %v482 = vmul.f32 %v418, %v418
      %v483 = vmul.f32 %v419, %v419
      %v484 = vmul.f32 %v420, %v420
      %v485 = vmul.f32 %v421, %v421
      %v486 = vmul.f32 %v422, %v422
      %v487 = vmul.f32 %v423, %v423
      %v488 = vmul.f32 %v424, %v424
      %v489 = vadd.f32 %v457, %v458
      %490 = vadd.xlane.f32.xlu0 %v489
      %v491 = vpop.xlane.xlu0 %490
      %v492 = vadd.f32 %v459, %v460
      %493 = vadd.xlane.f32.xlu0 %v492
      %v494 = vpop.xlane.xlu0 %493
      %v495 = vadd.f32 %v461, %v462
      %496 = vadd.xlane.f32.xlu0 %v495
      %v497 = vpop.xlane.xlu0 %496
      %v498 = vadd.f32 %v463, %v464
      %499 = vadd.xlane.f32.xlu0 %v498
      %v500 = vpop.xlane.xlu0 %499
      %v501 = vadd.f32 %v465, %v466
      %502 = vadd.xlane.f32.xlu0 %v501
      %v503 = vpop.xlane.xlu0 %502
      %v504 = vadd.f32 %v467, %v468
      %505 = vadd.xlane.f32.xlu0 %v504
      %v506 = vpop.xlane.xlu0 %505
      %v507 = vadd.f32 %v469, %v470
      %508 = vadd.xlane.f32.xlu0 %v507
      %v509 = vpop.xlane.xlu0 %508
      %v510 = vadd.f32 %v471, %v472
      %511 = vadd.xlane.f32.xlu0 %v510
      %v512 = vpop.xlane.xlu0 %511
      %v513 = vadd.f32 %v473, %v474
      %514 = vadd.xlane.f32.xlu0 %v513
      %v515 = vpop.xlane.xlu0 %514
      %v516 = vadd.f32 %v475, %v476
      %517 = vadd.xlane.f32.xlu0 %v516
      %v518 = vpop.xlane.xlu0 %517
      %v519 = vadd.f32 %v477, %v478
      %520 = vadd.xlane.f32.xlu0 %v519
      %v521 = vpop.xlane.xlu0 %520
      %v522 = vadd.f32 %v479, %v480
      %523 = vadd.xlane.f32.xlu0 %v522
      %v524 = vpop.xlane.xlu0 %523
      %v525 = vadd.f32 %v481, %v482
      %526 = vadd.xlane.f32.xlu0 %v525
      %v527 = vpop.xlane.xlu0 %526
      %v528 = vadd.f32 %v483, %v484
      %529 = vadd.xlane.f32.xlu0 %v528
      %v530 = vpop.xlane.xlu0 %529
      %v531 = vadd.f32 %v485, %v486
      %532 = vadd.xlane.f32.xlu0 %v531
      %v533 = vpop.xlane.xlu0 %532
      %v534 = vadd.f32 %v487, %v488
      %535 = vadd.xlane.f32.xlu0 %v534
      %v536 = vpop.xlane.xlu0 %535
      %v537 = vrcp.pop 256.0
      %v538 = vmul.f32 %v491, %v537
      %v539 = vmul.f32 %v494, %v537
      %v540 = vmul.f32 %v497, %v537
      %v541 = vmul.f32 %v500, %v537
      %v542 = vmul.f32 %v503, %v537
      %v543 = vmul.f32 %v506, %v537
      %v544 = vmul.f32 %v509, %v537
      %v545 = vmul.f32 %v512, %v537
      %v546 = vmul.f32 %v515, %v537
      %v547 = vmul.f32 %v518, %v537
      %v548 = vmul.f32 %v521, %v537
      %v549 = vmul.f32 %v524, %v537
      %v550 = vmul.f32 %v527, %v537
      %v551 = vmul.f32 %v530, %v537
      %v552 = vmul.f32 %v533, %v537
      %v553 = vmul.f32 %v536, %v537
      %v554 = vadd.f32 %v538, 1e-06
      %v555 = vadd.f32 %v539, 1e-06
      %v556 = vadd.f32 %v540, 1e-06
      %v557 = vadd.f32 %v541, 1e-06
      %v558 = vadd.f32 %v542, 1e-06
      %v559 = vadd.f32 %v543, 1e-06
      %v560 = vadd.f32 %v544, 1e-06
      %v561 = vadd.f32 %v545, 1e-06
      %v562 = vadd.f32 %v546, 1e-06
      %v563 = vadd.f32 %v547, 1e-06
      %v564 = vadd.f32 %v548, 1e-06
      %v565 = vadd.f32 %v549, 1e-06
      %v566 = vadd.f32 %v550, 1e-06
      %v567 = vadd.f32 %v551, 1e-06
      %v568 = vadd.f32 %v552, 1e-06
      %v569 = vadd.f32 %v553, 1e-06
      %v570 = vrsqrt.pop %v554
      %v571 = vrsqrt.pop %v555
      %v572 = vrsqrt.pop %v556
      %v573 = vrsqrt.pop %v557
      %v574 = vrsqrt.pop %v558
      %v575 = vrsqrt.pop %v559
      %v576 = vrsqrt.pop %v560
      %v577 = vrsqrt.pop %v561
      %v578 = vrsqrt.pop %v562
      %v579 = vrsqrt.pop %v563
      %v580 = vrsqrt.pop %v564
      %v581 = vrsqrt.pop %v565
      %v582 = vrsqrt.pop %v566
      %v583 = vrsqrt.pop %v567
      %v584 = vrsqrt.pop %v568
      %v585 = vrsqrt.pop %v569
      %v586 = vmul.f32 %v393, %v570
      %v587 = vmul.f32 %v394, %v570
      %v588 = vmul.f32 %v395, %v571
      %v589 = vmul.f32 %v396, %v571
      %v590 = vmul.f32 %v397, %v572
      %v591 = vmul.f32 %v398, %v572
      %v592 = vmul.f32 %v399, %v573
      %v593 = vmul.f32 %v400, %v573
      %v594 = vmul.f32 %v401, %v574
      %v595 = vmul.f32 %v402, %v574
      %v596 = vmul.f32 %v403, %v575
      %v597 = vmul.f32 %v404, %v575
      %v598 = vmul.f32 %v405, %v576
      %v599 = vmul.f32 %v406, %v576
      %v600 = vmul.f32 %v407, %v577
      %v601 = vmul.f32 %v408, %v577
      %v602 = vmul.f32 %v409, %v578
      %v603 = vmul.f32 %v410, %v578
      %v604 = vmul.f32 %v411, %v579
      %v605 = vmul.f32 %v412, %v579
      %v606 = vmul.f32 %v413, %v580
      %v607 = vmul.f32 %v414, %v580
      %v608 = vmul.f32 %v415, %v581
      %v609 = vmul.f32 %v416, %v581
      %v610 = vmul.f32 %v417, %v582
      %v611 = vmul.f32 %v418, %v582
      %v612 = vmul.f32 %v419, %v583
      %v613 = vmul.f32 %v420, %v583
      %v614 = vmul.f32 %v421, %v584
      %v615 = vmul.f32 %v422, %v584
      %v616 = vmul.f32 %v423, %v585
      %v617 = vmul.f32 %v424, %v585
      %v618 = vld [vmem:[%s2] sm:$0x3]
      %v620 = vlaneseq
      %v621 = vshrl.u32 %v620, 7
      %v622 = vsub.s32 0, %v621
      %v623 = vrot.slane %v618, %v622
      %v624 = vlaneseq
      %v625 = vshrl.u32 %v624, 7
      %v626 = vsub.s32 1, %v625
      %v627 = vrot.slane %v618, %v626
      %v630 = vmul.f32 %v586, %v623
      %v631 = vmul.f32 %v587, %v627
      %v632 = vmul.f32 %v588, %v623
      %v633 = vmul.f32 %v589, %v627
      %v634 = vmul.f32 %v590, %v623
      %v635 = vmul.f32 %v591, %v627
      %v636 = vmul.f32 %v592, %v623
      %v637 = vmul.f32 %v593, %v627
      %v638 = vmul.f32 %v594, %v623
      %v639 = vmul.f32 %v595, %v627
      %v640 = vmul.f32 %v596, %v623
      %v641 = vmul.f32 %v597, %v627
      %v642 = vmul.f32 %v598, %v623
      %v643 = vmul.f32 %v599, %v627
      %v644 = vmul.f32 %v600, %v623
      %v645 = vmul.f32 %v601, %v627
      %v646 = vmul.f32 %v602, %v623
      %v647 = vmul.f32 %v603, %v627
      %v648 = vmul.f32 %v604, %v623
      %v649 = vmul.f32 %v605, %v627
      %v650 = vmul.f32 %v606, %v623
      %v651 = vmul.f32 %v607, %v627
      %v652 = vmul.f32 %v608, %v623
      %v653 = vmul.f32 %v609, %v627
      %v654 = vmul.f32 %v610, %v623
      %v655 = vmul.f32 %v611, %v627
      %v656 = vmul.f32 %v612, %v623
      %v657 = vmul.f32 %v613, %v627
      %v658 = vmul.f32 %v614, %v623
      %v659 = vmul.f32 %v615, %v627
      %v660 = vmul.f32 %v616, %v623
      %v661 = vmul.f32 %v617, %v627
      %v662 = vpack.c.bf16 %v632, %v630
      %v663 = vpack.c.bf16 %v633, %v631
      %v664 = vpack.c.bf16 %v636, %v634
      %v665 = vpack.c.bf16 %v637, %v635
      %v666 = vpack.c.bf16 %v640, %v638
      %v667 = vpack.c.bf16 %v641, %v639
      %v668 = vpack.c.bf16 %v644, %v642
      %v669 = vpack.c.bf16 %v645, %v643
      %v670 = vpack.c.bf16 %v648, %v646
      %v671 = vpack.c.bf16 %v649, %v647
      %v672 = vpack.c.bf16 %v652, %v650
      %v673 = vpack.c.bf16 %v653, %v651
      %v674 = vpack.c.bf16 %v656, %v654
      %v675 = vpack.c.bf16 %v657, %v655
      %v676 = vpack.c.bf16 %v660, %v658
      %v677 = vpack.c.bf16 %v661, %v659
      %v678 = vld [vmem:[%s3] sm:$0xf]
      %v679 = vld [vmem:[%s3 + $0x10] sm:$0xf]
      %v680 = vld [vmem:[%s3 + $0x20] sm:$0xf]
      %v681 = vld [vmem:[%s3 + $0x30] sm:$0xf]
      %v682 = vld [vmem:[%s3 + $0x40] sm:$0xf]
      %v683 = vld [vmem:[%s3 + $0x50] sm:$0xf]
      %v684 = vld [vmem:[%s3 + $0x60] sm:$0xf]
      %v685 = vld [vmem:[%s3 + $0x70] sm:$0xf]
      %v686 = vld [vmem:[%s3 + $0x80] sm:$0xf]
      %v687 = vld [vmem:[%s3 + $0x90] sm:$0xf]
      %v688 = vld [vmem:[%s3 + $0xa0] sm:$0xf]
      %v689 = vld [vmem:[%s3 + $0xb0] sm:$0xf]
      %v690 = vld [vmem:[%s3 + $0xc0] sm:$0xf]
      %v691 = vld [vmem:[%s3 + $0xd0] sm:$0xf]
      %v692 = vld [vmem:[%s3 + $0xe0] sm:$0xf]
      %v693 = vld [vmem:[%s3 + $0xf0] sm:$0xf]
      %v694 = vld [vmem:[%s3 + $0x100] sm:$0xf]
      %v695 = vld [vmem:[%s3 + $0x110] sm:$0xf]
      %v696 = vld [vmem:[%s3 + $0x120] sm:$0xf]
      %v697 = vld [vmem:[%s3 + $0x130] sm:$0xf]
      %v698 = vld [vmem:[%s3 + $0x140] sm:$0xf]
      %v699 = vld [vmem:[%s3 + $0x150] sm:$0xf]
      %v700 = vld [vmem:[%s3 + $0x160] sm:$0xf]
      %v701 = vld [vmem:[%s3 + $0x170] sm:$0xf]
      %v702 = vld [vmem:[%s3 + $0x180] sm:$0xf]
      %v703 = vld [vmem:[%s3 + $0x190] sm:$0xf]
      %v704 = vld [vmem:[%s3 + $0x1a0] sm:$0xf]
      %v705 = vld [vmem:[%s3 + $0x1b0] sm:$0xf]
      %v706 = vld [vmem:[%s3 + $0x1c0] sm:$0xf]
      %v707 = vld [vmem:[%s3 + $0x1d0] sm:$0xf]
      %v708 = vld [vmem:[%s3 + $0x1e0] sm:$0xf]
      %v709 = vld [vmem:[%s3 + $0x1f0] sm:$0xf]
      %v742 = vunpack.c.l.b16 %v678
      %v743 = vunpack.c.l.b16 %v679
      %v744 = vunpack.c.l.b16 %v680
      %v745 = vunpack.c.l.b16 %v681
      %v746 = vunpack.c.l.b16 %v682
      %v747 = vunpack.c.l.b16 %v683
      %v748 = vunpack.c.l.b16 %v684
      %v749 = vunpack.c.l.b16 %v685
      %v750 = vunpack.c.l.b16 %v686
      %v751 = vunpack.c.l.b16 %v687
      %v752 = vunpack.c.l.b16 %v688
      %v753 = vunpack.c.l.b16 %v689
      %v754 = vunpack.c.l.b16 %v690
      %v755 = vunpack.c.l.b16 %v691
      %v756 = vunpack.c.l.b16 %v692
      %v757 = vunpack.c.l.b16 %v693
      %v758 = vunpack.c.l.b16 %v694
      %v759 = vunpack.c.l.b16 %v695
      %v760 = vunpack.c.l.b16 %v696
      %v761 = vunpack.c.l.b16 %v697
      %v762 = vunpack.c.l.b16 %v698
      %v763 = vunpack.c.l.b16 %v699
      %v764 = vunpack.c.l.b16 %v700
      %v765 = vunpack.c.l.b16 %v701
      %v766 = vunpack.c.l.b16 %v702
      %v767 = vunpack.c.l.b16 %v703
      %v768 = vunpack.c.l.b16 %v704
      %v769 = vunpack.c.l.b16 %v705
      %v770 = vunpack.c.l.b16 %v706
      %v771 = vunpack.c.l.b16 %v707
      %v772 = vunpack.c.l.b16 %v708
      %v773 = vunpack.c.l.b16 %v709
      %v774 = vpack.c.b16 %v743, %v742
      %v775 = vpack.c.b16 %v745, %v744
      %v776 = vpack.c.b16 %v747, %v746
      %v777 = vpack.c.b16 %v749, %v748
      %v778 = vpack.c.b16 %v751, %v750
      %v779 = vpack.c.b16 %v753, %v752
      %v780 = vpack.c.b16 %v755, %v754
      %v781 = vpack.c.b16 %v757, %v756
      %v782 = vpack.c.b16 %v759, %v758
      %v783 = vpack.c.b16 %v761, %v760
      %v784 = vpack.c.b16 %v763, %v762
      %v785 = vpack.c.b16 %v765, %v764
      %v786 = vpack.c.b16 %v767, %v766
      %v787 = vpack.c.b16 %v769, %v768
      %v788 = vpack.c.b16 %v771, %v770
      %v789 = vpack.c.b16 %v773, %v772
      %806 = vmatprep.subr.bf16.mxu0 0
      %807 = vmatpush1.bf16.msra.mxu0 %v774
      %808 = vmatprep.subr.bf16.mxu0 0
      %809 = vmatpush1.bf16.msra.mxu0 %v775
      %810 = vmatprep.subr.bf16.mxu0 0
      %811 = vmatpush1.bf16.msra.mxu0 %v776
      %812 = vmatprep.subr.bf16.mxu0 0
      %813 = vmatpush1.bf16.msra.mxu0 %v777
      %814 = vmatprep.subr.bf16.mxu0 0
      %815 = vmatpush1.bf16.msra.mxu0 %v778
      %816 = vmatprep.subr.bf16.mxu0 0
      %817 = vmatpush1.bf16.msra.mxu0 %v779
      %818 = vmatprep.subr.bf16.mxu0 0
      %819 = vmatpush1.bf16.msra.mxu0 %v780
      %820 = vmatprep.subr.bf16.mxu0 0
      %821 = vmatpush1.bf16.msra.mxu0 %v781
      %822 = vmatprep.subr.bf16.mxu0 0
      %823 = vmatpush1.bf16.msra.mxu0 %v782
      %824 = vmatprep.subr.bf16.mxu0 0
      %825 = vmatpush1.bf16.msra.mxu0 %v783
      %826 = vmatprep.subr.bf16.mxu0 0
      %827 = vmatpush1.bf16.msra.mxu0 %v784
      %828 = vmatprep.subr.bf16.mxu0 0
      %829 = vmatpush1.bf16.msra.mxu0 %v785
      %830 = vmatprep.subr.bf16.mxu0 0
      %831 = vmatpush1.bf16.msra.mxu0 %v786
      %832 = vmatprep.subr.bf16.mxu0 0
      %833 = vmatpush1.bf16.msra.mxu0 %v787
      %834 = vmatprep.subr.bf16.mxu0 0
      %835 = vmatpush1.bf16.msra.mxu0 %v788
      %836 = vmatprep.subr.bf16.mxu0 0
      %837 = vmatpush1.bf16.msra.mxu0 %v789
      %838 = vmatprep.mubr.bf16.mxu0 %v663
      %839 = vmatmul.mubr.bf16.gmra.mrb[0].mxu0 %v662
      %v840 = vpop.f32.mrb[0].mxu0
      %v841 = vadd.f32 0.0, %v840
      %v842 = vpop.f32.mrb[0].mxu0
      %v843 = vpop.f32.mrb[0].mxu0
      %v844 = vadd.f32 0.0, %v843
      %v845 = vpop.f32.mrb[0].mxu0
      %846 = vmatprep.mubr.bf16.mxu0 %v665
      %847 = vmatmul.mubr.bf16.gmra.mrb[0].mxu0 %v664
      %v848 = vpop.f32.mrb[0].mxu0
      %v849 = vadd.f32 0.0, %v848
      %v850 = vpop.f32.mrb[0].mxu0
      %v851 = vpop.f32.mrb[0].mxu0
      %v852 = vadd.f32 0.0, %v851
      %v853 = vpop.f32.mrb[0].mxu0
      %854 = vmatprep.mubr.bf16.mxu0 %v667
      %855 = vmatmul.mubr.bf16.gmra.mrb[0].mxu0 %v666
      %v856 = vpop.f32.mrb[0].mxu0
      %v857 = vadd.f32 0.0, %v856
      %v858 = vpop.f32.mrb[0].mxu0
      %v859 = vpop.f32.mrb[0].mxu0
      %v860 = vadd.f32 0.0, %v859
      %v861 = vpop.f32.mrb[0].mxu0
      %862 = vmatprep.mubr.bf16.mxu0 %v669
      %863 = vmatmul.mubr.bf16.gmra.mrb[0].mxu0 %v668
      %v864 = vpop.f32.mrb[0].mxu0
      %v865 = vadd.f32 0.0, %v864
      %v866 = vpop.f32.mrb[0].mxu0
      %v867 = vpop.f32.mrb[0].mxu0
      %v868 = vadd.f32 0.0, %v867
      %v869 = vpop.f32.mrb[0].mxu0
      %870 = vmatprep.mubr.bf16.mxu0 %v671
      %871 = vmatmul.mubr.bf16.gmra.mrb[0].mxu0 %v670
      %v872 = vpop.f32.mrb[0].mxu0
      %v873 = vadd.f32 0.0, %v872
      %v874 = vpop.f32.mrb[0].mxu0
      %v875 = vpop.f32.mrb[0].mxu0
      %v876 = vadd.f32 0.0, %v875
      %v877 = vpop.f32.mrb[0].mxu0
      %878 = vmatprep.mubr.bf16.mxu0 %v673
      %879 = vmatmul.mubr.bf16.gmra.mrb[0].mxu0 %v672
      %v880 = vpop.f32.mrb[0].mxu0
      %v881 = vadd.f32 0.0, %v880
      %v882 = vpop.f32.mrb[0].mxu0
      %v883 = vpop.f32.mrb[0].mxu0
      %v884 = vadd.f32 0.0, %v883
      %v885 = vpop.f32.mrb[0].mxu0
      %886 = vmatprep.mubr.bf16.mxu0 %v675
      %887 = vmatmul.mubr.bf16.gmra.mrb[0].mxu0 %v674
      %v888 = vpop.f32.mrb[0].mxu0
      %v889 = vadd.f32 0.0, %v888
      %v890 = vpop.f32.mrb[0].mxu0
      %v891 = vpop.f32.mrb[0].mxu0
      %v892 = vadd.f32 0.0, %v891
      %v893 = vpop.f32.mrb[0].mxu0
      %894 = vmatprep.mubr.bf16.mxu0 %v677
      %895 = vmatmul.mubr.bf16.gmra.mrb[0].mxu0 %v676
      %v896 = vpop.f32.mrb[0].mxu0
      %v897 = vadd.f32 0.0, %v896
      %v898 = vpop.f32.mrb[0].mxu0
      %v899 = vpop.f32.mrb[0].mxu0
      %v900 = vadd.f32 0.0, %v899
      %v901 = vpop.f32.mrb[0].mxu0
      %902 = vdwg.mxu0
      %v903 = vld [vmem:[%s4] sm:$0xf]
      %v904 = vld [vmem:[%s4 + $0x10] sm:$0xf]
      %v905 = vld [vmem:[%s4 + $0x20] sm:$0xf]
      %v906 = vld [vmem:[%s4 + $0x30] sm:$0xf]
      %v907 = vld [vmem:[%s4 + $0x40] sm:$0xf]
      %v908 = vld [vmem:[%s4 + $0x50] sm:$0xf]
      %v909 = vld [vmem:[%s4 + $0x60] sm:$0xf]
      %v910 = vld [vmem:[%s4 + $0x70] sm:$0xf]
      %v911 = vld [vmem:[%s4 + $0x80] sm:$0xf]
      %v912 = vld [vmem:[%s4 + $0x90] sm:$0xf]
      %v913 = vld [vmem:[%s4 + $0xa0] sm:$0xf]
      %v914 = vld [vmem:[%s4 + $0xb0] sm:$0xf]
      %v915 = vld [vmem:[%s4 + $0xc0] sm:$0xf]
      %v916 = vld [vmem:[%s4 + $0xd0] sm:$0xf]
      %v917 = vld [vmem:[%s4 + $0xe0] sm:$0xf]
      %v918 = vld [vmem:[%s4 + $0xf0] sm:$0xf]
      %v919 = vld [vmem:[%s4 + $0x100] sm:$0xf]
      %v920 = vld [vmem:[%s4 + $0x110] sm:$0xf]
      %v921 = vld [vmem:[%s4 + $0x120] sm:$0xf]
      %v922 = vld [vmem:[%s4 + $0x130] sm:$0xf]
      %v923 = vld [vmem:[%s4 + $0x140] sm:$0xf]
      %v924 = vld [vmem:[%s4 + $0x150] sm:$0xf]
      %v925 = vld [vmem:[%s4 + $0x160] sm:$0xf]
      %v926 = vld [vmem:[%s4 + $0x170] sm:$0xf]
      %v927 = vld [vmem:[%s4 + $0x180] sm:$0xf]
      %v928 = vld [vmem:[%s4 + $0x190] sm:$0xf]
      %v929 = vld [vmem:[%s4 + $0x1a0] sm:$0xf]
      %v930 = vld [vmem:[%s4 + $0x1b0] sm:$0xf]
      %v931 = vld [vmem:[%s4 + $0x1c0] sm:$0xf]
      %v932 = vld [vmem:[%s4 + $0x1d0] sm:$0xf]
      %v933 = vld [vmem:[%s4 + $0x1e0] sm:$0xf]
      %v934 = vld [vmem:[%s4 + $0x1f0] sm:$0xf]
      %v967 = vunpack.c.l.b16 %v903
      %v968 = vunpack.c.l.b16 %v904
      %v969 = vunpack.c.l.b16 %v905
      %v970 = vunpack.c.l.b16 %v906
      %v971 = vunpack.c.l.b16 %v907
      %v972 = vunpack.c.l.b16 %v908
      %v973 = vunpack.c.l.b16 %v909
      %v974 = vunpack.c.l.b16 %v910
      %v975 = vunpack.c.l.b16 %v911
      %v976 = vunpack.c.l.b16 %v912
      %v977 = vunpack.c.l.b16 %v913
      %v978 = vunpack.c.l.b16 %v914
      %v979 = vunpack.c.l.b16 %v915
      %v980 = vunpack.c.l.b16 %v916
      %v981 = vunpack.c.l.b16 %v917
      %v982 = vunpack.c.l.b16 %v918
      %v983 = vunpack.c.l.b16 %v919
      %v984 = vunpack.c.l.b16 %v920
      %v985 = vunpack.c.l.b16 %v921
      %v986 = vunpack.c.l.b16 %v922
      %v987 = vunpack.c.l.b16 %v923
      %v988 = vunpack.c.l.b16 %v924
      %v989 = vunpack.c.l.b16 %v925
      %v990 = vunpack.c.l.b16 %v926
      %v991 = vunpack.c.l.b16 %v927
      %v992 = vunpack.c.l.b16 %v928
      %v993 = vunpack.c.l.b16 %v929
      %v994 = vunpack.c.l.b16 %v930
      %v995 = vunpack.c.l.b16 %v931
      %v996 = vunpack.c.l.b16 %v932
      %v997 = vunpack.c.l.b16 %v933
      %v998 = vunpack.c.l.b16 %v934
      %v999 = vpack.c.b16 %v968, %v967
      %v1000 = vpack.c.b16 %v970, %v969
      %v1001 = vpack.c.b16 %v972, %v971
      %v1002 = vpack.c.b16 %v974, %v973
      %v1003 = vpack.c.b16 %v976, %v975
      %v1004 = vpack.c.b16 %v978, %v977
      %v1005 = vpack.c.b16 %v980, %v979
      %v1006 = vpack.c.b16 %v982, %v981
      %v1007 = vpack.c.b16 %v984, %v983
      %v1008 = vpack.c.b16 %v986, %v985
      %v1009 = vpack.c.b16 %v988, %v987
      %v1010 = vpack.c.b16 %v990, %v989
      %v1011 = vpack.c.b16 %v992, %v991
      %v1012 = vpack.c.b16 %v994, %v993
      %v1013 = vpack.c.b16 %v996, %v995
      %v1014 = vpack.c.b16 %v998, %v997
      %1031 = vmatprep.subr.bf16.mxu0 0
      %1032 = vmatpush1.bf16.msra.mxu0 %v999
      %1033 = vmatprep.subr.bf16.mxu0 0
      %1034 = vmatpush1.bf16.msra.mxu0 %v1000
      %1035 = vmatprep.subr.bf16.mxu0 0
      %1036 = vmatpush1.bf16.msra.mxu0 %v1001
      %1037 = vmatprep.subr.bf16.mxu0 0
      %1038 = vmatpush1.bf16.msra.mxu0 %v1002
      %1039 = vmatprep.subr.bf16.mxu0 0
      %1040 = vmatpush1.bf16.msra.mxu0 %v1003
      %1041 = vmatprep.subr.bf16.mxu0 0
      %1042 = vmatpush1.bf16.msra.mxu0 %v1004
      %1043 = vmatprep.subr.bf16.mxu0 0
      %1044 = vmatpush1.bf16.msra.mxu0 %v1005
      %1045 = vmatprep.subr.bf16.mxu0 0
      %1046 = vmatpush1.bf16.msra.mxu0 %v1006
      %1047 = vmatprep.subr.bf16.mxu0 0
      %1048 = vmatpush1.bf16.msra.mxu0 %v1007
      %1049 = vmatprep.subr.bf16.mxu0 0
      %1050 = vmatpush1.bf16.msra.mxu0 %v1008
      %1051 = vmatprep.subr.bf16.mxu0 0
      %1052 = vmatpush1.bf16.msra.mxu0 %v1009
      %1053 = vmatprep.subr.bf16.mxu0 0
      %1054 = vmatpush1.bf16.msra.mxu0 %v1010
      %1055 = vmatprep.subr.bf16.mxu0 0
      %1056 = vmatpush1.bf16.msra.mxu0 %v1011
      %1057 = vmatprep.subr.bf16.mxu0 0
      %1058 = vmatpush1.bf16.msra.mxu0 %v1012
      %1059 = vmatprep.subr.bf16.mxu0 0
      %1060 = vmatpush1.bf16.msra.mxu0 %v1013
      %1061 = vmatprep.subr.bf16.mxu0 0
      %1062 = vmatpush1.bf16.msra.mxu0 %v1014
      %1063 = vmatprep.mubr.bf16.mxu0 %v663
      %1064 = vmatmul.mubr.bf16.gmra.mrb[0].mxu0 %v662
      %v1065 = vpop.f32.mrb[0].mxu0
      %v1066 = vadd.f32 0.0, %v1065
      %v1067 = vpop.f32.mrb[0].mxu0
      %v1068 = vpop.f32.mrb[0].mxu0
      %v1069 = vadd.f32 0.0, %v1068
      %v1070 = vpop.f32.mrb[0].mxu0
      %1071 = vmatprep.mubr.bf16.mxu0 %v665
      %1072 = vmatmul.mubr.bf16.gmra.mrb[0].mxu0 %v664
      %v1073 = vpop.f32.mrb[0].mxu0
      %v1074 = vadd.f32 0.0, %v1073
      %v1075 = vpop.f32.mrb[0].mxu0
      %v1076 = vpop.f32.mrb[0].mxu0
      %v1077 = vadd.f32 0.0, %v1076
      %v1078 = vpop.f32.mrb[0].mxu0
      %1079 = vmatprep.mubr.bf16.mxu0 %v667
      %1080 = vmatmul.mubr.bf16.gmra.mrb[0].mxu0 %v666
      %v1081 = vpop.f32.mrb[0].mxu0
      %v1082 = vadd.f32 0.0, %v1081
      %v1083 = vpop.f32.mrb[0].mxu0
      %v1084 = vpop.f32.mrb[0].mxu0
      %v1085 = vadd.f32 0.0, %v1084
      %v1086 = vpop.f32.mrb[0].mxu0
      %1087 = vmatprep.mubr.bf16.mxu0 %v669
      %1088 = vmatmul.mubr.bf16.gmra.mrb[0].mxu0 %v668
      %v1089 = vpop.f32.mrb[0].mxu0
      %v1090 = vadd.f32 0.0, %v1089
      %v1091 = vpop.f32.mrb[0].mxu0
      %v1092 = vpop.f32.mrb[0].mxu0
      %v1093 = vadd.f32 0.0, %v1092
      %v1094 = vpop.f32.mrb[0].mxu0
      %1095 = vmatprep.mubr.bf16.mxu0 %v671
      %1096 = vmatmul.mubr.bf16.gmra.mrb[0].mxu0 %v670
      %v1097 = vpop.f32.mrb[0].mxu0
      %v1098 = vadd.f32 0.0, %v1097
      %v1099 = vpop.f32.mrb[0].mxu0
      %v1100 = vpop.f32.mrb[0].mxu0
      %v1101 = vadd.f32 0.0, %v1100
      %v1102 = vpop.f32.mrb[0].mxu0
      %1103 = vmatprep.mubr.bf16.mxu0 %v673
      %1104 = vmatmul.mubr.bf16.gmra.mrb[0].mxu0 %v672
      %v1105 = vpop.f32.mrb[0].mxu0
      %v1106 = vadd.f32 0.0, %v1105
      %v1107 = vpop.f32.mrb[0].mxu0
      %v1108 = vpop.f32.mrb[0].mxu0
      %v1109 = vadd.f32 0.0, %v1108
      %v1110 = vpop.f32.mrb[0].mxu0
      %1111 = vmatprep.mubr.bf16.mxu0 %v675
      %1112 = vmatmul.mubr.bf16.gmra.mrb[0].mxu0 %v674
      %v1113 = vpop.f32.mrb[0].mxu0
      %v1114 = vadd.f32 0.0, %v1113
      %v1115 = vpop.f32.mrb[0].mxu0
      %v1116 = vpop.f32.mrb[0].mxu0
      %v1117 = vadd.f32 0.0, %v1116
      %v1118 = vpop.f32.mrb[0].mxu0
      %1119 = vmatprep.mubr.bf16.mxu0 %v677
      %1120 = vmatmul.mubr.bf16.gmra.mrb[0].mxu0 %v676
      %v1121 = vpop.f32.mrb[0].mxu0
      %v1122 = vadd.f32 0.0, %v1121
      %v1123 = vpop.f32.mrb[0].mxu0
      %v1124 = vpop.f32.mrb[0].mxu0
      %v1125 = vadd.f32 0.0, %v1124
      %v1126 = vpop.f32.mrb[0].mxu0
      %1127 = vdwg.mxu0
      %v1128 = vxor.u32 %v841, 2147483648
      %v1129 = vxor.u32 %v844, 2147483648
      %v1130 = vxor.u32 %v849, 2147483648
      %v1131 = vxor.u32 %v852, 2147483648
      %v1132 = vxor.u32 %v857, 2147483648
      %v1133 = vxor.u32 %v860, 2147483648
      %v1134 = vxor.u32 %v865, 2147483648
      %v1135 = vxor.u32 %v868, 2147483648
      %v1136 = vxor.u32 %v873, 2147483648
      %v1137 = vxor.u32 %v876, 2147483648
      %v1138 = vxor.u32 %v881, 2147483648
      %v1139 = vxor.u32 %v884, 2147483648
      %v1140 = vxor.u32 %v889, 2147483648
      %v1141 = vxor.u32 %v892, 2147483648
      %v1142 = vxor.u32 %v897, 2147483648
      %v1143 = vxor.u32 %v900, 2147483648
      %v1144 = vmul.f32 %v1128, 1.442695
      %v1145 = vpow.pop %v1144
      %v1146 = vmul.f32 %v1129, 1.442695
      %v1147 = vpow.pop %v1146
      %v1148 = vmul.f32 %v1130, 1.442695
      %v1149 = vpow.pop %v1148
      %v1150 = vmul.f32 %v1131, 1.442695
      %v1151 = vpow.pop %v1150
      %v1152 = vmul.f32 %v1132, 1.442695
      %v1153 = vpow.pop %v1152
      %v1154 = vmul.f32 %v1133, 1.442695
      %v1155 = vpow.pop %v1154
      %v1156 = vmul.f32 %v1134, 1.442695
      %v1157 = vpow.pop %v1156
      %v1158 = vmul.f32 %v1135, 1.442695
      %v1159 = vpow.pop %v1158
      %v1160 = vmul.f32 %v1136, 1.442695
      %v1161 = vpow.pop %v1160
      %v1162 = vmul.f32 %v1137, 1.442695
      %v1163 = vpow.pop %v1162
      %v1164 = vmul.f32 %v1138, 1.442695
      %v1165 = vpow.pop %v1164
      %v1166 = vmul.f32 %v1139, 1.442695
      %v1167 = vpow.pop %v1166
      %v1168 = vmul.f32 %v1140, 1.442695
      %v1169 = vpow.pop %v1168
      %v1170 = vmul.f32 %v1141, 1.442695
      %v1171 = vpow.pop %v1170
      %v1172 = vmul.f32 %v1142, 1.442695
      %v1173 = vpow.pop %v1172
      %v1174 = vmul.f32 %v1143, 1.442695
      %v1175 = vpow.pop %v1174
      %v1176 = vadd.f32 %v1145, 1.0
      %v1177 = vadd.f32 %v1147, 1.0
      %v1178 = vadd.f32 %v1149, 1.0
      %v1179 = vadd.f32 %v1151, 1.0
      %v1180 = vadd.f32 %v1153, 1.0
      %v1181 = vadd.f32 %v1155, 1.0
      %v1182 = vadd.f32 %v1157, 1.0
      %v1183 = vadd.f32 %v1159, 1.0
      %v1184 = vadd.f32 %v1161, 1.0
      %v1185 = vadd.f32 %v1163, 1.0
      %v1186 = vadd.f32 %v1165, 1.0
      %v1187 = vadd.f32 %v1167, 1.0
      %v1188 = vadd.f32 %v1169, 1.0
      %v1189 = vadd.f32 %v1171, 1.0
      %v1190 = vadd.f32 %v1173, 1.0
      %v1191 = vadd.f32 %v1175, 1.0
      %v1192 = vrcp.pop %v1176
      %v1193 = vmul.f32 1.0, %v1192
      %v1194 = vrcp.pop %v1177
      %v1195 = vmul.f32 1.0, %v1194
      %v1196 = vrcp.pop %v1178
      %v1197 = vmul.f32 1.0, %v1196
      %v1198 = vrcp.pop %v1179
      %v1199 = vmul.f32 1.0, %v1198
      %v1200 = vrcp.pop %v1180
      %v1201 = vmul.f32 1.0, %v1200
      %v1202 = vrcp.pop %v1181
      %v1203 = vmul.f32 1.0, %v1202
      %v1204 = vrcp.pop %v1182
      %v1205 = vmul.f32 1.0, %v1204
      %v1206 = vrcp.pop %v1183
      %v1207 = vmul.f32 1.0, %v1206
      %v1208 = vrcp.pop %v1184
      %v1209 = vmul.f32 1.0, %v1208
      %v1210 = vrcp.pop %v1185
      %v1211 = vmul.f32 1.0, %v1210
      %v1212 = vrcp.pop %v1186
      %v1213 = vmul.f32 1.0, %v1212
      %v1214 = vrcp.pop %v1187
      %v1215 = vmul.f32 1.0, %v1214
      %v1216 = vrcp.pop %v1188
      %v1217 = vmul.f32 1.0, %v1216
      %v1218 = vrcp.pop %v1189
      %v1219 = vmul.f32 1.0, %v1218
      %v1220 = vrcp.pop %v1190
      %v1221 = vmul.f32 1.0, %v1220
      %v1222 = vrcp.pop %v1191
      %v1223 = vmul.f32 1.0, %v1222
      %v1224 = vmul.f32 %v841, %v1193
      %v1225 = vmul.f32 %v844, %v1195
      %v1226 = vmul.f32 %v849, %v1197
      %v1227 = vmul.f32 %v852, %v1199
      %v1228 = vmul.f32 %v857, %v1201
      %v1229 = vmul.f32 %v860, %v1203
      %v1230 = vmul.f32 %v865, %v1205
      %v1231 = vmul.f32 %v868, %v1207
      %v1232 = vmul.f32 %v873, %v1209
      %v1233 = vmul.f32 %v876, %v1211
      %v1234 = vmul.f32 %v881, %v1213
      %v1235 = vmul.f32 %v884, %v1215
      %v1236 = vmul.f32 %v889, %v1217
      %v1237 = vmul.f32 %v892, %v1219
      %v1238 = vmul.f32 %v897, %v1221
      %v1239 = vmul.f32 %v900, %v1223
      %v1240 = vmul.f32 %v1224, %v1066
      %v1241 = vmul.f32 %v1225, %v1069
      %v1242 = vmul.f32 %v1226, %v1074
      %v1243 = vmul.f32 %v1227, %v1077
      %v1244 = vmul.f32 %v1228, %v1082
      %v1245 = vmul.f32 %v1229, %v1085
      %v1246 = vmul.f32 %v1230, %v1090
      %v1247 = vmul.f32 %v1231, %v1093
      %v1248 = vmul.f32 %v1232, %v1098
      %v1249 = vmul.f32 %v1233, %v1101
      %v1250 = vmul.f32 %v1234, %v1106
      %v1251 = vmul.f32 %v1235, %v1109
      %v1252 = vmul.f32 %v1236, %v1114
      %v1253 = vmul.f32 %v1237, %v1117
      %v1254 = vmul.f32 %v1238, %v1122
      %v1255 = vmul.f32 %v1239, %v1125
      %v1256 = vpack.c.bf16 %v1241, %v1240
      %v1257 = vpack.c.bf16 %v1243, %v1242
      %v1258 = vpack.c.bf16 %v1245, %v1244
      %v1259 = vpack.c.bf16 %v1247, %v1246
      %v1260 = vpack.c.bf16 %v1249, %v1248
      %v1261 = vpack.c.bf16 %v1251, %v1250
      %v1262 = vpack.c.bf16 %v1253, %v1252
      %v1263 = vpack.c.bf16 %v1255, %v1254
      %v1264 = vld [vmem:[%s5] sm:$0xff]
      %v1265 = vld [vmem:[%s5 + $0x8] sm:$0xff]
      %v1266 = vld [vmem:[%s5 + $0x10] sm:$0xff]
      %v1267 = vld [vmem:[%s5 + $0x18] sm:$0xff]
      %v1268 = vld [vmem:[%s5 + $0x20] sm:$0xff]
      %v1269 = vld [vmem:[%s5 + $0x28] sm:$0xff]
      %v1270 = vld [vmem:[%s5 + $0x30] sm:$0xff]
      %v1271 = vld [vmem:[%s5 + $0x38] sm:$0xff]
      %v1272 = vld [vmem:[%s5 + $0x40] sm:$0xff]
      %v1273 = vld [vmem:[%s5 + $0x48] sm:$0xff]
      %v1274 = vld [vmem:[%s5 + $0x50] sm:$0xff]
      %v1275 = vld [vmem:[%s5 + $0x58] sm:$0xff]
      %v1276 = vld [vmem:[%s5 + $0x60] sm:$0xff]
      %v1277 = vld [vmem:[%s5 + $0x68] sm:$0xff]
      %v1278 = vld [vmem:[%s5 + $0x70] sm:$0xff]
      %v1279 = vld [vmem:[%s5 + $0x78] sm:$0xff]
      %v1280 = vld [vmem:[%s3 + $0x4] sm:$0xf]
      %v1281 = vld [vmem:[%s3 + $0x14] sm:$0xf]
      %v1282 = vld [vmem:[%s3 + $0x24] sm:$0xf]
      %v1283 = vld [vmem:[%s3 + $0x34] sm:$0xf]
      %v1284 = vld [vmem:[%s3 + $0x44] sm:$0xf]
      %v1285 = vld [vmem:[%s3 + $0x54] sm:$0xf]
      %v1286 = vld [vmem:[%s3 + $0x64] sm:$0xf]
      %v1287 = vld [vmem:[%s3 + $0x74] sm:$0xf]
      %v1288 = vld [vmem:[%s3 + $0x84] sm:$0xf]
      %v1289 = vld [vmem:[%s3 + $0x94] sm:$0xf]
      %v1290 = vld [vmem:[%s3 + $0xa4] sm:$0xf]
      %v1291 = vld [vmem:[%s3 + $0xb4] sm:$0xf]
      %v1292 = vld [vmem:[%s3 + $0xc4] sm:$0xf]
      %v1293 = vld [vmem:[%s3 + $0xd4] sm:$0xf]
      %v1294 = vld [vmem:[%s3 + $0xe4] sm:$0xf]
      %v1295 = vld [vmem:[%s3 + $0xf4] sm:$0xf]
      %v1296 = vld [vmem:[%s3 + $0x104] sm:$0xf]
      %v1297 = vld [vmem:[%s3 + $0x114] sm:$0xf]
      %v1298 = vld [vmem:[%s3 + $0x124] sm:$0xf]
      %v1299 = vld [vmem:[%s3 + $0x134] sm:$0xf]
      %v1300 = vld [vmem:[%s3 + $0x144] sm:$0xf]
      %v1301 = vld [vmem:[%s3 + $0x154] sm:$0xf]
      %v1302 = vld [vmem:[%s3 + $0x164] sm:$0xf]
      %v1303 = vld [vmem:[%s3 + $0x174] sm:$0xf]
      %v1304 = vld [vmem:[%s3 + $0x184] sm:$0xf]
      %v1305 = vld [vmem:[%s3 + $0x194] sm:$0xf]
      %v1306 = vld [vmem:[%s3 + $0x1a4] sm:$0xf]
      %v1307 = vld [vmem:[%s3 + $0x1b4] sm:$0xf]
      %v1308 = vld [vmem:[%s3 + $0x1c4] sm:$0xf]
      %v1309 = vld [vmem:[%s3 + $0x1d4] sm:$0xf]
      %v1310 = vld [vmem:[%s3 + $0x1e4] sm:$0xf]
      %v1311 = vld [vmem:[%s3 + $0x1f4] sm:$0xf]
      %v1344 = vunpack.c.l.b16 %v1280
      %v1345 = vunpack.c.l.b16 %v1281
      %v1346 = vunpack.c.l.b16 %v1282
      %v1347 = vunpack.c.l.b16 %v1283
      %v1348 = vunpack.c.l.b16 %v1284
      %v1349 = vunpack.c.l.b16 %v1285
      %v1350 = vunpack.c.l.b16 %v1286
      %v1351 = vunpack.c.l.b16 %v1287
      %v1352 = vunpack.c.l.b16 %v1288
      %v1353 = vunpack.c.l.b16 %v1289
      %v1354 = vunpack.c.l.b16 %v1290
      %v1355 = vunpack.c.l.b16 %v1291
      %v1356 = vunpack.c.l.b16 %v1292
      %v1357 = vunpack.c.l.b16 %v1293
      %v1358 = vunpack.c.l.b16 %v1294
      %v1359 = vunpack.c.l.b16 %v1295
      %v1360 = vunpack.c.l.b16 %v1296
      %v1361 = vunpack.c.l.b16 %v1297
      %v1362 = vunpack.c.l.b16 %v1298
      %v1363 = vunpack.c.l.b16 %v1299
      %v1364 = vunpack.c.l.b16 %v1300
      %v1365 = vunpack.c.l.b16 %v1301
      %v1366 = vunpack.c.l.b16 %v1302
      %v1367 = vunpack.c.l.b16 %v1303
      %v1368 = vunpack.c.l.b16 %v1304
      %v1369 = vunpack.c.l.b16 %v1305
      %v1370 = vunpack.c.l.b16 %v1306
      %v1371 = vunpack.c.l.b16 %v1307
      %v1372 = vunpack.c.l.b16 %v1308
      %v1373 = vunpack.c.l.b16 %v1309
      %v1374 = vunpack.c.l.b16 %v1310
      %v1375 = vunpack.c.l.b16 %v1311
      %v1376 = vpack.c.b16 %v1345, %v1344
      %v1377 = vpack.c.b16 %v1347, %v1346
      %v1378 = vpack.c.b16 %v1349, %v1348
      %v1379 = vpack.c.b16 %v1351, %v1350
      %v1380 = vpack.c.b16 %v1353, %v1352
      %v1381 = vpack.c.b16 %v1355, %v1354
      %v1382 = vpack.c.b16 %v1357, %v1356
      %v1383 = vpack.c.b16 %v1359, %v1358
      %v1384 = vpack.c.b16 %v1361, %v1360
      %v1385 = vpack.c.b16 %v1363, %v1362
      %v1386 = vpack.c.b16 %v1365, %v1364
      %v1387 = vpack.c.b16 %v1367, %v1366
      %v1388 = vpack.c.b16 %v1369, %v1368
      %v1389 = vpack.c.b16 %v1371, %v1370
      %v1390 = vpack.c.b16 %v1373, %v1372
      %v1391 = vpack.c.b16 %v1375, %v1374
      %1408 = vmatprep.subr.bf16.mxu0 0
      %1409 = vmatpush1.bf16.msra.mxu0 %v1376
      %1410 = vmatprep.subr.bf16.mxu0 0
      %1411 = vmatpush1.bf16.msra.mxu0 %v1377
      %1412 = vmatprep.subr.bf16.mxu0 0
      %1413 = vmatpush1.bf16.msra.mxu0 %v1378
      %1414 = vmatprep.subr.bf16.mxu0 0
      %1415 = vmatpush1.bf16.msra.mxu0 %v1379
      %1416 = vmatprep.subr.bf16.mxu0 0
      %1417 = vmatpush1.bf16.msra.mxu0 %v1380
      %1418 = vmatprep.subr.bf16.mxu0 0
      %1419 = vmatpush1.bf16.msra.mxu0 %v1381
      %1420 = vmatprep.subr.bf16.mxu0 0
      %1421 = vmatpush1.bf16.msra.mxu0 %v1382
      %1422 = vmatprep.subr.bf16.mxu0 0
      %1423 = vmatpush1.bf16.msra.mxu0 %v1383
      %1424 = vmatprep.subr.bf16.mxu0 0
      %1425 = vmatpush1.bf16.msra.mxu0 %v1384
      %1426 = vmatprep.subr.bf16.mxu0 0
      %1427 = vmatpush1.bf16.msra.mxu0 %v1385
      %1428 = vmatprep.subr.bf16.mxu0 0
      %1429 = vmatpush1.bf16.msra.mxu0 %v1386
      %1430 = vmatprep.subr.bf16.mxu0 0
      %1431 = vmatpush1.bf16.msra.mxu0 %v1387
      %1432 = vmatprep.subr.bf16.mxu0 0
      %1433 = vmatpush1.bf16.msra.mxu0 %v1388
      %1434 = vmatprep.subr.bf16.mxu0 0
      %1435 = vmatpush1.bf16.msra.mxu0 %v1389
      %1436 = vmatprep.subr.bf16.mxu0 0
      %1437 = vmatpush1.bf16.msra.mxu0 %v1390
      %1438 = vmatprep.subr.bf16.mxu0 0
      %1439 = vmatpush1.bf16.msra.mxu0 %v1391
      %1440 = vmatprep.mubr.bf16.mxu0 %v663
      %1441 = vmatmul.mubr.bf16.gmra.mrb[0].mxu0 %v662
      %v1442 = vpop.f32.mrb[0].mxu0
      %v1443 = vadd.f32 0.0, %v1442
      %v1444 = vpop.f32.mrb[0].mxu0
      %v1445 = vpop.f32.mrb[0].mxu0
      %v1446 = vadd.f32 0.0, %v1445
      %v1447 = vpop.f32.mrb[0].mxu0
      %1448 = vmatprep.mubr.bf16.mxu0 %v665
      %1449 = vmatmul.mubr.bf16.gmra.mrb[0].mxu0 %v664
      %v1450 = vpop.f32.mrb[0].mxu0
      %v1451 = vadd.f32 0.0, %v1450
      %v1452 = vpop.f32.mrb[0].mxu0
      %v1453 = vpop.f32.mrb[0].mxu0
      %v1454 = vadd.f32 0.0, %v1453
      %v1455 = vpop.f32.mrb[0].mxu0
      %1456 = vmatprep.mubr.bf16.mxu0 %v667
      %1457 = vmatmul.mubr.bf16.gmra.mrb[0].mxu0 %v666
      %v1458 = vpop.f32.mrb[0].mxu0
      %v1459 = vadd.f32 0.0, %v1458
      %v1460 = vpop.f32.mrb[0].mxu0
      %v1461 = vpop.f32.mrb[0].mxu0
      %v1462 = vadd.f32 0.0, %v1461
      %v1463 = vpop.f32.mrb[0].mxu0
      %1464 = vmatprep.mubr.bf16.mxu0 %v669
      %1465 = vmatmul.mubr.bf16.gmra.mrb[0].mxu0 %v668
      %v1466 = vpop.f32.mrb[0].mxu0
      %v1467 = vadd.f32 0.0, %v1466
      %v1468 = vpop.f32.mrb[0].mxu0
      %v1469 = vpop.f32.mrb[0].mxu0
      %v1470 = vadd.f32 0.0, %v1469
      %v1471 = vpop.f32.mrb[0].mxu0
      %1472 = vmatprep.mubr.bf16.mxu0 %v671
      %1473 = vmatmul.mubr.bf16.gmra.mrb[0].mxu0 %v670
      %v1474 = vpop.f32.mrb[0].mxu0
      %v1475 = vadd.f32 0.0, %v1474
      %v1476 = vpop.f32.mrb[0].mxu0
      %v1477 = vpop.f32.mrb[0].mxu0
      %v1478 = vadd.f32 0.0, %v1477
      %v1479 = vpop.f32.mrb[0].mxu0
      %1480 = vmatprep.mubr.bf16.mxu0 %v673
      %1481 = vmatmul.mubr.bf16.gmra.mrb[0].mxu0 %v672
      %v1482 = vpop.f32.mrb[0].mxu0
      %v1483 = vadd.f32 0.0, %v1482
      %v1484 = vpop.f32.mrb[0].mxu0
      %v1485 = vpop.f32.mrb[0].mxu0
      %v1486 = vadd.f32 0.0, %v1485
      %v1487 = vpop.f32.mrb[0].mxu0
      %1488 = vmatprep.mubr.bf16.mxu0 %v675
      %1489 = vmatmul.mubr.bf16.gmra.mrb[0].mxu0 %v674
      %v1490 = vpop.f32.mrb[0].mxu0
      %v1491 = vadd.f32 0.0, %v1490
      %v1492 = vpop.f32.mrb[0].mxu0
      %v1493 = vpop.f32.mrb[0].mxu0
      %v1494 = vadd.f32 0.0, %v1493
      %v1495 = vpop.f32.mrb[0].mxu0
      %1496 = vmatprep.mubr.bf16.mxu0 %v677
      %1497 = vmatmul.mubr.bf16.gmra.mrb[0].mxu0 %v676
      %v1498 = vpop.f32.mrb[0].mxu0
      %v1499 = vadd.f32 0.0, %v1498
      %v1500 = vpop.f32.mrb[0].mxu0
      %v1501 = vpop.f32.mrb[0].mxu0
      %v1502 = vadd.f32 0.0, %v1501
      %v1503 = vpop.f32.mrb[0].mxu0
      %1504 = vdwg.mxu0
      %v1505 = vld [vmem:[%s4 + $0x4] sm:$0xf]
      %v1506 = vld [vmem:[%s4 + $0x14] sm:$0xf]
      %v1507 = vld [vmem:[%s4 + $0x24] sm:$0xf]
      %v1508 = vld [vmem:[%s4 + $0x34] sm:$0xf]
      %v1509 = vld [vmem:[%s4 + $0x44] sm:$0xf]
      %v1510 = vld [vmem:[%s4 + $0x54] sm:$0xf]
      %v1511 = vld [vmem:[%s4 + $0x64] sm:$0xf]
      %v1512 = vld [vmem:[%s4 + $0x74] sm:$0xf]
      %v1513 = vld [vmem:[%s4 + $0x84] sm:$0xf]
      %v1514 = vld [vmem:[%s4 + $0x94] sm:$0xf]
      %v1515 = vld [vmem:[%s4 + $0xa4] sm:$0xf]
      %v1516 = vld [vmem:[%s4 + $0xb4] sm:$0xf]
      %v1517 = vld [vmem:[%s4 + $0xc4] sm:$0xf]
      %v1518 = vld [vmem:[%s4 + $0xd4] sm:$0xf]
      %v1519 = vld [vmem:[%s4 + $0xe4] sm:$0xf]
      %v1520 = vld [vmem:[%s4 + $0xf4] sm:$0xf]
      %v1521 = vld [vmem:[%s4 + $0x104] sm:$0xf]
      %v1522 = vld [vmem:[%s4 + $0x114] sm:$0xf]
      %v1523 = vld [vmem:[%s4 + $0x124] sm:$0xf]
      %v1524 = vld [vmem:[%s4 + $0x134] sm:$0xf]
      %v1525 = vld [vmem:[%s4 + $0x144] sm:$0xf]
      %v1526 = vld [vmem:[%s4 + $0x154] sm:$0xf]
      %v1527 = vld [vmem:[%s4 + $0x164] sm:$0xf]
      %v1528 = vld [vmem:[%s4 + $0x174] sm:$0xf]
      %v1529 = vld [vmem:[%s4 + $0x184] sm:$0xf]
      %v1530 = vld [vmem:[%s4 + $0x194] sm:$0xf]
      %v1531 = vld [vmem:[%s4 + $0x1a4] sm:$0xf]
      %v1532 = vld [vmem:[%s4 + $0x1b4] sm:$0xf]
      %v1533 = vld [vmem:[%s4 + $0x1c4] sm:$0xf]
      %v1534 = vld [vmem:[%s4 + $0x1d4] sm:$0xf]
      %v1535 = vld [vmem:[%s4 + $0x1e4] sm:$0xf]
      %v1536 = vld [vmem:[%s4 + $0x1f4] sm:$0xf]
      %v1569 = vunpack.c.l.b16 %v1505
      %v1570 = vunpack.c.l.b16 %v1506
      %v1571 = vunpack.c.l.b16 %v1507
      %v1572 = vunpack.c.l.b16 %v1508
      %v1573 = vunpack.c.l.b16 %v1509
      %v1574 = vunpack.c.l.b16 %v1510
      %v1575 = vunpack.c.l.b16 %v1511
      %v1576 = vunpack.c.l.b16 %v1512
      %v1577 = vunpack.c.l.b16 %v1513
      %v1578 = vunpack.c.l.b16 %v1514
      %v1579 = vunpack.c.l.b16 %v1515
      %v1580 = vunpack.c.l.b16 %v1516
      %v1581 = vunpack.c.l.b16 %v1517
      %v1582 = vunpack.c.l.b16 %v1518
      %v1583 = vunpack.c.l.b16 %v1519
      %v1584 = vunpack.c.l.b16 %v1520
      %v1585 = vunpack.c.l.b16 %v1521
      %v1586 = vunpack.c.l.b16 %v1522
      %v1587 = vunpack.c.l.b16 %v1523
      %v1588 = vunpack.c.l.b16 %v1524
      %v1589 = vunpack.c.l.b16 %v1525
      %v1590 = vunpack.c.l.b16 %v1526
      %v1591 = vunpack.c.l.b16 %v1527
      %v1592 = vunpack.c.l.b16 %v1528
      %v1593 = vunpack.c.l.b16 %v1529
      %v1594 = vunpack.c.l.b16 %v1530
      %v1595 = vunpack.c.l.b16 %v1531
      %v1596 = vunpack.c.l.b16 %v1532
      %v1597 = vunpack.c.l.b16 %v1533
      %v1598 = vunpack.c.l.b16 %v1534
      %v1599 = vunpack.c.l.b16 %v1535
      %v1600 = vunpack.c.l.b16 %v1536
      %v1601 = vpack.c.b16 %v1570, %v1569
      %v1602 = vpack.c.b16 %v1572, %v1571
      %v1603 = vpack.c.b16 %v1574, %v1573
      %v1604 = vpack.c.b16 %v1576, %v1575
      %v1605 = vpack.c.b16 %v1578, %v1577
      %v1606 = vpack.c.b16 %v1580, %v1579
      %v1607 = vpack.c.b16 %v1582, %v1581
      %v1608 = vpack.c.b16 %v1584, %v1583
      %v1609 = vpack.c.b16 %v1586, %v1585
      %v1610 = vpack.c.b16 %v1588, %v1587
      %v1611 = vpack.c.b16 %v1590, %v1589
      %v1612 = vpack.c.b16 %v1592, %v1591
      %v1613 = vpack.c.b16 %v1594, %v1593
      %v1614 = vpack.c.b16 %v1596, %v1595
      %v1615 = vpack.c.b16 %v1598, %v1597
      %v1616 = vpack.c.b16 %v1600, %v1599
      %1633 = vmatprep.subr.bf16.mxu0 0
      %1634 = vmatpush1.bf16.msra.mxu0 %v1601
      %1635 = vmatprep.subr.bf16.mxu0 0
      %1636 = vmatpush1.bf16.msra.mxu0 %v1602
      %1637 = vmatprep.subr.bf16.mxu0 0
      %1638 = vmatpush1.bf16.msra.mxu0 %v1603
      %1639 = vmatprep.subr.bf16.mxu0 0
      %1640 = vmatpush1.bf16.msra.mxu0 %v1604
      %1641 = vmatprep.subr.bf16.mxu0 0
      %1642 = vmatpush1.bf16.msra.mxu0 %v1605
      %1643 = vmatprep.subr.bf16.mxu0 0
      %1644 = vmatpush1.bf16.msra.mxu0 %v1606
      %1645 = vmatprep.subr.bf16.mxu0 0
      %1646 = vmatpush1.bf16.msra.mxu0 %v1607
      %1647 = vmatprep.subr.bf16.mxu0 0
      %1648 = vmatpush1.bf16.msra.mxu0 %v1608
      %1649 = vmatprep.subr.bf16.mxu0 0
      %1650 = vmatpush1.bf16.msra.mxu0 %v1609
      %1651 = vmatprep.subr.bf16.mxu0 0
      %1652 = vmatpush1.bf16.msra.mxu0 %v1610
      %1653 = vmatprep.subr.bf16.mxu0 0
      %1654 = vmatpush1.bf16.msra.mxu0 %v1611
      %1655 = vmatprep.subr.bf16.mxu0 0
      %1656 = vmatpush1.bf16.msra.mxu0 %v1612
      %1657 = vmatprep.subr.bf16.mxu0 0
      %1658 = vmatpush1.bf16.msra.mxu0 %v1613
      %1659 = vmatprep.subr.bf16.mxu0 0
      %1660 = vmatpush1.bf16.msra.mxu0 %v1614
      %1661 = vmatprep.subr.bf16.mxu0 0
      %1662 = vmatpush1.bf16.msra.mxu0 %v1615
      %1663 = vmatprep.subr.bf16.mxu0 0
      %1664 = vmatpush1.bf16.msra.mxu0 %v1616
      %1665 = vmatprep.mubr.bf16.mxu0 %v663
      %1666 = vmatmul.mubr.bf16.gmra.mrb[0].mxu0 %v662
      %v1667 = vpop.f32.mrb[0].mxu0
      %v1668 = vadd.f32 0.0, %v1667
      %v1669 = vpop.f32.mrb[0].mxu0
      %v1670 = vpop.f32.mrb[0].mxu0
      %v1671 = vadd.f32 0.0, %v1670
      %v1672 = vpop.f32.mrb[0].mxu0
      %1673 = vmatprep.mubr.bf16.mxu0 %v665
      %1674 = vmatmul.mubr.bf16.gmra.mrb[0].mxu0 %v664
      %v1675 = vpop.f32.mrb[0].mxu0
      %v1676 = vadd.f32 0.0, %v1675
      %v1677 = vpop.f32.mrb[0].mxu0
      %v1678 = vpop.f32.mrb[0].mxu0
      %v1679 = vadd.f32 0.0, %v1678
      %v1680 = vpop.f32.mrb[0].mxu0
      %1681 = vmatprep.mubr.bf16.mxu0 %v667
      %1682 = vmatmul.mubr.bf16.gmra.mrb[0].mxu0 %v666
      %v1683 = vpop.f32.mrb[0].mxu0
      %v1684 = vadd.f32 0.0, %v1683
      %v1685 = vpop.f32.mrb[0].mxu0
      %v1686 = vpop.f32.mrb[0].mxu0
      %v1687 = vadd.f32 0.0, %v1686
      %v1688 = vpop.f32.mrb[0].mxu0
      %1689 = vmatprep.mubr.bf16.mxu0 %v669
      %1690 = vmatmul.mubr.bf16.gmra.mrb[0].mxu0 %v668
      %v1691 = vpop.f32.mrb[0].mxu0
      %v1692 = vadd.f32 0.0, %v1691
      %v1693 = vpop.f32.mrb[0].mxu0
      %v1694 = vpop.f32.mrb[0].mxu0
      %v1695 = vadd.f32 0.0, %v1694
      %v1696 = vpop.f32.mrb[0].mxu0
      %1697 = vmatprep.mubr.bf16.mxu0 %v671
      %1698 = vmatmul.mubr.bf16.gmra.mrb[0].mxu0 %v670
      %v1699 = vpop.f32.mrb[0].mxu0
      %v1700 = vadd.f32 0.0, %v1699
      %v1701 = vpop.f32.mrb[0].mxu0
      %v1702 = vpop.f32.mrb[0].mxu0
      %v1703 = vadd.f32 0.0, %v1702
      %v1704 = vpop.f32.mrb[0].mxu0
      %1705 = vmatprep.mubr.bf16.mxu0 %v673
      %1706 = vmatmul.mubr.bf16.gmra.mrb[0].mxu0 %v672
      %v1707 = vpop.f32.mrb[0].mxu0
      %v1708 = vadd.f32 0.0, %v1707
      %v1709 = vpop.f32.mrb[0].mxu0
      %v1710 = vpop.f32.mrb[0].mxu0
      %v1711 = vadd.f32 0.0, %v1710
      %v1712 = vpop.f32.mrb[0].mxu0
      %1713 = vmatprep.mubr.bf16.mxu0 %v675
      %1714 = vmatmul.mubr.bf16.gmra.mrb[0].mxu0 %v674
      %v1715 = vpop.f32.mrb[0].mxu0
      %v1716 = vadd.f32 0.0, %v1715
      %v1717 = vpop.f32.mrb[0].mxu0
      %v1718 = vpop.f32.mrb[0].mxu0
      %v1719 = vadd.f32 0.0, %v1718
      %v1720 = vpop.f32.mrb[0].mxu0
      %1721 = vmatprep.mubr.bf16.mxu0 %v677
      %1722 = vmatmul.mubr.bf16.gmra.mrb[0].mxu0 %v676
      %v1723 = vpop.f32.mrb[0].mxu0
      %v1724 = vadd.f32 0.0, %v1723
      %v1725 = vpop.f32.mrb[0].mxu0
      %v1726 = vpop.f32.mrb[0].mxu0
      %v1727 = vadd.f32 0.0, %v1726
      %v1728 = vpop.f32.mrb[0].mxu0
      %1729 = vdwg.mxu0
      %v1730 = vxor.u32 %v1443, 2147483648
      %v1731 = vxor.u32 %v1446, 2147483648
      %v1732 = vxor.u32 %v1451, 2147483648
      %v1733 = vxor.u32 %v1454, 2147483648
      %v1734 = vxor.u32 %v1459, 2147483648
      %v1735 = vxor.u32 %v1462, 2147483648
      %v1736 = vxor.u32 %v1467, 2147483648
      %v1737 = vxor.u32 %v1470, 2147483648
      %v1738 = vxor.u32 %v1475, 2147483648
      %v1739 = vxor.u32 %v1478, 2147483648
      %v1740 = vxor.u32 %v1483, 2147483648
      %v1741 = vxor.u32 %v1486, 2147483648
      %v1742 = vxor.u32 %v1491, 2147483648
      %v1743 = vxor.u32 %v1494, 2147483648
      %v1744 = vxor.u32 %v1499, 2147483648
      %v1745 = vxor.u32 %v1502, 2147483648
      %v1746 = vmul.f32 %v1730, 1.442695
      %v1747 = vpow.pop %v1746
      %v1748 = vmul.f32 %v1731, 1.442695
      %v1749 = vpow.pop %v1748
      %v1750 = vmul.f32 %v1732, 1.442695
      %v1751 = vpow.pop %v1750
      %v1752 = vmul.f32 %v1733, 1.442695
      %v1753 = vpow.pop %v1752
      %v1754 = vmul.f32 %v1734, 1.442695
      %v1755 = vpow.pop %v1754
      %v1756 = vmul.f32 %v1735, 1.442695
      %v1757 = vpow.pop %v1756
      %v1758 = vmul.f32 %v1736, 1.442695
      %v1759 = vpow.pop %v1758
      %v1760 = vmul.f32 %v1737, 1.442695
      %v1761 = vpow.pop %v1760
      %v1762 = vmul.f32 %v1738, 1.442695
      %v1763 = vpow.pop %v1762
      %v1764 = vmul.f32 %v1739, 1.442695
      %v1765 = vpow.pop %v1764
      %v1766 = vmul.f32 %v1740, 1.442695
      %v1767 = vpow.pop %v1766
      %v1768 = vmul.f32 %v1741, 1.442695
      %v1769 = vpow.pop %v1768
      %v1770 = vmul.f32 %v1742, 1.442695
      %v1771 = vpow.pop %v1770
      %v1772 = vmul.f32 %v1743, 1.442695
      %v1773 = vpow.pop %v1772
      %v1774 = vmul.f32 %v1744, 1.442695
      %v1775 = vpow.pop %v1774
      %v1776 = vmul.f32 %v1745, 1.442695
      %v1777 = vpow.pop %v1776
      %v1778 = vadd.f32 %v1747, 1.0
      %v1779 = vadd.f32 %v1749, 1.0
      %v1780 = vadd.f32 %v1751, 1.0
      %v1781 = vadd.f32 %v1753, 1.0
      %v1782 = vadd.f32 %v1755, 1.0
      %v1783 = vadd.f32 %v1757, 1.0
      %v1784 = vadd.f32 %v1759, 1.0
      %v1785 = vadd.f32 %v1761, 1.0
      %v1786 = vadd.f32 %v1763, 1.0
      %v1787 = vadd.f32 %v1765, 1.0
      %v1788 = vadd.f32 %v1767, 1.0
      %v1789 = vadd.f32 %v1769, 1.0
      %v1790 = vadd.f32 %v1771, 1.0
      %v1791 = vadd.f32 %v1773, 1.0
      %v1792 = vadd.f32 %v1775, 1.0
      %v1793 = vadd.f32 %v1777, 1.0
      %v1794 = vrcp.pop %v1778
      %v1795 = vmul.f32 1.0, %v1794
      %v1796 = vrcp.pop %v1779
      %v1797 = vmul.f32 1.0, %v1796
      %v1798 = vrcp.pop %v1780
      %v1799 = vmul.f32 1.0, %v1798
      %v1800 = vrcp.pop %v1781
      %v1801 = vmul.f32 1.0, %v1800
      %v1802 = vrcp.pop %v1782
      %v1803 = vmul.f32 1.0, %v1802
      %v1804 = vrcp.pop %v1783
      %v1805 = vmul.f32 1.0, %v1804
      %v1806 = vrcp.pop %v1784
      %v1807 = vmul.f32 1.0, %v1806
      %v1808 = vrcp.pop %v1785
      %v1809 = vmul.f32 1.0, %v1808
      %v1810 = vrcp.pop %v1786
      %v1811 = vmul.f32 1.0, %v1810
      %v1812 = vrcp.pop %v1787
      %v1813 = vmul.f32 1.0, %v1812
      %v1814 = vrcp.pop %v1788
      %v1815 = vmul.f32 1.0, %v1814
      %v1816 = vrcp.pop %v1789
      %v1817 = vmul.f32 1.0, %v1816
      %v1818 = vrcp.pop %v1790
      %v1819 = vmul.f32 1.0, %v1818
      %v1820 = vrcp.pop %v1791
      %v1821 = vmul.f32 1.0, %v1820
      %v1822 = vrcp.pop %v1792
      %v1823 = vmul.f32 1.0, %v1822
      %v1824 = vrcp.pop %v1793
      %v1825 = vmul.f32 1.0, %v1824
      %v1826 = vmul.f32 %v1443, %v1795
      %v1827 = vmul.f32 %v1446, %v1797
      %v1828 = vmul.f32 %v1451, %v1799
      %v1829 = vmul.f32 %v1454, %v1801
      %v1830 = vmul.f32 %v1459, %v1803
      %v1831 = vmul.f32 %v1462, %v1805
      %v1832 = vmul.f32 %v1467, %v1807
      %v1833 = vmul.f32 %v1470, %v1809
      %v1834 = vmul.f32 %v1475, %v1811
      %v1835 = vmul.f32 %v1478, %v1813
      %v1836 = vmul.f32 %v1483, %v1815
      %v1837 = vmul.f32 %v1486, %v1817
      %v1838 = vmul.f32 %v1491, %v1819
      %v1839 = vmul.f32 %v1494, %v1821
      %v1840 = vmul.f32 %v1499, %v1823
      %v1841 = vmul.f32 %v1502, %v1825
      %v1842 = vmul.f32 %v1826, %v1668
      %v1843 = vmul.f32 %v1827, %v1671
      %v1844 = vmul.f32 %v1828, %v1676
      %v1845 = vmul.f32 %v1829, %v1679
      %v1846 = vmul.f32 %v1830, %v1684
      %v1847 = vmul.f32 %v1831, %v1687
      %v1848 = vmul.f32 %v1832, %v1692
      %v1849 = vmul.f32 %v1833, %v1695
      %v1850 = vmul.f32 %v1834, %v1700
      %v1851 = vmul.f32 %v1835, %v1703
      %v1852 = vmul.f32 %v1836, %v1708
      %v1853 = vmul.f32 %v1837, %v1711
      %v1854 = vmul.f32 %v1838, %v1716
      %v1855 = vmul.f32 %v1839, %v1719
      %v1856 = vmul.f32 %v1840, %v1724
      %v1857 = vmul.f32 %v1841, %v1727
      %v1858 = vpack.c.bf16 %v1843, %v1842
      %v1859 = vpack.c.bf16 %v1845, %v1844
      %v1860 = vpack.c.bf16 %v1847, %v1846
      %v1861 = vpack.c.bf16 %v1849, %v1848
      %v1862 = vpack.c.bf16 %v1851, %v1850
      %v1863 = vpack.c.bf16 %v1853, %v1852
      %v1864 = vpack.c.bf16 %v1855, %v1854
      %v1865 = vpack.c.bf16 %v1857, %v1856
      %v1866 = vld [vmem:[%s5 + $0x80] sm:$0xff]
      %v1867 = vld [vmem:[%s5 + $0x88] sm:$0xff]
      %v1868 = vld [vmem:[%s5 + $0x90] sm:$0xff]
      %v1869 = vld [vmem:[%s5 + $0x98] sm:$0xff]
      %v1870 = vld [vmem:[%s5 + $0xa0] sm:$0xff]
      %v1871 = vld [vmem:[%s5 + $0xa8] sm:$0xff]
      %v1872 = vld [vmem:[%s5 + $0xb0] sm:$0xff]
      %v1873 = vld [vmem:[%s5 + $0xb8] sm:$0xff]
      %v1874 = vld [vmem:[%s5 + $0xc0] sm:$0xff]
      %v1875 = vld [vmem:[%s5 + $0xc8] sm:$0xff]
      %v1876 = vld [vmem:[%s5 + $0xd0] sm:$0xff]
      %v1877 = vld [vmem:[%s5 + $0xd8] sm:$0xff]
      %v1878 = vld [vmem:[%s5 + $0xe0] sm:$0xff]
      %v1879 = vld [vmem:[%s5 + $0xe8] sm:$0xff]
      %v1880 = vld [vmem:[%s5 + $0xf0] sm:$0xff]
      %v1881 = vld [vmem:[%s5 + $0xf8] sm:$0xff]
      %v1898 = vunpack.c.l.b16 %v1866
      %v1899 = vunpack.c.h.b16 %v1866
      %v1900 = vunpack.c.l.b16 %v1867
      %v1901 = vunpack.c.h.b16 %v1867
      %v1902 = vunpack.c.l.b16 %v1868
      %v1903 = vunpack.c.h.b16 %v1868
      %v1904 = vunpack.c.l.b16 %v1869
      %v1905 = vunpack.c.h.b16 %v1869
      %v1906 = vunpack.c.l.b16 %v1870
      %v1907 = vunpack.c.h.b16 %v1870
      %v1908 = vunpack.c.l.b16 %v1871
      %v1909 = vunpack.c.h.b16 %v1871
      %v1910 = vunpack.c.l.b16 %v1872
      %v1911 = vunpack.c.h.b16 %v1872
      %v1912 = vunpack.c.l.b16 %v1873
      %v1913 = vunpack.c.h.b16 %v1873
      %v1914 = vunpack.c.l.b16 %v1874
      %v1915 = vunpack.c.h.b16 %v1874
      %v1916 = vunpack.c.l.b16 %v1875
      %v1917 = vunpack.c.h.b16 %v1875
      %v1918 = vunpack.c.l.b16 %v1876
      %v1919 = vunpack.c.h.b16 %v1876
      %v1920 = vunpack.c.l.b16 %v1877
      %v1921 = vunpack.c.h.b16 %v1877
      %v1922 = vunpack.c.l.b16 %v1878
      %v1923 = vunpack.c.h.b16 %v1878
      %v1924 = vunpack.c.l.b16 %v1879
      %v1925 = vunpack.c.h.b16 %v1879
      %v1926 = vunpack.c.l.b16 %v1880
      %v1927 = vunpack.c.h.b16 %v1880
      %v1928 = vunpack.c.l.b16 %v1881
      %v1929 = vunpack.c.h.b16 %v1881
      %v1930 = vpack.c.b16 %v1900, %v1898
      %v1931 = vpack.c.b16 %v1901, %v1899
      %v1932 = vpack.c.b16 %v1904, %v1902
      %v1933 = vpack.c.b16 %v1905, %v1903
      %v1934 = vpack.c.b16 %v1908, %v1906
      %v1935 = vpack.c.b16 %v1909, %v1907
      %v1936 = vpack.c.b16 %v1912, %v1910
      %v1937 = vpack.c.b16 %v1913, %v1911
      %v1938 = vpack.c.b16 %v1916, %v1914
      %v1939 = vpack.c.b16 %v1917, %v1915
      %v1940 = vpack.c.b16 %v1920, %v1918
      %v1941 = vpack.c.b16 %v1921, %v1919
      %v1942 = vpack.c.b16 %v1924, %v1922
      %v1943 = vpack.c.b16 %v1925, %v1923
      %v1944 = vpack.c.b16 %v1928, %v1926
      %v1945 = vpack.c.b16 %v1929, %v1927
      %1962 = vmatprep.subr.bf16.mxu0 %v1931
      %1963 = vmatpush1.bf16.msra.mxu0 %v1930
      %1964 = vmatprep.subr.bf16.mxu0 %v1933
      %1965 = vmatpush1.bf16.msra.mxu0 %v1932
      %1966 = vmatprep.subr.bf16.mxu0 %v1935
      %1967 = vmatpush1.bf16.msra.mxu0 %v1934
      %1968 = vmatprep.subr.bf16.mxu0 %v1937
      %1969 = vmatpush1.bf16.msra.mxu0 %v1936
      %1970 = vmatprep.subr.bf16.mxu0 %v1939
      %1971 = vmatpush1.bf16.msra.mxu0 %v1938
      %1972 = vmatprep.subr.bf16.mxu0 %v1941
      %1973 = vmatpush1.bf16.msra.mxu0 %v1940
      %1974 = vmatprep.subr.bf16.mxu0 %v1943
      %1975 = vmatpush1.bf16.msra.mxu0 %v1942
      %1976 = vmatprep.subr.bf16.mxu0 %v1945
      %1977 = vmatpush1.bf16.msra.mxu0 %v1944
      %1978 = vmatprep.subr.bf16.mxu0 0
      %1979 = vmatpush1.bf16.msra.mxu0 0
      %1980 = vmatprep.subr.bf16.mxu0 0
      %1981 = vmatpush1.bf16.msra.mxu0 0
      %1982 = vmatprep.subr.bf16.mxu0 0
      %1983 = vmatpush1.bf16.msra.mxu0 0
      %1984 = vmatprep.subr.bf16.mxu0 0
      %1985 = vmatpush1.bf16.msra.mxu0 0
      %1986 = vmatprep.subr.bf16.mxu0 0
      %1987 = vmatpush1.bf16.msra.mxu0 0
      %1988 = vmatprep.subr.bf16.mxu0 0
      %1989 = vmatpush1.bf16.msra.mxu0 0
      %1990 = vmatprep.subr.bf16.mxu0 0
      %1991 = vmatpush1.bf16.msra.mxu0 0
      %1992 = vmatprep.subr.bf16.mxu0 0
      %1993 = vmatpush1.bf16.msra.mxu0 0
      %1994 = vmatprep.mubr.bf16.mxu0 0
      %1995 = vmatmul.mubr.bf16.gmra.mrb[0].mxu0 %v1858
      %v1996 = vpop.f32.mrb[0].mxu0
      %v1997 = vadd.f32 0.0, %v1996
      %v1998 = vpop.f32.mrb[0].mxu0
      %v1999 = vadd.f32 0.0, %v1998
      %v2000 = vpop.f32.mrb[0].mxu0
      %v2001 = vadd.f32 0.0, %v2000
      %v2002 = vpop.f32.mrb[0].mxu0
      %v2003 = vadd.f32 0.0, %v2002
      %2004 = vmatprep.mubr.bf16.mxu0 0
      %2005 = vmatmul.mubr.bf16.gmra.mrb[0].mxu0 %v1859
      %v2006 = vpop.f32.mrb[0].mxu0
      %v2007 = vadd.f32 0.0, %v2006
      %v2008 = vpop.f32.mrb[0].mxu0
      %v2009 = vadd.f32 0.0, %v2008
      %v2010 = vpop.f32.mrb[0].mxu0
      %v2011 = vadd.f32 0.0, %v2010
      %v2012 = vpop.f32.mrb[0].mxu0
      %v2013 = vadd.f32 0.0, %v2012
      %2014 = vmatprep.mubr.bf16.mxu0 0
      %2015 = vmatmul.mubr.bf16.gmra.mrb[0].mxu0 %v1860
      %v2016 = vpop.f32.mrb[0].mxu0
      %v2017 = vadd.f32 0.0, %v2016
      %v2018 = vpop.f32.mrb[0].mxu0
      %v2019 = vadd.f32 0.0, %v2018
      %v2020 = vpop.f32.mrb[0].mxu0
      %v2021 = vadd.f32 0.0, %v2020
      %v2022 = vpop.f32.mrb[0].mxu0
      %v2023 = vadd.f32 0.0, %v2022
      %2024 = vmatprep.mubr.bf16.mxu0 0
      %2025 = vmatmul.mubr.bf16.gmra.mrb[0].mxu0 %v1861
      %v2026 = vpop.f32.mrb[0].mxu0
      %v2027 = vadd.f32 0.0, %v2026
      %v2028 = vpop.f32.mrb[0].mxu0
      %v2029 = vadd.f32 0.0, %v2028
      %v2030 = vpop.f32.mrb[0].mxu0
      %v2031 = vadd.f32 0.0, %v2030
      %v2032 = vpop.f32.mrb[0].mxu0
      %v2033 = vadd.f32 0.0, %v2032
      %2034 = vmatprep.mubr.bf16.mxu0 0
      %2035 = vmatmul.mubr.bf16.gmra.mrb[0].mxu0 %v1862
      %v2036 = vpop.f32.mrb[0].mxu0
      %v2037 = vadd.f32 0.0, %v2036
      %v2038 = vpop.f32.mrb[0].mxu0
      %v2039 = vadd.f32 0.0, %v2038
      %v2040 = vpop.f32.mrb[0].mxu0
      %v2041 = vadd.f32 0.0, %v2040
      %v2042 = vpop.f32.mrb[0].mxu0
      %v2043 = vadd.f32 0.0, %v2042
      %2044 = vmatprep.mubr.bf16.mxu0 0
      %2045 = vmatmul.mubr.bf16.gmra.mrb[0].mxu0 %v1863
      %v2046 = vpop.f32.mrb[0].mxu0
      %v2047 = vadd.f32 0.0, %v2046
      %v2048 = vpop.f32.mrb[0].mxu0
      %v2049 = vadd.f32 0.0, %v2048
      %v2050 = vpop.f32.mrb[0].mxu0
      %v2051 = vadd.f32 0.0, %v2050
      %v2052 = vpop.f32.mrb[0].mxu0
      %v2053 = vadd.f32 0.0, %v2052
      %2054 = vmatprep.mubr.bf16.mxu0 0
      %2055 = vmatmul.mubr.bf16.gmra.mrb[0].mxu0 %v1864
      %v2056 = vpop.f32.mrb[0].mxu0
      %v2057 = vadd.f32 0.0, %v2056
      %v2058 = vpop.f32.mrb[0].mxu0
      %v2059 = vadd.f32 0.0, %v2058
      %v2060 = vpop.f32.mrb[0].mxu0
      %v2061 = vadd.f32 0.0, %v2060
      %v2062 = vpop.f32.mrb[0].mxu0
      %v2063 = vadd.f32 0.0, %v2062
      %2064 = vmatprep.mubr.bf16.mxu0 0
      %2065 = vmatmul.mubr.bf16.gmra.mrb[0].mxu0 %v1865
      %v2066 = vpop.f32.mrb[0].mxu0
      %v2067 = vadd.f32 0.0, %v2066
      %v2068 = vpop.f32.mrb[0].mxu0
      %v2069 = vadd.f32 0.0, %v2068
      %v2070 = vpop.f32.mrb[0].mxu0
      %v2071 = vadd.f32 0.0, %v2070
      %v2072 = vpop.f32.mrb[0].mxu0
      %v2073 = vadd.f32 0.0, %v2072
      %2074 = vdwg.mxu0
      %v2091 = vunpack.c.l.b16 %v1264
      %v2092 = vunpack.c.h.b16 %v1264
      %v2093 = vunpack.c.l.b16 %v1265
      %v2094 = vunpack.c.h.b16 %v1265
      %v2095 = vunpack.c.l.b16 %v1266
      %v2096 = vunpack.c.h.b16 %v1266
      %v2097 = vunpack.c.l.b16 %v1267
      %v2098 = vunpack.c.h.b16 %v1267
      %v2099 = vunpack.c.l.b16 %v1268
      %v2100 = vunpack.c.h.b16 %v1268
      %v2101 = vunpack.c.l.b16 %v1269
      %v2102 = vunpack.c.h.b16 %v1269
      %v2103 = vunpack.c.l.b16 %v1270
      %v2104 = vunpack.c.h.b16 %v1270
      %v2105 = vunpack.c.l.b16 %v1271
      %v2106 = vunpack.c.h.b16 %v1271
      %v2107 = vunpack.c.l.b16 %v1272
      %v2108 = vunpack.c.h.b16 %v1272
      %v2109 = vunpack.c.l.b16 %v1273
      %v2110 = vunpack.c.h.b16 %v1273
      %v2111 = vunpack.c.l.b16 %v1274
      %v2112 = vunpack.c.h.b16 %v1274
      %v2113 = vunpack.c.l.b16 %v1275
      %v2114 = vunpack.c.h.b16 %v1275
      %v2115 = vunpack.c.l.b16 %v1276
      %v2116 = vunpack.c.h.b16 %v1276
      %v2117 = vunpack.c.l.b16 %v1277
      %v2118 = vunpack.c.h.b16 %v1277
      %v2119 = vunpack.c.l.b16 %v1278
      %v2120 = vunpack.c.h.b16 %v1278
      %v2121 = vunpack.c.l.b16 %v1279
      %v2122 = vunpack.c.h.b16 %v1279
      %v2123 = vpack.c.b16 %v2093, %v2091
      %v2124 = vpack.c.b16 %v2094, %v2092
      %v2125 = vpack.c.b16 %v2097, %v2095
      %v2126 = vpack.c.b16 %v2098, %v2096
      %v2127 = vpack.c.b16 %v2101, %v2099
      %v2128 = vpack.c.b16 %v2102, %v2100
      %v2129 = vpack.c.b16 %v2105, %v2103
      %v2130 = vpack.c.b16 %v2106, %v2104
      %v2131 = vpack.c.b16 %v2109, %v2107
      %v2132 = vpack.c.b16 %v2110, %v2108
      %v2133 = vpack.c.b16 %v2113, %v2111
      %v2134 = vpack.c.b16 %v2114, %v2112
      %v2135 = vpack.c.b16 %v2117, %v2115
      %v2136 = vpack.c.b16 %v2118, %v2116
      %v2137 = vpack.c.b16 %v2121, %v2119
      %v2138 = vpack.c.b16 %v2122, %v2120
      %2155 = vmatprep.subr.bf16.mxu0 %v2124
      %2156 = vmatpush1.bf16.msra.mxu0 %v2123
      %2157 = vmatprep.subr.bf16.mxu0 %v2126
      %2158 = vmatpush1.bf16.msra.mxu0 %v2125
      %2159 = vmatprep.subr.bf16.mxu0 %v2128
      %2160 = vmatpush1.bf16.msra.mxu0 %v2127
      %2161 = vmatprep.subr.bf16.mxu0 %v2130
      %2162 = vmatpush1.bf16.msra.mxu0 %v2129
      %2163 = vmatprep.subr.bf16.mxu0 %v2132
      %2164 = vmatpush1.bf16.msra.mxu0 %v2131
      %2165 = vmatprep.subr.bf16.mxu0 %v2134
      %2166 = vmatpush1.bf16.msra.mxu0 %v2133
      %2167 = vmatprep.subr.bf16.mxu0 %v2136
      %2168 = vmatpush1.bf16.msra.mxu0 %v2135
      %2169 = vmatprep.subr.bf16.mxu0 %v2138
      %2170 = vmatpush1.bf16.msra.mxu0 %v2137
      %2171 = vmatprep.subr.bf16.mxu0 0
      %2172 = vmatpush1.bf16.msra.mxu0 0
      %2173 = vmatprep.subr.bf16.mxu0 0
      %2174 = vmatpush1.bf16.msra.mxu0 0
      %2175 = vmatprep.subr.bf16.mxu0 0
      %2176 = vmatpush1.bf16.msra.mxu0 0
      %2177 = vmatprep.subr.bf16.mxu0 0
      %2178 = vmatpush1.bf16.msra.mxu0 0
      %2179 = vmatprep.subr.bf16.mxu0 0
      %2180 = vmatpush1.bf16.msra.mxu0 0
      %2181 = vmatprep.subr.bf16.mxu0 0
      %2182 = vmatpush1.bf16.msra.mxu0 0
      %2183 = vmatprep.subr.bf16.mxu0 0
      %2184 = vmatpush1.bf16.msra.mxu0 0
      %2185 = vmatprep.subr.bf16.mxu0 0
      %2186 = vmatpush1.bf16.msra.mxu0 0
      %2187 = vmatprep.mubr.bf16.mxu0 0
      %2188 = vmatmul.mubr.bf16.gmra.mrb[0].mxu0 %v1256
      %v2189 = vpop.f32.mrb[0].mxu0
      %v2190 = vadd.f32 %v1997, %v2189
      %v2191 = vpop.f32.mrb[0].mxu0
      %v2192 = vadd.f32 %v1999, %v2191
      %v2193 = vpop.f32.mrb[0].mxu0
      %v2194 = vadd.f32 %v2001, %v2193
      %v2195 = vpop.f32.mrb[0].mxu0
      %v2196 = vadd.f32 %v2003, %v2195
      %2197 = vmatprep.mubr.bf16.mxu0 0
      %2198 = vmatmul.mubr.bf16.gmra.mrb[0].mxu0 %v1257
      %v2199 = vpop.f32.mrb[0].mxu0
      %v2200 = vadd.f32 %v2007, %v2199
      %v2201 = vpop.f32.mrb[0].mxu0
      %v2202 = vadd.f32 %v2009, %v2201
      %v2203 = vpop.f32.mrb[0].mxu0
      %v2204 = vadd.f32 %v2011, %v2203
      %v2205 = vpop.f32.mrb[0].mxu0
      %v2206 = vadd.f32 %v2013, %v2205
      %2207 = vmatprep.mubr.bf16.mxu0 0
      %2208 = vmatmul.mubr.bf16.gmra.mrb[0].mxu0 %v1258
      %v2209 = vpop.f32.mrb[0].mxu0
      %v2210 = vadd.f32 %v2017, %v2209
      %v2211 = vpop.f32.mrb[0].mxu0
      %v2212 = vadd.f32 %v2019, %v2211
      %v2213 = vpop.f32.mrb[0].mxu0
      %v2214 = vadd.f32 %v2021, %v2213
      %v2215 = vpop.f32.mrb[0].mxu0
      %v2216 = vadd.f32 %v2023, %v2215
      %2217 = vmatprep.mubr.bf16.mxu0 0
      %2218 = vmatmul.mubr.bf16.gmra.mrb[0].mxu0 %v1259
      %v2219 = vpop.f32.mrb[0].mxu0
      %v2220 = vadd.f32 %v2027, %v2219
      %v2221 = vpop.f32.mrb[0].mxu0
      %v2222 = vadd.f32 %v2029, %v2221
      %v2223 = vpop.f32.mrb[0].mxu0
      %v2224 = vadd.f32 %v2031, %v2223
      %v2225 = vpop.f32.mrb[0].mxu0
      %v2226 = vadd.f32 %v2033, %v2225
      %2227 = vmatprep.mubr.bf16.mxu0 0
      %2228 = vmatmul.mubr.bf16.gmra.mrb[0].mxu0 %v1260
      %v2229 = vpop.f32.mrb[0].mxu0
      %v2230 = vadd.f32 %v2037, %v2229
      %v2231 = vpop.f32.mrb[0].mxu0
      %v2232 = vadd.f32 %v2039, %v2231
      %v2233 = vpop.f32.mrb[0].mxu0
      %v2234 = vadd.f32 %v2041, %v2233
      %v2235 = vpop.f32.mrb[0].mxu0
      %v2236 = vadd.f32 %v2043, %v2235
      %2237 = vmatprep.mubr.bf16.mxu0 0
      %2238 = vmatmul.mubr.bf16.gmra.mrb[0].mxu0 %v1261
      %v2239 = vpop.f32.mrb[0].mxu0
      %v2240 = vadd.f32 %v2047, %v2239
      %v2241 = vpop.f32.mrb[0].mxu0
      %v2242 = vadd.f32 %v2049, %v2241
      %v2243 = vpop.f32.mrb[0].mxu0
      %v2244 = vadd.f32 %v2051, %v2243
      %v2245 = vpop.f32.mrb[0].mxu0
      %v2246 = vadd.f32 %v2053, %v2245
      %2247 = vmatprep.mubr.bf16.mxu0 0
      %2248 = vmatmul.mubr.bf16.gmra.mrb[0].mxu0 %v1262
      %v2249 = vpop.f32.mrb[0].mxu0
      %v2250 = vadd.f32 %v2057, %v2249
      %v2251 = vpop.f32.mrb[0].mxu0
      %v2252 = vadd.f32 %v2059, %v2251
      %v2253 = vpop.f32.mrb[0].mxu0
      %v2254 = vadd.f32 %v2061, %v2253
      %v2255 = vpop.f32.mrb[0].mxu0
      %v2256 = vadd.f32 %v2063, %v2255
      %2257 = vmatprep.mubr.bf16.mxu0 0
      %2258 = vmatmul.mubr.bf16.gmra.mrb[0].mxu0 %v1263
      %v2259 = vpop.f32.mrb[0].mxu0
      %v2260 = vadd.f32 %v2067, %v2259
      %v2261 = vpop.f32.mrb[0].mxu0
      %v2262 = vadd.f32 %v2069, %v2261
      %v2263 = vpop.f32.mrb[0].mxu0
      %v2264 = vadd.f32 %v2071, %v2263
      %v2265 = vpop.f32.mrb[0].mxu0
      %v2266 = vadd.f32 %v2073, %v2265
      %2267 = vdwg.mxu0
      %v2268 = vld [vmem:[%s3 + $0x8] sm:$0xf]
      %v2269 = vld [vmem:[%s3 + $0x18] sm:$0xf]
      %v2270 = vld [vmem:[%s3 + $0x28] sm:$0xf]
      %v2271 = vld [vmem:[%s3 + $0x38] sm:$0xf]
      %v2272 = vld [vmem:[%s3 + $0x48] sm:$0xf]
      %v2273 = vld [vmem:[%s3 + $0x58] sm:$0xf]
      %v2274 = vld [vmem:[%s3 + $0x68] sm:$0xf]
      %v2275 = vld [vmem:[%s3 + $0x78] sm:$0xf]
      %v2276 = vld [vmem:[%s3 + $0x88] sm:$0xf]
      %v2277 = vld [vmem:[%s3 + $0x98] sm:$0xf]
      %v2278 = vld [vmem:[%s3 + $0xa8] sm:$0xf]
      %v2279 = vld [vmem:[%s3 + $0xb8] sm:$0xf]
      %v2280 = vld [vmem:[%s3 + $0xc8] sm:$0xf]
      %v2281 = vld [vmem:[%s3 + $0xd8] sm:$0xf]
      %v2282 = vld [vmem:[%s3 + $0xe8] sm:$0xf]
      %v2283 = vld [vmem:[%s3 + $0xf8] sm:$0xf]
      %v2284 = vld [vmem:[%s3 + $0x108] sm:$0xf]
      %v2285 = vld [vmem:[%s3 + $0x118] sm:$0xf]
      %v2286 = vld [vmem:[%s3 + $0x128] sm:$0xf]
      %v2287 = vld [vmem:[%s3 + $0x138] sm:$0xf]
      %v2288 = vld [vmem:[%s3 + $0x148] sm:$0xf]
      %v2289 = vld [vmem:[%s3 + $0x158] sm:$0xf]
      %v2290 = vld [vmem:[%s3 + $0x168] sm:$0xf]
      %v2291 = vld [vmem:[%s3 + $0x178] sm:$0xf]
      %v2292 = vld [vmem:[%s3 + $0x188] sm:$0xf]
      %v2293 = vld [vmem:[%s3 + $0x198] sm:$0xf]
      %v2294 = vld [vmem:[%s3 + $0x1a8] sm:$0xf]
      %v2295 = vld [vmem:[%s3 + $0x1b8] sm:$0xf]
      %v2296 = vld [vmem:[%s3 + $0x1c8] sm:$0xf]
      %v2297 = vld [vmem:[%s3 + $0x1d8] sm:$0xf]
      %v2298 = vld [vmem:[%s3 + $0x1e8] sm:$0xf]
      %v2299 = vld [vmem:[%s3 + $0x1f8] sm:$0xf]
      %v2332 = vunpack.c.l.b16 %v2268
      %v2333 = vunpack.c.l.b16 %v2269
      %v2334 = vunpack.c.l.b16 %v2270
      %v2335 = vunpack.c.l.b16 %v2271
      %v2336 = vunpack.c.l.b16 %v2272
      %v2337 = vunpack.c.l.b16 %v2273
      %v2338 = vunpack.c.l.b16 %v2274
      %v2339 = vunpack.c.l.b16 %v2275
      %v2340 = vunpack.c.l.b16 %v2276
      %v2341 = vunpack.c.l.b16 %v2277
      %v2342 = vunpack.c.l.b16 %v2278
      %v2343 = vunpack.c.l.b16 %v2279
      %v2344 = vunpack.c.l.b16 %v2280
      %v2345 = vunpack.c.l.b16 %v2281
      %v2346 = vunpack.c.l.b16 %v2282
      %v2347 = vunpack.c.l.b16 %v2283
      %v2348 = vunpack.c.l.b16 %v2284
      %v2349 = vunpack.c.l.b16 %v2285
      %v2350 = vunpack.c.l.b16 %v2286
      %v2351 = vunpack.c.l.b16 %v2287
      %v2352 = vunpack.c.l.b16 %v2288
      %v2353 = vunpack.c.l.b16 %v2289
      %v2354 = vunpack.c.l.b16 %v2290
      %v2355 = vunpack.c.l.b16 %v2291
      %v2356 = vunpack.c.l.b16 %v2292
      %v2357 = vunpack.c.l.b16 %v2293
      %v2358 = vunpack.c.l.b16 %v2294
      %v2359 = vunpack.c.l.b16 %v2295
      %v2360 = vunpack.c.l.b16 %v2296
      %v2361 = vunpack.c.l.b16 %v2297
      %v2362 = vunpack.c.l.b16 %v2298
      %v2363 = vunpack.c.l.b16 %v2299
      %v2364 = vpack.c.b16 %v2333, %v2332
      %v2365 = vpack.c.b16 %v2335, %v2334
      %v2366 = vpack.c.b16 %v2337, %v2336
      %v2367 = vpack.c.b16 %v2339, %v2338
      %v2368 = vpack.c.b16 %v2341, %v2340
      %v2369 = vpack.c.b16 %v2343, %v2342
      %v2370 = vpack.c.b16 %v2345, %v2344
      %v2371 = vpack.c.b16 %v2347, %v2346
      %v2372 = vpack.c.b16 %v2349, %v2348
      %v2373 = vpack.c.b16 %v2351, %v2350
      %v2374 = vpack.c.b16 %v2353, %v2352
      %v2375 = vpack.c.b16 %v2355, %v2354
      %v2376 = vpack.c.b16 %v2357, %v2356
      %v2377 = vpack.c.b16 %v2359, %v2358
      %v2378 = vpack.c.b16 %v2361, %v2360
      %v2379 = vpack.c.b16 %v2363, %v2362
      %2396 = vmatprep.subr.bf16.mxu0 0
      %2397 = vmatpush1.bf16.msra.mxu0 %v2364
      %2398 = vmatprep.subr.bf16.mxu0 0
      %2399 = vmatpush1.bf16.msra.mxu0 %v2365
      %2400 = vmatprep.subr.bf16.mxu0 0
      %2401 = vmatpush1.bf16.msra.mxu0 %v2366
      %2402 = vmatprep.subr.bf16.mxu0 0
      %2403 = vmatpush1.bf16.msra.mxu0 %v2367
      %2404 = vmatprep.subr.bf16.mxu0 0
      %2405 = vmatpush1.bf16.msra.mxu0 %v2368
      %2406 = vmatprep.subr.bf16.mxu0 0
      %2407 = vmatpush1.bf16.msra.mxu0 %v2369
      %2408 = vmatprep.subr.bf16.mxu0 0
      %2409 = vmatpush1.bf16.msra.mxu0 %v2370
      %2410 = vmatprep.subr.bf16.mxu0 0
      %2411 = vmatpush1.bf16.msra.mxu0 %v2371
      %2412 = vmatprep.subr.bf16.mxu0 0
      %2413 = vmatpush1.bf16.msra.mxu0 %v2372
      %2414 = vmatprep.subr.bf16.mxu0 0
      %2415 = vmatpush1.bf16.msra.mxu0 %v2373
      %2416 = vmatprep.subr.bf16.mxu0 0
      %2417 = vmatpush1.bf16.msra.mxu0 %v2374
      %2418 = vmatprep.subr.bf16.mxu0 0
      %2419 = vmatpush1.bf16.msra.mxu0 %v2375
      %2420 = vmatprep.subr.bf16.mxu0 0
      %2421 = vmatpush1.bf16.msra.mxu0 %v2376
      %2422 = vmatprep.subr.bf16.mxu0 0
      %2423 = vmatpush1.bf16.msra.mxu0 %v2377
      %2424 = vmatprep.subr.bf16.mxu0 0
      %2425 = vmatpush1.bf16.msra.mxu0 %v2378
      %2426 = vmatprep.subr.bf16.mxu0 0
      %2427 = vmatpush1.bf16.msra.mxu0 %v2379
      %2428 = vmatprep.mubr.bf16.mxu0 %v663
      %2429 = vmatmul.mubr.bf16.gmra.mrb[0].mxu0 %v662
      %v2430 = vpop.f32.mrb[0].mxu0
      %v2431 = vadd.f32 0.0, %v2430
      %v2432 = vpop.f32.mrb[0].mxu0
      %v2433 = vpop.f32.mrb[0].mxu0
      %v2434 = vadd.f32 0.0, %v2433
      %v2435 = vpop.f32.mrb[0].mxu0
      %2436 = vmatprep.mubr.bf16.mxu0 %v665
      %2437 = vmatmul.mubr.bf16.gmra.mrb[0].mxu0 %v664
      %v2438 = vpop.f32.mrb[0].mxu0
      %v2439 = vadd.f32 0.0, %v2438
      %v2440 = vpop.f32.mrb[0].mxu0
      %v2441 = vpop.f32.mrb[0].mxu0
      %v2442 = vadd.f32 0.0, %v2441
      %v2443 = vpop.f32.mrb[0].mxu0
      %2444 = vmatprep.mubr.bf16.mxu0 %v667
      %2445 = vmatmul.mubr.bf16.gmra.mrb[0].mxu0 %v666
      %v2446 = vpop.f32.mrb[0].mxu0
      %v2447 = vadd.f32 0.0, %v2446
      %v2448 = vpop.f32.mrb[0].mxu0
      %v2449 = vpop.f32.mrb[0].mxu0
      %v2450 = vadd.f32 0.0, %v2449
      %v2451 = vpop.f32.mrb[0].mxu0
      %2452 = vmatprep.mubr.bf16.mxu0 %v669
      %2453 = vmatmul.mubr.bf16.gmra.mrb[0].mxu0 %v668
      %v2454 = vpop.f32.mrb[0].mxu0
      %v2455 = vadd.f32 0.0, %v2454
      %v2456 = vpop.f32.mrb[0].mxu0
      %v2457 = vpop.f32.mrb[0].mxu0
      %v2458 = vadd.f32 0.0, %v2457
      %v2459 = vpop.f32.mrb[0].mxu0
      %2460 = vmatprep.mubr.bf16.mxu0 %v671
      %2461 = vmatmul.mubr.bf16.gmra.mrb[0].mxu0 %v670
      %v2462 = vpop.f32.mrb[0].mxu0
      %v2463 = vadd.f32 0.0, %v2462
      %v2464 = vpop.f32.mrb[0].mxu0
      %v2465 = vpop.f32.mrb[0].mxu0
      %v2466 = vadd.f32 0.0, %v2465
      %v2467 = vpop.f32.mrb[0].mxu0
      %2468 = vmatprep.mubr.bf16.mxu0 %v673
      %2469 = vmatmul.mubr.bf16.gmra.mrb[0].mxu0 %v672
      %v2470 = vpop.f32.mrb[0].mxu0
      %v2471 = vadd.f32 0.0, %v2470
      %v2472 = vpop.f32.mrb[0].mxu0
      %v2473 = vpop.f32.mrb[0].mxu0
      %v2474 = vadd.f32 0.0, %v2473
      %v2475 = vpop.f32.mrb[0].mxu0
      %2476 = vmatprep.mubr.bf16.mxu0 %v675
      %2477 = vmatmul.mubr.bf16.gmra.mrb[0].mxu0 %v674
      %v2478 = vpop.f32.mrb[0].mxu0
      %v2479 = vadd.f32 0.0, %v2478
      %v2480 = vpop.f32.mrb[0].mxu0
      %v2481 = vpop.f32.mrb[0].mxu0
      %v2482 = vadd.f32 0.0, %v2481
      %v2483 = vpop.f32.mrb[0].mxu0
      %2484 = vmatprep.mubr.bf16.mxu0 %v677
      %2485 = vmatmul.mubr.bf16.gmra.mrb[0].mxu0 %v676
      %v2486 = vpop.f32.mrb[0].mxu0
      %v2487 = vadd.f32 0.0, %v2486
      %v2488 = vpop.f32.mrb[0].mxu0
      %v2489 = vpop.f32.mrb[0].mxu0
      %v2490 = vadd.f32 0.0, %v2489
      %v2491 = vpop.f32.mrb[0].mxu0
      %2492 = vdwg.mxu0
      %v2493 = vld [vmem:[%s4 + $0x8] sm:$0xf]
      %v2494 = vld [vmem:[%s4 + $0x18] sm:$0xf]
      %v2495 = vld [vmem:[%s4 + $0x28] sm:$0xf]
      %v2496 = vld [vmem:[%s4 + $0x38] sm:$0xf]
      %v2497 = vld [vmem:[%s4 + $0x48] sm:$0xf]
      %v2498 = vld [vmem:[%s4 + $0x58] sm:$0xf]
      %v2499 = vld [vmem:[%s4 + $0x68] sm:$0xf]
      %v2500 = vld [vmem:[%s4 + $0x78] sm:$0xf]
      %v2501 = vld [vmem:[%s4 + $0x88] sm:$0xf]
      %v2502 = vld [vmem:[%s4 + $0x98] sm:$0xf]
      %v2503 = vld [vmem:[%s4 + $0xa8] sm:$0xf]
      %v2504 = vld [vmem:[%s4 + $0xb8] sm:$0xf]
      %v2505 = vld [vmem:[%s4 + $0xc8] sm:$0xf]
      %v2506 = vld [vmem:[%s4 + $0xd8] sm:$0xf]
      %v2507 = vld [vmem:[%s4 + $0xe8] sm:$0xf]
      %v2508 = vld [vmem:[%s4 + $0xf8] sm:$0xf]
      %v2509 = vld [vmem:[%s4 + $0x108] sm:$0xf]
      %v2510 = vld [vmem:[%s4 + $0x118] sm:$0xf]
      %v2511 = vld [vmem:[%s4 + $0x128] sm:$0xf]
      %v2512 = vld [vmem:[%s4 + $0x138] sm:$0xf]
      %v2513 = vld [vmem:[%s4 + $0x148] sm:$0xf]
      %v2514 = vld [vmem:[%s4 + $0x158] sm:$0xf]
      %v2515 = vld [vmem:[%s4 + $0x168] sm:$0xf]
      %v2516 = vld [vmem:[%s4 + $0x178] sm:$0xf]
      %v2517 = vld [vmem:[%s4 + $0x188] sm:$0xf]
      %v2518 = vld [vmem:[%s4 + $0x198] sm:$0xf]
      %v2519 = vld [vmem:[%s4 + $0x1a8] sm:$0xf]
      %v2520 = vld [vmem:[%s4 + $0x1b8] sm:$0xf]
      %v2521 = vld [vmem:[%s4 + $0x1c8] sm:$0xf]
      %v2522 = vld [vmem:[%s4 + $0x1d8] sm:$0xf]
      %v2523 = vld [vmem:[%s4 + $0x1e8] sm:$0xf]
      %v2524 = vld [vmem:[%s4 + $0x1f8] sm:$0xf]
      %v2557 = vunpack.c.l.b16 %v2493
      %v2558 = vunpack.c.l.b16 %v2494
      %v2559 = vunpack.c.l.b16 %v2495
      %v2560 = vunpack.c.l.b16 %v2496
      %v2561 = vunpack.c.l.b16 %v2497
      %v2562 = vunpack.c.l.b16 %v2498
      %v2563 = vunpack.c.l.b16 %v2499
      %v2564 = vunpack.c.l.b16 %v2500
      %v2565 = vunpack.c.l.b16 %v2501
      %v2566 = vunpack.c.l.b16 %v2502
      %v2567 = vunpack.c.l.b16 %v2503
      %v2568 = vunpack.c.l.b16 %v2504
      %v2569 = vunpack.c.l.b16 %v2505
      %v2570 = vunpack.c.l.b16 %v2506
      %v2571 = vunpack.c.l.b16 %v2507
      %v2572 = vunpack.c.l.b16 %v2508
      %v2573 = vunpack.c.l.b16 %v2509
      %v2574 = vunpack.c.l.b16 %v2510
      %v2575 = vunpack.c.l.b16 %v2511
      %v2576 = vunpack.c.l.b16 %v2512
      %v2577 = vunpack.c.l.b16 %v2513
      %v2578 = vunpack.c.l.b16 %v2514
      %v2579 = vunpack.c.l.b16 %v2515
      %v2580 = vunpack.c.l.b16 %v2516
      %v2581 = vunpack.c.l.b16 %v2517
      %v2582 = vunpack.c.l.b16 %v2518
      %v2583 = vunpack.c.l.b16 %v2519
      %v2584 = vunpack.c.l.b16 %v2520
      %v2585 = vunpack.c.l.b16 %v2521
      %v2586 = vunpack.c.l.b16 %v2522
      %v2587 = vunpack.c.l.b16 %v2523
      %v2588 = vunpack.c.l.b16 %v2524
      %v2589 = vpack.c.b16 %v2558, %v2557
      %v2590 = vpack.c.b16 %v2560, %v2559
      %v2591 = vpack.c.b16 %v2562, %v2561
      %v2592 = vpack.c.b16 %v2564, %v2563
      %v2593 = vpack.c.b16 %v2566, %v2565
      %v2594 = vpack.c.b16 %v2568, %v2567
      %v2595 = vpack.c.b16 %v2570, %v2569
      %v2596 = vpack.c.b16 %v2572, %v2571
      %v2597 = vpack.c.b16 %v2574, %v2573
      %v2598 = vpack.c.b16 %v2576, %v2575
      %v2599 = vpack.c.b16 %v2578, %v2577
      %v2600 = vpack.c.b16 %v2580, %v2579
      %v2601 = vpack.c.b16 %v2582, %v2581
      %v2602 = vpack.c.b16 %v2584, %v2583
      %v2603 = vpack.c.b16 %v2586, %v2585
      %v2604 = vpack.c.b16 %v2588, %v2587
      %2621 = vmatprep.subr.bf16.mxu0 0
      %2622 = vmatpush1.bf16.msra.mxu0 %v2589
      %2623 = vmatprep.subr.bf16.mxu0 0
      %2624 = vmatpush1.bf16.msra.mxu0 %v2590
      %2625 = vmatprep.subr.bf16.mxu0 0
      %2626 = vmatpush1.bf16.msra.mxu0 %v2591
      %2627 = vmatprep.subr.bf16.mxu0 0
      %2628 = vmatpush1.bf16.msra.mxu0 %v2592
      %2629 = vmatprep.subr.bf16.mxu0 0
      %2630 = vmatpush1.bf16.msra.mxu0 %v2593
      %2631 = vmatprep.subr.bf16.mxu0 0
      %2632 = vmatpush1.bf16.msra.mxu0 %v2594
      %2633 = vmatprep.subr.bf16.mxu0 0
      %2634 = vmatpush1.bf16.msra.mxu0 %v2595
      %2635 = vmatprep.subr.bf16.mxu0 0
      %2636 = vmatpush1.bf16.msra.mxu0 %v2596
      %2637 = vmatprep.subr.bf16.mxu0 0
      %2638 = vmatpush1.bf16.msra.mxu0 %v2597
      %2639 = vmatprep.subr.bf16.mxu0 0
      %2640 = vmatpush1.bf16.msra.mxu0 %v2598
      %2641 = vmatprep.subr.bf16.mxu0 0
      %2642 = vmatpush1.bf16.msra.mxu0 %v2599
      %2643 = vmatprep.subr.bf16.mxu0 0
      %2644 = vmatpush1.bf16.msra.mxu0 %v2600
      %2645 = vmatprep.subr.bf16.mxu0 0
      %2646 = vmatpush1.bf16.msra.mxu0 %v2601
      %2647 = vmatprep.subr.bf16.mxu0 0
      %2648 = vmatpush1.bf16.msra.mxu0 %v2602
      %2649 = vmatprep.subr.bf16.mxu0 0
      %2650 = vmatpush1.bf16.msra.mxu0 %v2603
      %2651 = vmatprep.subr.bf16.mxu0 0
      %2652 = vmatpush1.bf16.msra.mxu0 %v2604
      %2653 = vmatprep.mubr.bf16.mxu0 %v663
      %2654 = vmatmul.mubr.bf16.gmra.mrb[0].mxu0 %v662
      %v2655 = vpop.f32.mrb[0].mxu0
      %v2656 = vadd.f32 0.0, %v2655
      %v2657 = vpop.f32.mrb[0].mxu0
      %v2658 = vpop.f32.mrb[0].mxu0
      %v2659 = vadd.f32 0.0, %v2658
      %v2660 = vpop.f32.mrb[0].mxu0
      %2661 = vmatprep.mubr.bf16.mxu0 %v665
      %2662 = vmatmul.mubr.bf16.gmra.mrb[0].mxu0 %v664
      %v2663 = vpop.f32.mrb[0].mxu0
      %v2664 = vadd.f32 0.0, %v2663
      %v2665 = vpop.f32.mrb[0].mxu0
      %v2666 = vpop.f32.mrb[0].mxu0
      %v2667 = vadd.f32 0.0, %v2666
      %v2668 = vpop.f32.mrb[0].mxu0
      %2669 = vmatprep.mubr.bf16.mxu0 %v667
      %2670 = vmatmul.mubr.bf16.gmra.mrb[0].mxu0 %v666
      %v2671 = vpop.f32.mrb[0].mxu0
      %v2672 = vadd.f32 0.0, %v2671
      %v2673 = vpop.f32.mrb[0].mxu0
      %v2674 = vpop.f32.mrb[0].mxu0
      %v2675 = vadd.f32 0.0, %v2674
      %v2676 = vpop.f32.mrb[0].mxu0
      %2677 = vmatprep.mubr.bf16.mxu0 %v669
      %2678 = vmatmul.mubr.bf16.gmra.mrb[0].mxu0 %v668
      %v2679 = vpop.f32.mrb[0].mxu0
      %v2680 = vadd.f32 0.0, %v2679
      %v2681 = vpop.f32.mrb[0].mxu0
      %v2682 = vpop.f32.mrb[0].mxu0
      %v2683 = vadd.f32 0.0, %v2682
      %v2684 = vpop.f32.mrb[0].mxu0
      %2685 = vmatprep.mubr.bf16.mxu0 %v671
      %2686 = vmatmul.mubr.bf16.gmra.mrb[0].mxu0 %v670
      %v2687 = vpop.f32.mrb[0].mxu0
      %v2688 = vadd.f32 0.0, %v2687
      %v2689 = vpop.f32.mrb[0].mxu0
      %v2690 = vpop.f32.mrb[0].mxu0
      %v2691 = vadd.f32 0.0, %v2690
      %v2692 = vpop.f32.mrb[0].mxu0
      %2693 = vmatprep.mubr.bf16.mxu0 %v673
      %2694 = vmatmul.mubr.bf16.gmra.mrb[0].mxu0 %v672
      %v2695 = vpop.f32.mrb[0].mxu0
      %v2696 = vadd.f32 0.0, %v2695
      %v2697 = vpop.f32.mrb[0].mxu0
      %v2698 = vpop.f32.mrb[0].mxu0
      %v2699 = vadd.f32 0.0, %v2698
      %v2700 = vpop.f32.mrb[0].mxu0
      %2701 = vmatprep.mubr.bf16.mxu0 %v675
      %2702 = vmatmul.mubr.bf16.gmra.mrb[0].mxu0 %v674
      %v2703 = vpop.f32.mrb[0].mxu0
      %v2704 = vadd.f32 0.0, %v2703
      %v2705 = vpop.f32.mrb[0].mxu0
      %v2706 = vpop.f32.mrb[0].mxu0
      %v2707 = vadd.f32 0.0, %v2706
      %v2708 = vpop.f32.mrb[0].mxu0
      %2709 = vmatprep.mubr.bf16.mxu0 %v677
      %2710 = vmatmul.mubr.bf16.gmra.mrb[0].mxu0 %v676
      %v2711 = vpop.f32.mrb[0].mxu0
      %v2712 = vadd.f32 0.0, %v2711
      %v2713 = vpop.f32.mrb[0].mxu0
      %v2714 = vpop.f32.mrb[0].mxu0
      %v2715 = vadd.f32 0.0, %v2714
      %v2716 = vpop.f32.mrb[0].mxu0
      %2717 = vdwg.mxu0
      %v2718 = vxor.u32 %v2431, 2147483648
      %v2719 = vxor.u32 %v2434, 2147483648
      %v2720 = vxor.u32 %v2439, 2147483648
      %v2721 = vxor.u32 %v2442, 2147483648
      %v2722 = vxor.u32 %v2447, 2147483648
      %v2723 = vxor.u32 %v2450, 2147483648
      %v2724 = vxor.u32 %v2455, 2147483648
      %v2725 = vxor.u32 %v2458, 2147483648
      %v2726 = vxor.u32 %v2463, 2147483648
      %v2727 = vxor.u32 %v2466, 2147483648
      %v2728 = vxor.u32 %v2471, 2147483648
      %v2729 = vxor.u32 %v2474, 2147483648
      %v2730 = vxor.u32 %v2479, 2147483648
      %v2731 = vxor.u32 %v2482, 2147483648
      %v2732 = vxor.u32 %v2487, 2147483648
      %v2733 = vxor.u32 %v2490, 2147483648
      %v2734 = vmul.f32 %v2718, 1.442695
      %v2735 = vpow.pop %v2734
      %v2736 = vmul.f32 %v2719, 1.442695
      %v2737 = vpow.pop %v2736
      %v2738 = vmul.f32 %v2720, 1.442695
      %v2739 = vpow.pop %v2738
      %v2740 = vmul.f32 %v2721, 1.442695
      %v2741 = vpow.pop %v2740
      %v2742 = vmul.f32 %v2722, 1.442695
      %v2743 = vpow.pop %v2742
      %v2744 = vmul.f32 %v2723, 1.442695
      %v2745 = vpow.pop %v2744
      %v2746 = vmul.f32 %v2724, 1.442695
      %v2747 = vpow.pop %v2746
      %v2748 = vmul.f32 %v2725, 1.442695
      %v2749 = vpow.pop %v2748
      %v2750 = vmul.f32 %v2726, 1.442695
      %v2751 = vpow.pop %v2750
      %v2752 = vmul.f32 %v2727, 1.442695
      %v2753 = vpow.pop %v2752
      %v2754 = vmul.f32 %v2728, 1.442695
      %v2755 = vpow.pop %v2754
      %v2756 = vmul.f32 %v2729, 1.442695
      %v2757 = vpow.pop %v2756
      %v2758 = vmul.f32 %v2730, 1.442695
      %v2759 = vpow.pop %v2758
      %v2760 = vmul.f32 %v2731, 1.442695
      %v2761 = vpow.pop %v2760
      %v2762 = vmul.f32 %v2732, 1.442695
      %v2763 = vpow.pop %v2762
      %v2764 = vmul.f32 %v2733, 1.442695
      %v2765 = vpow.pop %v2764
      %v2766 = vadd.f32 %v2735, 1.0
      %v2767 = vadd.f32 %v2737, 1.0
      %v2768 = vadd.f32 %v2739, 1.0
      %v2769 = vadd.f32 %v2741, 1.0
      %v2770 = vadd.f32 %v2743, 1.0
      %v2771 = vadd.f32 %v2745, 1.0
      %v2772 = vadd.f32 %v2747, 1.0
      %v2773 = vadd.f32 %v2749, 1.0
      %v2774 = vadd.f32 %v2751, 1.0
      %v2775 = vadd.f32 %v2753, 1.0
      %v2776 = vadd.f32 %v2755, 1.0
      %v2777 = vadd.f32 %v2757, 1.0
      %v2778 = vadd.f32 %v2759, 1.0
      %v2779 = vadd.f32 %v2761, 1.0
      %v2780 = vadd.f32 %v2763, 1.0
      %v2781 = vadd.f32 %v2765, 1.0
      %v2782 = vrcp.pop %v2766
      %v2783 = vmul.f32 1.0, %v2782
      %v2784 = vrcp.pop %v2767
      %v2785 = vmul.f32 1.0, %v2784
      %v2786 = vrcp.pop %v2768
      %v2787 = vmul.f32 1.0, %v2786
      %v2788 = vrcp.pop %v2769
      %v2789 = vmul.f32 1.0, %v2788
      %v2790 = vrcp.pop %v2770
      %v2791 = vmul.f32 1.0, %v2790
      %v2792 = vrcp.pop %v2771
      %v2793 = vmul.f32 1.0, %v2792
      %v2794 = vrcp.pop %v2772
      %v2795 = vmul.f32 1.0, %v2794
      %v2796 = vrcp.pop %v2773
      %v2797 = vmul.f32 1.0, %v2796
      %v2798 = vrcp.pop %v2774
      %v2799 = vmul.f32 1.0, %v2798
      %v2800 = vrcp.pop %v2775
      %v2801 = vmul.f32 1.0, %v2800
      %v2802 = vrcp.pop %v2776
      %v2803 = vmul.f32 1.0, %v2802
      %v2804 = vrcp.pop %v2777
      %v2805 = vmul.f32 1.0, %v2804
      %v2806 = vrcp.pop %v2778
      %v2807 = vmul.f32 1.0, %v2806
      %v2808 = vrcp.pop %v2779
      %v2809 = vmul.f32 1.0, %v2808
      %v2810 = vrcp.pop %v2780
      %v2811 = vmul.f32 1.0, %v2810
      %v2812 = vrcp.pop %v2781
      %v2813 = vmul.f32 1.0, %v2812
      %v2814 = vmul.f32 %v2431, %v2783
      %v2815 = vmul.f32 %v2434, %v2785
      %v2816 = vmul.f32 %v2439, %v2787
      %v2817 = vmul.f32 %v2442, %v2789
      %v2818 = vmul.f32 %v2447, %v2791
      %v2819 = vmul.f32 %v2450, %v2793
      %v2820 = vmul.f32 %v2455, %v2795
      %v2821 = vmul.f32 %v2458, %v2797
      %v2822 = vmul.f32 %v2463, %v2799
      %v2823 = vmul.f32 %v2466, %v2801
      %v2824 = vmul.f32 %v2471, %v2803
      %v2825 = vmul.f32 %v2474, %v2805
      %v2826 = vmul.f32 %v2479, %v2807
      %v2827 = vmul.f32 %v2482, %v2809
      %v2828 = vmul.f32 %v2487, %v2811
      %v2829 = vmul.f32 %v2490, %v2813
      %v2830 = vmul.f32 %v2814, %v2656
      %v2831 = vmul.f32 %v2815, %v2659
      %v2832 = vmul.f32 %v2816, %v2664
      %v2833 = vmul.f32 %v2817, %v2667
      %v2834 = vmul.f32 %v2818, %v2672
      %v2835 = vmul.f32 %v2819, %v2675
      %v2836 = vmul.f32 %v2820, %v2680
      %v2837 = vmul.f32 %v2821, %v2683
      %v2838 = vmul.f32 %v2822, %v2688
      %v2839 = vmul.f32 %v2823, %v2691
      %v2840 = vmul.f32 %v2824, %v2696
      %v2841 = vmul.f32 %v2825, %v2699
      %v2842 = vmul.f32 %v2826, %v2704
      %v2843 = vmul.f32 %v2827, %v2707
      %v2844 = vmul.f32 %v2828, %v2712
      %v2845 = vmul.f32 %v2829, %v2715
      %v2846 = vpack.c.bf16 %v2831, %v2830
      %v2847 = vpack.c.bf16 %v2833, %v2832
      %v2848 = vpack.c.bf16 %v2835, %v2834
      %v2849 = vpack.c.bf16 %v2837, %v2836
      %v2850 = vpack.c.bf16 %v2839, %v2838
      %v2851 = vpack.c.bf16 %v2841, %v2840
      %v2852 = vpack.c.bf16 %v2843, %v2842
      %v2853 = vpack.c.bf16 %v2845, %v2844
      %v2854 = vld [vmem:[%s5 + $0x100] sm:$0xff]
      %v2855 = vld [vmem:[%s5 + $0x108] sm:$0xff]
      %v2856 = vld [vmem:[%s5 + $0x110] sm:$0xff]
      %v2857 = vld [vmem:[%s5 + $0x118] sm:$0xff]
      %v2858 = vld [vmem:[%s5 + $0x120] sm:$0xff]
      %v2859 = vld [vmem:[%s5 + $0x128] sm:$0xff]
      %v2860 = vld [vmem:[%s5 + $0x130] sm:$0xff]
      %v2861 = vld [vmem:[%s5 + $0x138] sm:$0xff]
      %v2862 = vld [vmem:[%s5 + $0x140] sm:$0xff]
      %v2863 = vld [vmem:[%s5 + $0x148] sm:$0xff]
      %v2864 = vld [vmem:[%s5 + $0x150] sm:$0xff]
      %v2865 = vld [vmem:[%s5 + $0x158] sm:$0xff]
      %v2866 = vld [vmem:[%s5 + $0x160] sm:$0xff]
      %v2867 = vld [vmem:[%s5 + $0x168] sm:$0xff]
      %v2868 = vld [vmem:[%s5 + $0x170] sm:$0xff]
      %v2869 = vld [vmem:[%s5 + $0x178] sm:$0xff]
      %v2886 = vunpack.c.l.b16 %v2854
      %v2887 = vunpack.c.h.b16 %v2854
      %v2888 = vunpack.c.l.b16 %v2855
      %v2889 = vunpack.c.h.b16 %v2855
      %v2890 = vunpack.c.l.b16 %v2856
      %v2891 = vunpack.c.h.b16 %v2856
      %v2892 = vunpack.c.l.b16 %v2857
      %v2893 = vunpack.c.h.b16 %v2857
      %v2894 = vunpack.c.l.b16 %v2858
      %v2895 = vunpack.c.h.b16 %v2858
      %v2896 = vunpack.c.l.b16 %v2859
      %v2897 = vunpack.c.h.b16 %v2859
      %v2898 = vunpack.c.l.b16 %v2860
      %v2899 = vunpack.c.h.b16 %v2860
      %v2900 = vunpack.c.l.b16 %v2861
      %v2901 = vunpack.c.h.b16 %v2861
      %v2902 = vunpack.c.l.b16 %v2862
      %v2903 = vunpack.c.h.b16 %v2862
      %v2904 = vunpack.c.l.b16 %v2863
      %v2905 = vunpack.c.h.b16 %v2863
      %v2906 = vunpack.c.l.b16 %v2864
      %v2907 = vunpack.c.h.b16 %v2864
      %v2908 = vunpack.c.l.b16 %v2865
      %v2909 = vunpack.c.h.b16 %v2865
      %v2910 = vunpack.c.l.b16 %v2866
      %v2911 = vunpack.c.h.b16 %v2866
      %v2912 = vunpack.c.l.b16 %v2867
      %v2913 = vunpack.c.h.b16 %v2867
      %v2914 = vunpack.c.l.b16 %v2868
      %v2915 = vunpack.c.h.b16 %v2868
      %v2916 = vunpack.c.l.b16 %v2869
      %v2917 = vunpack.c.h.b16 %v2869
      %v2918 = vpack.c.b16 %v2888, %v2886
      %v2919 = vpack.c.b16 %v2889, %v2887
      %v2920 = vpack.c.b16 %v2892, %v2890
      %v2921 = vpack.c.b16 %v2893, %v2891
      %v2922 = vpack.c.b16 %v2896, %v2894
      %v2923 = vpack.c.b16 %v2897, %v2895
      %v2924 = vpack.c.b16 %v2900, %v2898
      %v2925 = vpack.c.b16 %v2901, %v2899
      %v2926 = vpack.c.b16 %v2904, %v2902
      %v2927 = vpack.c.b16 %v2905, %v2903
      %v2928 = vpack.c.b16 %v2908, %v2906
      %v2929 = vpack.c.b16 %v2909, %v2907
      %v2930 = vpack.c.b16 %v2912, %v2910
      %v2931 = vpack.c.b16 %v2913, %v2911
      %v2932 = vpack.c.b16 %v2916, %v2914
      %v2933 = vpack.c.b16 %v2917, %v2915
      %2950 = vmatprep.subr.bf16.mxu0 %v2919
      %2951 = vmatpush1.bf16.msra.mxu0 %v2918
      %2952 = vmatprep.subr.bf16.mxu0 %v2921
      %2953 = vmatpush1.bf16.msra.mxu0 %v2920
      %2954 = vmatprep.subr.bf16.mxu0 %v2923
      %2955 = vmatpush1.bf16.msra.mxu0 %v2922
      %2956 = vmatprep.subr.bf16.mxu0 %v2925
      %2957 = vmatpush1.bf16.msra.mxu0 %v2924
      %2958 = vmatprep.subr.bf16.mxu0 %v2927
      %2959 = vmatpush1.bf16.msra.mxu0 %v2926
      %2960 = vmatprep.subr.bf16.mxu0 %v2929
      %2961 = vmatpush1.bf16.msra.mxu0 %v2928
      %2962 = vmatprep.subr.bf16.mxu0 %v2931
      %2963 = vmatpush1.bf16.msra.mxu0 %v2930
      %2964 = vmatprep.subr.bf16.mxu0 %v2933
      %2965 = vmatpush1.bf16.msra.mxu0 %v2932
      %2966 = vmatprep.subr.bf16.mxu0 0
      %2967 = vmatpush1.bf16.msra.mxu0 0
      %2968 = vmatprep.subr.bf16.mxu0 0
      %2969 = vmatpush1.bf16.msra.mxu0 0
      %2970 = vmatprep.subr.bf16.mxu0 0
      %2971 = vmatpush1.bf16.msra.mxu0 0
      %2972 = vmatprep.subr.bf16.mxu0 0
      %2973 = vmatpush1.bf16.msra.mxu0 0
      %2974 = vmatprep.subr.bf16.mxu0 0
      %2975 = vmatpush1.bf16.msra.mxu0 0
      %2976 = vmatprep.subr.bf16.mxu0 0
      %2977 = vmatpush1.bf16.msra.mxu0 0
      %2978 = vmatprep.subr.bf16.mxu0 0
      %2979 = vmatpush1.bf16.msra.mxu0 0
      %2980 = vmatprep.subr.bf16.mxu0 0
      %2981 = vmatpush1.bf16.msra.mxu0 0
      %2982 = vmatprep.mubr.bf16.mxu0 0
      %2983 = vmatmul.mubr.bf16.gmra.mrb[0].mxu0 %v2846
      %v2984 = vpop.f32.mrb[0].mxu0
      %v2985 = vadd.f32 0.0, %v2984
      %v2986 = vpop.f32.mrb[0].mxu0
      %v2987 = vadd.f32 0.0, %v2986
      %v2988 = vpop.f32.mrb[0].mxu0
      %v2989 = vadd.f32 0.0, %v2988
      %v2990 = vpop.f32.mrb[0].mxu0
      %v2991 = vadd.f32 0.0, %v2990
      %2992 = vmatprep.mubr.bf16.mxu0 0
      %2993 = vmatmul.mubr.bf16.gmra.mrb[0].mxu0 %v2847
      %v2994 = vpop.f32.mrb[0].mxu0
      %v2995 = vadd.f32 0.0, %v2994
      %v2996 = vpop.f32.mrb[0].mxu0
      %v2997 = vadd.f32 0.0, %v2996
      %v2998 = vpop.f32.mrb[0].mxu0
      %v2999 = vadd.f32 0.0, %v2998
      %v3000 = vpop.f32.mrb[0].mxu0
      %v3001 = vadd.f32 0.0, %v3000
      %3002 = vmatprep.mubr.bf16.mxu0 0
      %3003 = vmatmul.mubr.bf16.gmra.mrb[0].mxu0 %v2848
      %v3004 = vpop.f32.mrb[0].mxu0
      %v3005 = vadd.f32 0.0, %v3004
      %v3006 = vpop.f32.mrb[0].mxu0
      %v3007 = vadd.f32 0.0, %v3006
      %v3008 = vpop.f32.mrb[0].mxu0
      %v3009 = vadd.f32 0.0, %v3008
      %v3010 = vpop.f32.mrb[0].mxu0
      %v3011 = vadd.f32 0.0, %v3010
      %3012 = vmatprep.mubr.bf16.mxu0 0
      %3013 = vmatmul.mubr.bf16.gmra.mrb[0].mxu0 %v2849
      %v3014 = vpop.f32.mrb[0].mxu0
      %v3015 = vadd.f32 0.0, %v3014
      %v3016 = vpop.f32.mrb[0].mxu0
      %v3017 = vadd.f32 0.0, %v3016
      %v3018 = vpop.f32.mrb[0].mxu0
      %v3019 = vadd.f32 0.0, %v3018
      %v3020 = vpop.f32.mrb[0].mxu0
      %v3021 = vadd.f32 0.0, %v3020
      %3022 = vmatprep.mubr.bf16.mxu0 0
      %3023 = vmatmul.mubr.bf16.gmra.mrb[0].mxu0 %v2850
      %v3024 = vpop.f32.mrb[0].mxu0
      %v3025 = vadd.f32 0.0, %v3024
      %v3026 = vpop.f32.mrb[0].mxu0
      %v3027 = vadd.f32 0.0, %v3026
      %v3028 = vpop.f32.mrb[0].mxu0
      %v3029 = vadd.f32 0.0, %v3028
      %v3030 = vpop.f32.mrb[0].mxu0
      %v3031 = vadd.f32 0.0, %v3030
      %3032 = vmatprep.mubr.bf16.mxu0 0
      %3033 = vmatmul.mubr.bf16.gmra.mrb[0].mxu0 %v2851
      %v3034 = vpop.f32.mrb[0].mxu0
      %v3035 = vadd.f32 0.0, %v3034
      %v3036 = vpop.f32.mrb[0].mxu0
      %v3037 = vadd.f32 0.0, %v3036
      %v3038 = vpop.f32.mrb[0].mxu0
      %v3039 = vadd.f32 0.0, %v3038
      %v3040 = vpop.f32.mrb[0].mxu0
      %v3041 = vadd.f32 0.0, %v3040
      %3042 = vmatprep.mubr.bf16.mxu0 0
      %3043 = vmatmul.mubr.bf16.gmra.mrb[0].mxu0 %v2852
      %v3044 = vpop.f32.mrb[0].mxu0
      %v3045 = vadd.f32 0.0, %v3044
      %v3046 = vpop.f32.mrb[0].mxu0
      %v3047 = vadd.f32 0.0, %v3046
      %v3048 = vpop.f32.mrb[0].mxu0
      %v3049 = vadd.f32 0.0, %v3048
      %v3050 = vpop.f32.mrb[0].mxu0
      %v3051 = vadd.f32 0.0, %v3050
      %3052 = vmatprep.mubr.bf16.mxu0 0
      %3053 = vmatmul.mubr.bf16.gmra.mrb[0].mxu0 %v2853
      %v3054 = vpop.f32.mrb[0].mxu0
      %v3055 = vadd.f32 0.0, %v3054
      %v3056 = vpop.f32.mrb[0].mxu0
      %v3057 = vadd.f32 0.0, %v3056
      %v3058 = vpop.f32.mrb[0].mxu0
      %v3059 = vadd.f32 0.0, %v3058
      %v3060 = vpop.f32.mrb[0].mxu0
      %v3061 = vadd.f32 0.0, %v3060
      %3062 = vdwg.mxu0
      %v3063 = vadd.f32 %v2190, %v2985
      %v3064 = vadd.f32 %v2192, %v2987
      %v3065 = vadd.f32 %v2194, %v2989
      %v3066 = vadd.f32 %v2196, %v2991
      %v3067 = vadd.f32 %v2200, %v2995
      %v3068 = vadd.f32 %v2202, %v2997
      %v3069 = vadd.f32 %v2204, %v2999
      %v3070 = vadd.f32 %v2206, %v3001
      %v3071 = vadd.f32 %v2210, %v3005
      %v3072 = vadd.f32 %v2212, %v3007
      %v3073 = vadd.f32 %v2214, %v3009
      %v3074 = vadd.f32 %v2216, %v3011
      %v3075 = vadd.f32 %v2220, %v3015
      %v3076 = vadd.f32 %v2222, %v3017
      %v3077 = vadd.f32 %v2224, %v3019
      %v3078 = vadd.f32 %v2226, %v3021
      %v3079 = vadd.f32 %v2230, %v3025
      %v3080 = vadd.f32 %v2232, %v3027
      %v3081 = vadd.f32 %v2234, %v3029
      %v3082 = vadd.f32 %v2236, %v3031
      %v3083 = vadd.f32 %v2240, %v3035
      %v3084 = vadd.f32 %v2242, %v3037
      %v3085 = vadd.f32 %v2244, %v3039
      %v3086 = vadd.f32 %v2246, %v3041
      %v3087 = vadd.f32 %v2250, %v3045
      %v3088 = vadd.f32 %v2252, %v3047
      %v3089 = vadd.f32 %v2254, %v3049
      %v3090 = vadd.f32 %v2256, %v3051
      %v3091 = vadd.f32 %v2260, %v3055
      %v3092 = vadd.f32 %v2262, %v3057
      %v3093 = vadd.f32 %v2264, %v3059
      %v3094 = vadd.f32 %v2266, %v3061
      %v3095 = vld [vmem:[%s3 + $0xc] sm:$0xf]
      %v3096 = vld [vmem:[%s3 + $0x1c] sm:$0xf]
      %v3097 = vld [vmem:[%s3 + $0x2c] sm:$0xf]
      %v3098 = vld [vmem:[%s3 + $0x3c] sm:$0xf]
      %v3099 = vld [vmem:[%s3 + $0x4c] sm:$0xf]
      %v3100 = vld [vmem:[%s3 + $0x5c] sm:$0xf]
      %v3101 = vld [vmem:[%s3 + $0x6c] sm:$0xf]
      %v3102 = vld [vmem:[%s3 + $0x7c] sm:$0xf]
      %v3103 = vld [vmem:[%s3 + $0x8c] sm:$0xf]
      %v3104 = vld [vmem:[%s3 + $0x9c] sm:$0xf]
      %v3105 = vld [vmem:[%s3 + $0xac] sm:$0xf]
      %v3106 = vld [vmem:[%s3 + $0xbc] sm:$0xf]
      %v3107 = vld [vmem:[%s3 + $0xcc] sm:$0xf]
      %v3108 = vld [vmem:[%s3 + $0xdc] sm:$0xf]
      %v3109 = vld [vmem:[%s3 + $0xec] sm:$0xf]
      %v3110 = vld [vmem:[%s3 + $0xfc] sm:$0xf]
      %v3111 = vld [vmem:[%s3 + $0x10c] sm:$0xf]
      %v3112 = vld [vmem:[%s3 + $0x11c] sm:$0xf]
      %v3113 = vld [vmem:[%s3 + $0x12c] sm:$0xf]
      %v3114 = vld [vmem:[%s3 + $0x13c] sm:$0xf]
      %v3115 = vld [vmem:[%s3 + $0x14c] sm:$0xf]
      %v3116 = vld [vmem:[%s3 + $0x15c] sm:$0xf]
      %v3117 = vld [vmem:[%s3 + $0x16c] sm:$0xf]
      %v3118 = vld [vmem:[%s3 + $0x17c] sm:$0xf]
      %v3119 = vld [vmem:[%s3 + $0x18c] sm:$0xf]
      %v3120 = vld [vmem:[%s3 + $0x19c] sm:$0xf]
      %v3121 = vld [vmem:[%s3 + $0x1ac] sm:$0xf]
      %v3122 = vld [vmem:[%s3 + $0x1bc] sm:$0xf]
      %v3123 = vld [vmem:[%s3 + $0x1cc] sm:$0xf]
      %v3124 = vld [vmem:[%s3 + $0x1dc] sm:$0xf]
      %v3125 = vld [vmem:[%s3 + $0x1ec] sm:$0xf]
      %v3126 = vld [vmem:[%s3 + $0x1fc] sm:$0xf]
      %v3159 = vunpack.c.l.b16 %v3095
      %v3160 = vunpack.c.l.b16 %v3096
      %v3161 = vunpack.c.l.b16 %v3097
      %v3162 = vunpack.c.l.b16 %v3098
      %v3163 = vunpack.c.l.b16 %v3099
      %v3164 = vunpack.c.l.b16 %v3100
      %v3165 = vunpack.c.l.b16 %v3101
      %v3166 = vunpack.c.l.b16 %v3102
      %v3167 = vunpack.c.l.b16 %v3103
      %v3168 = vunpack.c.l.b16 %v3104
      %v3169 = vunpack.c.l.b16 %v3105
      %v3170 = vunpack.c.l.b16 %v3106
      %v3171 = vunpack.c.l.b16 %v3107
      %v3172 = vunpack.c.l.b16 %v3108
      %v3173 = vunpack.c.l.b16 %v3109
      %v3174 = vunpack.c.l.b16 %v3110
      %v3175 = vunpack.c.l.b16 %v3111
      %v3176 = vunpack.c.l.b16 %v3112
      %v3177 = vunpack.c.l.b16 %v3113
      %v3178 = vunpack.c.l.b16 %v3114
      %v3179 = vunpack.c.l.b16 %v3115
      %v3180 = vunpack.c.l.b16 %v3116
      %v3181 = vunpack.c.l.b16 %v3117
      %v3182 = vunpack.c.l.b16 %v3118
      %v3183 = vunpack.c.l.b16 %v3119
      %v3184 = vunpack.c.l.b16 %v3120
      %v3185 = vunpack.c.l.b16 %v3121
      %v3186 = vunpack.c.l.b16 %v3122
      %v3187 = vunpack.c.l.b16 %v3123
      %v3188 = vunpack.c.l.b16 %v3124
      %v3189 = vunpack.c.l.b16 %v3125
      %v3190 = vunpack.c.l.b16 %v3126
      %v3191 = vpack.c.b16 %v3160, %v3159
      %v3192 = vpack.c.b16 %v3162, %v3161
      %v3193 = vpack.c.b16 %v3164, %v3163
      %v3194 = vpack.c.b16 %v3166, %v3165
      %v3195 = vpack.c.b16 %v3168, %v3167
      %v3196 = vpack.c.b16 %v3170, %v3169
      %v3197 = vpack.c.b16 %v3172, %v3171
      %v3198 = vpack.c.b16 %v3174, %v3173
      %v3199 = vpack.c.b16 %v3176, %v3175
      %v3200 = vpack.c.b16 %v3178, %v3177
      %v3201 = vpack.c.b16 %v3180, %v3179
      %v3202 = vpack.c.b16 %v3182, %v3181
      %v3203 = vpack.c.b16 %v3184, %v3183
      %v3204 = vpack.c.b16 %v3186, %v3185
      %v3205 = vpack.c.b16 %v3188, %v3187
      %v3206 = vpack.c.b16 %v3190, %v3189
      %3223 = vmatprep.subr.bf16.mxu0 0
      %3224 = vmatpush1.bf16.msra.mxu0 %v3191
      %3225 = vmatprep.subr.bf16.mxu0 0
      %3226 = vmatpush1.bf16.msra.mxu0 %v3192
      %3227 = vmatprep.subr.bf16.mxu0 0
      %3228 = vmatpush1.bf16.msra.mxu0 %v3193
      %3229 = vmatprep.subr.bf16.mxu0 0
      %3230 = vmatpush1.bf16.msra.mxu0 %v3194
      %3231 = vmatprep.subr.bf16.mxu0 0
      %3232 = vmatpush1.bf16.msra.mxu0 %v3195
      %3233 = vmatprep.subr.bf16.mxu0 0
      %3234 = vmatpush1.bf16.msra.mxu0 %v3196
      %3235 = vmatprep.subr.bf16.mxu0 0
      %3236 = vmatpush1.bf16.msra.mxu0 %v3197
      %3237 = vmatprep.subr.bf16.mxu0 0
      %3238 = vmatpush1.bf16.msra.mxu0 %v3198
      %3239 = vmatprep.subr.bf16.mxu0 0
      %3240 = vmatpush1.bf16.msra.mxu0 %v3199
      %3241 = vmatprep.subr.bf16.mxu0 0
      %3242 = vmatpush1.bf16.msra.mxu0 %v3200
      %3243 = vmatprep.subr.bf16.mxu0 0
      %3244 = vmatpush1.bf16.msra.mxu0 %v3201
      %3245 = vmatprep.subr.bf16.mxu0 0
      %3246 = vmatpush1.bf16.msra.mxu0 %v3202
      %3247 = vmatprep.subr.bf16.mxu0 0
      %3248 = vmatpush1.bf16.msra.mxu0 %v3203
      %3249 = vmatprep.subr.bf16.mxu0 0
      %3250 = vmatpush1.bf16.msra.mxu0 %v3204
      %3251 = vmatprep.subr.bf16.mxu0 0
      %3252 = vmatpush1.bf16.msra.mxu0 %v3205
      %3253 = vmatprep.subr.bf16.mxu0 0
      %3254 = vmatpush1.bf16.msra.mxu0 %v3206
      %3255 = vmatprep.mubr.bf16.mxu0 %v663
      %3256 = vmatmul.mubr.bf16.gmra.mrb[0].mxu0 %v662
      %v3257 = vpop.f32.mrb[0].mxu0
      %v3258 = vadd.f32 0.0, %v3257
      %v3259 = vpop.f32.mrb[0].mxu0
      %v3260 = vpop.f32.mrb[0].mxu0
      %v3261 = vadd.f32 0.0, %v3260
      %v3262 = vpop.f32.mrb[0].mxu0
      %3263 = vmatprep.mubr.bf16.mxu0 %v665
      %3264 = vmatmul.mubr.bf16.gmra.mrb[0].mxu0 %v664
      %v3265 = vpop.f32.mrb[0].mxu0
      %v3266 = vadd.f32 0.0, %v3265
      %v3267 = vpop.f32.mrb[0].mxu0
      %v3268 = vpop.f32.mrb[0].mxu0
      %v3269 = vadd.f32 0.0, %v3268
      %v3270 = vpop.f32.mrb[0].mxu0
      %3271 = vmatprep.mubr.bf16.mxu0 %v667
      %3272 = vmatmul.mubr.bf16.gmra.mrb[0].mxu0 %v666
      %v3273 = vpop.f32.mrb[0].mxu0
      %v3274 = vadd.f32 0.0, %v3273
      %v3275 = vpop.f32.mrb[0].mxu0
      %v3276 = vpop.f32.mrb[0].mxu0
      %v3277 = vadd.f32 0.0, %v3276
      %v3278 = vpop.f32.mrb[0].mxu0
      %3279 = vmatprep.mubr.bf16.mxu0 %v669
      %3280 = vmatmul.mubr.bf16.gmra.mrb[0].mxu0 %v668
      %v3281 = vpop.f32.mrb[0].mxu0
      %v3282 = vadd.f32 0.0, %v3281
      %v3283 = vpop.f32.mrb[0].mxu0
      %v3284 = vpop.f32.mrb[0].mxu0
      %v3285 = vadd.f32 0.0, %v3284
      %v3286 = vpop.f32.mrb[0].mxu0
      %3287 = vmatprep.mubr.bf16.mxu0 %v671
      %3288 = vmatmul.mubr.bf16.gmra.mrb[0].mxu0 %v670
      %v3289 = vpop.f32.mrb[0].mxu0
      %v3290 = vadd.f32 0.0, %v3289
      %v3291 = vpop.f32.mrb[0].mxu0
      %v3292 = vpop.f32.mrb[0].mxu0
      %v3293 = vadd.f32 0.0, %v3292
      %v3294 = vpop.f32.mrb[0].mxu0
      %3295 = vmatprep.mubr.bf16.mxu0 %v673
      %3296 = vmatmul.mubr.bf16.gmra.mrb[0].mxu0 %v672
      %v3297 = vpop.f32.mrb[0].mxu0
      %v3298 = vadd.f32 0.0, %v3297
      %v3299 = vpop.f32.mrb[0].mxu0
      %v3300 = vpop.f32.mrb[0].mxu0
      %v3301 = vadd.f32 0.0, %v3300
      %v3302 = vpop.f32.mrb[0].mxu0
      %3303 = vmatprep.mubr.bf16.mxu0 %v675
      %3304 = vmatmul.mubr.bf16.gmra.mrb[0].mxu0 %v674
      %v3305 = vpop.f32.mrb[0].mxu0
      %v3306 = vadd.f32 0.0, %v3305
      %v3307 = vpop.f32.mrb[0].mxu0
      %v3308 = vpop.f32.mrb[0].mxu0
      %v3309 = vadd.f32 0.0, %v3308
      %v3310 = vpop.f32.mrb[0].mxu0
      %3311 = vmatprep.mubr.bf16.mxu0 %v677
      %3312 = vmatmul.mubr.bf16.gmra.mrb[0].mxu0 %v676
      %v3313 = vpop.f32.mrb[0].mxu0
      %v3314 = vadd.f32 0.0, %v3313
      %v3315 = vpop.f32.mrb[0].mxu0
      %v3316 = vpop.f32.mrb[0].mxu0
      %v3317 = vadd.f32 0.0, %v3316
      %v3318 = vpop.f32.mrb[0].mxu0
      %3319 = vdwg.mxu0
      %v3320 = vld [vmem:[%s4 + $0xc] sm:$0xf]
      %v3321 = vld [vmem:[%s4 + $0x1c] sm:$0xf]
      %v3322 = vld [vmem:[%s4 + $0x2c] sm:$0xf]
      %v3323 = vld [vmem:[%s4 + $0x3c] sm:$0xf]
      %v3324 = vld [vmem:[%s4 + $0x4c] sm:$0xf]
      %v3325 = vld [vmem:[%s4 + $0x5c] sm:$0xf]
      %v3326 = vld [vmem:[%s4 + $0x6c] sm:$0xf]
      %v3327 = vld [vmem:[%s4 + $0x7c] sm:$0xf]
      %v3328 = vld [vmem:[%s4 + $0x8c] sm:$0xf]
      %v3329 = vld [vmem:[%s4 + $0x9c] sm:$0xf]
      %v3330 = vld [vmem:[%s4 + $0xac] sm:$0xf]
      %v3331 = vld [vmem:[%s4 + $0xbc] sm:$0xf]
      %v3332 = vld [vmem:[%s4 + $0xcc] sm:$0xf]
      %v3333 = vld [vmem:[%s4 + $0xdc] sm:$0xf]
      %v3334 = vld [vmem:[%s4 + $0xec] sm:$0xf]
      %v3335 = vld [vmem:[%s4 + $0xfc] sm:$0xf]
      %v3336 = vld [vmem:[%s4 + $0x10c] sm:$0xf]
      %v3337 = vld [vmem:[%s4 + $0x11c] sm:$0xf]
      %v3338 = vld [vmem:[%s4 + $0x12c] sm:$0xf]
      %v3339 = vld [vmem:[%s4 + $0x13c] sm:$0xf]
      %v3340 = vld [vmem:[%s4 + $0x14c] sm:$0xf]
      %v3341 = vld [vmem:[%s4 + $0x15c] sm:$0xf]
      %v3342 = vld [vmem:[%s4 + $0x16c] sm:$0xf]
      %v3343 = vld [vmem:[%s4 + $0x17c] sm:$0xf]
      %v3344 = vld [vmem:[%s4 + $0x18c] sm:$0xf]
      %v3345 = vld [vmem:[%s4 + $0x19c] sm:$0xf]
      %v3346 = vld [vmem:[%s4 + $0x1ac] sm:$0xf]
      %v3347 = vld [vmem:[%s4 + $0x1bc] sm:$0xf]
      %v3348 = vld [vmem:[%s4 + $0x1cc] sm:$0xf]
      %v3349 = vld [vmem:[%s4 + $0x1dc] sm:$0xf]
      %v3350 = vld [vmem:[%s4 + $0x1ec] sm:$0xf]
      %v3351 = vld [vmem:[%s4 + $0x1fc] sm:$0xf]
      %v3384 = vunpack.c.l.b16 %v3320
      %v3385 = vunpack.c.l.b16 %v3321
      %v3386 = vunpack.c.l.b16 %v3322
      %v3387 = vunpack.c.l.b16 %v3323
      %v3388 = vunpack.c.l.b16 %v3324
      %v3389 = vunpack.c.l.b16 %v3325
      %v3390 = vunpack.c.l.b16 %v3326
      %v3391 = vunpack.c.l.b16 %v3327
      %v3392 = vunpack.c.l.b16 %v3328
      %v3393 = vunpack.c.l.b16 %v3329
      %v3394 = vunpack.c.l.b16 %v3330
      %v3395 = vunpack.c.l.b16 %v3331
      %v3396 = vunpack.c.l.b16 %v3332
      %v3397 = vunpack.c.l.b16 %v3333
      %v3398 = vunpack.c.l.b16 %v3334
      %v3399 = vunpack.c.l.b16 %v3335
      %v3400 = vunpack.c.l.b16 %v3336
      %v3401 = vunpack.c.l.b16 %v3337
      %v3402 = vunpack.c.l.b16 %v3338
      %v3403 = vunpack.c.l.b16 %v3339
      %v3404 = vunpack.c.l.b16 %v3340
      %v3405 = vunpack.c.l.b16 %v3341
      %v3406 = vunpack.c.l.b16 %v3342
      %v3407 = vunpack.c.l.b16 %v3343
      %v3408 = vunpack.c.l.b16 %v3344
      %v3409 = vunpack.c.l.b16 %v3345
      %v3410 = vunpack.c.l.b16 %v3346
      %v3411 = vunpack.c.l.b16 %v3347
      %v3412 = vunpack.c.l.b16 %v3348
      %v3413 = vunpack.c.l.b16 %v3349
      %v3414 = vunpack.c.l.b16 %v3350
      %v3415 = vunpack.c.l.b16 %v3351
      %v3416 = vpack.c.b16 %v3385, %v3384
      %v3417 = vpack.c.b16 %v3387, %v3386
      %v3418 = vpack.c.b16 %v3389, %v3388
      %v3419 = vpack.c.b16 %v3391, %v3390
      %v3420 = vpack.c.b16 %v3393, %v3392
      %v3421 = vpack.c.b16 %v3395, %v3394
      %v3422 = vpack.c.b16 %v3397, %v3396
      %v3423 = vpack.c.b16 %v3399, %v3398
      %v3424 = vpack.c.b16 %v3401, %v3400
      %v3425 = vpack.c.b16 %v3403, %v3402
      %v3426 = vpack.c.b16 %v3405, %v3404
      %v3427 = vpack.c.b16 %v3407, %v3406
      %v3428 = vpack.c.b16 %v3409, %v3408
      %v3429 = vpack.c.b16 %v3411, %v3410
      %v3430 = vpack.c.b16 %v3413, %v3412
      %v3431 = vpack.c.b16 %v3415, %v3414
      %3448 = vmatprep.subr.bf16.mxu0 0
      %3449 = vmatpush1.bf16.msra.mxu0 %v3416
      %3450 = vmatprep.subr.bf16.mxu0 0
      %3451 = vmatpush1.bf16.msra.mxu0 %v3417
      %3452 = vmatprep.subr.bf16.mxu0 0
      %3453 = vmatpush1.bf16.msra.mxu0 %v3418
      %3454 = vmatprep.subr.bf16.mxu0 0
      %3455 = vmatpush1.bf16.msra.mxu0 %v3419
      %3456 = vmatprep.subr.bf16.mxu0 0
      %3457 = vmatpush1.bf16.msra.mxu0 %v3420
      %3458 = vmatprep.subr.bf16.mxu0 0
      %3459 = vmatpush1.bf16.msra.mxu0 %v3421
      %3460 = vmatprep.subr.bf16.mxu0 0
      %3461 = vmatpush1.bf16.msra.mxu0 %v3422
      %3462 = vmatprep.subr.bf16.mxu0 0
      %3463 = vmatpush1.bf16.msra.mxu0 %v3423
      %3464 = vmatprep.subr.bf16.mxu0 0
      %3465 = vmatpush1.bf16.msra.mxu0 %v3424
      %3466 = vmatprep.subr.bf16.mxu0 0
      %3467 = vmatpush1.bf16.msra.mxu0 %v3425
      %3468 = vmatprep.subr.bf16.mxu0 0
      %3469 = vmatpush1.bf16.msra.mxu0 %v3426
      %3470 = vmatprep.subr.bf16.mxu0 0
      %3471 = vmatpush1.bf16.msra.mxu0 %v3427
      %3472 = vmatprep.subr.bf16.mxu0 0
      %3473 = vmatpush1.bf16.msra.mxu0 %v3428
      %3474 = vmatprep.subr.bf16.mxu0 0
      %3475 = vmatpush1.bf16.msra.mxu0 %v3429
      %3476 = vmatprep.subr.bf16.mxu0 0
      %3477 = vmatpush1.bf16.msra.mxu0 %v3430
      %3478 = vmatprep.subr.bf16.mxu0 0
      %3479 = vmatpush1.bf16.msra.mxu0 %v3431
      %3480 = vmatprep.mubr.bf16.mxu0 %v663
      %3481 = vmatmul.mubr.bf16.gmra.mrb[0].mxu0 %v662
      %v3482 = vpop.f32.mrb[0].mxu0
      %v3483 = vadd.f32 0.0, %v3482
      %v3484 = vpop.f32.mrb[0].mxu0
      %v3485 = vpop.f32.mrb[0].mxu0
      %v3486 = vadd.f32 0.0, %v3485
      %v3487 = vpop.f32.mrb[0].mxu0
      %3488 = vmatprep.mubr.bf16.mxu0 %v665
      %3489 = vmatmul.mubr.bf16.gmra.mrb[0].mxu0 %v664
      %v3490 = vpop.f32.mrb[0].mxu0
      %v3491 = vadd.f32 0.0, %v3490
      %v3492 = vpop.f32.mrb[0].mxu0
      %v3493 = vpop.f32.mrb[0].mxu0
      %v3494 = vadd.f32 0.0, %v3493
      %v3495 = vpop.f32.mrb[0].mxu0
      %3496 = vmatprep.mubr.bf16.mxu0 %v667
      %3497 = vmatmul.mubr.bf16.gmra.mrb[0].mxu0 %v666
      %v3498 = vpop.f32.mrb[0].mxu0
      %v3499 = vadd.f32 0.0, %v3498
      %v3500 = vpop.f32.mrb[0].mxu0
      %v3501 = vpop.f32.mrb[0].mxu0
      %v3502 = vadd.f32 0.0, %v3501
      %v3503 = vpop.f32.mrb[0].mxu0
      %3504 = vmatprep.mubr.bf16.mxu0 %v669
      %3505 = vmatmul.mubr.bf16.gmra.mrb[0].mxu0 %v668
      %v3506 = vpop.f32.mrb[0].mxu0
      %v3507 = vadd.f32 0.0, %v3506
      %v3508 = vpop.f32.mrb[0].mxu0
      %v3509 = vpop.f32.mrb[0].mxu0
      %v3510 = vadd.f32 0.0, %v3509
      %v3511 = vpop.f32.mrb[0].mxu0
      %3512 = vmatprep.mubr.bf16.mxu0 %v671
      %3513 = vmatmul.mubr.bf16.gmra.mrb[0].mxu0 %v670
      %v3514 = vpop.f32.mrb[0].mxu0
      %v3515 = vadd.f32 0.0, %v3514
      %v3516 = vpop.f32.mrb[0].mxu0
      %v3517 = vpop.f32.mrb[0].mxu0
      %v3518 = vadd.f32 0.0, %v3517
      %v3519 = vpop.f32.mrb[0].mxu0
      %3520 = vmatprep.mubr.bf16.mxu0 %v673
      %3521 = vmatmul.mubr.bf16.gmra.mrb[0].mxu0 %v672
      %v3522 = vpop.f32.mrb[0].mxu0
      %v3523 = vadd.f32 0.0, %v3522
      %v3524 = vpop.f32.mrb[0].mxu0
      %v3525 = vpop.f32.mrb[0].mxu0
      %v3526 = vadd.f32 0.0, %v3525
      %v3527 = vpop.f32.mrb[0].mxu0
      %3528 = vmatprep.mubr.bf16.mxu0 %v675
      %3529 = vmatmul.mubr.bf16.gmra.mrb[0].mxu0 %v674
      %v3530 = vpop.f32.mrb[0].mxu0
      %v3531 = vadd.f32 0.0, %v3530
      %v3532 = vpop.f32.mrb[0].mxu0
      %v3533 = vpop.f32.mrb[0].mxu0
      %v3534 = vadd.f32 0.0, %v3533
      %v3535 = vpop.f32.mrb[0].mxu0
      %3536 = vmatprep.mubr.bf16.mxu0 %v677
      %3537 = vmatmul.mubr.bf16.gmra.mrb[0].mxu0 %v676
      %v3538 = vpop.f32.mrb[0].mxu0
      %v3539 = vadd.f32 0.0, %v3538
      %v3540 = vpop.f32.mrb[0].mxu0
      %v3541 = vpop.f32.mrb[0].mxu0
      %v3542 = vadd.f32 0.0, %v3541
      %v3543 = vpop.f32.mrb[0].mxu0
      %3544 = vdwg.mxu0
      %v3545 = vxor.u32 %v3258, 2147483648
      %v3546 = vxor.u32 %v3261, 2147483648
      %v3547 = vxor.u32 %v3266, 2147483648
      %v3548 = vxor.u32 %v3269, 2147483648
      %v3549 = vxor.u32 %v3274, 2147483648
      %v3550 = vxor.u32 %v3277, 2147483648
      %v3551 = vxor.u32 %v3282, 2147483648
      %v3552 = vxor.u32 %v3285, 2147483648
      %v3553 = vxor.u32 %v3290, 2147483648
      %v3554 = vxor.u32 %v3293, 2147483648
      %v3555 = vxor.u32 %v3298, 2147483648
      %v3556 = vxor.u32 %v3301, 2147483648
      %v3557 = vxor.u32 %v3306, 2147483648
      %v3558 = vxor.u32 %v3309, 2147483648
      %v3559 = vxor.u32 %v3314, 2147483648
      %v3560 = vxor.u32 %v3317, 2147483648
      %v3561 = vmul.f32 %v3545, 1.442695
      %v3562 = vpow.pop %v3561
      %v3563 = vmul.f32 %v3546, 1.442695
      %v3564 = vpow.pop %v3563
      %v3565 = vmul.f32 %v3547, 1.442695
      %v3566 = vpow.pop %v3565
      %v3567 = vmul.f32 %v3548, 1.442695
      %v3568 = vpow.pop %v3567
      %v3569 = vmul.f32 %v3549, 1.442695
      %v3570 = vpow.pop %v3569
      %v3571 = vmul.f32 %v3550, 1.442695
      %v3572 = vpow.pop %v3571
      %v3573 = vmul.f32 %v3551, 1.442695
      %v3574 = vpow.pop %v3573
      %v3575 = vmul.f32 %v3552, 1.442695
      %v3576 = vpow.pop %v3575
      %v3577 = vmul.f32 %v3553, 1.442695
      %v3578 = vpow.pop %v3577
      %v3579 = vmul.f32 %v3554, 1.442695
      %v3580 = vpow.pop %v3579
      %v3581 = vmul.f32 %v3555, 1.442695
      %v3582 = vpow.pop %v3581
      %v3583 = vmul.f32 %v3556, 1.442695
      %v3584 = vpow.pop %v3583
      %v3585 = vmul.f32 %v3557, 1.442695
      %v3586 = vpow.pop %v3585
      %v3587 = vmul.f32 %v3558, 1.442695
      %v3588 = vpow.pop %v3587
      %v3589 = vmul.f32 %v3559, 1.442695
      %v3590 = vpow.pop %v3589
      %v3591 = vmul.f32 %v3560, 1.442695
      %v3592 = vpow.pop %v3591
      %v3593 = vadd.f32 %v3562, 1.0
      %v3594 = vadd.f32 %v3564, 1.0
      %v3595 = vadd.f32 %v3566, 1.0
      %v3596 = vadd.f32 %v3568, 1.0
      %v3597 = vadd.f32 %v3570, 1.0
      %v3598 = vadd.f32 %v3572, 1.0
      %v3599 = vadd.f32 %v3574, 1.0
      %v3600 = vadd.f32 %v3576, 1.0
      %v3601 = vadd.f32 %v3578, 1.0
      %v3602 = vadd.f32 %v3580, 1.0
      %v3603 = vadd.f32 %v3582, 1.0
      %v3604 = vadd.f32 %v3584, 1.0
      %v3605 = vadd.f32 %v3586, 1.0
      %v3606 = vadd.f32 %v3588, 1.0
      %v3607 = vadd.f32 %v3590, 1.0
      %v3608 = vadd.f32 %v3592, 1.0
      %v3609 = vrcp.pop %v3593
      %v3610 = vmul.f32 1.0, %v3609
      %v3611 = vrcp.pop %v3594
      %v3612 = vmul.f32 1.0, %v3611
      %v3613 = vrcp.pop %v3595
      %v3614 = vmul.f32 1.0, %v3613
      %v3615 = vrcp.pop %v3596
      %v3616 = vmul.f32 1.0, %v3615
      %v3617 = vrcp.pop %v3597
      %v3618 = vmul.f32 1.0, %v3617
      %v3619 = vrcp.pop %v3598
      %v3620 = vmul.f32 1.0, %v3619
      %v3621 = vrcp.pop %v3599
      %v3622 = vmul.f32 1.0, %v3621
      %v3623 = vrcp.pop %v3600
      %v3624 = vmul.f32 1.0, %v3623
      %v3625 = vrcp.pop %v3601
      %v3626 = vmul.f32 1.0, %v3625
      %v3627 = vrcp.pop %v3602
      %v3628 = vmul.f32 1.0, %v3627
      %v3629 = vrcp.pop %v3603
      %v3630 = vmul.f32 1.0, %v3629
      %v3631 = vrcp.pop %v3604
      %v3632 = vmul.f32 1.0, %v3631
      %v3633 = vrcp.pop %v3605
      %v3634 = vmul.f32 1.0, %v3633
      %v3635 = vrcp.pop %v3606
      %v3636 = vmul.f32 1.0, %v3635
      %v3637 = vrcp.pop %v3607
      %v3638 = vmul.f32 1.0, %v3637
      %v3639 = vrcp.pop %v3608
      %v3640 = vmul.f32 1.0, %v3639
      %v3641 = vmul.f32 %v3258, %v3610
      %v3642 = vmul.f32 %v3261, %v3612
      %v3643 = vmul.f32 %v3266, %v3614
      %v3644 = vmul.f32 %v3269, %v3616
      %v3645 = vmul.f32 %v3274, %v3618
      %v3646 = vmul.f32 %v3277, %v3620
      %v3647 = vmul.f32 %v3282, %v3622
      %v3648 = vmul.f32 %v3285, %v3624
      %v3649 = vmul.f32 %v3290, %v3626
      %v3650 = vmul.f32 %v3293, %v3628
      %v3651 = vmul.f32 %v3298, %v3630
      %v3652 = vmul.f32 %v3301, %v3632
      %v3653 = vmul.f32 %v3306, %v3634
      %v3654 = vmul.f32 %v3309, %v3636
      %v3655 = vmul.f32 %v3314, %v3638
      %v3656 = vmul.f32 %v3317, %v3640
      %v3657 = vmul.f32 %v3641, %v3483
      %v3658 = vmul.f32 %v3642, %v3486
      %v3659 = vmul.f32 %v3643, %v3491
      %v3660 = vmul.f32 %v3644, %v3494
      %v3661 = vmul.f32 %v3645, %v3499
      %v3662 = vmul.f32 %v3646, %v3502
      %v3663 = vmul.f32 %v3647, %v3507
      %v3664 = vmul.f32 %v3648, %v3510
      %v3665 = vmul.f32 %v3649, %v3515
      %v3666 = vmul.f32 %v3650, %v3518
      %v3667 = vmul.f32 %v3651, %v3523
      %v3668 = vmul.f32 %v3652, %v3526
      %v3669 = vmul.f32 %v3653, %v3531
      %v3670 = vmul.f32 %v3654, %v3534
      %v3671 = vmul.f32 %v3655, %v3539
      %v3672 = vmul.f32 %v3656, %v3542
      %v3673 = vpack.c.bf16 %v3658, %v3657
      %v3674 = vpack.c.bf16 %v3660, %v3659
      %v3675 = vpack.c.bf16 %v3662, %v3661
      %v3676 = vpack.c.bf16 %v3664, %v3663
      %v3677 = vpack.c.bf16 %v3666, %v3665
      %v3678 = vpack.c.bf16 %v3668, %v3667
      %v3679 = vpack.c.bf16 %v3670, %v3669
      %v3680 = vpack.c.bf16 %v3672, %v3671
      %v3681 = vld [vmem:[%s5 + $0x180] sm:$0xff]
      %v3682 = vld [vmem:[%s5 + $0x188] sm:$0xff]
      %v3683 = vld [vmem:[%s5 + $0x190] sm:$0xff]
      %v3684 = vld [vmem:[%s5 + $0x198] sm:$0xff]
      %v3685 = vld [vmem:[%s5 + $0x1a0] sm:$0xff]
      %v3686 = vld [vmem:[%s5 + $0x1a8] sm:$0xff]
      %v3687 = vld [vmem:[%s5 + $0x1b0] sm:$0xff]
      %v3688 = vld [vmem:[%s5 + $0x1b8] sm:$0xff]
      %v3689 = vld [vmem:[%s5 + $0x1c0] sm:$0xff]
      %v3690 = vld [vmem:[%s5 + $0x1c8] sm:$0xff]
      %v3691 = vld [vmem:[%s5 + $0x1d0] sm:$0xff]
      %v3692 = vld [vmem:[%s5 + $0x1d8] sm:$0xff]
      %v3693 = vld [vmem:[%s5 + $0x1e0] sm:$0xff]
      %v3694 = vld [vmem:[%s5 + $0x1e8] sm:$0xff]
      %v3695 = vld [vmem:[%s5 + $0x1f0] sm:$0xff]
      %v3696 = vld [vmem:[%s5 + $0x1f8] sm:$0xff]
      %v3713 = vunpack.c.l.b16 %v3681
      %v3714 = vunpack.c.h.b16 %v3681
      %v3715 = vunpack.c.l.b16 %v3682
      %v3716 = vunpack.c.h.b16 %v3682
      %v3717 = vunpack.c.l.b16 %v3683
      %v3718 = vunpack.c.h.b16 %v3683
      %v3719 = vunpack.c.l.b16 %v3684
      %v3720 = vunpack.c.h.b16 %v3684
      %v3721 = vunpack.c.l.b16 %v3685
      %v3722 = vunpack.c.h.b16 %v3685
      %v3723 = vunpack.c.l.b16 %v3686
      %v3724 = vunpack.c.h.b16 %v3686
      %v3725 = vunpack.c.l.b16 %v3687
      %v3726 = vunpack.c.h.b16 %v3687
      %v3727 = vunpack.c.l.b16 %v3688
      %v3728 = vunpack.c.h.b16 %v3688
      %v3729 = vunpack.c.l.b16 %v3689
      %v3730 = vunpack.c.h.b16 %v3689
      %v3731 = vunpack.c.l.b16 %v3690
      %v3732 = vunpack.c.h.b16 %v3690
      %v3733 = vunpack.c.l.b16 %v3691
      %v3734 = vunpack.c.h.b16 %v3691
      %v3735 = vunpack.c.l.b16 %v3692
      %v3736 = vunpack.c.h.b16 %v3692
      %v3737 = vunpack.c.l.b16 %v3693
      %v3738 = vunpack.c.h.b16 %v3693
      %v3739 = vunpack.c.l.b16 %v3694
      %v3740 = vunpack.c.h.b16 %v3694
      %v3741 = vunpack.c.l.b16 %v3695
      %v3742 = vunpack.c.h.b16 %v3695
      %v3743 = vunpack.c.l.b16 %v3696
      %v3744 = vunpack.c.h.b16 %v3696
      %v3745 = vpack.c.b16 %v3715, %v3713
      %v3746 = vpack.c.b16 %v3716, %v3714
      %v3747 = vpack.c.b16 %v3719, %v3717
      %v3748 = vpack.c.b16 %v3720, %v3718
      %v3749 = vpack.c.b16 %v3723, %v3721
      %v3750 = vpack.c.b16 %v3724, %v3722
      %v3751 = vpack.c.b16 %v3727, %v3725
      %v3752 = vpack.c.b16 %v3728, %v3726
      %v3753 = vpack.c.b16 %v3731, %v3729
      %v3754 = vpack.c.b16 %v3732, %v3730
      %v3755 = vpack.c.b16 %v3735, %v3733
      %v3756 = vpack.c.b16 %v3736, %v3734
      %v3757 = vpack.c.b16 %v3739, %v3737
      %v3758 = vpack.c.b16 %v3740, %v3738
      %v3759 = vpack.c.b16 %v3743, %v3741
      %v3760 = vpack.c.b16 %v3744, %v3742
      %3777 = vmatprep.subr.bf16.mxu0 %v3746
      %3778 = vmatpush1.bf16.msra.mxu0 %v3745
      %3779 = vmatprep.subr.bf16.mxu0 %v3748
      %3780 = vmatpush1.bf16.msra.mxu0 %v3747
      %3781 = vmatprep.subr.bf16.mxu0 %v3750
      %3782 = vmatpush1.bf16.msra.mxu0 %v3749
      %3783 = vmatprep.subr.bf16.mxu0 %v3752
      %3784 = vmatpush1.bf16.msra.mxu0 %v3751
      %3785 = vmatprep.subr.bf16.mxu0 %v3754
      %3786 = vmatpush1.bf16.msra.mxu0 %v3753
      %3787 = vmatprep.subr.bf16.mxu0 %v3756
      %3788 = vmatpush1.bf16.msra.mxu0 %v3755
      %3789 = vmatprep.subr.bf16.mxu0 %v3758
      %3790 = vmatpush1.bf16.msra.mxu0 %v3757
      %3791 = vmatprep.subr.bf16.mxu0 %v3760
      %3792 = vmatpush1.bf16.msra.mxu0 %v3759
      %3793 = vmatprep.subr.bf16.mxu0 0
      %3794 = vmatpush1.bf16.msra.mxu0 0
      %3795 = vmatprep.subr.bf16.mxu0 0
      %3796 = vmatpush1.bf16.msra.mxu0 0
      %3797 = vmatprep.subr.bf16.mxu0 0
      %3798 = vmatpush1.bf16.msra.mxu0 0
      %3799 = vmatprep.subr.bf16.mxu0 0
      %3800 = vmatpush1.bf16.msra.mxu0 0
      %3801 = vmatprep.subr.bf16.mxu0 0
      %3802 = vmatpush1.bf16.msra.mxu0 0
      %3803 = vmatprep.subr.bf16.mxu0 0
      %3804 = vmatpush1.bf16.msra.mxu0 0
      %3805 = vmatprep.subr.bf16.mxu0 0
      %3806 = vmatpush1.bf16.msra.mxu0 0
      %3807 = vmatprep.subr.bf16.mxu0 0
      %3808 = vmatpush1.bf16.msra.mxu0 0
      %3809 = vmatprep.mubr.bf16.mxu0 0
      %3810 = vmatmul.mubr.bf16.gmra.mrb[0].mxu0 %v3673
      %v3811 = vpop.f32.mrb[0].mxu0
      %v3812 = vadd.f32 0.0, %v3811
      %v3813 = vpop.f32.mrb[0].mxu0
      %v3814 = vadd.f32 0.0, %v3813
      %v3815 = vpop.f32.mrb[0].mxu0
      %v3816 = vadd.f32 0.0, %v3815
      %v3817 = vpop.f32.mrb[0].mxu0
      %v3818 = vadd.f32 0.0, %v3817
      %3819 = vmatprep.mubr.bf16.mxu0 0
      %3820 = vmatmul.mubr.bf16.gmra.mrb[0].mxu0 %v3674
      %v3821 = vpop.f32.mrb[0].mxu0
      %v3822 = vadd.f32 0.0, %v3821
      %v3823 = vpop.f32.mrb[0].mxu0
      %v3824 = vadd.f32 0.0, %v3823
      %v3825 = vpop.f32.mrb[0].mxu0
      %v3826 = vadd.f32 0.0, %v3825
      %v3827 = vpop.f32.mrb[0].mxu0
      %v3828 = vadd.f32 0.0, %v3827
      %3829 = vmatprep.mubr.bf16.mxu0 0
      %3830 = vmatmul.mubr.bf16.gmra.mrb[0].mxu0 %v3675
      %v3831 = vpop.f32.mrb[0].mxu0
      %v3832 = vadd.f32 0.0, %v3831
      %v3833 = vpop.f32.mrb[0].mxu0
      %v3834 = vadd.f32 0.0, %v3833
      %v3835 = vpop.f32.mrb[0].mxu0
      %v3836 = vadd.f32 0.0, %v3835
      %v3837 = vpop.f32.mrb[0].mxu0
      %v3838 = vadd.f32 0.0, %v3837
      %3839 = vmatprep.mubr.bf16.mxu0 0
      %3840 = vmatmul.mubr.bf16.gmra.mrb[0].mxu0 %v3676
      %v3841 = vpop.f32.mrb[0].mxu0
      %v3842 = vadd.f32 0.0, %v3841
      %v3843 = vpop.f32.mrb[0].mxu0
      %v3844 = vadd.f32 0.0, %v3843
      %v3845 = vpop.f32.mrb[0].mxu0
      %v3846 = vadd.f32 0.0, %v3845
      %v3847 = vpop.f32.mrb[0].mxu0
      %v3848 = vadd.f32 0.0, %v3847
      %3849 = vmatprep.mubr.bf16.mxu0 0
      %3850 = vmatmul.mubr.bf16.gmra.mrb[0].mxu0 %v3677
      %v3851 = vpop.f32.mrb[0].mxu0
      %v3852 = vadd.f32 0.0, %v3851
      %v3853 = vpop.f32.mrb[0].mxu0
      %v3854 = vadd.f32 0.0, %v3853
      %v3855 = vpop.f32.mrb[0].mxu0
      %v3856 = vadd.f32 0.0, %v3855
      %v3857 = vpop.f32.mrb[0].mxu0
      %v3858 = vadd.f32 0.0, %v3857
      %3859 = vmatprep.mubr.bf16.mxu0 0
      %3860 = vmatmul.mubr.bf16.gmra.mrb[0].mxu0 %v3678
      %v3861 = vpop.f32.mrb[0].mxu0
      %v3862 = vadd.f32 0.0, %v3861
      %v3863 = vpop.f32.mrb[0].mxu0
      %v3864 = vadd.f32 0.0, %v3863
      %v3865 = vpop.f32.mrb[0].mxu0
      %v3866 = vadd.f32 0.0, %v3865
      %v3867 = vpop.f32.mrb[0].mxu0
      %v3868 = vadd.f32 0.0, %v3867
      %3869 = vmatprep.mubr.bf16.mxu0 0
      %3870 = vmatmul.mubr.bf16.gmra.mrb[0].mxu0 %v3679
      %v3871 = vpop.f32.mrb[0].mxu0
      %v3872 = vadd.f32 0.0, %v3871
      %v3873 = vpop.f32.mrb[0].mxu0
      %v3874 = vadd.f32 0.0, %v3873
      %v3875 = vpop.f32.mrb[0].mxu0
      %v3876 = vadd.f32 0.0, %v3875
      %v3877 = vpop.f32.mrb[0].mxu0
      %v3878 = vadd.f32 0.0, %v3877
      %3879 = vmatprep.mubr.bf16.mxu0 0
      %3880 = vmatmul.mubr.bf16.gmra.mrb[0].mxu0 %v3680
      %v3881 = vpop.f32.mrb[0].mxu0
      %v3882 = vadd.f32 0.0, %v3881
      %v3883 = vpop.f32.mrb[0].mxu0
      %v3884 = vadd.f32 0.0, %v3883
      %v3885 = vpop.f32.mrb[0].mxu0
      %v3886 = vadd.f32 0.0, %v3885
      %v3887 = vpop.f32.mrb[0].mxu0
      %v3888 = vadd.f32 0.0, %v3887
      %3889 = vdwg.mxu0
      %v3890 = vadd.f32 %v3063, %v3812
      %v3891 = vadd.f32 %v3064, %v3814
      %v3892 = vadd.f32 %v3065, %v3816
      %v3893 = vadd.f32 %v3066, %v3818
      %v3894 = vadd.f32 %v3067, %v3822
      %v3895 = vadd.f32 %v3068, %v3824
      %v3896 = vadd.f32 %v3069, %v3826
      %v3897 = vadd.f32 %v3070, %v3828
      %v3898 = vadd.f32 %v3071, %v3832
      %v3899 = vadd.f32 %v3072, %v3834
      %v3900 = vadd.f32 %v3073, %v3836
      %v3901 = vadd.f32 %v3074, %v3838
      %v3902 = vadd.f32 %v3075, %v3842
      %v3903 = vadd.f32 %v3076, %v3844
      %v3904 = vadd.f32 %v3077, %v3846
      %v3905 = vadd.f32 %v3078, %v3848
      %v3906 = vadd.f32 %v3079, %v3852
      %v3907 = vadd.f32 %v3080, %v3854
      %v3908 = vadd.f32 %v3081, %v3856
      %v3909 = vadd.f32 %v3082, %v3858
      %v3910 = vadd.f32 %v3083, %v3862
      %v3911 = vadd.f32 %v3084, %v3864
      %v3912 = vadd.f32 %v3085, %v3866
      %v3913 = vadd.f32 %v3086, %v3868
      %v3914 = vadd.f32 %v3087, %v3872
      %v3915 = vadd.f32 %v3088, %v3874
      %v3916 = vadd.f32 %v3089, %v3876
      %v3917 = vadd.f32 %v3090, %v3878
      %v3918 = vadd.f32 %v3091, %v3882
      %v3919 = vadd.f32 %v3092, %v3884
      %v3920 = vadd.f32 %v3093, %v3886
      %v3921 = vadd.f32 %v3094, %v3888
      %3922 = vst [vmem:[%s319] sm:$0xff] %v3890
      %3923 = vst [vmem:[%s319 + $0x8] sm:$0xff] %v3891
      %3924 = vst [vmem:[%s319 + $0x10] sm:$0xff] %v3892
      %3925 = vst [vmem:[%s319 + $0x18] sm:$0xff] %v3893
      %3926 = vst [vmem:[%s319 + $0x20] sm:$0xff] %v3894
      %3927 = vst [vmem:[%s319 + $0x28] sm:$0xff] %v3895
      %3928 = vst [vmem:[%s319 + $0x30] sm:$0xff] %v3896
      %3929 = vst [vmem:[%s319 + $0x38] sm:$0xff] %v3897
      %3930 = vst [vmem:[%s319 + $0x40] sm:$0xff] %v3898
      %3931 = vst [vmem:[%s319 + $0x48] sm:$0xff] %v3899
      %3932 = vst [vmem:[%s319 + $0x50] sm:$0xff] %v3900
      %3933 = vst [vmem:[%s319 + $0x58] sm:$0xff] %v3901
      %3934 = vst [vmem:[%s319 + $0x60] sm:$0xff] %v3902
      %3935 = vst [vmem:[%s319 + $0x68] sm:$0xff] %v3903
      %3936 = vst [vmem:[%s319 + $0x70] sm:$0xff] %v3904
      %3937 = vst [vmem:[%s319 + $0x78] sm:$0xff] %v3905
      %3938 = vst [vmem:[%s319 + $0x80] sm:$0xff] %v3906
      %3939 = vst [vmem:[%s319 + $0x88] sm:$0xff] %v3907
      %3940 = vst [vmem:[%s319 + $0x90] sm:$0xff] %v3908
      %3941 = vst [vmem:[%s319 + $0x98] sm:$0xff] %v3909
      %3942 = vst [vmem:[%s319 + $0xa0] sm:$0xff] %v3910
      %3943 = vst [vmem:[%s319 + $0xa8] sm:$0xff] %v3911
      %3944 = vst [vmem:[%s319 + $0xb0] sm:$0xff] %v3912
      %3945 = vst [vmem:[%s319 + $0xb8] sm:$0xff] %v3913
      %3946 = vst [vmem:[%s319 + $0xc0] sm:$0xff] %v3914
      %3947 = vst [vmem:[%s319 + $0xc8] sm:$0xff] %v3915
      %3948 = vst [vmem:[%s319 + $0xd0] sm:$0xff] %v3916
      %3949 = vst [vmem:[%s319 + $0xd8] sm:$0xff] %v3917
      %3950 = vst [vmem:[%s319 + $0xe0] sm:$0xff] %v3918
      %3951 = vst [vmem:[%s319 + $0xe8] sm:$0xff] %v3919
      %3952 = vst [vmem:[%s319 + $0xf0] sm:$0xff] %v3920
      %3953 = vst [vmem:[%s319 + $0xf8] sm:$0xff] %v3921
      %s3954 = smul.u32 16, %s19
      %p3955 = scmp.lt.s32.totalorder %s3954, 31
      %s3956 = scalar_select %p3955, %s3954, 31
      %s3957 = smul.addr %s3956, 2
      %s3958 = smul.addr %s3957, 8
      %s3959 = scalar_lea.vmem %s6, %s3958
      %s3960 = smul.u32 16, %s19
      %p3961 = scmp.lt.s32.totalorder %s3960, 31
      %s3962 = scalar_select %p3961, %s3960, 31
      %s3963 = smul.addr %s3962, 2
      %s3964 = smul.addr %s3963, 8
      %s3965 = scalar_lea.vmem %s7, %s3964
      // Predicated region
      $region45: #{internlm2_forward.5} parent=43 // pred_check
        %p3966 = pneg %p173
      $region46: #{internlm2_forward.5} parent=43 // pred_check_branch
        %3968 = sbr.rel (%p3966) target = $region48
      $region47: #{internlm2_forward.5} parent=43 // pred_region
        %s3969 = smul.u32 16, %s19
      $region48: #{internlm2_forward.5} parent=43 // pred_fallthru
        _
      // Predicated region
      $region49: #{internlm2_forward.5} parent=43 // pred_check
        %p3970 = pneg %p199
      $region50: #{internlm2_forward.5} parent=43 // pred_check_branch
        %3972 = sbr.rel (%p3970) target = $region52
      $region51: #{internlm2_forward.5} parent=43 // pred_region
        %s3973 = smul.u32 16, %s19
      $region52: #{internlm2_forward.5} parent=43 // pred_fallthru
        _
    $region44: #{internlm2_forward.5} parent=5 // pred_fallthru
      _
    %p3974 = scmp.le.s32.totalorder 2, %s14
    // Predicated region
    $region53: #{internlm2_forward.5} parent=5 // pred_check
      %p3975 = pneg %p3974
    $region54: #{internlm2_forward.5} parent=5 // pred_check_branch
      %3977 = sbr.rel (%p3975) target = $region56
    $region55: #{internlm2_forward.5} parent=5 // pred_region
      %s3978 = ssub.s32 %s14, 2
      // Predicated region
      $region57: #{internlm2_forward.5} parent=55 // pred_check
        %p3979 = pneg %p179
      $region58: #{internlm2_forward.5} parent=55 // pred_check_branch
        %3981 = sbr.rel (%p3979) target = $region60
      $region59: #{internlm2_forward.5} parent=55 // pred_region
        %s3982 = smul.u32 16, %s20
        %p3983 = scmp.lt.s32.totalorder %s3982, 31
        %s3984 = scalar_select %p3983, %s3982, 31
        %s3985 = smul.addr %s3984, 2
        %s3986 = smul.addr %s3985, 8
        %s3987 = scalar_lea.vmem %s6, %s3986
      $region60: #{internlm2_forward.5} parent=55 // pred_fallthru
        _
      // Predicated region
      $region61: #{internlm2_forward.5} parent=55 // pred_check
        %p3988 = pneg %p205
      $region62: #{internlm2_forward.5} parent=55 // pred_check_branch
        %3990 = sbr.rel (%p3988) target = $region64
      $region63: #{internlm2_forward.5} parent=55 // pred_region
        %s3991 = smul.u32 16, %s20
        %p3992 = scmp.lt.s32.totalorder %s3991, 31
        %s3993 = scalar_select %p3992, %s3991, 31
        %s3994 = smul.addr %s3993, 2
        %s3995 = smul.addr %s3994, 8
        %s3996 = scalar_lea.vmem %s7, %s3995
      $region64: #{internlm2_forward.5} parent=55 // pred_fallthru
        _
    $region56: #{internlm2_forward.5} parent=5 // pred_fallthru
      _
  $region6: #{internlm2_forward.5} parent=0 // loop_footer
    %s18 = sadd.s32 1, %s14
  $region7: #{internlm2_forward.5} parent=0 // loop_footer_branch
    %13 = sbr.rel target = $region3
  $region8: #{internlm2_forward.5} parent=0 // loop_exit
    _

// kernel: internlm2_forward.7
$region0: #{internlm2_forward.7}
  #allocation0 [shape = 'u32[]', space=smem, size = 0x4, offset = 0x4, fixed_abs, tag = 'smem constant byte address 0x4 - core index']
  #allocation1 [shape = 'u32[144,128]{1,0:T(1,128)}', space=vmem, size = 0x12000, scoped, tag = 'internal scratch']
  %s0 = inlined_call_operand.vmem [shape: f32[256,256], index: 0, kind: input, shape index: {}]
  %s1 = inlined_call_operand.vmem [shape: f32[256,256], index: 1, kind: input, shape index: {}]
  %s2 = inlined_call_operand.vmem [shape: f32[1,256], index: 2, kind: input, shape index: {}]
  %s3 = inlined_call_operand.vmem [shape: bf16[256,512], index: 3, kind: input, shape index: {}]
  %s4 = inlined_call_operand.vmem [shape: bf16[256,512], index: 4, kind: input, shape index: {}]
  %s5 = inlined_call_operand.vmem [shape: bf16[512,256], index: 5, kind: input, shape index: {}]
  %s6 = inlined_call_operand.vmem [shape: f32[1,256], index: 6, kind: input, shape index: {}]
  %s7 = inlined_call_operand.hbm [shape: f32[256,256], index: 7, kind: output, shape index: {}]
  %s8 = sld [smem:[#allocation0]]
  $region61: #{internlm2_forward.7} parent=0
    _
  %s10 = ssub.s32 1, %s8
  %s11 = scalar_select 0, %s10, %s8
  $region1: #{internlm2_forward.7} parent=0
    #allocation2 [shape = 'u8[262144]{0}', space=vmem, size = 0x40000, scoped, tag = 'output window, operand 0']
    #allocation3 [shape = 's32[2]{0}', space=sflag, size = 0x8, scoped, tag = 'scoped memory for internlm2_forward.7']
    %12 = vsyncpa [#allocation3], 0
    %s13 = scalar_lea.sflag [#allocation3], 1
    %14 = vsyncpa %s13, 0
    loop: start=0, step=1, limit=4
    $region2: #{internlm2_forward.7} parent=1 // loop_pre_header
      _
    $region3: #{internlm2_forward.7} parent=1 // loop_header
      %s16 = sphi 0, %s20
      %p17 = scmp.ge.s32.totalorder %s16, 4
      %s26 = sphi 0, %s28
      %s29 = sphi 0, %s26
      %s30 = sphi 0, %s29
      %s46 = sphi 0, %s30
      %s52 = sphi 0, %s54
      %s55 = sphi 0, %s52
      %s56 = sphi 0, %s55
      %s72 = sphi 0, %s56
      %s76 = sphi 0, %s76
      %s78 = sphi 0, %s76
      %s79 = sphi 0, %s78
      %s93 = sphi 0, %s79
      %s97 = sphi 0, %s97
      %s99 = sphi 0, %s97
      %s100 = sphi 0, %s99
      %s114 = sphi 0, %s100
      %s118 = sphi 0, %s118
      %s120 = sphi 0, %s118
      %s121 = sphi 0, %s120
      %s135 = sphi 0, %s121
      %s139 = sphi 0, %s139
      %s141 = sphi 0, %s139
      %s142 = sphi 0, %s141
      %s156 = sphi 0, %s142
      %s160 = sphi 0, %s160
      %s162 = sphi 0, %s160
      %s163 = sphi 0, %s162
      %s177 = sphi 0, %s163
      %s183 = sphi 0, %s185
      %s186 = sphi 0, %s183
      %s187 = sphi 0, %s186
      %s203 = sphi 0, %s187
    $region4: #{internlm2_forward.7} parent=1 // loop_header_branch
      %19 = sbr.rel (%p17) target = $region8
    $region5: #{internlm2_forward.7} parent=1 // loop_body
      %s21 = ssub.s32 %s16, 1
      %s22 = ssub.s32 %s16, 2
      %s23 = sadd.s32 %s16, 1
      %s24 = ssub.s32 %s16, %s23
      %p25 = scmp.eq.s32.totalorder %s24, 0
      %s27 = sadd.s32 %s26, 1
      %s28 = scalar_select %p25, %s26, %s27
      %p31 = pneg %p25
      %p32 = scmp.eq.s32.totalorder %s16, 1
      %p33 = por %p31, %p32
      %p34 = scmp.ne.s32.totalorder %s26, %s29
      %p35 = scmp.eq.s32.totalorder %s16, 0
      %p36 = por %p34, %p35
      %p37 = scmp.ne.s32.totalorder %s26, %s29
      %p38 = scmp.eq.s32.totalorder %s21, 1
      %p39 = por %p37, %p38
      %p40 = scmp.ne.s32.totalorder %s29, %s30
      %p41 = scmp.eq.s32.totalorder %s21, 0
      %p42 = por %p40, %p41
      %p43 = scmp.ne.s32.totalorder %s29, %s30
      %p44 = scmp.eq.s32.totalorder %s22, 1
      %p45 = por %p43, %p44
      %p47 = scmp.ne.s32.totalorder %s30, %s46
      %p48 = scmp.eq.s32.totalorder %s22, 0
      %p49 = por %p47, %p48
      %s50 = ssub.s32 %s16, %s23
      %p51 = scmp.eq.s32.totalorder %s50, 0
      %s53 = sadd.s32 %s52, 1
      %s54 = scalar_select %p51, %s52, %s53
      %p57 = pneg %p51
      %p58 = scmp.eq.s32.totalorder %s16, 1
      %p59 = por %p57, %p58
      %p60 = scmp.ne.s32.totalorder %s52, %s55
      %p61 = scmp.eq.s32.totalorder %s16, 0
      %p62 = por %p60, %p61
      %p63 = scmp.ne.s32.totalorder %s52, %s55
      %p64 = scmp.eq.s32.totalorder %s21, 1
      %p65 = por %p63, %p64
      %p66 = scmp.ne.s32.totalorder %s55, %s56
      %p67 = scmp.eq.s32.totalorder %s21, 0
      %p68 = por %p66, %p67
      %p69 = scmp.ne.s32.totalorder %s55, %s56
      %p70 = scmp.eq.s32.totalorder %s22, 1
      %p71 = por %p69, %p70
      %p73 = scmp.ne.s32.totalorder %s56, %s72
      %p74 = scmp.eq.s32.totalorder %s22, 0
      %p75 = por %p73, %p74
      %s77 = sadd.s32 %s76, 1
      %p80 = scmp.eq.s32.totalorder %s16, 1
      %p81 = scmp.ne.s32.totalorder %s76, %s78
      %p82 = scmp.eq.s32.totalorder %s16, 0
      %p83 = por %p81, %p82
      %p84 = scmp.ne.s32.totalorder %s76, %s78
      %p85 = scmp.eq.s32.totalorder %s21, 1
      %p86 = por %p84, %p85
      %p87 = scmp.ne.s32.totalorder %s78, %s79
      %p88 = scmp.eq.s32.totalorder %s21, 0
      %p89 = por %p87, %p88
      %p90 = scmp.ne.s32.totalorder %s78, %s79
      %p91 = scmp.eq.s32.totalorder %s22, 1
      %p92 = por %p90, %p91
      %p94 = scmp.ne.s32.totalorder %s79, %s93
      %p95 = scmp.eq.s32.totalorder %s22, 0
      %p96 = por %p94, %p95
      %s98 = sadd.s32 %s97, 1
      %p101 = scmp.eq.s32.totalorder %s16, 1
      %p102 = scmp.ne.s32.totalorder %s97, %s99
      %p103 = scmp.eq.s32.totalorder %s16, 0
      %p104 = por %p102, %p103
      %p105 = scmp.ne.s32.totalorder %s97, %s99
      %p106 = scmp.eq.s32.totalorder %s21, 1
      %p107 = por %p105, %p106
      %p108 = scmp.ne.s32.totalorder %s99, %s100
      %p109 = scmp.eq.s32.totalorder %s21, 0
      %p110 = por %p108, %p109
      %p111 = scmp.ne.s32.totalorder %s99, %s100
      %p112 = scmp.eq.s32.totalorder %s22, 1
      %p113 = por %p111, %p112
      %p115 = scmp.ne.s32.totalorder %s100, %s114
      %p116 = scmp.eq.s32.totalorder %s22, 0
      %p117 = por %p115, %p116
      %s119 = sadd.s32 %s118, 1
      %p122 = scmp.eq.s32.totalorder %s16, 1
      %p123 = scmp.ne.s32.totalorder %s118, %s120
      %p124 = scmp.eq.s32.totalorder %s16, 0
      %p125 = por %p123, %p124
      %p126 = scmp.ne.s32.totalorder %s118, %s120
      %p127 = scmp.eq.s32.totalorder %s21, 1
      %p128 = por %p126, %p127
      %p129 = scmp.ne.s32.totalorder %s120, %s121
      %p130 = scmp.eq.s32.totalorder %s21, 0
      %p131 = por %p129, %p130
      %p132 = scmp.ne.s32.totalorder %s120, %s121
      %p133 = scmp.eq.s32.totalorder %s22, 1
      %p134 = por %p132, %p133
      %p136 = scmp.ne.s32.totalorder %s121, %s135
      %p137 = scmp.eq.s32.totalorder %s22, 0
      %p138 = por %p136, %p137
      %s140 = sadd.s32 %s139, 1
      %p143 = scmp.eq.s32.totalorder %s16, 1
      %p144 = scmp.ne.s32.totalorder %s139, %s141
      %p145 = scmp.eq.s32.totalorder %s16, 0
      %p146 = por %p144, %p145
      %p147 = scmp.ne.s32.totalorder %s139, %s141
      %p148 = scmp.eq.s32.totalorder %s21, 1
      %p149 = por %p147, %p148
      %p150 = scmp.ne.s32.totalorder %s141, %s142
      %p151 = scmp.eq.s32.totalorder %s21, 0
      %p152 = por %p150, %p151
      %p153 = scmp.ne.s32.totalorder %s141, %s142
      %p154 = scmp.eq.s32.totalorder %s22, 1
      %p155 = por %p153, %p154
      %p157 = scmp.ne.s32.totalorder %s142, %s156
      %p158 = scmp.eq.s32.totalorder %s22, 0
      %p159 = por %p157, %p158
      %s161 = sadd.s32 %s160, 1
      %p164 = scmp.eq.s32.totalorder %s16, 1
      %p165 = scmp.ne.s32.totalorder %s160, %s162
      %p166 = scmp.eq.s32.totalorder %s16, 0
      %p167 = por %p165, %p166
      %p168 = scmp.ne.s32.totalorder %s160, %s162
      %p169 = scmp.eq.s32.totalorder %s21, 1
      %p170 = por %p168, %p169
      %p171 = scmp.ne.s32.totalorder %s162, %s163
      %p172 = scmp.eq.s32.totalorder %s21, 0
      %p173 = por %p171, %p172
      %p174 = scmp.ne.s32.totalorder %s162, %s163
      %p175 = scmp.eq.s32.totalorder %s22, 1
      %p176 = por %p174, %p175
      %p178 = scmp.ne.s32.totalorder %s163, %s177
      %p179 = scmp.eq.s32.totalorder %s22, 0
      %p180 = por %p178, %p179
      %s181 = ssub.s32 %s16, %s23
      %p182 = scmp.eq.s32.totalorder %s181, 0
      %s184 = sadd.s32 %s183, 1
      %s185 = scalar_select %p182, %s183, %s184
      %p188 = pneg %p182
      %p189 = scmp.eq.s32.totalorder %s16, 1
      %p190 = por %p188, %p189
      %p191 = scmp.ne.s32.totalorder %s183, %s186
      %p192 = scmp.eq.s32.totalorder %s16, 0
      %p193 = por %p191, %p192
      %p194 = scmp.ne.s32.totalorder %s183, %s186
      %p195 = scmp.eq.s32.totalorder %s21, 1
      %p196 = por %p194, %p195
      %p197 = scmp.ne.s32.totalorder %s186, %s187
      %p198 = scmp.eq.s32.totalorder %s21, 0
      %p199 = por %p197, %p198
      %p200 = scmp.ne.s32.totalorder %s186, %s187
      %p201 = scmp.eq.s32.totalorder %s22, 1
      %p202 = por %p200, %p201
      %p204 = scmp.ne.s32.totalorder %s187, %s203
      %p205 = scmp.eq.s32.totalorder %s22, 0
      %p206 = por %p204, %p205
      %p207 = scmp.le.s32.totalorder 1, %s16
      %p208 = scmp.lt.s32.totalorder %s16, 3
      %p209 = pnand %p207, %p208
      %p210 = pneg %p209
      // Predicated region
      $region9: #{internlm2_forward.7} parent=5 // pred_check
        _
      $region10: #{internlm2_forward.7} parent=5 // pred_check_branch
        %212 = sbr.rel (%p209) target = $region12
      $region11: #{internlm2_forward.7} parent=5 // pred_region
        %s213 = ssub.s32 %s16, 1
        // Predicated region
        $region13: #{internlm2_forward.7} parent=11 // pred_check
          %p214 = pneg %p89
        $region14: #{internlm2_forward.7} parent=11 // pred_check_branch
          %216 = sbr.rel (%p214) target = $region16
        $region15: #{internlm2_forward.7} parent=11 // pred_region
          _
        $region16: #{internlm2_forward.7} parent=11 // pred_fallthru
          _
        // Predicated region
        $region17: #{internlm2_forward.7} parent=11 // pred_check
          %p217 = pneg %p110
        $region18: #{internlm2_forward.7} parent=11 // pred_check_branch
          %219 = sbr.rel (%p217) target = $region20
        $region19: #{internlm2_forward.7} parent=11 // pred_region
          _
        $region20: #{internlm2_forward.7} parent=11 // pred_fallthru
          _
        // Predicated region
        $region21: #{internlm2_forward.7} parent=11 // pred_check
          %p220 = pneg %p131
        $region22: #{internlm2_forward.7} parent=11 // pred_check_branch
          %222 = sbr.rel (%p220) target = $region24
        $region23: #{internlm2_forward.7} parent=11 // pred_region
          _
        $region24: #{internlm2_forward.7} parent=11 // pred_fallthru
          _
        // Predicated region
        $region25: #{internlm2_forward.7} parent=11 // pred_check
          %p223 = pneg %p152
        $region26: #{internlm2_forward.7} parent=11 // pred_check_branch
          %225 = sbr.rel (%p223) target = $region28
        $region27: #{internlm2_forward.7} parent=11 // pred_region
          _
        $region28: #{internlm2_forward.7} parent=11 // pred_fallthru
          _
        // Predicated region
        $region29: #{internlm2_forward.7} parent=11 // pred_check
          %p226 = pneg %p173
        $region30: #{internlm2_forward.7} parent=11 // pred_check_branch
          %228 = sbr.rel (%p226) target = $region32
        $region31: #{internlm2_forward.7} parent=11 // pred_region
          _
        $region32: #{internlm2_forward.7} parent=11 // pred_fallthru
          _
      $region12: #{internlm2_forward.7} parent=5 // pred_fallthru
        _
      %p229 = scmp.lt.s32.totalorder %s16, 2
      // Predicated region
      $region33: #{internlm2_forward.7} parent=5 // pred_check
        %p230 = pneg %p229
      $region34: #{internlm2_forward.7} parent=5 // pred_check_branch
        %232 = sbr.rel (%p230) target = $region36
      $region35: #{internlm2_forward.7} parent=5 // pred_region
        // Predicated region
        $region37: #{internlm2_forward.7} parent=35 // pred_check
          %p233 = pneg %p36
        $region38: #{internlm2_forward.7} parent=35 // pred_check_branch
          %235 = sbr.rel (%p233) target = $region40
        $region39: #{internlm2_forward.7} parent=35 // pred_region
          %s236 = smul.u32 16, %s16
          %p237 = scmp.lt.s32.totalorder %s236, 31
          %s238 = scalar_select %p237, %s236, 31
          %s239 = smul.addr %s238, 2
          %s240 = smul.addr %s239, 8
          %s241 = scalar_lea.vmem %s0, %s240
          %s242 = smul.u32 16, %s16
        $region40: #{internlm2_forward.7} parent=35 // pred_fallthru
          _
        // Predicated region
        $region41: #{internlm2_forward.7} parent=35 // pred_check
          %p243 = pneg %p62
        $region42: #{internlm2_forward.7} parent=35 // pred_check_branch
          %245 = sbr.rel (%p243) target = $region44
        $region43: #{internlm2_forward.7} parent=35 // pred_region
          %s246 = smul.u32 16, %s16
          %p247 = scmp.lt.s32.totalorder %s246, 31
          %s248 = scalar_select %p247, %s246, 31
          %s249 = smul.addr %s248, 2
          %s250 = smul.addr %s249, 8
          %s251 = scalar_lea.vmem %s1, %s250
          %s252 = smul.u32 16, %s16
        $region44: #{internlm2_forward.7} parent=35 // pred_fallthru
          _
      $region36: #{internlm2_forward.7} parent=5 // pred_fallthru
        _
      %p253 = scmp.le.s32.totalorder 1, %s16
      %p254 = scmp.lt.s32.totalorder %s16, 3
      %p255 = pnand %p253, %p254
      %p256 = pneg %p255
      // Predicated region
      $region45: #{internlm2_forward.7} parent=5 // pred_check
        _
      $region46: #{internlm2_forward.7} parent=5 // pred_check_branch
        %258 = sbr.rel (%p255) target = $region48
      $region47: #{internlm2_forward.7} parent=5 // pred_region
        %s259 = ssub.s32 %s16, 1
        %s260 = smul.u32 16, %s21
        %p261 = scmp.lt.s32.totalorder %s260, 31
        %s262 = scalar_select %p261, %s260, 31
        %s263 = smul.addr %s262, 2
        %s264 = smul.addr %s263, 8
        %s265 = scalar_lea.vmem %s0, %s264
        %p266 = pneg %p42
        %p267 = pneg %p39
        %s268 = smul.u32 16, %s21
        %p269 = scmp.lt.s32.totalorder %s268, 31
        %s270 = scalar_select %p269, %s268, 31
        %s271 = smul.addr %s270, 2
        %s272 = smul.addr %s271, 8
        %s273 = scalar_lea.vmem %s1, %s272
        %p274 = pneg %p68
        %p275 = pneg %p65
        %p276 = pneg %p89
        %p277 = pneg %p86
        %p278 = pneg %p110
        %p279 = pneg %p107
        %p280 = pneg %p131
        %p281 = pneg %p128
        %p282 = pneg %p152
        %p283 = pneg %p149
        %p284 = pneg %p173
        %p285 = pneg %p170
        %p286 = pneg %p199
        %p287 = pneg %p196
        %s288 = sand.u32 %s186, 1
        %s289 = scalar_lea.sflag [#allocation3], %s288
        %s290 = sand.u32 %s186, 1
        %s291 = smul.addr %s290, 256
        %s292 = scalar_lea.vmem [#allocation2], %s291
        %s293 = smul.u32 16, %s21
        %p294 = scmp.lt.s32.totalorder %s293, 31
        %s295 = scalar_select %p294, %s293, 31
        %s296 = smul.addr %s295, 2
        %s297 = smul.addr %s296, 8
        %s298 = scalar_lea.vmem %s0, %s297
        %s299 = smul.u32 16, %s21
        %s300 = smul.u32 16, %s21
        %p301 = scmp.lt.s32.totalorder %s300, 31
        %s302 = scalar_select %p301, %s300, 31
        %s303 = smul.addr %s302, 2
        %s304 = smul.addr %s303, 8
        %s305 = scalar_lea.vmem %s1, %s304
        %s306 = smul.u32 16, %s21
        %s307 = smul.u32 16, %s21
        %v309 = vld [vmem:[%s298] sm:$0xff]
        %v310 = vld [vmem:[%s298 + $0x8] sm:$0xff]
        %v311 = vld [vmem:[%s298 + $0x10] sm:$0xff]
        %v312 = vld [vmem:[%s298 + $0x18] sm:$0xff]
        %v313 = vld [vmem:[%s298 + $0x20] sm:$0xff]
        %v314 = vld [vmem:[%s298 + $0x28] sm:$0xff]
        %v315 = vld [vmem:[%s298 + $0x30] sm:$0xff]
        %v316 = vld [vmem:[%s298 + $0x38] sm:$0xff]
        %v317 = vld [vmem:[%s298 + $0x40] sm:$0xff]
        %v318 = vld [vmem:[%s298 + $0x48] sm:$0xff]
        %v319 = vld [vmem:[%s298 + $0x50] sm:$0xff]
        %v320 = vld [vmem:[%s298 + $0x58] sm:$0xff]
        %v321 = vld [vmem:[%s298 + $0x60] sm:$0xff]
        %v322 = vld [vmem:[%s298 + $0x68] sm:$0xff]
        %v323 = vld [vmem:[%s298 + $0x70] sm:$0xff]
        %v324 = vld [vmem:[%s298 + $0x78] sm:$0xff]
        %v325 = vld [vmem:[%s298 + $0x80] sm:$0xff]
        %v326 = vld [vmem:[%s298 + $0x88] sm:$0xff]
        %v327 = vld [vmem:[%s298 + $0x90] sm:$0xff]
        %v328 = vld [vmem:[%s298 + $0x98] sm:$0xff]
        %v329 = vld [vmem:[%s298 + $0xa0] sm:$0xff]
        %v330 = vld [vmem:[%s298 + $0xa8] sm:$0xff]
        %v331 = vld [vmem:[%s298 + $0xb0] sm:$0xff]
        %v332 = vld [vmem:[%s298 + $0xb8] sm:$0xff]
        %v333 = vld [vmem:[%s298 + $0xc0] sm:$0xff]
        %v334 = vld [vmem:[%s298 + $0xc8] sm:$0xff]
        %v335 = vld [vmem:[%s298 + $0xd0] sm:$0xff]
        %v336 = vld [vmem:[%s298 + $0xd8] sm:$0xff]
        %v337 = vld [vmem:[%s298 + $0xe0] sm:$0xff]
        %v338 = vld [vmem:[%s298 + $0xe8] sm:$0xff]
        %v339 = vld [vmem:[%s298 + $0xf0] sm:$0xff]
        %v340 = vld [vmem:[%s298 + $0xf8] sm:$0xff]
        %v341 = vld [vmem:[%s305] sm:$0xff]
        %v342 = vld [vmem:[%s305 + $0x8] sm:$0xff]
        %v343 = vld [vmem:[%s305 + $0x10] sm:$0xff]
        %v344 = vld [vmem:[%s305 + $0x18] sm:$0xff]
        %v345 = vld [vmem:[%s305 + $0x20] sm:$0xff]
        %v346 = vld [vmem:[%s305 + $0x28] sm:$0xff]
        %v347 = vld [vmem:[%s305 + $0x30] sm:$0xff]
        %v348 = vld [vmem:[%s305 + $0x38] sm:$0xff]
        %v349 = vld [vmem:[%s305 + $0x40] sm:$0xff]
        %v350 = vld [vmem:[%s305 + $0x48] sm:$0xff]
        %v351 = vld [vmem:[%s305 + $0x50] sm:$0xff]
        %v352 = vld [vmem:[%s305 + $0x58] sm:$0xff]
        %v353 = vld [vmem:[%s305 + $0x60] sm:$0xff]
        %v354 = vld [vmem:[%s305 + $0x68] sm:$0xff]
        %v355 = vld [vmem:[%s305 + $0x70] sm:$0xff]
        %v356 = vld [vmem:[%s305 + $0x78] sm:$0xff]
        %v357 = vld [vmem:[%s305 + $0x80] sm:$0xff]
        %v358 = vld [vmem:[%s305 + $0x88] sm:$0xff]
        %v359 = vld [vmem:[%s305 + $0x90] sm:$0xff]
        %v360 = vld [vmem:[%s305 + $0x98] sm:$0xff]
        %v361 = vld [vmem:[%s305 + $0xa0] sm:$0xff]
        %v362 = vld [vmem:[%s305 + $0xa8] sm:$0xff]
        %v363 = vld [vmem:[%s305 + $0xb0] sm:$0xff]
        %v364 = vld [vmem:[%s305 + $0xb8] sm:$0xff]
        %v365 = vld [vmem:[%s305 + $0xc0] sm:$0xff]
        %v366 = vld [vmem:[%s305 + $0xc8] sm:$0xff]
        %v367 = vld [vmem:[%s305 + $0xd0] sm:$0xff]
        %v368 = vld [vmem:[%s305 + $0xd8] sm:$0xff]
        %v369 = vld [vmem:[%s305 + $0xe0] sm:$0xff]
        %v370 = vld [vmem:[%s305 + $0xe8] sm:$0xff]
        %v371 = vld [vmem:[%s305 + $0xf0] sm:$0xff]
        %v372 = vld [vmem:[%s305 + $0xf8] sm:$0xff]
        %v373 = vadd.f32 %v309, %v341
        %v374 = vadd.f32 %v310, %v342
        %v375 = vadd.f32 %v311, %v343
        %v376 = vadd.f32 %v312, %v344
        %v377 = vadd.f32 %v313, %v345
        %v378 = vadd.f32 %v314, %v346
        %v379 = vadd.f32 %v315, %v347
        %v380 = vadd.f32 %v316, %v348
        %v381 = vadd.f32 %v317, %v349
        %v382 = vadd.f32 %v318, %v350
        %v383 = vadd.f32 %v319, %v351
        %v384 = vadd.f32 %v320, %v352
        %v385 = vadd.f32 %v321, %v353
        %v386 = vadd.f32 %v322, %v354
        %v387 = vadd.f32 %v323, %v355
        %v388 = vadd.f32 %v324, %v356
        %v389 = vadd.f32 %v325, %v357
        %v390 = vadd.f32 %v326, %v358
        %v391 = vadd.f32 %v327, %v359
        %v392 = vadd.f32 %v328, %v360
        %v393 = vadd.f32 %v329, %v361
        %v394 = vadd.f32 %v330, %v362
        %v395 = vadd.f32 %v331, %v363
        %v396 = vadd.f32 %v332, %v364
        %v397 = vadd.f32 %v333, %v365
        %v398 = vadd.f32 %v334, %v366
        %v399 = vadd.f32 %v335, %v367
        %v400 = vadd.f32 %v336, %v368
        %v401 = vadd.f32 %v337, %v369
        %v402 = vadd.f32 %v338, %v370
        %v403 = vadd.f32 %v339, %v371
        %v404 = vadd.f32 %v340, %v372
        %v405 = vmul.f32 %v373, %v373
        %v406 = vmul.f32 %v374, %v374
        %v407 = vmul.f32 %v375, %v375
        %v408 = vmul.f32 %v376, %v376
        %v409 = vmul.f32 %v377, %v377
        %v410 = vmul.f32 %v378, %v378
        %v411 = vmul.f32 %v379, %v379
        %v412 = vmul.f32 %v380, %v380
        %v413 = vmul.f32 %v381, %v381
        %v414 = vmul.f32 %v382, %v382
        %v415 = vmul.f32 %v383, %v383
        %v416 = vmul.f32 %v384, %v384
        %v417 = vmul.f32 %v385, %v385
        %v418 = vmul.f32 %v386, %v386
        %v419 = vmul.f32 %v387, %v387
        %v420 = vmul.f32 %v388, %v388
        %v421 = vmul.f32 %v389, %v389
        %v422 = vmul.f32 %v390, %v390
        %v423 = vmul.f32 %v391, %v391
        %v424 = vmul.f32 %v392, %v392
        %v425 = vmul.f32 %v393, %v393
        %v426 = vmul.f32 %v394, %v394
        %v427 = vmul.f32 %v395, %v395
        %v428 = vmul.f32 %v396, %v396
        %v429 = vmul.f32 %v397, %v397
        %v430 = vmul.f32 %v398, %v398
        %v431 = vmul.f32 %v399, %v399
        %v432 = vmul.f32 %v400, %v400
        %v433 = vmul.f32 %v401, %v401
        %v434 = vmul.f32 %v402, %v402
        %v435 = vmul.f32 %v403, %v403
        %v436 = vmul.f32 %v404, %v404
        %v437 = vadd.f32 %v405, %v406
        %438 = vadd.xlane.f32.xlu0 %v437
        %v439 = vpop.xlane.xlu0 %438
        %v440 = vadd.f32 %v407, %v408
        %441 = vadd.xlane.f32.xlu0 %v440
        %v442 = vpop.xlane.xlu0 %441
        %v443 = vadd.f32 %v409, %v410
        %444 = vadd.xlane.f32.xlu0 %v443
        %v445 = vpop.xlane.xlu0 %444
        %v446 = vadd.f32 %v411, %v412
        %447 = vadd.xlane.f32.xlu0 %v446
        %v448 = vpop.xlane.xlu0 %447
        %v449 = vadd.f32 %v413, %v414
        %450 = vadd.xlane.f32.xlu0 %v449
        %v451 = vpop.xlane.xlu0 %450
        %v452 = vadd.f32 %v415, %v416
        %453 = vadd.xlane.f32.xlu0 %v452
        %v454 = vpop.xlane.xlu0 %453
        %v455 = vadd.f32 %v417, %v418
        %456 = vadd.xlane.f32.xlu0 %v455
        %v457 = vpop.xlane.xlu0 %456
        %v458 = vadd.f32 %v419, %v420
        %459 = vadd.xlane.f32.xlu0 %v458
        %v460 = vpop.xlane.xlu0 %459
        %v461 = vadd.f32 %v421, %v422
        %462 = vadd.xlane.f32.xlu0 %v461
        %v463 = vpop.xlane.xlu0 %462
        %v464 = vadd.f32 %v423, %v424
        %465 = vadd.xlane.f32.xlu0 %v464
        %v466 = vpop.xlane.xlu0 %465
        %v467 = vadd.f32 %v425, %v426
        %468 = vadd.xlane.f32.xlu0 %v467
        %v469 = vpop.xlane.xlu0 %468
        %v470 = vadd.f32 %v427, %v428
        %471 = vadd.xlane.f32.xlu0 %v470
        %v472 = vpop.xlane.xlu0 %471
        %v473 = vadd.f32 %v429, %v430
        %474 = vadd.xlane.f32.xlu0 %v473
        %v475 = vpop.xlane.xlu0 %474
        %v476 = vadd.f32 %v431, %v432
        %477 = vadd.xlane.f32.xlu0 %v476
        %v478 = vpop.xlane.xlu0 %477
        %v479 = vadd.f32 %v433, %v434
        %480 = vadd.xlane.f32.xlu0 %v479
        %v481 = vpop.xlane.xlu0 %480
        %v482 = vadd.f32 %v435, %v436
        %483 = vadd.xlane.f32.xlu0 %v482
        %v484 = vpop.xlane.xlu0 %483
        %v485 = vrcp.pop 256.0
        %v486 = vmul.f32 %v439, %v485
        %v487 = vmul.f32 %v442, %v485
        %v488 = vmul.f32 %v445, %v485
        %v489 = vmul.f32 %v448, %v485
        %v490 = vmul.f32 %v451, %v485
        %v491 = vmul.f32 %v454, %v485
        %v492 = vmul.f32 %v457, %v485
        %v493 = vmul.f32 %v460, %v485
        %v494 = vmul.f32 %v463, %v485
        %v495 = vmul.f32 %v466, %v485
        %v496 = vmul.f32 %v469, %v485
        %v497 = vmul.f32 %v472, %v485
        %v498 = vmul.f32 %v475, %v485
        %v499 = vmul.f32 %v478, %v485
        %v500 = vmul.f32 %v481, %v485
        %v501 = vmul.f32 %v484, %v485
        %v502 = vadd.f32 %v486, 1e-06
        %v503 = vadd.f32 %v487, 1e-06
        %v504 = vadd.f32 %v488, 1e-06
        %v505 = vadd.f32 %v489, 1e-06
        %v506 = vadd.f32 %v490, 1e-06
        %v507 = vadd.f32 %v491, 1e-06
        %v508 = vadd.f32 %v492, 1e-06
        %v509 = vadd.f32 %v493, 1e-06
        %v510 = vadd.f32 %v494, 1e-06
        %v511 = vadd.f32 %v495, 1e-06
        %v512 = vadd.f32 %v496, 1e-06
        %v513 = vadd.f32 %v497, 1e-06
        %v514 = vadd.f32 %v498, 1e-06
        %v515 = vadd.f32 %v499, 1e-06
        %v516 = vadd.f32 %v500, 1e-06
        %v517 = vadd.f32 %v501, 1e-06
        %v518 = vrsqrt.pop %v502
        %v519 = vrsqrt.pop %v503
        %v520 = vrsqrt.pop %v504
        %v521 = vrsqrt.pop %v505
        %v522 = vrsqrt.pop %v506
        %v523 = vrsqrt.pop %v507
        %v524 = vrsqrt.pop %v508
        %v525 = vrsqrt.pop %v509
        %v526 = vrsqrt.pop %v510
        %v527 = vrsqrt.pop %v511
        %v528 = vrsqrt.pop %v512
        %v529 = vrsqrt.pop %v513
        %v530 = vrsqrt.pop %v514
        %v531 = vrsqrt.pop %v515
        %v532 = vrsqrt.pop %v516
        %v533 = vrsqrt.pop %v517
        %v534 = vmul.f32 %v373, %v518
        %v535 = vmul.f32 %v374, %v518
        %v536 = vmul.f32 %v375, %v519
        %v537 = vmul.f32 %v376, %v519
        %v538 = vmul.f32 %v377, %v520
        %v539 = vmul.f32 %v378, %v520
        %v540 = vmul.f32 %v379, %v521
        %v541 = vmul.f32 %v380, %v521
        %v542 = vmul.f32 %v381, %v522
        %v543 = vmul.f32 %v382, %v522
        %v544 = vmul.f32 %v383, %v523
        %v545 = vmul.f32 %v384, %v523
        %v546 = vmul.f32 %v385, %v524
        %v547 = vmul.f32 %v386, %v524
        %v548 = vmul.f32 %v387, %v525
        %v549 = vmul.f32 %v388, %v525
        %v550 = vmul.f32 %v389, %v526
        %v551 = vmul.f32 %v390, %v526
        %v552 = vmul.f32 %v391, %v527
        %v553 = vmul.f32 %v392, %v527
        %v554 = vmul.f32 %v393, %v528
        %v555 = vmul.f32 %v394, %v528
        %v556 = vmul.f32 %v395, %v529
        %v557 = vmul.f32 %v396, %v529
        %v558 = vmul.f32 %v397, %v530
        %v559 = vmul.f32 %v398, %v530
        %v560 = vmul.f32 %v399, %v531
        %v561 = vmul.f32 %v400, %v531
        %v562 = vmul.f32 %v401, %v532
        %v563 = vmul.f32 %v402, %v532
        %v564 = vmul.f32 %v403, %v533
        %v565 = vmul.f32 %v404, %v533
        %v566 = vld [vmem:[%s2] sm:$0x3]
        %v568 = vlaneseq
        %v569 = vshrl.u32 %v568, 7
        %v570 = vsub.s32 0, %v569
        %v571 = vrot.slane %v566, %v570
        %v572 = vlaneseq
        %v573 = vshrl.u32 %v572, 7
        %v574 = vsub.s32 1, %v573
        %v575 = vrot.slane %v566, %v574
        %v578 = vmul.f32 %v534, %v571
        %v579 = vmul.f32 %v535, %v575
        %v580 = vmul.f32 %v536, %v571
        %v581 = vmul.f32 %v537, %v575
        %v582 = vmul.f32 %v538, %v571
        %v583 = vmul.f32 %v539, %v575
        %v584 = vmul.f32 %v540, %v571
        %v585 = vmul.f32 %v541, %v575
        %v586 = vmul.f32 %v542, %v571
        %v587 = vmul.f32 %v543, %v575
        %v588 = vmul.f32 %v544, %v571
        %v589 = vmul.f32 %v545, %v575
        %v590 = vmul.f32 %v546, %v571
        %v591 = vmul.f32 %v547, %v575
        %v592 = vmul.f32 %v548, %v571
        %v593 = vmul.f32 %v549, %v575
        %v594 = vmul.f32 %v550, %v571
        %v595 = vmul.f32 %v551, %v575
        %v596 = vmul.f32 %v552, %v571
        %v597 = vmul.f32 %v553, %v575
        %v598 = vmul.f32 %v554, %v571
        %v599 = vmul.f32 %v555, %v575
        %v600 = vmul.f32 %v556, %v571
        %v601 = vmul.f32 %v557, %v575
        %v602 = vmul.f32 %v558, %v571
        %v603 = vmul.f32 %v559, %v575
        %v604 = vmul.f32 %v560, %v571
        %v605 = vmul.f32 %v561, %v575
        %v606 = vmul.f32 %v562, %v571
        %v607 = vmul.f32 %v563, %v575
        %v608 = vmul.f32 %v564, %v571
        %v609 = vmul.f32 %v565, %v575
        %v610 = vpack.c.bf16 %v580, %v578
        %v611 = vpack.c.bf16 %v581, %v579
        %v612 = vpack.c.bf16 %v584, %v582
        %v613 = vpack.c.bf16 %v585, %v583
        %v614 = vpack.c.bf16 %v588, %v586
        %v615 = vpack.c.bf16 %v589, %v587
        %v616 = vpack.c.bf16 %v592, %v590
        %v617 = vpack.c.bf16 %v593, %v591
        %v618 = vpack.c.bf16 %v596, %v594
        %v619 = vpack.c.bf16 %v597, %v595
        %v620 = vpack.c.bf16 %v600, %v598
        %v621 = vpack.c.bf16 %v601, %v599
        %v622 = vpack.c.bf16 %v604, %v602
        %v623 = vpack.c.bf16 %v605, %v603
        %v624 = vpack.c.bf16 %v608, %v606
        %v625 = vpack.c.bf16 %v609, %v607
        %v626 = vld [vmem:[%s3] sm:$0xf]
        %v627 = vld [vmem:[%s3 + $0x10] sm:$0xf]
        %v628 = vld [vmem:[%s3 + $0x20] sm:$0xf]
        %v629 = vld [vmem:[%s3 + $0x30] sm:$0xf]
        %v630 = vld [vmem:[%s3 + $0x40] sm:$0xf]
        %v631 = vld [vmem:[%s3 + $0x50] sm:$0xf]
        %v632 = vld [vmem:[%s3 + $0x60] sm:$0xf]
        %v633 = vld [vmem:[%s3 + $0x70] sm:$0xf]
        %v634 = vld [vmem:[%s3 + $0x80] sm:$0xf]
        %v635 = vld [vmem:[%s3 + $0x90] sm:$0xf]
        %v636 = vld [vmem:[%s3 + $0xa0] sm:$0xf]
        %v637 = vld [vmem:[%s3 + $0xb0] sm:$0xf]
        %v638 = vld [vmem:[%s3 + $0xc0] sm:$0xf]
        %v639 = vld [vmem:[%s3 + $0xd0] sm:$0xf]
        %v640 = vld [vmem:[%s3 + $0xe0] sm:$0xf]
        %v641 = vld [vmem:[%s3 + $0xf0] sm:$0xf]
        %v642 = vld [vmem:[%s3 + $0x100] sm:$0xf]
        %v643 = vld [vmem:[%s3 + $0x110] sm:$0xf]
        %v644 = vld [vmem:[%s3 + $0x120] sm:$0xf]
        %v645 = vld [vmem:[%s3 + $0x130] sm:$0xf]
        %v646 = vld [vmem:[%s3 + $0x140] sm:$0xf]
        %v647 = vld [vmem:[%s3 + $0x150] sm:$0xf]
        %v648 = vld [vmem:[%s3 + $0x160] sm:$0xf]
        %v649 = vld [vmem:[%s3 + $0x170] sm:$0xf]
        %v650 = vld [vmem:[%s3 + $0x180] sm:$0xf]
        %v651 = vld [vmem:[%s3 + $0x190] sm:$0xf]
        %v652 = vld [vmem:[%s3 + $0x1a0] sm:$0xf]
        %v653 = vld [vmem:[%s3 + $0x1b0] sm:$0xf]
        %v654 = vld [vmem:[%s3 + $0x1c0] sm:$0xf]
        %v655 = vld [vmem:[%s3 + $0x1d0] sm:$0xf]
        %v656 = vld [vmem:[%s3 + $0x1e0] sm:$0xf]
        %v657 = vld [vmem:[%s3 + $0x1f0] sm:$0xf]
        %v690 = vunpack.c.l.b16 %v626
        %v691 = vunpack.c.l.b16 %v627
        %v692 = vunpack.c.l.b16 %v628
        %v693 = vunpack.c.l.b16 %v629
        %v694 = vunpack.c.l.b16 %v630
        %v695 = vunpack.c.l.b16 %v631
        %v696 = vunpack.c.l.b16 %v632
        %v697 = vunpack.c.l.b16 %v633
        %v698 = vunpack.c.l.b16 %v634
        %v699 = vunpack.c.l.b16 %v635
        %v700 = vunpack.c.l.b16 %v636
        %v701 = vunpack.c.l.b16 %v637
        %v702 = vunpack.c.l.b16 %v638
        %v703 = vunpack.c.l.b16 %v639
        %v704 = vunpack.c.l.b16 %v640
        %v705 = vunpack.c.l.b16 %v641
        %v706 = vunpack.c.l.b16 %v642
        %v707 = vunpack.c.l.b16 %v643
        %v708 = vunpack.c.l.b16 %v644
        %v709 = vunpack.c.l.b16 %v645
        %v710 = vunpack.c.l.b16 %v646
        %v711 = vunpack.c.l.b16 %v647
        %v712 = vunpack.c.l.b16 %v648
        %v713 = vunpack.c.l.b16 %v649
        %v714 = vunpack.c.l.b16 %v650
        %v715 = vunpack.c.l.b16 %v651
        %v716 = vunpack.c.l.b16 %v652
        %v717 = vunpack.c.l.b16 %v653
        %v718 = vunpack.c.l.b16 %v654
        %v719 = vunpack.c.l.b16 %v655
        %v720 = vunpack.c.l.b16 %v656
        %v721 = vunpack.c.l.b16 %v657
        %v722 = vpack.c.b16 %v691, %v690
        %v723 = vpack.c.b16 %v693, %v692
        %v724 = vpack.c.b16 %v695, %v694
        %v725 = vpack.c.b16 %v697, %v696
        %v726 = vpack.c.b16 %v699, %v698
        %v727 = vpack.c.b16 %v701, %v700
        %v728 = vpack.c.b16 %v703, %v702
        %v729 = vpack.c.b16 %v705, %v704
        %v730 = vpack.c.b16 %v707, %v706
        %v731 = vpack.c.b16 %v709, %v708
        %v732 = vpack.c.b16 %v711, %v710
        %v733 = vpack.c.b16 %v713, %v712
        %v734 = vpack.c.b16 %v715, %v714
        %v735 = vpack.c.b16 %v717, %v716
        %v736 = vpack.c.b16 %v719, %v718
        %v737 = vpack.c.b16 %v721, %v720
        %754 = vmatprep.subr.bf16.mxu0 0
        %755 = vmatpush1.bf16.msra.mxu0 %v722
        %756 = vmatprep.subr.bf16.mxu0 0
        %757 = vmatpush1.bf16.msra.mxu0 %v723
        %758 = vmatprep.subr.bf16.mxu0 0
        %759 = vmatpush1.bf16.msra.mxu0 %v724
        %760 = vmatprep.subr.bf16.mxu0 0
        %761 = vmatpush1.bf16.msra.mxu0 %v725
        %762 = vmatprep.subr.bf16.mxu0 0
        %763 = vmatpush1.bf16.msra.mxu0 %v726
        %764 = vmatprep.subr.bf16.mxu0 0
        %765 = vmatpush1.bf16.msra.mxu0 %v727
        %766 = vmatprep.subr.bf16.mxu0 0
        %767 = vmatpush1.bf16.msra.mxu0 %v728
        %768 = vmatprep.subr.bf16.mxu0 0
        %769 = vmatpush1.bf16.msra.mxu0 %v729
        %770 = vmatprep.subr.bf16.mxu0 0
        %771 = vmatpush1.bf16.msra.mxu0 %v730
        %772 = vmatprep.subr.bf16.mxu0 0
        %773 = vmatpush1.bf16.msra.mxu0 %v731
        %774 = vmatprep.subr.bf16.mxu0 0
        %775 = vmatpush1.bf16.msra.mxu0 %v732
        %776 = vmatprep.subr.bf16.mxu0 0
        %777 = vmatpush1.bf16.msra.mxu0 %v733
        %778 = vmatprep.subr.bf16.mxu0 0
        %779 = vmatpush1.bf16.msra.mxu0 %v734
        %780 = vmatprep.subr.bf16.mxu0 0
        %781 = vmatpush1.bf16.msra.mxu0 %v735
        %782 = vmatprep.subr.bf16.mxu0 0
        %783 = vmatpush1.bf16.msra.mxu0 %v736
        %784 = vmatprep.subr.bf16.mxu0 0
        %785 = vmatpush1.bf16.msra.mxu0 %v737
        %786 = vmatprep.mubr.bf16.mxu0 %v611
        %787 = vmatmul.mubr.bf16.gmra.mrb[0].mxu0 %v610
        %v788 = vpop.f32.mrb[0].mxu0
        %v789 = vadd.f32 0.0, %v788
        %v790 = vpop.f32.mrb[0].mxu0
        %v791 = vpop.f32.mrb[0].mxu0
        %v792 = vadd.f32 0.0, %v791
        %v793 = vpop.f32.mrb[0].mxu0
        %794 = vmatprep.mubr.bf16.mxu0 %v613
        %795 = vmatmul.mubr.bf16.gmra.mrb[0].mxu0 %v612
        %v796 = vpop.f32.mrb[0].mxu0
        %v797 = vadd.f32 0.0, %v796
        %v798 = vpop.f32.mrb[0].mxu0
        %v799 = vpop.f32.mrb[0].mxu0
        %v800 = vadd.f32 0.0, %v799
        %v801 = vpop.f32.mrb[0].mxu0
        %802 = vmatprep.mubr.bf16.mxu0 %v615
        %803 = vmatmul.mubr.bf16.gmra.mrb[0].mxu0 %v614
        %v804 = vpop.f32.mrb[0].mxu0
        %v805 = vadd.f32 0.0, %v804
        %v806 = vpop.f32.mrb[0].mxu0
        %v807 = vpop.f32.mrb[0].mxu0
        %v808 = vadd.f32 0.0, %v807
        %v809 = vpop.f32.mrb[0].mxu0
        %810 = vmatprep.mubr.bf16.mxu0 %v617
        %811 = vmatmul.mubr.bf16.gmra.mrb[0].mxu0 %v616
        %v812 = vpop.f32.mrb[0].mxu0
        %v813 = vadd.f32 0.0, %v812
        %v814 = vpop.f32.mrb[0].mxu0
        %v815 = vpop.f32.mrb[0].mxu0
        %v816 = vadd.f32 0.0, %v815
        %v817 = vpop.f32.mrb[0].mxu0
        %818 = vmatprep.mubr.bf16.mxu0 %v619
        %819 = vmatmul.mubr.bf16.gmra.mrb[0].mxu0 %v618
        %v820 = vpop.f32.mrb[0].mxu0
        %v821 = vadd.f32 0.0, %v820
        %v822 = vpop.f32.mrb[0].mxu0
        %v823 = vpop.f32.mrb[0].mxu0
        %v824 = vadd.f32 0.0, %v823
        %v825 = vpop.f32.mrb[0].mxu0
        %826 = vmatprep.mubr.bf16.mxu0 %v621
        %827 = vmatmul.mubr.bf16.gmra.mrb[0].mxu0 %v620
        %v828 = vpop.f32.mrb[0].mxu0
        %v829 = vadd.f32 0.0, %v828
        %v830 = vpop.f32.mrb[0].mxu0
        %v831 = vpop.f32.mrb[0].mxu0
        %v832 = vadd.f32 0.0, %v831
        %v833 = vpop.f32.mrb[0].mxu0
        %834 = vmatprep.mubr.bf16.mxu0 %v623
        %835 = vmatmul.mubr.bf16.gmra.mrb[0].mxu0 %v622
        %v836 = vpop.f32.mrb[0].mxu0
        %v837 = vadd.f32 0.0, %v836
        %v838 = vpop.f32.mrb[0].mxu0
        %v839 = vpop.f32.mrb[0].mxu0
        %v840 = vadd.f32 0.0, %v839
        %v841 = vpop.f32.mrb[0].mxu0
        %842 = vmatprep.mubr.bf16.mxu0 %v625
        %843 = vmatmul.mubr.bf16.gmra.mrb[0].mxu0 %v624
        %v844 = vpop.f32.mrb[0].mxu0
        %v845 = vadd.f32 0.0, %v844
        %v846 = vpop.f32.mrb[0].mxu0
        %v847 = vpop.f32.mrb[0].mxu0
        %v848 = vadd.f32 0.0, %v847
        %v849 = vpop.f32.mrb[0].mxu0
        %850 = vdwg.mxu0
        %v851 = vld [vmem:[%s4] sm:$0xf]
        %v852 = vld [vmem:[%s4 + $0x10] sm:$0xf]
        %v853 = vld [vmem:[%s4 + $0x20] sm:$0xf]
        %v854 = vld [vmem:[%s4 + $0x30] sm:$0xf]
        %v855 = vld [vmem:[%s4 + $0x40] sm:$0xf]
        %v856 = vld [vmem:[%s4 + $0x50] sm:$0xf]
        %v857 = vld [vmem:[%s4 + $0x60] sm:$0xf]
        %v858 = vld [vmem:[%s4 + $0x70] sm:$0xf]
        %v859 = vld [vmem:[%s4 + $0x80] sm:$0xf]
        %v860 = vld [vmem:[%s4 + $0x90] sm:$0xf]
        %v861 = vld [vmem:[%s4 + $0xa0] sm:$0xf]
        %v862 = vld [vmem:[%s4 + $0xb0] sm:$0xf]
        %v863 = vld [vmem:[%s4 + $0xc0] sm:$0xf]
        %v864 = vld [vmem:[%s4 + $0xd0] sm:$0xf]
        %v865 = vld [vmem:[%s4 + $0xe0] sm:$0xf]
        %v866 = vld [vmem:[%s4 + $0xf0] sm:$0xf]
        %v867 = vld [vmem:[%s4 + $0x100] sm:$0xf]
        %v868 = vld [vmem:[%s4 + $0x110] sm:$0xf]
        %v869 = vld [vmem:[%s4 + $0x120] sm:$0xf]
        %v870 = vld [vmem:[%s4 + $0x130] sm:$0xf]
        %v871 = vld [vmem:[%s4 + $0x140] sm:$0xf]
        %v872 = vld [vmem:[%s4 + $0x150] sm:$0xf]
        %v873 = vld [vmem:[%s4 + $0x160] sm:$0xf]
        %v874 = vld [vmem:[%s4 + $0x170] sm:$0xf]
        %v875 = vld [vmem:[%s4 + $0x180] sm:$0xf]
        %v876 = vld [vmem:[%s4 + $0x190] sm:$0xf]
        %v877 = vld [vmem:[%s4 + $0x1a0] sm:$0xf]
        %v878 = vld [vmem:[%s4 + $0x1b0] sm:$0xf]
        %v879 = vld [vmem:[%s4 + $0x1c0] sm:$0xf]
        %v880 = vld [vmem:[%s4 + $0x1d0] sm:$0xf]
        %v881 = vld [vmem:[%s4 + $0x1e0] sm:$0xf]
        %v882 = vld [vmem:[%s4 + $0x1f0] sm:$0xf]
        %v915 = vunpack.c.l.b16 %v851
        %v916 = vunpack.c.l.b16 %v852
        %v917 = vunpack.c.l.b16 %v853
        %v918 = vunpack.c.l.b16 %v854
        %v919 = vunpack.c.l.b16 %v855
        %v920 = vunpack.c.l.b16 %v856
        %v921 = vunpack.c.l.b16 %v857
        %v922 = vunpack.c.l.b16 %v858
        %v923 = vunpack.c.l.b16 %v859
        %v924 = vunpack.c.l.b16 %v860
        %v925 = vunpack.c.l.b16 %v861
        %v926 = vunpack.c.l.b16 %v862
        %v927 = vunpack.c.l.b16 %v863
        %v928 = vunpack.c.l.b16 %v864
        %v929 = vunpack.c.l.b16 %v865
        %v930 = vunpack.c.l.b16 %v866
        %v931 = vunpack.c.l.b16 %v867
        %v932 = vunpack.c.l.b16 %v868
        %v933 = vunpack.c.l.b16 %v869
        %v934 = vunpack.c.l.b16 %v870
        %v935 = vunpack.c.l.b16 %v871
        %v936 = vunpack.c.l.b16 %v872
        %v937 = vunpack.c.l.b16 %v873
        %v938 = vunpack.c.l.b16 %v874
        %v939 = vunpack.c.l.b16 %v875
        %v940 = vunpack.c.l.b16 %v876
        %v941 = vunpack.c.l.b16 %v877
        %v942 = vunpack.c.l.b16 %v878
        %v943 = vunpack.c.l.b16 %v879
        %v944 = vunpack.c.l.b16 %v880
        %v945 = vunpack.c.l.b16 %v881
        %v946 = vunpack.c.l.b16 %v882
        %v947 = vpack.c.b16 %v916, %v915
        %v948 = vpack.c.b16 %v918, %v917
        %v949 = vpack.c.b16 %v920, %v919
        %v950 = vpack.c.b16 %v922, %v921
        %v951 = vpack.c.b16 %v924, %v923
        %v952 = vpack.c.b16 %v926, %v925
        %v953 = vpack.c.b16 %v928, %v927
        %v954 = vpack.c.b16 %v930, %v929
        %v955 = vpack.c.b16 %v932, %v931
        %v956 = vpack.c.b16 %v934, %v933
        %v957 = vpack.c.b16 %v936, %v935
        %v958 = vpack.c.b16 %v938, %v937
        %v959 = vpack.c.b16 %v940, %v939
        %v960 = vpack.c.b16 %v942, %v941
        %v961 = vpack.c.b16 %v944, %v943
        %v962 = vpack.c.b16 %v946, %v945
        %979 = vmatprep.subr.bf16.mxu0 0
        %980 = vmatpush1.bf16.msra.mxu0 %v947
        %981 = vmatprep.subr.bf16.mxu0 0
        %982 = vmatpush1.bf16.msra.mxu0 %v948
        %983 = vmatprep.subr.bf16.mxu0 0
        %984 = vmatpush1.bf16.msra.mxu0 %v949
        %985 = vmatprep.subr.bf16.mxu0 0
        %986 = vmatpush1.bf16.msra.mxu0 %v950
        %987 = vmatprep.subr.bf16.mxu0 0
        %988 = vmatpush1.bf16.msra.mxu0 %v951
        %989 = vmatprep.subr.bf16.mxu0 0
        %990 = vmatpush1.bf16.msra.mxu0 %v952
        %991 = vmatprep.subr.bf16.mxu0 0
        %992 = vmatpush1.bf16.msra.mxu0 %v953
        %993 = vmatprep.subr.bf16.mxu0 0
        %994 = vmatpush1.bf16.msra.mxu0 %v954
        %995 = vmatprep.subr.bf16.mxu0 0
        %996 = vmatpush1.bf16.msra.mxu0 %v955
        %997 = vmatprep.subr.bf16.mxu0 0
        %998 = vmatpush1.bf16.msra.mxu0 %v956
        %999 = vmatprep.subr.bf16.mxu0 0
        %1000 = vmatpush1.bf16.msra.mxu0 %v957
        %1001 = vmatprep.subr.bf16.mxu0 0
        %1002 = vmatpush1.bf16.msra.mxu0 %v958
        %1003 = vmatprep.subr.bf16.mxu0 0
        %1004 = vmatpush1.bf16.msra.mxu0 %v959
        %1005 = vmatprep.subr.bf16.mxu0 0
        %1006 = vmatpush1.bf16.msra.mxu0 %v960
        %1007 = vmatprep.subr.bf16.mxu0 0
        %1008 = vmatpush1.bf16.msra.mxu0 %v961
        %1009 = vmatprep.subr.bf16.mxu0 0
        %1010 = vmatpush1.bf16.msra.mxu0 %v962
        %1011 = vmatprep.mubr.bf16.mxu0 %v611
        %1012 = vmatmul.mubr.bf16.gmra.mrb[0].mxu0 %v610
        %v1013 = vpop.f32.mrb[0].mxu0
        %v1014 = vadd.f32 0.0, %v1013
        %v1015 = vpop.f32.mrb[0].mxu0
        %v1016 = vpop.f32.mrb[0].mxu0
        %v1017 = vadd.f32 0.0, %v1016
        %v1018 = vpop.f32.mrb[0].mxu0
        %1019 = vmatprep.mubr.bf16.mxu0 %v613
        %1020 = vmatmul.mubr.bf16.gmra.mrb[0].mxu0 %v612
        %v1021 = vpop.f32.mrb[0].mxu0
        %v1022 = vadd.f32 0.0, %v1021
        %v1023 = vpop.f32.mrb[0].mxu0
        %v1024 = vpop.f32.mrb[0].mxu0
        %v1025 = vadd.f32 0.0, %v1024
        %v1026 = vpop.f32.mrb[0].mxu0
        %1027 = vmatprep.mubr.bf16.mxu0 %v615
        %1028 = vmatmul.mubr.bf16.gmra.mrb[0].mxu0 %v614
        %v1029 = vpop.f32.mrb[0].mxu0
        %v1030 = vadd.f32 0.0, %v1029
        %v1031 = vpop.f32.mrb[0].mxu0
        %v1032 = vpop.f32.mrb[0].mxu0
        %v1033 = vadd.f32 0.0, %v1032
        %v1034 = vpop.f32.mrb[0].mxu0
        %1035 = vmatprep.mubr.bf16.mxu0 %v617
        %1036 = vmatmul.mubr.bf16.gmra.mrb[0].mxu0 %v616
        %v1037 = vpop.f32.mrb[0].mxu0
        %v1038 = vadd.f32 0.0, %v1037
        %v1039 = vpop.f32.mrb[0].mxu0
        %v1040 = vpop.f32.mrb[0].mxu0
        %v1041 = vadd.f32 0.0, %v1040
        %v1042 = vpop.f32.mrb[0].mxu0
        %1043 = vmatprep.mubr.bf16.mxu0 %v619
        %1044 = vmatmul.mubr.bf16.gmra.mrb[0].mxu0 %v618
        %v1045 = vpop.f32.mrb[0].mxu0
        %v1046 = vadd.f32 0.0, %v1045
        %v1047 = vpop.f32.mrb[0].mxu0
        %v1048 = vpop.f32.mrb[0].mxu0
        %v1049 = vadd.f32 0.0, %v1048
        %v1050 = vpop.f32.mrb[0].mxu0
        %1051 = vmatprep.mubr.bf16.mxu0 %v621
        %1052 = vmatmul.mubr.bf16.gmra.mrb[0].mxu0 %v620
        %v1053 = vpop.f32.mrb[0].mxu0
        %v1054 = vadd.f32 0.0, %v1053
        %v1055 = vpop.f32.mrb[0].mxu0
        %v1056 = vpop.f32.mrb[0].mxu0
        %v1057 = vadd.f32 0.0, %v1056
        %v1058 = vpop.f32.mrb[0].mxu0
        %1059 = vmatprep.mubr.bf16.mxu0 %v623
        %1060 = vmatmul.mubr.bf16.gmra.mrb[0].mxu0 %v622
        %v1061 = vpop.f32.mrb[0].mxu0
        %v1062 = vadd.f32 0.0, %v1061
        %v1063 = vpop.f32.mrb[0].mxu0
        %v1064 = vpop.f32.mrb[0].mxu0
        %v1065 = vadd.f32 0.0, %v1064
        %v1066 = vpop.f32.mrb[0].mxu0
        %1067 = vmatprep.mubr.bf16.mxu0 %v625
        %1068 = vmatmul.mubr.bf16.gmra.mrb[0].mxu0 %v624
        %v1069 = vpop.f32.mrb[0].mxu0
        %v1070 = vadd.f32 0.0, %v1069
        %v1071 = vpop.f32.mrb[0].mxu0
        %v1072 = vpop.f32.mrb[0].mxu0
        %v1073 = vadd.f32 0.0, %v1072
        %v1074 = vpop.f32.mrb[0].mxu0
        %1075 = vdwg.mxu0
        %v1076 = vxor.u32 %v789, 2147483648
        %v1077 = vxor.u32 %v792, 2147483648
        %v1078 = vxor.u32 %v797, 2147483648
        %v1079 = vxor.u32 %v800, 2147483648
        %v1080 = vxor.u32 %v805, 2147483648
        %v1081 = vxor.u32 %v808, 2147483648
        %v1082 = vxor.u32 %v813, 2147483648
        %v1083 = vxor.u32 %v816, 2147483648
        %v1084 = vxor.u32 %v821, 2147483648
        %v1085 = vxor.u32 %v824, 2147483648
        %v1086 = vxor.u32 %v829, 2147483648
        %v1087 = vxor.u32 %v832, 2147483648
        %v1088 = vxor.u32 %v837, 2147483648
        %v1089 = vxor.u32 %v840, 2147483648
        %v1090 = vxor.u32 %v845, 2147483648
        %v1091 = vxor.u32 %v848, 2147483648
        %v1092 = vmul.f32 %v1076, 1.442695
        %v1093 = vpow.pop %v1092
        %v1094 = vmul.f32 %v1077, 1.442695
        %v1095 = vpow.pop %v1094
        %v1096 = vmul.f32 %v1078, 1.442695
        %v1097 = vpow.pop %v1096
        %v1098 = vmul.f32 %v1079, 1.442695
        %v1099 = vpow.pop %v1098
        %v1100 = vmul.f32 %v1080, 1.442695
        %v1101 = vpow.pop %v1100
        %v1102 = vmul.f32 %v1081, 1.442695
        %v1103 = vpow.pop %v1102
        %v1104 = vmul.f32 %v1082, 1.442695
        %v1105 = vpow.pop %v1104
        %v1106 = vmul.f32 %v1083, 1.442695
        %v1107 = vpow.pop %v1106
        %v1108 = vmul.f32 %v1084, 1.442695
        %v1109 = vpow.pop %v1108
        %v1110 = vmul.f32 %v1085, 1.442695
        %v1111 = vpow.pop %v1110
        %v1112 = vmul.f32 %v1086, 1.442695
        %v1113 = vpow.pop %v1112
        %v1114 = vmul.f32 %v1087, 1.442695
        %v1115 = vpow.pop %v1114
        %v1116 = vmul.f32 %v1088, 1.442695
        %v1117 = vpow.pop %v1116
        %v1118 = vmul.f32 %v1089, 1.442695
        %v1119 = vpow.pop %v1118
        %v1120 = vmul.f32 %v1090, 1.442695
        %v1121 = vpow.pop %v1120
        %v1122 = vmul.f32 %v1091, 1.442695
        %v1123 = vpow.pop %v1122
        %v1124 = vadd.f32 %v1093, 1.0
        %v1125 = vadd.f32 %v1095, 1.0
        %v1126 = vadd.f32 %v1097, 1.0
        %v1127 = vadd.f32 %v1099, 1.0
        %v1128 = vadd.f32 %v1101, 1.0
        %v1129 = vadd.f32 %v1103, 1.0
        %v1130 = vadd.f32 %v1105, 1.0
        %v1131 = vadd.f32 %v1107, 1.0
        %v1132 = vadd.f32 %v1109, 1.0
        %v1133 = vadd.f32 %v1111, 1.0
        %v1134 = vadd.f32 %v1113, 1.0
        %v1135 = vadd.f32 %v1115, 1.0
        %v1136 = vadd.f32 %v1117, 1.0
        %v1137 = vadd.f32 %v1119, 1.0
        %v1138 = vadd.f32 %v1121, 1.0
        %v1139 = vadd.f32 %v1123, 1.0
        %v1140 = vrcp.pop %v1124
        %v1141 = vmul.f32 1.0, %v1140
        %v1142 = vrcp.pop %v1125
        %v1143 = vmul.f32 1.0, %v1142
        %v1144 = vrcp.pop %v1126
        %v1145 = vmul.f32 1.0, %v1144
        %v1146 = vrcp.pop %v1127
        %v1147 = vmul.f32 1.0, %v1146
        %v1148 = vrcp.pop %v1128
        %v1149 = vmul.f32 1.0, %v1148
        %v1150 = vrcp.pop %v1129
        %v1151 = vmul.f32 1.0, %v1150
        %v1152 = vrcp.pop %v1130
        %v1153 = vmul.f32 1.0, %v1152
        %v1154 = vrcp.pop %v1131
        %v1155 = vmul.f32 1.0, %v1154
        %v1156 = vrcp.pop %v1132
        %v1157 = vmul.f32 1.0, %v1156
        %v1158 = vrcp.pop %v1133
        %v1159 = vmul.f32 1.0, %v1158
        %v1160 = vrcp.pop %v1134
        %v1161 = vmul.f32 1.0, %v1160
        %v1162 = vrcp.pop %v1135
        %v1163 = vmul.f32 1.0, %v1162
        %v1164 = vrcp.pop %v1136
        %v1165 = vmul.f32 1.0, %v1164
        %v1166 = vrcp.pop %v1137
        %v1167 = vmul.f32 1.0, %v1166
        %v1168 = vrcp.pop %v1138
        %v1169 = vmul.f32 1.0, %v1168
        %v1170 = vrcp.pop %v1139
        %v1171 = vmul.f32 1.0, %v1170
        %v1172 = vmul.f32 %v789, %v1141
        %v1173 = vmul.f32 %v792, %v1143
        %v1174 = vmul.f32 %v797, %v1145
        %v1175 = vmul.f32 %v800, %v1147
        %v1176 = vmul.f32 %v805, %v1149
        %v1177 = vmul.f32 %v808, %v1151
        %v1178 = vmul.f32 %v813, %v1153
        %v1179 = vmul.f32 %v816, %v1155
        %v1180 = vmul.f32 %v821, %v1157
        %v1181 = vmul.f32 %v824, %v1159
        %v1182 = vmul.f32 %v829, %v1161
        %v1183 = vmul.f32 %v832, %v1163
        %v1184 = vmul.f32 %v837, %v1165
        %v1185 = vmul.f32 %v840, %v1167
        %v1186 = vmul.f32 %v845, %v1169
        %v1187 = vmul.f32 %v848, %v1171
        %v1188 = vmul.f32 %v1172, %v1014
        %v1189 = vmul.f32 %v1173, %v1017
        %v1190 = vmul.f32 %v1174, %v1022
        %v1191 = vmul.f32 %v1175, %v1025
        %v1192 = vmul.f32 %v1176, %v1030
        %v1193 = vmul.f32 %v1177, %v1033
        %v1194 = vmul.f32 %v1178, %v1038
        %v1195 = vmul.f32 %v1179, %v1041
        %v1196 = vmul.f32 %v1180, %v1046
        %v1197 = vmul.f32 %v1181, %v1049
        %v1198 = vmul.f32 %v1182, %v1054
        %v1199 = vmul.f32 %v1183, %v1057
        %v1200 = vmul.f32 %v1184, %v1062
        %v1201 = vmul.f32 %v1185, %v1065
        %v1202 = vmul.f32 %v1186, %v1070
        %v1203 = vmul.f32 %v1187, %v1073
        %v1204 = vpack.c.bf16 %v1189, %v1188
        %v1205 = vpack.c.bf16 %v1191, %v1190
        %v1206 = vpack.c.bf16 %v1193, %v1192
        %v1207 = vpack.c.bf16 %v1195, %v1194
        %v1208 = vpack.c.bf16 %v1197, %v1196
        %v1209 = vpack.c.bf16 %v1199, %v1198
        %v1210 = vpack.c.bf16 %v1201, %v1200
        %v1211 = vpack.c.bf16 %v1203, %v1202
        %v1212 = vld [vmem:[%s5] sm:$0xff]
        %v1213 = vld [vmem:[%s5 + $0x8] sm:$0xff]
        %v1214 = vld [vmem:[%s5 + $0x10] sm:$0xff]
        %v1215 = vld [vmem:[%s5 + $0x18] sm:$0xff]
        %v1216 = vld [vmem:[%s5 + $0x20] sm:$0xff]
        %v1217 = vld [vmem:[%s5 + $0x28] sm:$0xff]
        %v1218 = vld [vmem:[%s5 + $0x30] sm:$0xff]
        %v1219 = vld [vmem:[%s5 + $0x38] sm:$0xff]
        %v1220 = vld [vmem:[%s5 + $0x40] sm:$0xff]
        %v1221 = vld [vmem:[%s5 + $0x48] sm:$0xff]
        %v1222 = vld [vmem:[%s5 + $0x50] sm:$0xff]
        %v1223 = vld [vmem:[%s5 + $0x58] sm:$0xff]
        %v1224 = vld [vmem:[%s5 + $0x60] sm:$0xff]
        %v1225 = vld [vmem:[%s5 + $0x68] sm:$0xff]
        %v1226 = vld [vmem:[%s5 + $0x70] sm:$0xff]
        %v1227 = vld [vmem:[%s5 + $0x78] sm:$0xff]
        %v1228 = vld [vmem:[%s3 + $0x4] sm:$0xf]
        %v1229 = vld [vmem:[%s3 + $0x14] sm:$0xf]
        %v1230 = vld [vmem:[%s3 + $0x24] sm:$0xf]
        %v1231 = vld [vmem:[%s3 + $0x34] sm:$0xf]
        %v1232 = vld [vmem:[%s3 + $0x44] sm:$0xf]
        %v1233 = vld [vmem:[%s3 + $0x54] sm:$0xf]
        %v1234 = vld [vmem:[%s3 + $0x64] sm:$0xf]
        %v1235 = vld [vmem:[%s3 + $0x74] sm:$0xf]
        %v1236 = vld [vmem:[%s3 + $0x84] sm:$0xf]
        %v1237 = vld [vmem:[%s3 + $0x94] sm:$0xf]
        %v1238 = vld [vmem:[%s3 + $0xa4] sm:$0xf]
        %v1239 = vld [vmem:[%s3 + $0xb4] sm:$0xf]
        %v1240 = vld [vmem:[%s3 + $0xc4] sm:$0xf]
        %v1241 = vld [vmem:[%s3 + $0xd4] sm:$0xf]
        %v1242 = vld [vmem:[%s3 + $0xe4] sm:$0xf]
        %v1243 = vld [vmem:[%s3 + $0xf4] sm:$0xf]
        %v1244 = vld [vmem:[%s3 + $0x104] sm:$0xf]
        %v1245 = vld [vmem:[%s3 + $0x114] sm:$0xf]
        %v1246 = vld [vmem:[%s3 + $0x124] sm:$0xf]
        %v1247 = vld [vmem:[%s3 + $0x134] sm:$0xf]
        %v1248 = vld [vmem:[%s3 + $0x144] sm:$0xf]
        %v1249 = vld [vmem:[%s3 + $0x154] sm:$0xf]
        %v1250 = vld [vmem:[%s3 + $0x164] sm:$0xf]
        %v1251 = vld [vmem:[%s3 + $0x174] sm:$0xf]
        %v1252 = vld [vmem:[%s3 + $0x184] sm:$0xf]
        %v1253 = vld [vmem:[%s3 + $0x194] sm:$0xf]
        %v1254 = vld [vmem:[%s3 + $0x1a4] sm:$0xf]
        %v1255 = vld [vmem:[%s3 + $0x1b4] sm:$0xf]
        %v1256 = vld [vmem:[%s3 + $0x1c4] sm:$0xf]
        %v1257 = vld [vmem:[%s3 + $0x1d4] sm:$0xf]
        %v1258 = vld [vmem:[%s3 + $0x1e4] sm:$0xf]
        %v1259 = vld [vmem:[%s3 + $0x1f4] sm:$0xf]
        %v1292 = vunpack.c.l.b16 %v1228
        %v1293 = vunpack.c.l.b16 %v1229
        %v1294 = vunpack.c.l.b16 %v1230
        %v1295 = vunpack.c.l.b16 %v1231
        %v1296 = vunpack.c.l.b16 %v1232
        %v1297 = vunpack.c.l.b16 %v1233
        %v1298 = vunpack.c.l.b16 %v1234
        %v1299 = vunpack.c.l.b16 %v1235
        %v1300 = vunpack.c.l.b16 %v1236
        %v1301 = vunpack.c.l.b16 %v1237
        %v1302 = vunpack.c.l.b16 %v1238
        %v1303 = vunpack.c.l.b16 %v1239
        %v1304 = vunpack.c.l.b16 %v1240
        %v1305 = vunpack.c.l.b16 %v1241
        %v1306 = vunpack.c.l.b16 %v1242
        %v1307 = vunpack.c.l.b16 %v1243
        %v1308 = vunpack.c.l.b16 %v1244
        %v1309 = vunpack.c.l.b16 %v1245
        %v1310 = vunpack.c.l.b16 %v1246
        %v1311 = vunpack.c.l.b16 %v1247
        %v1312 = vunpack.c.l.b16 %v1248
        %v1313 = vunpack.c.l.b16 %v1249
        %v1314 = vunpack.c.l.b16 %v1250
        %v1315 = vunpack.c.l.b16 %v1251
        %v1316 = vunpack.c.l.b16 %v1252
        %v1317 = vunpack.c.l.b16 %v1253
        %v1318 = vunpack.c.l.b16 %v1254
        %v1319 = vunpack.c.l.b16 %v1255
        %v1320 = vunpack.c.l.b16 %v1256
        %v1321 = vunpack.c.l.b16 %v1257
        %v1322 = vunpack.c.l.b16 %v1258
        %v1323 = vunpack.c.l.b16 %v1259
        %v1324 = vpack.c.b16 %v1293, %v1292
        %v1325 = vpack.c.b16 %v1295, %v1294
        %v1326 = vpack.c.b16 %v1297, %v1296
        %v1327 = vpack.c.b16 %v1299, %v1298
        %v1328 = vpack.c.b16 %v1301, %v1300
        %v1329 = vpack.c.b16 %v1303, %v1302
        %v1330 = vpack.c.b16 %v1305, %v1304
        %v1331 = vpack.c.b16 %v1307, %v1306
        %v1332 = vpack.c.b16 %v1309, %v1308
        %v1333 = vpack.c.b16 %v1311, %v1310
        %v1334 = vpack.c.b16 %v1313, %v1312
        %v1335 = vpack.c.b16 %v1315, %v1314
        %v1336 = vpack.c.b16 %v1317, %v1316
        %v1337 = vpack.c.b16 %v1319, %v1318
        %v1338 = vpack.c.b16 %v1321, %v1320
        %v1339 = vpack.c.b16 %v1323, %v1322
        %1356 = vmatprep.subr.bf16.mxu0 0
        %1357 = vmatpush1.bf16.msra.mxu0 %v1324
        %1358 = vmatprep.subr.bf16.mxu0 0
        %1359 = vmatpush1.bf16.msra.mxu0 %v1325
        %1360 = vmatprep.subr.bf16.mxu0 0
        %1361 = vmatpush1.bf16.msra.mxu0 %v1326
        %1362 = vmatprep.subr.bf16.mxu0 0
        %1363 = vmatpush1.bf16.msra.mxu0 %v1327
        %1364 = vmatprep.subr.bf16.mxu0 0
        %1365 = vmatpush1.bf16.msra.mxu0 %v1328
        %1366 = vmatprep.subr.bf16.mxu0 0
        %1367 = vmatpush1.bf16.msra.mxu0 %v1329
        %1368 = vmatprep.subr.bf16.mxu0 0
        %1369 = vmatpush1.bf16.msra.mxu0 %v1330
        %1370 = vmatprep.subr.bf16.mxu0 0
        %1371 = vmatpush1.bf16.msra.mxu0 %v1331
        %1372 = vmatprep.subr.bf16.mxu0 0
        %1373 = vmatpush1.bf16.msra.mxu0 %v1332
        %1374 = vmatprep.subr.bf16.mxu0 0
        %1375 = vmatpush1.bf16.msra.mxu0 %v1333
        %1376 = vmatprep.subr.bf16.mxu0 0
        %1377 = vmatpush1.bf16.msra.mxu0 %v1334
        %1378 = vmatprep.subr.bf16.mxu0 0
        %1379 = vmatpush1.bf16.msra.mxu0 %v1335
        %1380 = vmatprep.subr.bf16.mxu0 0
        %1381 = vmatpush1.bf16.msra.mxu0 %v1336
        %1382 = vmatprep.subr.bf16.mxu0 0
        %1383 = vmatpush1.bf16.msra.mxu0 %v1337
        %1384 = vmatprep.subr.bf16.mxu0 0
        %1385 = vmatpush1.bf16.msra.mxu0 %v1338
        %1386 = vmatprep.subr.bf16.mxu0 0
        %1387 = vmatpush1.bf16.msra.mxu0 %v1339
        %1388 = vmatprep.mubr.bf16.mxu0 %v611
        %1389 = vmatmul.mubr.bf16.gmra.mrb[0].mxu0 %v610
        %v1390 = vpop.f32.mrb[0].mxu0
        %v1391 = vadd.f32 0.0, %v1390
        %v1392 = vpop.f32.mrb[0].mxu0
        %v1393 = vpop.f32.mrb[0].mxu0
        %v1394 = vadd.f32 0.0, %v1393
        %v1395 = vpop.f32.mrb[0].mxu0
        %1396 = vmatprep.mubr.bf16.mxu0 %v613
        %1397 = vmatmul.mubr.bf16.gmra.mrb[0].mxu0 %v612
        %v1398 = vpop.f32.mrb[0].mxu0
        %v1399 = vadd.f32 0.0, %v1398
        %v1400 = vpop.f32.mrb[0].mxu0
        %v1401 = vpop.f32.mrb[0].mxu0
        %v1402 = vadd.f32 0.0, %v1401
        %v1403 = vpop.f32.mrb[0].mxu0
        %1404 = vmatprep.mubr.bf16.mxu0 %v615
        %1405 = vmatmul.mubr.bf16.gmra.mrb[0].mxu0 %v614
        %v1406 = vpop.f32.mrb[0].mxu0
        %v1407 = vadd.f32 0.0, %v1406
        %v1408 = vpop.f32.mrb[0].mxu0
        %v1409 = vpop.f32.mrb[0].mxu0
        %v1410 = vadd.f32 0.0, %v1409
        %v1411 = vpop.f32.mrb[0].mxu0
        %1412 = vmatprep.mubr.bf16.mxu0 %v617
        %1413 = vmatmul.mubr.bf16.gmra.mrb[0].mxu0 %v616
        %v1414 = vpop.f32.mrb[0].mxu0
        %v1415 = vadd.f32 0.0, %v1414
        %v1416 = vpop.f32.mrb[0].mxu0
        %v1417 = vpop.f32.mrb[0].mxu0
        %v1418 = vadd.f32 0.0, %v1417
        %v1419 = vpop.f32.mrb[0].mxu0
        %1420 = vmatprep.mubr.bf16.mxu0 %v619
        %1421 = vmatmul.mubr.bf16.gmra.mrb[0].mxu0 %v618
        %v1422 = vpop.f32.mrb[0].mxu0
        %v1423 = vadd.f32 0.0, %v1422
        %v1424 = vpop.f32.mrb[0].mxu0
        %v1425 = vpop.f32.mrb[0].mxu0
        %v1426 = vadd.f32 0.0, %v1425
        %v1427 = vpop.f32.mrb[0].mxu0
        %1428 = vmatprep.mubr.bf16.mxu0 %v621
        %1429 = vmatmul.mubr.bf16.gmra.mrb[0].mxu0 %v620
        %v1430 = vpop.f32.mrb[0].mxu0
        %v1431 = vadd.f32 0.0, %v1430
        %v1432 = vpop.f32.mrb[0].mxu0
        %v1433 = vpop.f32.mrb[0].mxu0
        %v1434 = vadd.f32 0.0, %v1433
        %v1435 = vpop.f32.mrb[0].mxu0
        %1436 = vmatprep.mubr.bf16.mxu0 %v623
        %1437 = vmatmul.mubr.bf16.gmra.mrb[0].mxu0 %v622
        %v1438 = vpop.f32.mrb[0].mxu0
        %v1439 = vadd.f32 0.0, %v1438
        %v1440 = vpop.f32.mrb[0].mxu0
        %v1441 = vpop.f32.mrb[0].mxu0
        %v1442 = vadd.f32 0.0, %v1441
        %v1443 = vpop.f32.mrb[0].mxu0
        %1444 = vmatprep.mubr.bf16.mxu0 %v625
        %1445 = vmatmul.mubr.bf16.gmra.mrb[0].mxu0 %v624
        %v1446 = vpop.f32.mrb[0].mxu0
        %v1447 = vadd.f32 0.0, %v1446
        %v1448 = vpop.f32.mrb[0].mxu0
        %v1449 = vpop.f32.mrb[0].mxu0
        %v1450 = vadd.f32 0.0, %v1449
        %v1451 = vpop.f32.mrb[0].mxu0
        %1452 = vdwg.mxu0
        %v1453 = vld [vmem:[%s4 + $0x4] sm:$0xf]
        %v1454 = vld [vmem:[%s4 + $0x14] sm:$0xf]
        %v1455 = vld [vmem:[%s4 + $0x24] sm:$0xf]
        %v1456 = vld [vmem:[%s4 + $0x34] sm:$0xf]
        %v1457 = vld [vmem:[%s4 + $0x44] sm:$0xf]
        %v1458 = vld [vmem:[%s4 + $0x54] sm:$0xf]
        %v1459 = vld [vmem:[%s4 + $0x64] sm:$0xf]
        %v1460 = vld [vmem:[%s4 + $0x74] sm:$0xf]
        %v1461 = vld [vmem:[%s4 + $0x84] sm:$0xf]
        %v1462 = vld [vmem:[%s4 + $0x94] sm:$0xf]
        %v1463 = vld [vmem:[%s4 + $0xa4] sm:$0xf]
        %v1464 = vld [vmem:[%s4 + $0xb4] sm:$0xf]
        %v1465 = vld [vmem:[%s4 + $0xc4] sm:$0xf]
        %v1466 = vld [vmem:[%s4 + $0xd4] sm:$0xf]
        %v1467 = vld [vmem:[%s4 + $0xe4] sm:$0xf]
        %v1468 = vld [vmem:[%s4 + $0xf4] sm:$0xf]
        %v1469 = vld [vmem:[%s4 + $0x104] sm:$0xf]
        %v1470 = vld [vmem:[%s4 + $0x114] sm:$0xf]
        %v1471 = vld [vmem:[%s4 + $0x124] sm:$0xf]
        %v1472 = vld [vmem:[%s4 + $0x134] sm:$0xf]
        %v1473 = vld [vmem:[%s4 + $0x144] sm:$0xf]
        %v1474 = vld [vmem:[%s4 + $0x154] sm:$0xf]
        %v1475 = vld [vmem:[%s4 + $0x164] sm:$0xf]
        %v1476 = vld [vmem:[%s4 + $0x174] sm:$0xf]
        %v1477 = vld [vmem:[%s4 + $0x184] sm:$0xf]
        %v1478 = vld [vmem:[%s4 + $0x194] sm:$0xf]
        %v1479 = vld [vmem:[%s4 + $0x1a4] sm:$0xf]
        %v1480 = vld [vmem:[%s4 + $0x1b4] sm:$0xf]
        %v1481 = vld [vmem:[%s4 + $0x1c4] sm:$0xf]
        %v1482 = vld [vmem:[%s4 + $0x1d4] sm:$0xf]
        %v1483 = vld [vmem:[%s4 + $0x1e4] sm:$0xf]
        %v1484 = vld [vmem:[%s4 + $0x1f4] sm:$0xf]
        %v1517 = vunpack.c.l.b16 %v1453
        %v1518 = vunpack.c.l.b16 %v1454
        %v1519 = vunpack.c.l.b16 %v1455
        %v1520 = vunpack.c.l.b16 %v1456
        %v1521 = vunpack.c.l.b16 %v1457
        %v1522 = vunpack.c.l.b16 %v1458
        %v1523 = vunpack.c.l.b16 %v1459
        %v1524 = vunpack.c.l.b16 %v1460
        %v1525 = vunpack.c.l.b16 %v1461
        %v1526 = vunpack.c.l.b16 %v1462
        %v1527 = vunpack.c.l.b16 %v1463
        %v1528 = vunpack.c.l.b16 %v1464
        %v1529 = vunpack.c.l.b16 %v1465
        %v1530 = vunpack.c.l.b16 %v1466
        %v1531 = vunpack.c.l.b16 %v1467
        %v1532 = vunpack.c.l.b16 %v1468
        %v1533 = vunpack.c.l.b16 %v1469
        %v1534 = vunpack.c.l.b16 %v1470
        %v1535 = vunpack.c.l.b16 %v1471
        %v1536 = vunpack.c.l.b16 %v1472
        %v1537 = vunpack.c.l.b16 %v1473
        %v1538 = vunpack.c.l.b16 %v1474
        %v1539 = vunpack.c.l.b16 %v1475
        %v1540 = vunpack.c.l.b16 %v1476
        %v1541 = vunpack.c.l.b16 %v1477
        %v1542 = vunpack.c.l.b16 %v1478
        %v1543 = vunpack.c.l.b16 %v1479
        %v1544 = vunpack.c.l.b16 %v1480
        %v1545 = vunpack.c.l.b16 %v1481
        %v1546 = vunpack.c.l.b16 %v1482
        %v1547 = vunpack.c.l.b16 %v1483
        %v1548 = vunpack.c.l.b16 %v1484
        %v1549 = vpack.c.b16 %v1518, %v1517
        %v1550 = vpack.c.b16 %v1520, %v1519
        %v1551 = vpack.c.b16 %v1522, %v1521
        %v1552 = vpack.c.b16 %v1524, %v1523
        %v1553 = vpack.c.b16 %v1526, %v1525
        %v1554 = vpack.c.b16 %v1528, %v1527
        %v1555 = vpack.c.b16 %v1530, %v1529
        %v1556 = vpack.c.b16 %v1532, %v1531
        %v1557 = vpack.c.b16 %v1534, %v1533
        %v1558 = vpack.c.b16 %v1536, %v1535
        %v1559 = vpack.c.b16 %v1538, %v1537
        %v1560 = vpack.c.b16 %v1540, %v1539
        %v1561 = vpack.c.b16 %v1542, %v1541
        %v1562 = vpack.c.b16 %v1544, %v1543
        %v1563 = vpack.c.b16 %v1546, %v1545
        %v1564 = vpack.c.b16 %v1548, %v1547
        %1581 = vmatprep.subr.bf16.mxu0 0
        %1582 = vmatpush1.bf16.msra.mxu0 %v1549
        %1583 = vmatprep.subr.bf16.mxu0 0
        %1584 = vmatpush1.bf16.msra.mxu0 %v1550
        %1585 = vmatprep.subr.bf16.mxu0 0
        %1586 = vmatpush1.bf16.msra.mxu0 %v1551
        %1587 = vmatprep.subr.bf16.mxu0 0
        %1588 = vmatpush1.bf16.msra.mxu0 %v1552
        %1589 = vmatprep.subr.bf16.mxu0 0
        %1590 = vmatpush1.bf16.msra.mxu0 %v1553
        %1591 = vmatprep.subr.bf16.mxu0 0
        %1592 = vmatpush1.bf16.msra.mxu0 %v1554
        %1593 = vmatprep.subr.bf16.mxu0 0
        %1594 = vmatpush1.bf16.msra.mxu0 %v1555
        %1595 = vmatprep.subr.bf16.mxu0 0
        %1596 = vmatpush1.bf16.msra.mxu0 %v1556
        %1597 = vmatprep.subr.bf16.mxu0 0
        %1598 = vmatpush1.bf16.msra.mxu0 %v1557
        %1599 = vmatprep.subr.bf16.mxu0 0
        %1600 = vmatpush1.bf16.msra.mxu0 %v1558
        %1601 = vmatprep.subr.bf16.mxu0 0
        %1602 = vmatpush1.bf16.msra.mxu0 %v1559
        %1603 = vmatprep.subr.bf16.mxu0 0
        %1604 = vmatpush1.bf16.msra.mxu0 %v1560
        %1605 = vmatprep.subr.bf16.mxu0 0
        %1606 = vmatpush1.bf16.msra.mxu0 %v1561
        %1607 = vmatprep.subr.bf16.mxu0 0
        %1608 = vmatpush1.bf16.msra.mxu0 %v1562
        %1609 = vmatprep.subr.bf16.mxu0 0
        %1610 = vmatpush1.bf16.msra.mxu0 %v1563
        %1611 = vmatprep.subr.bf16.mxu0 0
        %1612 = vmatpush1.bf16.msra.mxu0 %v1564
        %1613 = vmatprep.mubr.bf16.mxu0 %v611
        %1614 = vmatmul.mubr.bf16.gmra.mrb[0].mxu0 %v610
        %v1615 = vpop.f32.mrb[0].mxu0
        %v1616 = vadd.f32 0.0, %v1615
        %v1617 = vpop.f32.mrb[0].mxu0
        %v1618 = vpop.f32.mrb[0].mxu0
        %v1619 = vadd.f32 0.0, %v1618
        %v1620 = vpop.f32.mrb[0].mxu0
        %1621 = vmatprep.mubr.bf16.mxu0 %v613
        %1622 = vmatmul.mubr.bf16.gmra.mrb[0].mxu0 %v612
        %v1623 = vpop.f32.mrb[0].mxu0
        %v1624 = vadd.f32 0.0, %v1623
        %v1625 = vpop.f32.mrb[0].mxu0
        %v1626 = vpop.f32.mrb[0].mxu0
        %v1627 = vadd.f32 0.0, %v1626
        %v1628 = vpop.f32.mrb[0].mxu0
        %1629 = vmatprep.mubr.bf16.mxu0 %v615
        %1630 = vmatmul.mubr.bf16.gmra.mrb[0].mxu0 %v614
        %v1631 = vpop.f32.mrb[0].mxu0
        %v1632 = vadd.f32 0.0, %v1631
        %v1633 = vpop.f32.mrb[0].mxu0
        %v1634 = vpop.f32.mrb[0].mxu0
        %v1635 = vadd.f32 0.0, %v1634
        %v1636 = vpop.f32.mrb[0].mxu0
        %1637 = vmatprep.mubr.bf16.mxu0 %v617
        %1638 = vmatmul.mubr.bf16.gmra.mrb[0].mxu0 %v616
        %v1639 = vpop.f32.mrb[0].mxu0
        %v1640 = vadd.f32 0.0, %v1639
        %v1641 = vpop.f32.mrb[0].mxu0
        %v1642 = vpop.f32.mrb[0].mxu0
        %v1643 = vadd.f32 0.0, %v1642
        %v1644 = vpop.f32.mrb[0].mxu0
        %1645 = vmatprep.mubr.bf16.mxu0 %v619
        %1646 = vmatmul.mubr.bf16.gmra.mrb[0].mxu0 %v618
        %v1647 = vpop.f32.mrb[0].mxu0
        %v1648 = vadd.f32 0.0, %v1647
        %v1649 = vpop.f32.mrb[0].mxu0
        %v1650 = vpop.f32.mrb[0].mxu0
        %v1651 = vadd.f32 0.0, %v1650
        %v1652 = vpop.f32.mrb[0].mxu0
        %1653 = vmatprep.mubr.bf16.mxu0 %v621
        %1654 = vmatmul.mubr.bf16.gmra.mrb[0].mxu0 %v620
        %v1655 = vpop.f32.mrb[0].mxu0
        %v1656 = vadd.f32 0.0, %v1655
        %v1657 = vpop.f32.mrb[0].mxu0
        %v1658 = vpop.f32.mrb[0].mxu0
        %v1659 = vadd.f32 0.0, %v1658
        %v1660 = vpop.f32.mrb[0].mxu0
        %1661 = vmatprep.mubr.bf16.mxu0 %v623
        %1662 = vmatmul.mubr.bf16.gmra.mrb[0].mxu0 %v622
        %v1663 = vpop.f32.mrb[0].mxu0
        %v1664 = vadd.f32 0.0, %v1663
        %v1665 = vpop.f32.mrb[0].mxu0
        %v1666 = vpop.f32.mrb[0].mxu0
        %v1667 = vadd.f32 0.0, %v1666
        %v1668 = vpop.f32.mrb[0].mxu0
        %1669 = vmatprep.mubr.bf16.mxu0 %v625
        %1670 = vmatmul.mubr.bf16.gmra.mrb[0].mxu0 %v624
        %v1671 = vpop.f32.mrb[0].mxu0
        %v1672 = vadd.f32 0.0, %v1671
        %v1673 = vpop.f32.mrb[0].mxu0
        %v1674 = vpop.f32.mrb[0].mxu0
        %v1675 = vadd.f32 0.0, %v1674
        %v1676 = vpop.f32.mrb[0].mxu0
        %1677 = vdwg.mxu0
        %v1678 = vxor.u32 %v1391, 2147483648
        %v1679 = vxor.u32 %v1394, 2147483648
        %v1680 = vxor.u32 %v1399, 2147483648
        %v1681 = vxor.u32 %v1402, 2147483648
        %v1682 = vxor.u32 %v1407, 2147483648
        %v1683 = vxor.u32 %v1410, 2147483648
        %v1684 = vxor.u32 %v1415, 2147483648
        %v1685 = vxor.u32 %v1418, 2147483648
        %v1686 = vxor.u32 %v1423, 2147483648
        %v1687 = vxor.u32 %v1426, 2147483648
        %v1688 = vxor.u32 %v1431, 2147483648
        %v1689 = vxor.u32 %v1434, 2147483648
        %v1690 = vxor.u32 %v1439, 2147483648
        %v1691 = vxor.u32 %v1442, 2147483648
        %v1692 = vxor.u32 %v1447, 2147483648
        %v1693 = vxor.u32 %v1450, 2147483648
        %v1694 = vmul.f32 %v1678, 1.442695
        %v1695 = vpow.pop %v1694
        %v1696 = vmul.f32 %v1679, 1.442695
        %v1697 = vpow.pop %v1696
        %v1698 = vmul.f32 %v1680, 1.442695
        %v1699 = vpow.pop %v1698
        %v1700 = vmul.f32 %v1681, 1.442695
        %v1701 = vpow.pop %v1700
        %v1702 = vmul.f32 %v1682, 1.442695
        %v1703 = vpow.pop %v1702
        %v1704 = vmul.f32 %v1683, 1.442695
        %v1705 = vpow.pop %v1704
        %v1706 = vmul.f32 %v1684, 1.442695
        %v1707 = vpow.pop %v1706
        %v1708 = vmul.f32 %v1685, 1.442695
        %v1709 = vpow.pop %v1708
        %v1710 = vmul.f32 %v1686, 1.442695
        %v1711 = vpow.pop %v1710
        %v1712 = vmul.f32 %v1687, 1.442695
        %v1713 = vpow.pop %v1712
        %v1714 = vmul.f32 %v1688, 1.442695
        %v1715 = vpow.pop %v1714
        %v1716 = vmul.f32 %v1689, 1.442695
        %v1717 = vpow.pop %v1716
        %v1718 = vmul.f32 %v1690, 1.442695
        %v1719 = vpow.pop %v1718
        %v1720 = vmul.f32 %v1691, 1.442695
        %v1721 = vpow.pop %v1720
        %v1722 = vmul.f32 %v1692, 1.442695
        %v1723 = vpow.pop %v1722
        %v1724 = vmul.f32 %v1693, 1.442695
        %v1725 = vpow.pop %v1724
        %v1726 = vadd.f32 %v1695, 1.0
        %v1727 = vadd.f32 %v1697, 1.0
        %v1728 = vadd.f32 %v1699, 1.0
        %v1729 = vadd.f32 %v1701, 1.0
        %v1730 = vadd.f32 %v1703, 1.0
        %v1731 = vadd.f32 %v1705, 1.0
        %v1732 = vadd.f32 %v1707, 1.0
        %v1733 = vadd.f32 %v1709, 1.0
        %v1734 = vadd.f32 %v1711, 1.0
        %v1735 = vadd.f32 %v1713, 1.0
        %v1736 = vadd.f32 %v1715, 1.0
        %v1737 = vadd.f32 %v1717, 1.0
        %v1738 = vadd.f32 %v1719, 1.0
        %v1739 = vadd.f32 %v1721, 1.0
        %v1740 = vadd.f32 %v1723, 1.0
        %v1741 = vadd.f32 %v1725, 1.0
        %v1742 = vrcp.pop %v1726
        %v1743 = vmul.f32 1.0, %v1742
        %v1744 = vrcp.pop %v1727
        %v1745 = vmul.f32 1.0, %v1744
        %v1746 = vrcp.pop %v1728
        %v1747 = vmul.f32 1.0, %v1746
        %v1748 = vrcp.pop %v1729
        %v1749 = vmul.f32 1.0, %v1748
        %v1750 = vrcp.pop %v1730
        %v1751 = vmul.f32 1.0, %v1750
        %v1752 = vrcp.pop %v1731
        %v1753 = vmul.f32 1.0, %v1752
        %v1754 = vrcp.pop %v1732
        %v1755 = vmul.f32 1.0, %v1754
        %v1756 = vrcp.pop %v1733
        %v1757 = vmul.f32 1.0, %v1756
        %v1758 = vrcp.pop %v1734
        %v1759 = vmul.f32 1.0, %v1758
        %v1760 = vrcp.pop %v1735
        %v1761 = vmul.f32 1.0, %v1760
        %v1762 = vrcp.pop %v1736
        %v1763 = vmul.f32 1.0, %v1762
        %v1764 = vrcp.pop %v1737
        %v1765 = vmul.f32 1.0, %v1764
        %v1766 = vrcp.pop %v1738
        %v1767 = vmul.f32 1.0, %v1766
        %v1768 = vrcp.pop %v1739
        %v1769 = vmul.f32 1.0, %v1768
        %v1770 = vrcp.pop %v1740
        %v1771 = vmul.f32 1.0, %v1770
        %v1772 = vrcp.pop %v1741
        %v1773 = vmul.f32 1.0, %v1772
        %v1774 = vmul.f32 %v1391, %v1743
        %v1775 = vmul.f32 %v1394, %v1745
        %v1776 = vmul.f32 %v1399, %v1747
        %v1777 = vmul.f32 %v1402, %v1749
        %v1778 = vmul.f32 %v1407, %v1751
        %v1779 = vmul.f32 %v1410, %v1753
        %v1780 = vmul.f32 %v1415, %v1755
        %v1781 = vmul.f32 %v1418, %v1757
        %v1782 = vmul.f32 %v1423, %v1759
        %v1783 = vmul.f32 %v1426, %v1761
        %v1784 = vmul.f32 %v1431, %v1763
        %v1785 = vmul.f32 %v1434, %v1765
        %v1786 = vmul.f32 %v1439, %v1767
        %v1787 = vmul.f32 %v1442, %v1769
        %v1788 = vmul.f32 %v1447, %v1771
        %v1789 = vmul.f32 %v1450, %v1773
        %v1790 = vmul.f32 %v1774, %v1616
        %v1791 = vmul.f32 %v1775, %v1619
        %v1792 = vmul.f32 %v1776, %v1624
        %v1793 = vmul.f32 %v1777, %v1627
        %v1794 = vmul.f32 %v1778, %v1632
        %v1795 = vmul.f32 %v1779, %v1635
        %v1796 = vmul.f32 %v1780, %v1640
        %v1797 = vmul.f32 %v1781, %v1643
        %v1798 = vmul.f32 %v1782, %v1648
        %v1799 = vmul.f32 %v1783, %v1651
        %v1800 = vmul.f32 %v1784, %v1656
        %v1801 = vmul.f32 %v1785, %v1659
        %v1802 = vmul.f32 %v1786, %v1664
        %v1803 = vmul.f32 %v1787, %v1667
        %v1804 = vmul.f32 %v1788, %v1672
        %v1805 = vmul.f32 %v1789, %v1675
        %v1806 = vpack.c.bf16 %v1791, %v1790
        %v1807 = vpack.c.bf16 %v1793, %v1792
        %v1808 = vpack.c.bf16 %v1795, %v1794
        %v1809 = vpack.c.bf16 %v1797, %v1796
        %v1810 = vpack.c.bf16 %v1799, %v1798
        %v1811 = vpack.c.bf16 %v1801, %v1800
        %v1812 = vpack.c.bf16 %v1803, %v1802
        %v1813 = vpack.c.bf16 %v1805, %v1804
        %v1814 = vld [vmem:[%s5 + $0x80] sm:$0xff]
        %v1815 = vld [vmem:[%s5 + $0x88] sm:$0xff]
        %v1816 = vld [vmem:[%s5 + $0x90] sm:$0xff]
        %v1817 = vld [vmem:[%s5 + $0x98] sm:$0xff]
        %v1818 = vld [vmem:[%s5 + $0xa0] sm:$0xff]
        %v1819 = vld [vmem:[%s5 + $0xa8] sm:$0xff]
        %v1820 = vld [vmem:[%s5 + $0xb0] sm:$0xff]
        %v1821 = vld [vmem:[%s5 + $0xb8] sm:$0xff]
        %v1822 = vld [vmem:[%s5 + $0xc0] sm:$0xff]
        %v1823 = vld [vmem:[%s5 + $0xc8] sm:$0xff]
        %v1824 = vld [vmem:[%s5 + $0xd0] sm:$0xff]
        %v1825 = vld [vmem:[%s5 + $0xd8] sm:$0xff]
        %v1826 = vld [vmem:[%s5 + $0xe0] sm:$0xff]
        %v1827 = vld [vmem:[%s5 + $0xe8] sm:$0xff]
        %v1828 = vld [vmem:[%s5 + $0xf0] sm:$0xff]
        %v1829 = vld [vmem:[%s5 + $0xf8] sm:$0xff]
        %v1846 = vunpack.c.l.b16 %v1814
        %v1847 = vunpack.c.h.b16 %v1814
        %v1848 = vunpack.c.l.b16 %v1815
        %v1849 = vunpack.c.h.b16 %v1815
        %v1850 = vunpack.c.l.b16 %v1816
        %v1851 = vunpack.c.h.b16 %v1816
        %v1852 = vunpack.c.l.b16 %v1817
        %v1853 = vunpack.c.h.b16 %v1817
        %v1854 = vunpack.c.l.b16 %v1818
        %v1855 = vunpack.c.h.b16 %v1818
        %v1856 = vunpack.c.l.b16 %v1819
        %v1857 = vunpack.c.h.b16 %v1819
        %v1858 = vunpack.c.l.b16 %v1820
        %v1859 = vunpack.c.h.b16 %v1820
        %v1860 = vunpack.c.l.b16 %v1821
        %v1861 = vunpack.c.h.b16 %v1821
        %v1862 = vunpack.c.l.b16 %v1822
        %v1863 = vunpack.c.h.b16 %v1822
        %v1864 = vunpack.c.l.b16 %v1823
        %v1865 = vunpack.c.h.b16 %v1823
        %v1866 = vunpack.c.l.b16 %v1824
        %v1867 = vunpack.c.h.b16 %v1824
        %v1868 = vunpack.c.l.b16 %v1825
        %v1869 = vunpack.c.h.b16 %v1825
        %v1870 = vunpack.c.l.b16 %v1826
        %v1871 = vunpack.c.h.b16 %v1826
        %v1872 = vunpack.c.l.b16 %v1827
        %v1873 = vunpack.c.h.b16 %v1827
        %v1874 = vunpack.c.l.b16 %v1828
        %v1875 = vunpack.c.h.b16 %v1828
        %v1876 = vunpack.c.l.b16 %v1829
        %v1877 = vunpack.c.h.b16 %v1829
        %v1878 = vpack.c.b16 %v1848, %v1846
        %v1879 = vpack.c.b16 %v1849, %v1847
        %v1880 = vpack.c.b16 %v1852, %v1850
        %v1881 = vpack.c.b16 %v1853, %v1851
        %v1882 = vpack.c.b16 %v1856, %v1854
        %v1883 = vpack.c.b16 %v1857, %v1855
        %v1884 = vpack.c.b16 %v1860, %v1858
        %v1885 = vpack.c.b16 %v1861, %v1859
        %v1886 = vpack.c.b16 %v1864, %v1862
        %v1887 = vpack.c.b16 %v1865, %v1863
        %v1888 = vpack.c.b16 %v1868, %v1866
        %v1889 = vpack.c.b16 %v1869, %v1867
        %v1890 = vpack.c.b16 %v1872, %v1870
        %v1891 = vpack.c.b16 %v1873, %v1871
        %v1892 = vpack.c.b16 %v1876, %v1874
        %v1893 = vpack.c.b16 %v1877, %v1875
        %1910 = vmatprep.subr.bf16.mxu0 %v1879
        %1911 = vmatpush1.bf16.msra.mxu0 %v1878
        %1912 = vmatprep.subr.bf16.mxu0 %v1881
        %1913 = vmatpush1.bf16.msra.mxu0 %v1880
        %1914 = vmatprep.subr.bf16.mxu0 %v1883
        %1915 = vmatpush1.bf16.msra.mxu0 %v1882
        %1916 = vmatprep.subr.bf16.mxu0 %v1885
        %1917 = vmatpush1.bf16.msra.mxu0 %v1884
        %1918 = vmatprep.subr.bf16.mxu0 %v1887
        %1919 = vmatpush1.bf16.msra.mxu0 %v1886
        %1920 = vmatprep.subr.bf16.mxu0 %v1889
        %1921 = vmatpush1.bf16.msra.mxu0 %v1888
        %1922 = vmatprep.subr.bf16.mxu0 %v1891
        %1923 = vmatpush1.bf16.msra.mxu0 %v1890
        %1924 = vmatprep.subr.bf16.mxu0 %v1893
        %1925 = vmatpush1.bf16.msra.mxu0 %v1892
        %1926 = vmatprep.subr.bf16.mxu0 0
        %1927 = vmatpush1.bf16.msra.mxu0 0
        %1928 = vmatprep.subr.bf16.mxu0 0
        %1929 = vmatpush1.bf16.msra.mxu0 0
        %1930 = vmatprep.subr.bf16.mxu0 0
        %1931 = vmatpush1.bf16.msra.mxu0 0
        %1932 = vmatprep.subr.bf16.mxu0 0
        %1933 = vmatpush1.bf16.msra.mxu0 0
        %1934 = vmatprep.subr.bf16.mxu0 0
        %1935 = vmatpush1.bf16.msra.mxu0 0
        %1936 = vmatprep.subr.bf16.mxu0 0
        %1937 = vmatpush1.bf16.msra.mxu0 0
        %1938 = vmatprep.subr.bf16.mxu0 0
        %1939 = vmatpush1.bf16.msra.mxu0 0
        %1940 = vmatprep.subr.bf16.mxu0 0
        %1941 = vmatpush1.bf16.msra.mxu0 0
        %1942 = vmatprep.mubr.bf16.mxu0 0
        %1943 = vmatmul.mubr.bf16.gmra.mrb[0].mxu0 %v1806
        %v1944 = vpop.f32.mrb[0].mxu0
        %v1945 = vadd.f32 0.0, %v1944
        %v1946 = vpop.f32.mrb[0].mxu0
        %v1947 = vadd.f32 0.0, %v1946
        %v1948 = vpop.f32.mrb[0].mxu0
        %v1949 = vadd.f32 0.0, %v1948
        %v1950 = vpop.f32.mrb[0].mxu0
        %v1951 = vadd.f32 0.0, %v1950
        %1952 = vmatprep.mubr.bf16.mxu0 0
        %1953 = vmatmul.mubr.bf16.gmra.mrb[0].mxu0 %v1807
        %v1954 = vpop.f32.mrb[0].mxu0
        %v1955 = vadd.f32 0.0, %v1954
        %v1956 = vpop.f32.mrb[0].mxu0
        %v1957 = vadd.f32 0.0, %v1956
        %v1958 = vpop.f32.mrb[0].mxu0
        %v1959 = vadd.f32 0.0, %v1958
        %v1960 = vpop.f32.mrb[0].mxu0
        %v1961 = vadd.f32 0.0, %v1960
        %1962 = vmatprep.mubr.bf16.mxu0 0
        %1963 = vmatmul.mubr.bf16.gmra.mrb[0].mxu0 %v1808
        %v1964 = vpop.f32.mrb[0].mxu0
        %v1965 = vadd.f32 0.0, %v1964
        %v1966 = vpop.f32.mrb[0].mxu0
        %v1967 = vadd.f32 0.0, %v1966
        %v1968 = vpop.f32.mrb[0].mxu0
        %v1969 = vadd.f32 0.0, %v1968
        %v1970 = vpop.f32.mrb[0].mxu0
        %v1971 = vadd.f32 0.0, %v1970
        %1972 = vmatprep.mubr.bf16.mxu0 0
        %1973 = vmatmul.mubr.bf16.gmra.mrb[0].mxu0 %v1809
        %v1974 = vpop.f32.mrb[0].mxu0
        %v1975 = vadd.f32 0.0, %v1974
        %v1976 = vpop.f32.mrb[0].mxu0
        %v1977 = vadd.f32 0.0, %v1976
        %v1978 = vpop.f32.mrb[0].mxu0
        %v1979 = vadd.f32 0.0, %v1978
        %v1980 = vpop.f32.mrb[0].mxu0
        %v1981 = vadd.f32 0.0, %v1980
        %1982 = vmatprep.mubr.bf16.mxu0 0
        %1983 = vmatmul.mubr.bf16.gmra.mrb[0].mxu0 %v1810
        %v1984 = vpop.f32.mrb[0].mxu0
        %v1985 = vadd.f32 0.0, %v1984
        %v1986 = vpop.f32.mrb[0].mxu0
        %v1987 = vadd.f32 0.0, %v1986
        %v1988 = vpop.f32.mrb[0].mxu0
        %v1989 = vadd.f32 0.0, %v1988
        %v1990 = vpop.f32.mrb[0].mxu0
        %v1991 = vadd.f32 0.0, %v1990
        %1992 = vmatprep.mubr.bf16.mxu0 0
        %1993 = vmatmul.mubr.bf16.gmra.mrb[0].mxu0 %v1811
        %v1994 = vpop.f32.mrb[0].mxu0
        %v1995 = vadd.f32 0.0, %v1994
        %v1996 = vpop.f32.mrb[0].mxu0
        %v1997 = vadd.f32 0.0, %v1996
        %v1998 = vpop.f32.mrb[0].mxu0
        %v1999 = vadd.f32 0.0, %v1998
        %v2000 = vpop.f32.mrb[0].mxu0
        %v2001 = vadd.f32 0.0, %v2000
        %2002 = vmatprep.mubr.bf16.mxu0 0
        %2003 = vmatmul.mubr.bf16.gmra.mrb[0].mxu0 %v1812
        %v2004 = vpop.f32.mrb[0].mxu0
        %v2005 = vadd.f32 0.0, %v2004
        %v2006 = vpop.f32.mrb[0].mxu0
        %v2007 = vadd.f32 0.0, %v2006
        %v2008 = vpop.f32.mrb[0].mxu0
        %v2009 = vadd.f32 0.0, %v2008
        %v2010 = vpop.f32.mrb[0].mxu0
        %v2011 = vadd.f32 0.0, %v2010
        %2012 = vmatprep.mubr.bf16.mxu0 0
        %2013 = vmatmul.mubr.bf16.gmra.mrb[0].mxu0 %v1813
        %v2014 = vpop.f32.mrb[0].mxu0
        %v2015 = vadd.f32 0.0, %v2014
        %v2016 = vpop.f32.mrb[0].mxu0
        %v2017 = vadd.f32 0.0, %v2016
        %v2018 = vpop.f32.mrb[0].mxu0
        %v2019 = vadd.f32 0.0, %v2018
        %v2020 = vpop.f32.mrb[0].mxu0
        %v2021 = vadd.f32 0.0, %v2020
        %2022 = vdwg.mxu0
        %v2039 = vunpack.c.l.b16 %v1212
        %v2040 = vunpack.c.h.b16 %v1212
        %v2041 = vunpack.c.l.b16 %v1213
        %v2042 = vunpack.c.h.b16 %v1213
        %v2043 = vunpack.c.l.b16 %v1214
        %v2044 = vunpack.c.h.b16 %v1214
        %v2045 = vunpack.c.l.b16 %v1215
        %v2046 = vunpack.c.h.b16 %v1215
        %v2047 = vunpack.c.l.b16 %v1216
        %v2048 = vunpack.c.h.b16 %v1216
        %v2049 = vunpack.c.l.b16 %v1217
        %v2050 = vunpack.c.h.b16 %v1217
        %v2051 = vunpack.c.l.b16 %v1218
        %v2052 = vunpack.c.h.b16 %v1218
        %v2053 = vunpack.c.l.b16 %v1219
        %v2054 = vunpack.c.h.b16 %v1219
        %v2055 = vunpack.c.l.b16 %v1220
        %v2056 = vunpack.c.h.b16 %v1220
        %v2057 = vunpack.c.l.b16 %v1221
        %v2058 = vunpack.c.h.b16 %v1221
        %v2059 = vunpack.c.l.b16 %v1222
        %v2060 = vunpack.c.h.b16 %v1222
        %v2061 = vunpack.c.l.b16 %v1223
        %v2062 = vunpack.c.h.b16 %v1223
        %v2063 = vunpack.c.l.b16 %v1224
        %v2064 = vunpack.c.h.b16 %v1224
        %v2065 = vunpack.c.l.b16 %v1225
        %v2066 = vunpack.c.h.b16 %v1225
        %v2067 = vunpack.c.l.b16 %v1226
        %v2068 = vunpack.c.h.b16 %v1226
        %v2069 = vunpack.c.l.b16 %v1227
        %v2070 = vunpack.c.h.b16 %v1227
        %v2071 = vpack.c.b16 %v2041, %v2039
        %v2072 = vpack.c.b16 %v2042, %v2040
        %v2073 = vpack.c.b16 %v2045, %v2043
        %v2074 = vpack.c.b16 %v2046, %v2044
        %v2075 = vpack.c.b16 %v2049, %v2047
        %v2076 = vpack.c.b16 %v2050, %v2048
        %v2077 = vpack.c.b16 %v2053, %v2051
        %v2078 = vpack.c.b16 %v2054, %v2052
        %v2079 = vpack.c.b16 %v2057, %v2055
        %v2080 = vpack.c.b16 %v2058, %v2056
        %v2081 = vpack.c.b16 %v2061, %v2059
        %v2082 = vpack.c.b16 %v2062, %v2060
        %v2083 = vpack.c.b16 %v2065, %v2063
        %v2084 = vpack.c.b16 %v2066, %v2064
        %v2085 = vpack.c.b16 %v2069, %v2067
        %v2086 = vpack.c.b16 %v2070, %v2068
        %2103 = vmatprep.subr.bf16.mxu0 %v2072
        %2104 = vmatpush1.bf16.msra.mxu0 %v2071
        %2105 = vmatprep.subr.bf16.mxu0 %v2074
        %2106 = vmatpush1.bf16.msra.mxu0 %v2073
        %2107 = vmatprep.subr.bf16.mxu0 %v2076
        %2108 = vmatpush1.bf16.msra.mxu0 %v2075
        %2109 = vmatprep.subr.bf16.mxu0 %v2078
        %2110 = vmatpush1.bf16.msra.mxu0 %v2077
        %2111 = vmatprep.subr.bf16.mxu0 %v2080
        %2112 = vmatpush1.bf16.msra.mxu0 %v2079
        %2113 = vmatprep.subr.bf16.mxu0 %v2082
        %2114 = vmatpush1.bf16.msra.mxu0 %v2081
        %2115 = vmatprep.subr.bf16.mxu0 %v2084
        %2116 = vmatpush1.bf16.msra.mxu0 %v2083
        %2117 = vmatprep.subr.bf16.mxu0 %v2086
        %2118 = vmatpush1.bf16.msra.mxu0 %v2085
        %2119 = vmatprep.subr.bf16.mxu0 0
        %2120 = vmatpush1.bf16.msra.mxu0 0
        %2121 = vmatprep.subr.bf16.mxu0 0
        %2122 = vmatpush1.bf16.msra.mxu0 0
        %2123 = vmatprep.subr.bf16.mxu0 0
        %2124 = vmatpush1.bf16.msra.mxu0 0
        %2125 = vmatprep.subr.bf16.mxu0 0
        %2126 = vmatpush1.bf16.msra.mxu0 0
        %2127 = vmatprep.subr.bf16.mxu0 0
        %2128 = vmatpush1.bf16.msra.mxu0 0
        %2129 = vmatprep.subr.bf16.mxu0 0
        %2130 = vmatpush1.bf16.msra.mxu0 0
        %2131 = vmatprep.subr.bf16.mxu0 0
        %2132 = vmatpush1.bf16.msra.mxu0 0
        %2133 = vmatprep.subr.bf16.mxu0 0
        %2134 = vmatpush1.bf16.msra.mxu0 0
        %2135 = vmatprep.mubr.bf16.mxu0 0
        %2136 = vmatmul.mubr.bf16.gmra.mrb[0].mxu0 %v1204
        %v2137 = vpop.f32.mrb[0].mxu0
        %v2138 = vadd.f32 %v1945, %v2137
        %v2139 = vpop.f32.mrb[0].mxu0
        %v2140 = vadd.f32 %v1947, %v2139
        %v2141 = vpop.f32.mrb[0].mxu0
        %v2142 = vadd.f32 %v1949, %v2141
        %v2143 = vpop.f32.mrb[0].mxu0
        %v2144 = vadd.f32 %v1951, %v2143
        %2145 = vmatprep.mubr.bf16.mxu0 0
        %2146 = vmatmul.mubr.bf16.gmra.mrb[0].mxu0 %v1205
        %v2147 = vpop.f32.mrb[0].mxu0
        %v2148 = vadd.f32 %v1955, %v2147
        %v2149 = vpop.f32.mrb[0].mxu0
        %v2150 = vadd.f32 %v1957, %v2149
        %v2151 = vpop.f32.mrb[0].mxu0
        %v2152 = vadd.f32 %v1959, %v2151
        %v2153 = vpop.f32.mrb[0].mxu0
        %v2154 = vadd.f32 %v1961, %v2153
        %2155 = vmatprep.mubr.bf16.mxu0 0
        %2156 = vmatmul.mubr.bf16.gmra.mrb[0].mxu0 %v1206
        %v2157 = vpop.f32.mrb[0].mxu0
        %v2158 = vadd.f32 %v1965, %v2157
        %v2159 = vpop.f32.mrb[0].mxu0
        %v2160 = vadd.f32 %v1967, %v2159
        %v2161 = vpop.f32.mrb[0].mxu0
        %v2162 = vadd.f32 %v1969, %v2161
        %v2163 = vpop.f32.mrb[0].mxu0
        %v2164 = vadd.f32 %v1971, %v2163
        %2165 = vmatprep.mubr.bf16.mxu0 0
        %2166 = vmatmul.mubr.bf16.gmra.mrb[0].mxu0 %v1207
        %v2167 = vpop.f32.mrb[0].mxu0
        %v2168 = vadd.f32 %v1975, %v2167
        %v2169 = vpop.f32.mrb[0].mxu0
        %v2170 = vadd.f32 %v1977, %v2169
        %v2171 = vpop.f32.mrb[0].mxu0
        %v2172 = vadd.f32 %v1979, %v2171
        %v2173 = vpop.f32.mrb[0].mxu0
        %v2174 = vadd.f32 %v1981, %v2173
        %2175 = vmatprep.mubr.bf16.mxu0 0
        %2176 = vmatmul.mubr.bf16.gmra.mrb[0].mxu0 %v1208
        %v2177 = vpop.f32.mrb[0].mxu0
        %v2178 = vadd.f32 %v1985, %v2177
        %v2179 = vpop.f32.mrb[0].mxu0
        %v2180 = vadd.f32 %v1987, %v2179
        %v2181 = vpop.f32.mrb[0].mxu0
        %v2182 = vadd.f32 %v1989, %v2181
        %v2183 = vpop.f32.mrb[0].mxu0
        %v2184 = vadd.f32 %v1991, %v2183
        %2185 = vmatprep.mubr.bf16.mxu0 0
        %2186 = vmatmul.mubr.bf16.gmra.mrb[0].mxu0 %v1209
        %v2187 = vpop.f32.mrb[0].mxu0
        %v2188 = vadd.f32 %v1995, %v2187
        %v2189 = vpop.f32.mrb[0].mxu0
        %v2190 = vadd.f32 %v1997, %v2189
        %v2191 = vpop.f32.mrb[0].mxu0
        %v2192 = vadd.f32 %v1999, %v2191
        %v2193 = vpop.f32.mrb[0].mxu0
        %v2194 = vadd.f32 %v2001, %v2193
        %2195 = vmatprep.mubr.bf16.mxu0 0
        %2196 = vmatmul.mubr.bf16.gmra.mrb[0].mxu0 %v1210
        %v2197 = vpop.f32.mrb[0].mxu0
        %v2198 = vadd.f32 %v2005, %v2197
        %v2199 = vpop.f32.mrb[0].mxu0
        %v2200 = vadd.f32 %v2007, %v2199
        %v2201 = vpop.f32.mrb[0].mxu0
        %v2202 = vadd.f32 %v2009, %v2201
        %v2203 = vpop.f32.mrb[0].mxu0
        %v2204 = vadd.f32 %v2011, %v2203
        %2205 = vmatprep.mubr.bf16.mxu0 0
        %2206 = vmatmul.mubr.bf16.gmra.mrb[0].mxu0 %v1211
        %v2207 = vpop.f32.mrb[0].mxu0
        %v2208 = vadd.f32 %v2015, %v2207
        %v2209 = vpop.f32.mrb[0].mxu0
        %v2210 = vadd.f32 %v2017, %v2209
        %v2211 = vpop.f32.mrb[0].mxu0
        %v2212 = vadd.f32 %v2019, %v2211
        %v2213 = vpop.f32.mrb[0].mxu0
        %v2214 = vadd.f32 %v2021, %v2213
        %2215 = vdwg.mxu0
        %v2216 = vld [vmem:[%s3 + $0x8] sm:$0xf]
        %v2217 = vld [vmem:[%s3 + $0x18] sm:$0xf]
        %v2218 = vld [vmem:[%s3 + $0x28] sm:$0xf]
        %v2219 = vld [vmem:[%s3 + $0x38] sm:$0xf]
        %v2220 = vld [vmem:[%s3 + $0x48] sm:$0xf]
        %v2221 = vld [vmem:[%s3 + $0x58] sm:$0xf]
        %v2222 = vld [vmem:[%s3 + $0x68] sm:$0xf]
        %v2223 = vld [vmem:[%s3 + $0x78] sm:$0xf]
        %v2224 = vld [vmem:[%s3 + $0x88] sm:$0xf]
        %v2225 = vld [vmem:[%s3 + $0x98] sm:$0xf]
        %v2226 = vld [vmem:[%s3 + $0xa8] sm:$0xf]
        %v2227 = vld [vmem:[%s3 + $0xb8] sm:$0xf]
        %v2228 = vld [vmem:[%s3 + $0xc8] sm:$0xf]
        %v2229 = vld [vmem:[%s3 + $0xd8] sm:$0xf]
        %v2230 = vld [vmem:[%s3 + $0xe8] sm:$0xf]
        %v2231 = vld [vmem:[%s3 + $0xf8] sm:$0xf]
        %v2232 = vld [vmem:[%s3 + $0x108] sm:$0xf]
        %v2233 = vld [vmem:[%s3 + $0x118] sm:$0xf]
        %v2234 = vld [vmem:[%s3 + $0x128] sm:$0xf]
        %v2235 = vld [vmem:[%s3 + $0x138] sm:$0xf]
        %v2236 = vld [vmem:[%s3 + $0x148] sm:$0xf]
        %v2237 = vld [vmem:[%s3 + $0x158] sm:$0xf]
        %v2238 = vld [vmem:[%s3 + $0x168] sm:$0xf]
        %v2239 = vld [vmem:[%s3 + $0x178] sm:$0xf]
        %v2240 = vld [vmem:[%s3 + $0x188] sm:$0xf]
        %v2241 = vld [vmem:[%s3 + $0x198] sm:$0xf]
        %v2242 = vld [vmem:[%s3 + $0x1a8] sm:$0xf]
        %v2243 = vld [vmem:[%s3 + $0x1b8] sm:$0xf]
        %v2244 = vld [vmem:[%s3 + $0x1c8] sm:$0xf]
        %v2245 = vld [vmem:[%s3 + $0x1d8] sm:$0xf]
        %v2246 = vld [vmem:[%s3 + $0x1e8] sm:$0xf]
        %v2247 = vld [vmem:[%s3 + $0x1f8] sm:$0xf]
        %v2280 = vunpack.c.l.b16 %v2216
        %v2281 = vunpack.c.l.b16 %v2217
        %v2282 = vunpack.c.l.b16 %v2218
        %v2283 = vunpack.c.l.b16 %v2219
        %v2284 = vunpack.c.l.b16 %v2220
        %v2285 = vunpack.c.l.b16 %v2221
        %v2286 = vunpack.c.l.b16 %v2222
        %v2287 = vunpack.c.l.b16 %v2223
        %v2288 = vunpack.c.l.b16 %v2224
        %v2289 = vunpack.c.l.b16 %v2225
        %v2290 = vunpack.c.l.b16 %v2226
        %v2291 = vunpack.c.l.b16 %v2227
        %v2292 = vunpack.c.l.b16 %v2228
        %v2293 = vunpack.c.l.b16 %v2229
        %v2294 = vunpack.c.l.b16 %v2230
        %v2295 = vunpack.c.l.b16 %v2231
        %v2296 = vunpack.c.l.b16 %v2232
        %v2297 = vunpack.c.l.b16 %v2233
        %v2298 = vunpack.c.l.b16 %v2234
        %v2299 = vunpack.c.l.b16 %v2235
        %v2300 = vunpack.c.l.b16 %v2236
        %v2301 = vunpack.c.l.b16 %v2237
        %v2302 = vunpack.c.l.b16 %v2238
        %v2303 = vunpack.c.l.b16 %v2239
        %v2304 = vunpack.c.l.b16 %v2240
        %v2305 = vunpack.c.l.b16 %v2241
        %v2306 = vunpack.c.l.b16 %v2242
        %v2307 = vunpack.c.l.b16 %v2243
        %v2308 = vunpack.c.l.b16 %v2244
        %v2309 = vunpack.c.l.b16 %v2245
        %v2310 = vunpack.c.l.b16 %v2246
        %v2311 = vunpack.c.l.b16 %v2247
        %v2312 = vpack.c.b16 %v2281, %v2280
        %v2313 = vpack.c.b16 %v2283, %v2282
        %v2314 = vpack.c.b16 %v2285, %v2284
        %v2315 = vpack.c.b16 %v2287, %v2286
        %v2316 = vpack.c.b16 %v2289, %v2288
        %v2317 = vpack.c.b16 %v2291, %v2290
        %v2318 = vpack.c.b16 %v2293, %v2292
        %v2319 = vpack.c.b16 %v2295, %v2294
        %v2320 = vpack.c.b16 %v2297, %v2296
        %v2321 = vpack.c.b16 %v2299, %v2298
        %v2322 = vpack.c.b16 %v2301, %v2300
        %v2323 = vpack.c.b16 %v2303, %v2302
        %v2324 = vpack.c.b16 %v2305, %v2304
        %v2325 = vpack.c.b16 %v2307, %v2306
        %v2326 = vpack.c.b16 %v2309, %v2308
        %v2327 = vpack.c.b16 %v2311, %v2310
        %2344 = vmatprep.subr.bf16.mxu0 0
        %2345 = vmatpush1.bf16.msra.mxu0 %v2312
        %2346 = vmatprep.subr.bf16.mxu0 0
        %2347 = vmatpush1.bf16.msra.mxu0 %v2313
        %2348 = vmatprep.subr.bf16.mxu0 0
        %2349 = vmatpush1.bf16.msra.mxu0 %v2314
        %2350 = vmatprep.subr.bf16.mxu0 0
        %2351 = vmatpush1.bf16.msra.mxu0 %v2315
        %2352 = vmatprep.subr.bf16.mxu0 0
        %2353 = vmatpush1.bf16.msra.mxu0 %v2316
        %2354 = vmatprep.subr.bf16.mxu0 0
        %2355 = vmatpush1.bf16.msra.mxu0 %v2317
        %2356 = vmatprep.subr.bf16.mxu0 0
        %2357 = vmatpush1.bf16.msra.mxu0 %v2318
        %2358 = vmatprep.subr.bf16.mxu0 0
        %2359 = vmatpush1.bf16.msra.mxu0 %v2319
        %2360 = vmatprep.subr.bf16.mxu0 0
        %2361 = vmatpush1.bf16.msra.mxu0 %v2320
        %2362 = vmatprep.subr.bf16.mxu0 0
        %2363 = vmatpush1.bf16.msra.mxu0 %v2321
        %2364 = vmatprep.subr.bf16.mxu0 0
        %2365 = vmatpush1.bf16.msra.mxu0 %v2322
        %2366 = vmatprep.subr.bf16.mxu0 0
        %2367 = vmatpush1.bf16.msra.mxu0 %v2323
        %2368 = vmatprep.subr.bf16.mxu0 0
        %2369 = vmatpush1.bf16.msra.mxu0 %v2324
        %2370 = vmatprep.subr.bf16.mxu0 0
        %2371 = vmatpush1.bf16.msra.mxu0 %v2325
        %2372 = vmatprep.subr.bf16.mxu0 0
        %2373 = vmatpush1.bf16.msra.mxu0 %v2326
        %2374 = vmatprep.subr.bf16.mxu0 0
        %2375 = vmatpush1.bf16.msra.mxu0 %v2327
        %2376 = vmatprep.mubr.bf16.mxu0 %v611
        %2377 = vmatmul.mubr.bf16.gmra.mrb[0].mxu0 %v610
        %v2378 = vpop.f32.mrb[0].mxu0
        %v2379 = vadd.f32 0.0, %v2378
        %v2380 = vpop.f32.mrb[0].mxu0
        %v2381 = vpop.f32.mrb[0].mxu0
        %v2382 = vadd.f32 0.0, %v2381
        %v2383 = vpop.f32.mrb[0].mxu0
        %2384 = vmatprep.mubr.bf16.mxu0 %v613
        %2385 = vmatmul.mubr.bf16.gmra.mrb[0].mxu0 %v612
        %v2386 = vpop.f32.mrb[0].mxu0
        %v2387 = vadd.f32 0.0, %v2386
        %v2388 = vpop.f32.mrb[0].mxu0
        %v2389 = vpop.f32.mrb[0].mxu0
        %v2390 = vadd.f32 0.0, %v2389
        %v2391 = vpop.f32.mrb[0].mxu0
        %2392 = vmatprep.mubr.bf16.mxu0 %v615
        %2393 = vmatmul.mubr.bf16.gmra.mrb[0].mxu0 %v614
        %v2394 = vpop.f32.mrb[0].mxu0
        %v2395 = vadd.f32 0.0, %v2394
        %v2396 = vpop.f32.mrb[0].mxu0
        %v2397 = vpop.f32.mrb[0].mxu0
        %v2398 = vadd.f32 0.0, %v2397
        %v2399 = vpop.f32.mrb[0].mxu0
        %2400 = vmatprep.mubr.bf16.mxu0 %v617
        %2401 = vmatmul.mubr.bf16.gmra.mrb[0].mxu0 %v616
        %v2402 = vpop.f32.mrb[0].mxu0
        %v2403 = vadd.f32 0.0, %v2402
        %v2404 = vpop.f32.mrb[0].mxu0
        %v2405 = vpop.f32.mrb[0].mxu0
        %v2406 = vadd.f32 0.0, %v2405
        %v2407 = vpop.f32.mrb[0].mxu0
        %2408 = vmatprep.mubr.bf16.mxu0 %v619
        %2409 = vmatmul.mubr.bf16.gmra.mrb[0].mxu0 %v618
        %v2410 = vpop.f32.mrb[0].mxu0
        %v2411 = vadd.f32 0.0, %v2410
        %v2412 = vpop.f32.mrb[0].mxu0
        %v2413 = vpop.f32.mrb[0].mxu0
        %v2414 = vadd.f32 0.0, %v2413
        %v2415 = vpop.f32.mrb[0].mxu0
        %2416 = vmatprep.mubr.bf16.mxu0 %v621
        %2417 = vmatmul.mubr.bf16.gmra.mrb[0].mxu0 %v620
        %v2418 = vpop.f32.mrb[0].mxu0
        %v2419 = vadd.f32 0.0, %v2418
        %v2420 = vpop.f32.mrb[0].mxu0
        %v2421 = vpop.f32.mrb[0].mxu0
        %v2422 = vadd.f32 0.0, %v2421
        %v2423 = vpop.f32.mrb[0].mxu0
        %2424 = vmatprep.mubr.bf16.mxu0 %v623
        %2425 = vmatmul.mubr.bf16.gmra.mrb[0].mxu0 %v622
        %v2426 = vpop.f32.mrb[0].mxu0
        %v2427 = vadd.f32 0.0, %v2426
        %v2428 = vpop.f32.mrb[0].mxu0
        %v2429 = vpop.f32.mrb[0].mxu0
        %v2430 = vadd.f32 0.0, %v2429
        %v2431 = vpop.f32.mrb[0].mxu0
        %2432 = vmatprep.mubr.bf16.mxu0 %v625
        %2433 = vmatmul.mubr.bf16.gmra.mrb[0].mxu0 %v624
        %v2434 = vpop.f32.mrb[0].mxu0
        %v2435 = vadd.f32 0.0, %v2434
        %v2436 = vpop.f32.mrb[0].mxu0
        %v2437 = vpop.f32.mrb[0].mxu0
        %v2438 = vadd.f32 0.0, %v2437
        %v2439 = vpop.f32.mrb[0].mxu0
        %2440 = vdwg.mxu0
        %v2441 = vld [vmem:[%s4 + $0x8] sm:$0xf]
        %v2442 = vld [vmem:[%s4 + $0x18] sm:$0xf]
        %v2443 = vld [vmem:[%s4 + $0x28] sm:$0xf]
        %v2444 = vld [vmem:[%s4 + $0x38] sm:$0xf]
        %v2445 = vld [vmem:[%s4 + $0x48] sm:$0xf]
        %v2446 = vld [vmem:[%s4 + $0x58] sm:$0xf]
        %v2447 = vld [vmem:[%s4 + $0x68] sm:$0xf]
        %v2448 = vld [vmem:[%s4 + $0x78] sm:$0xf]
        %v2449 = vld [vmem:[%s4 + $0x88] sm:$0xf]
        %v2450 = vld [vmem:[%s4 + $0x98] sm:$0xf]
        %v2451 = vld [vmem:[%s4 + $0xa8] sm:$0xf]
        %v2452 = vld [vmem:[%s4 + $0xb8] sm:$0xf]
        %v2453 = vld [vmem:[%s4 + $0xc8] sm:$0xf]
        %v2454 = vld [vmem:[%s4 + $0xd8] sm:$0xf]
        %v2455 = vld [vmem:[%s4 + $0xe8] sm:$0xf]
        %v2456 = vld [vmem:[%s4 + $0xf8] sm:$0xf]
        %v2457 = vld [vmem:[%s4 + $0x108] sm:$0xf]
        %v2458 = vld [vmem:[%s4 + $0x118] sm:$0xf]
        %v2459 = vld [vmem:[%s4 + $0x128] sm:$0xf]
        %v2460 = vld [vmem:[%s4 + $0x138] sm:$0xf]
        %v2461 = vld [vmem:[%s4 + $0x148] sm:$0xf]
        %v2462 = vld [vmem:[%s4 + $0x158] sm:$0xf]
        %v2463 = vld [vmem:[%s4 + $0x168] sm:$0xf]
        %v2464 = vld [vmem:[%s4 + $0x178] sm:$0xf]
        %v2465 = vld [vmem:[%s4 + $0x188] sm:$0xf]
        %v2466 = vld [vmem:[%s4 + $0x198] sm:$0xf]
        %v2467 = vld [vmem:[%s4 + $0x1a8] sm:$0xf]
        %v2468 = vld [vmem:[%s4 + $0x1b8] sm:$0xf]
        %v2469 = vld [vmem:[%s4 + $0x1c8] sm:$0xf]
        %v2470 = vld [vmem:[%s4 + $0x1d8] sm:$0xf]
        %v2471 = vld [vmem:[%s4 + $0x1e8] sm:$0xf]
        %v2472 = vld [vmem:[%s4 + $0x1f8] sm:$0xf]
        %v2505 = vunpack.c.l.b16 %v2441
        %v2506 = vunpack.c.l.b16 %v2442
        %v2507 = vunpack.c.l.b16 %v2443
        %v2508 = vunpack.c.l.b16 %v2444
        %v2509 = vunpack.c.l.b16 %v2445
        %v2510 = vunpack.c.l.b16 %v2446
        %v2511 = vunpack.c.l.b16 %v2447
        %v2512 = vunpack.c.l.b16 %v2448
        %v2513 = vunpack.c.l.b16 %v2449
        %v2514 = vunpack.c.l.b16 %v2450
        %v2515 = vunpack.c.l.b16 %v2451
        %v2516 = vunpack.c.l.b16 %v2452
        %v2517 = vunpack.c.l.b16 %v2453
        %v2518 = vunpack.c.l.b16 %v2454
        %v2519 = vunpack.c.l.b16 %v2455
        %v2520 = vunpack.c.l.b16 %v2456
        %v2521 = vunpack.c.l.b16 %v2457
        %v2522 = vunpack.c.l.b16 %v2458
        %v2523 = vunpack.c.l.b16 %v2459
        %v2524 = vunpack.c.l.b16 %v2460
        %v2525 = vunpack.c.l.b16 %v2461
        %v2526 = vunpack.c.l.b16 %v2462
        %v2527 = vunpack.c.l.b16 %v2463
        %v2528 = vunpack.c.l.b16 %v2464
        %v2529 = vunpack.c.l.b16 %v2465
        %v2530 = vunpack.c.l.b16 %v2466
        %v2531 = vunpack.c.l.b16 %v2467
        %v2532 = vunpack.c.l.b16 %v2468
        %v2533 = vunpack.c.l.b16 %v2469
        %v2534 = vunpack.c.l.b16 %v2470
        %v2535 = vunpack.c.l.b16 %v2471
        %v2536 = vunpack.c.l.b16 %v2472
        %v2537 = vpack.c.b16 %v2506, %v2505
        %v2538 = vpack.c.b16 %v2508, %v2507
        %v2539 = vpack.c.b16 %v2510, %v2509
        %v2540 = vpack.c.b16 %v2512, %v2511
        %v2541 = vpack.c.b16 %v2514, %v2513
        %v2542 = vpack.c.b16 %v2516, %v2515
        %v2543 = vpack.c.b16 %v2518, %v2517
        %v2544 = vpack.c.b16 %v2520, %v2519
        %v2545 = vpack.c.b16 %v2522, %v2521
        %v2546 = vpack.c.b16 %v2524, %v2523
        %v2547 = vpack.c.b16 %v2526, %v2525
        %v2548 = vpack.c.b16 %v2528, %v2527
        %v2549 = vpack.c.b16 %v2530, %v2529
        %v2550 = vpack.c.b16 %v2532, %v2531
        %v2551 = vpack.c.b16 %v2534, %v2533
        %v2552 = vpack.c.b16 %v2536, %v2535
        %2569 = vmatprep.subr.bf16.mxu0 0
        %2570 = vmatpush1.bf16.msra.mxu0 %v2537
        %2571 = vmatprep.subr.bf16.mxu0 0
        %2572 = vmatpush1.bf16.msra.mxu0 %v2538
        %2573 = vmatprep.subr.bf16.mxu0 0
        %2574 = vmatpush1.bf16.msra.mxu0 %v2539
        %2575 = vmatprep.subr.bf16.mxu0 0
        %2576 = vmatpush1.bf16.msra.mxu0 %v2540
        %2577 = vmatprep.subr.bf16.mxu0 0
        %2578 = vmatpush1.bf16.msra.mxu0 %v2541
        %2579 = vmatprep.subr.bf16.mxu0 0
        %2580 = vmatpush1.bf16.msra.mxu0 %v2542
        %2581 = vmatprep.subr.bf16.mxu0 0
        %2582 = vmatpush1.bf16.msra.mxu0 %v2543
        %2583 = vmatprep.subr.bf16.mxu0 0
        %2584 = vmatpush1.bf16.msra.mxu0 %v2544
        %2585 = vmatprep.subr.bf16.mxu0 0
        %2586 = vmatpush1.bf16.msra.mxu0 %v2545
        %2587 = vmatprep.subr.bf16.mxu0 0
        %2588 = vmatpush1.bf16.msra.mxu0 %v2546
        %2589 = vmatprep.subr.bf16.mxu0 0
        %2590 = vmatpush1.bf16.msra.mxu0 %v2547
        %2591 = vmatprep.subr.bf16.mxu0 0
        %2592 = vmatpush1.bf16.msra.mxu0 %v2548
        %2593 = vmatprep.subr.bf16.mxu0 0
        %2594 = vmatpush1.bf16.msra.mxu0 %v2549
        %2595 = vmatprep.subr.bf16.mxu0 0
        %2596 = vmatpush1.bf16.msra.mxu0 %v2550
        %2597 = vmatprep.subr.bf16.mxu0 0
        %2598 = vmatpush1.bf16.msra.mxu0 %v2551
        %2599 = vmatprep.subr.bf16.mxu0 0
        %2600 = vmatpush1.bf16.msra.mxu0 %v2552
        %2601 = vmatprep.mubr.bf16.mxu0 %v611
        %2602 = vmatmul.mubr.bf16.gmra.mrb[0].mxu0 %v610
        %v2603 = vpop.f32.mrb[0].mxu0
        %v2604 = vadd.f32 0.0, %v2603
        %v2605 = vpop.f32.mrb[0].mxu0
        %v2606 = vpop.f32.mrb[0].mxu0
        %v2607 = vadd.f32 0.0, %v2606
        %v2608 = vpop.f32.mrb[0].mxu0
        %2609 = vmatprep.mubr.bf16.mxu0 %v613
        %2610 = vmatmul.mubr.bf16.gmra.mrb[0].mxu0 %v612
        %v2611 = vpop.f32.mrb[0].mxu0
        %v2612 = vadd.f32 0.0, %v2611
        %v2613 = vpop.f32.mrb[0].mxu0
        %v2614 = vpop.f32.mrb[0].mxu0
        %v2615 = vadd.f32 0.0, %v2614
        %v2616 = vpop.f32.mrb[0].mxu0
        %2617 = vmatprep.mubr.bf16.mxu0 %v615
        %2618 = vmatmul.mubr.bf16.gmra.mrb[0].mxu0 %v614
        %v2619 = vpop.f32.mrb[0].mxu0
        %v2620 = vadd.f32 0.0, %v2619
        %v2621 = vpop.f32.mrb[0].mxu0
        %v2622 = vpop.f32.mrb[0].mxu0
        %v2623 = vadd.f32 0.0, %v2622
        %v2624 = vpop.f32.mrb[0].mxu0
        %2625 = vmatprep.mubr.bf16.mxu0 %v617
        %2626 = vmatmul.mubr.bf16.gmra.mrb[0].mxu0 %v616
        %v2627 = vpop.f32.mrb[0].mxu0
        %v2628 = vadd.f32 0.0, %v2627
        %v2629 = vpop.f32.mrb[0].mxu0
        %v2630 = vpop.f32.mrb[0].mxu0
        %v2631 = vadd.f32 0.0, %v2630
        %v2632 = vpop.f32.mrb[0].mxu0
        %2633 = vmatprep.mubr.bf16.mxu0 %v619
        %2634 = vmatmul.mubr.bf16.gmra.mrb[0].mxu0 %v618
        %v2635 = vpop.f32.mrb[0].mxu0
        %v2636 = vadd.f32 0.0, %v2635
        %v2637 = vpop.f32.mrb[0].mxu0
        %v2638 = vpop.f32.mrb[0].mxu0
        %v2639 = vadd.f32 0.0, %v2638
        %v2640 = vpop.f32.mrb[0].mxu0
        %2641 = vmatprep.mubr.bf16.mxu0 %v621
        %2642 = vmatmul.mubr.bf16.gmra.mrb[0].mxu0 %v620
        %v2643 = vpop.f32.mrb[0].mxu0
        %v2644 = vadd.f32 0.0, %v2643
        %v2645 = vpop.f32.mrb[0].mxu0
        %v2646 = vpop.f32.mrb[0].mxu0
        %v2647 = vadd.f32 0.0, %v2646
        %v2648 = vpop.f32.mrb[0].mxu0
        %2649 = vmatprep.mubr.bf16.mxu0 %v623
        %2650 = vmatmul.mubr.bf16.gmra.mrb[0].mxu0 %v622
        %v2651 = vpop.f32.mrb[0].mxu0
        %v2652 = vadd.f32 0.0, %v2651
        %v2653 = vpop.f32.mrb[0].mxu0
        %v2654 = vpop.f32.mrb[0].mxu0
        %v2655 = vadd.f32 0.0, %v2654
        %v2656 = vpop.f32.mrb[0].mxu0
        %2657 = vmatprep.mubr.bf16.mxu0 %v625
        %2658 = vmatmul.mubr.bf16.gmra.mrb[0].mxu0 %v624
        %v2659 = vpop.f32.mrb[0].mxu0
        %v2660 = vadd.f32 0.0, %v2659
        %v2661 = vpop.f32.mrb[0].mxu0
        %v2662 = vpop.f32.mrb[0].mxu0
        %v2663 = vadd.f32 0.0, %v2662
        %v2664 = vpop.f32.mrb[0].mxu0
        %2665 = vdwg.mxu0
        %v2666 = vxor.u32 %v2379, 2147483648
        %v2667 = vxor.u32 %v2382, 2147483648
        %v2668 = vxor.u32 %v2387, 2147483648
        %v2669 = vxor.u32 %v2390, 2147483648
        %v2670 = vxor.u32 %v2395, 2147483648
        %v2671 = vxor.u32 %v2398, 2147483648
        %v2672 = vxor.u32 %v2403, 2147483648
        %v2673 = vxor.u32 %v2406, 2147483648
        %v2674 = vxor.u32 %v2411, 2147483648
        %v2675 = vxor.u32 %v2414, 2147483648
        %v2676 = vxor.u32 %v2419, 2147483648
        %v2677 = vxor.u32 %v2422, 2147483648
        %v2678 = vxor.u32 %v2427, 2147483648
        %v2679 = vxor.u32 %v2430, 2147483648
        %v2680 = vxor.u32 %v2435, 2147483648
        %v2681 = vxor.u32 %v2438, 2147483648
        %v2682 = vmul.f32 %v2666, 1.442695
        %v2683 = vpow.pop %v2682
        %v2684 = vmul.f32 %v2667, 1.442695
        %v2685 = vpow.pop %v2684
        %v2686 = vmul.f32 %v2668, 1.442695
        %v2687 = vpow.pop %v2686
        %v2688 = vmul.f32 %v2669, 1.442695
        %v2689 = vpow.pop %v2688
        %v2690 = vmul.f32 %v2670, 1.442695
        %v2691 = vpow.pop %v2690
        %v2692 = vmul.f32 %v2671, 1.442695
        %v2693 = vpow.pop %v2692
        %v2694 = vmul.f32 %v2672, 1.442695
        %v2695 = vpow.pop %v2694
        %v2696 = vmul.f32 %v2673, 1.442695
        %v2697 = vpow.pop %v2696
        %v2698 = vmul.f32 %v2674, 1.442695
        %v2699 = vpow.pop %v2698
        %v2700 = vmul.f32 %v2675, 1.442695
        %v2701 = vpow.pop %v2700
        %v2702 = vmul.f32 %v2676, 1.442695
        %v2703 = vpow.pop %v2702
        %v2704 = vmul.f32 %v2677, 1.442695
        %v2705 = vpow.pop %v2704
        %v2706 = vmul.f32 %v2678, 1.442695
        %v2707 = vpow.pop %v2706
        %v2708 = vmul.f32 %v2679, 1.442695
        %v2709 = vpow.pop %v2708
        %v2710 = vmul.f32 %v2680, 1.442695
        %v2711 = vpow.pop %v2710
        %v2712 = vmul.f32 %v2681, 1.442695
        %v2713 = vpow.pop %v2712
        %v2714 = vadd.f32 %v2683, 1.0
        %v2715 = vadd.f32 %v2685, 1.0
        %v2716 = vadd.f32 %v2687, 1.0
        %v2717 = vadd.f32 %v2689, 1.0
        %v2718 = vadd.f32 %v2691, 1.0
        %v2719 = vadd.f32 %v2693, 1.0
        %v2720 = vadd.f32 %v2695, 1.0
        %v2721 = vadd.f32 %v2697, 1.0
        %v2722 = vadd.f32 %v2699, 1.0
        %v2723 = vadd.f32 %v2701, 1.0
        %v2724 = vadd.f32 %v2703, 1.0
        %v2725 = vadd.f32 %v2705, 1.0
        %v2726 = vadd.f32 %v2707, 1.0
        %v2727 = vadd.f32 %v2709, 1.0
        %v2728 = vadd.f32 %v2711, 1.0
        %v2729 = vadd.f32 %v2713, 1.0
        %v2730 = vrcp.pop %v2714
        %v2731 = vmul.f32 1.0, %v2730
        %v2732 = vrcp.pop %v2715
        %v2733 = vmul.f32 1.0, %v2732
        %v2734 = vrcp.pop %v2716
        %v2735 = vmul.f32 1.0, %v2734
        %v2736 = vrcp.pop %v2717
        %v2737 = vmul.f32 1.0, %v2736
        %v2738 = vrcp.pop %v2718
        %v2739 = vmul.f32 1.0, %v2738
        %v2740 = vrcp.pop %v2719
        %v2741 = vmul.f32 1.0, %v2740
        %v2742 = vrcp.pop %v2720
        %v2743 = vmul.f32 1.0, %v2742
        %v2744 = vrcp.pop %v2721
        %v2745 = vmul.f32 1.0, %v2744
        %v2746 = vrcp.pop %v2722
        %v2747 = vmul.f32 1.0, %v2746
        %v2748 = vrcp.pop %v2723
        %v2749 = vmul.f32 1.0, %v2748
        %v2750 = vrcp.pop %v2724
        %v2751 = vmul.f32 1.0, %v2750
        %v2752 = vrcp.pop %v2725
        %v2753 = vmul.f32 1.0, %v2752
        %v2754 = vrcp.pop %v2726
        %v2755 = vmul.f32 1.0, %v2754
        %v2756 = vrcp.pop %v2727
        %v2757 = vmul.f32 1.0, %v2756
        %v2758 = vrcp.pop %v2728
        %v2759 = vmul.f32 1.0, %v2758
        %v2760 = vrcp.pop %v2729
        %v2761 = vmul.f32 1.0, %v2760
        %v2762 = vmul.f32 %v2379, %v2731
        %v2763 = vmul.f32 %v2382, %v2733
        %v2764 = vmul.f32 %v2387, %v2735
        %v2765 = vmul.f32 %v2390, %v2737
        %v2766 = vmul.f32 %v2395, %v2739
        %v2767 = vmul.f32 %v2398, %v2741
        %v2768 = vmul.f32 %v2403, %v2743
        %v2769 = vmul.f32 %v2406, %v2745
        %v2770 = vmul.f32 %v2411, %v2747
        %v2771 = vmul.f32 %v2414, %v2749
        %v2772 = vmul.f32 %v2419, %v2751
        %v2773 = vmul.f32 %v2422, %v2753
        %v2774 = vmul.f32 %v2427, %v2755
        %v2775 = vmul.f32 %v2430, %v2757
        %v2776 = vmul.f32 %v2435, %v2759
        %v2777 = vmul.f32 %v2438, %v2761
        %v2778 = vmul.f32 %v2762, %v2604
        %v2779 = vmul.f32 %v2763, %v2607
        %v2780 = vmul.f32 %v2764, %v2612
        %v2781 = vmul.f32 %v2765, %v2615
        %v2782 = vmul.f32 %v2766, %v2620
        %v2783 = vmul.f32 %v2767, %v2623
        %v2784 = vmul.f32 %v2768, %v2628
        %v2785 = vmul.f32 %v2769, %v2631
        %v2786 = vmul.f32 %v2770, %v2636
        %v2787 = vmul.f32 %v2771, %v2639
        %v2788 = vmul.f32 %v2772, %v2644
        %v2789 = vmul.f32 %v2773, %v2647
        %v2790 = vmul.f32 %v2774, %v2652
        %v2791 = vmul.f32 %v2775, %v2655
        %v2792 = vmul.f32 %v2776, %v2660
        %v2793 = vmul.f32 %v2777, %v2663
        %v2794 = vpack.c.bf16 %v2779, %v2778
        %v2795 = vpack.c.bf16 %v2781, %v2780
        %v2796 = vpack.c.bf16 %v2783, %v2782
        %v2797 = vpack.c.bf16 %v2785, %v2784
        %v2798 = vpack.c.bf16 %v2787, %v2786
        %v2799 = vpack.c.bf16 %v2789, %v2788
        %v2800 = vpack.c.bf16 %v2791, %v2790
        %v2801 = vpack.c.bf16 %v2793, %v2792
        %v2802 = vld [vmem:[%s5 + $0x100] sm:$0xff]
        %v2803 = vld [vmem:[%s5 + $0x108] sm:$0xff]
        %v2804 = vld [vmem:[%s5 + $0x110] sm:$0xff]
        %v2805 = vld [vmem:[%s5 + $0x118] sm:$0xff]
        %v2806 = vld [vmem:[%s5 + $0x120] sm:$0xff]
        %v2807 = vld [vmem:[%s5 + $0x128] sm:$0xff]
        %v2808 = vld [vmem:[%s5 + $0x130] sm:$0xff]
        %v2809 = vld [vmem:[%s5 + $0x138] sm:$0xff]
        %v2810 = vld [vmem:[%s5 + $0x140] sm:$0xff]
        %v2811 = vld [vmem:[%s5 + $0x148] sm:$0xff]
        %v2812 = vld [vmem:[%s5 + $0x150] sm:$0xff]
        %v2813 = vld [vmem:[%s5 + $0x158] sm:$0xff]
        %v2814 = vld [vmem:[%s5 + $0x160] sm:$0xff]
        %v2815 = vld [vmem:[%s5 + $0x168] sm:$0xff]
        %v2816 = vld [vmem:[%s5 + $0x170] sm:$0xff]
        %v2817 = vld [vmem:[%s5 + $0x178] sm:$0xff]
        %v2834 = vunpack.c.l.b16 %v2802
        %v2835 = vunpack.c.h.b16 %v2802
        %v2836 = vunpack.c.l.b16 %v2803
        %v2837 = vunpack.c.h.b16 %v2803
        %v2838 = vunpack.c.l.b16 %v2804
        %v2839 = vunpack.c.h.b16 %v2804
        %v2840 = vunpack.c.l.b16 %v2805
        %v2841 = vunpack.c.h.b16 %v2805
        %v2842 = vunpack.c.l.b16 %v2806
        %v2843 = vunpack.c.h.b16 %v2806
        %v2844 = vunpack.c.l.b16 %v2807
        %v2845 = vunpack.c.h.b16 %v2807
        %v2846 = vunpack.c.l.b16 %v2808
        %v2847 = vunpack.c.h.b16 %v2808
        %v2848 = vunpack.c.l.b16 %v2809
        %v2849 = vunpack.c.h.b16 %v2809
        %v2850 = vunpack.c.l.b16 %v2810
        %v2851 = vunpack.c.h.b16 %v2810
        %v2852 = vunpack.c.l.b16 %v2811
        %v2853 = vunpack.c.h.b16 %v2811
        %v2854 = vunpack.c.l.b16 %v2812
        %v2855 = vunpack.c.h.b16 %v2812
        %v2856 = vunpack.c.l.b16 %v2813
        %v2857 = vunpack.c.h.b16 %v2813
        %v2858 = vunpack.c.l.b16 %v2814
        %v2859 = vunpack.c.h.b16 %v2814
        %v2860 = vunpack.c.l.b16 %v2815
        %v2861 = vunpack.c.h.b16 %v2815
        %v2862 = vunpack.c.l.b16 %v2816
        %v2863 = vunpack.c.h.b16 %v2816
        %v2864 = vunpack.c.l.b16 %v2817
        %v2865 = vunpack.c.h.b16 %v2817
        %v2866 = vpack.c.b16 %v2836, %v2834
        %v2867 = vpack.c.b16 %v2837, %v2835
        %v2868 = vpack.c.b16 %v2840, %v2838
        %v2869 = vpack.c.b16 %v2841, %v2839
        %v2870 = vpack.c.b16 %v2844, %v2842
        %v2871 = vpack.c.b16 %v2845, %v2843
        %v2872 = vpack.c.b16 %v2848, %v2846
        %v2873 = vpack.c.b16 %v2849, %v2847
        %v2874 = vpack.c.b16 %v2852, %v2850
        %v2875 = vpack.c.b16 %v2853, %v2851
        %v2876 = vpack.c.b16 %v2856, %v2854
        %v2877 = vpack.c.b16 %v2857, %v2855
        %v2878 = vpack.c.b16 %v2860, %v2858
        %v2879 = vpack.c.b16 %v2861, %v2859
        %v2880 = vpack.c.b16 %v2864, %v2862
        %v2881 = vpack.c.b16 %v2865, %v2863
        %2898 = vmatprep.subr.bf16.mxu0 %v2867
        %2899 = vmatpush1.bf16.msra.mxu0 %v2866
        %2900 = vmatprep.subr.bf16.mxu0 %v2869
        %2901 = vmatpush1.bf16.msra.mxu0 %v2868
        %2902 = vmatprep.subr.bf16.mxu0 %v2871
        %2903 = vmatpush1.bf16.msra.mxu0 %v2870
        %2904 = vmatprep.subr.bf16.mxu0 %v2873
        %2905 = vmatpush1.bf16.msra.mxu0 %v2872
        %2906 = vmatprep.subr.bf16.mxu0 %v2875
        %2907 = vmatpush1.bf16.msra.mxu0 %v2874
        %2908 = vmatprep.subr.bf16.mxu0 %v2877
        %2909 = vmatpush1.bf16.msra.mxu0 %v2876
        %2910 = vmatprep.subr.bf16.mxu0 %v2879
        %2911 = vmatpush1.bf16.msra.mxu0 %v2878
        %2912 = vmatprep.subr.bf16.mxu0 %v2881
        %2913 = vmatpush1.bf16.msra.mxu0 %v2880
        %2914 = vmatprep.subr.bf16.mxu0 0
        %2915 = vmatpush1.bf16.msra.mxu0 0
        %2916 = vmatprep.subr.bf16.mxu0 0
        %2917 = vmatpush1.bf16.msra.mxu0 0
        %2918 = vmatprep.subr.bf16.mxu0 0
        %2919 = vmatpush1.bf16.msra.mxu0 0
        %2920 = vmatprep.subr.bf16.mxu0 0
        %2921 = vmatpush1.bf16.msra.mxu0 0
        %2922 = vmatprep.subr.bf16.mxu0 0
        %2923 = vmatpush1.bf16.msra.mxu0 0
        %2924 = vmatprep.subr.bf16.mxu0 0
        %2925 = vmatpush1.bf16.msra.mxu0 0
        %2926 = vmatprep.subr.bf16.mxu0 0
        %2927 = vmatpush1.bf16.msra.mxu0 0
        %2928 = vmatprep.subr.bf16.mxu0 0
        %2929 = vmatpush1.bf16.msra.mxu0 0
        %2930 = vmatprep.mubr.bf16.mxu0 0
        %2931 = vmatmul.mubr.bf16.gmra.mrb[0].mxu0 %v2794
        %v2932 = vpop.f32.mrb[0].mxu0
        %v2933 = vadd.f32 0.0, %v2932
        %v2934 = vpop.f32.mrb[0].mxu0
        %v2935 = vadd.f32 0.0, %v2934
        %v2936 = vpop.f32.mrb[0].mxu0
        %v2937 = vadd.f32 0.0, %v2936
        %v2938 = vpop.f32.mrb[0].mxu0
        %v2939 = vadd.f32 0.0, %v2938
        %2940 = vmatprep.mubr.bf16.mxu0 0
        %2941 = vmatmul.mubr.bf16.gmra.mrb[0].mxu0 %v2795
        %v2942 = vpop.f32.mrb[0].mxu0
        %v2943 = vadd.f32 0.0, %v2942
        %v2944 = vpop.f32.mrb[0].mxu0
        %v2945 = vadd.f32 0.0, %v2944
        %v2946 = vpop.f32.mrb[0].mxu0
        %v2947 = vadd.f32 0.0, %v2946
        %v2948 = vpop.f32.mrb[0].mxu0
        %v2949 = vadd.f32 0.0, %v2948
        %2950 = vmatprep.mubr.bf16.mxu0 0
        %2951 = vmatmul.mubr.bf16.gmra.mrb[0].mxu0 %v2796
        %v2952 = vpop.f32.mrb[0].mxu0
        %v2953 = vadd.f32 0.0, %v2952
        %v2954 = vpop.f32.mrb[0].mxu0
        %v2955 = vadd.f32 0.0, %v2954
        %v2956 = vpop.f32.mrb[0].mxu0
        %v2957 = vadd.f32 0.0, %v2956
        %v2958 = vpop.f32.mrb[0].mxu0
        %v2959 = vadd.f32 0.0, %v2958
        %2960 = vmatprep.mubr.bf16.mxu0 0
        %2961 = vmatmul.mubr.bf16.gmra.mrb[0].mxu0 %v2797
        %v2962 = vpop.f32.mrb[0].mxu0
        %v2963 = vadd.f32 0.0, %v2962
        %v2964 = vpop.f32.mrb[0].mxu0
        %v2965 = vadd.f32 0.0, %v2964
        %v2966 = vpop.f32.mrb[0].mxu0
        %v2967 = vadd.f32 0.0, %v2966
        %v2968 = vpop.f32.mrb[0].mxu0
        %v2969 = vadd.f32 0.0, %v2968
        %2970 = vmatprep.mubr.bf16.mxu0 0
        %2971 = vmatmul.mubr.bf16.gmra.mrb[0].mxu0 %v2798
        %v2972 = vpop.f32.mrb[0].mxu0
        %v2973 = vadd.f32 0.0, %v2972
        %v2974 = vpop.f32.mrb[0].mxu0
        %v2975 = vadd.f32 0.0, %v2974
        %v2976 = vpop.f32.mrb[0].mxu0
        %v2977 = vadd.f32 0.0, %v2976
        %v2978 = vpop.f32.mrb[0].mxu0
        %v2979 = vadd.f32 0.0, %v2978
        %2980 = vmatprep.mubr.bf16.mxu0 0
        %2981 = vmatmul.mubr.bf16.gmra.mrb[0].mxu0 %v2799
        %v2982 = vpop.f32.mrb[0].mxu0
        %v2983 = vadd.f32 0.0, %v2982
        %v2984 = vpop.f32.mrb[0].mxu0
        %v2985 = vadd.f32 0.0, %v2984
        %v2986 = vpop.f32.mrb[0].mxu0
        %v2987 = vadd.f32 0.0, %v2986
        %v2988 = vpop.f32.mrb[0].mxu0
        %v2989 = vadd.f32 0.0, %v2988
        %2990 = vmatprep.mubr.bf16.mxu0 0
        %2991 = vmatmul.mubr.bf16.gmra.mrb[0].mxu0 %v2800
        %v2992 = vpop.f32.mrb[0].mxu0
        %v2993 = vadd.f32 0.0, %v2992
        %v2994 = vpop.f32.mrb[0].mxu0
        %v2995 = vadd.f32 0.0, %v2994
        %v2996 = vpop.f32.mrb[0].mxu0
        %v2997 = vadd.f32 0.0, %v2996
        %v2998 = vpop.f32.mrb[0].mxu0
        %v2999 = vadd.f32 0.0, %v2998
        %3000 = vmatprep.mubr.bf16.mxu0 0
        %3001 = vmatmul.mubr.bf16.gmra.mrb[0].mxu0 %v2801
        %v3002 = vpop.f32.mrb[0].mxu0
        %v3003 = vadd.f32 0.0, %v3002
        %v3004 = vpop.f32.mrb[0].mxu0
        %v3005 = vadd.f32 0.0, %v3004
        %v3006 = vpop.f32.mrb[0].mxu0
        %v3007 = vadd.f32 0.0, %v3006
        %v3008 = vpop.f32.mrb[0].mxu0
        %v3009 = vadd.f32 0.0, %v3008
        %3010 = vdwg.mxu0
        %v3011 = vadd.f32 %v2138, %v2933
        %v3012 = vadd.f32 %v2140, %v2935
        %v3013 = vadd.f32 %v2142, %v2937
        %v3014 = vadd.f32 %v2144, %v2939
        %v3015 = vadd.f32 %v2148, %v2943
        %v3016 = vadd.f32 %v2150, %v2945
        %v3017 = vadd.f32 %v2152, %v2947
        %v3018 = vadd.f32 %v2154, %v2949
        %v3019 = vadd.f32 %v2158, %v2953
        %v3020 = vadd.f32 %v2160, %v2955
        %v3021 = vadd.f32 %v2162, %v2957
        %v3022 = vadd.f32 %v2164, %v2959
        %v3023 = vadd.f32 %v2168, %v2963
        %v3024 = vadd.f32 %v2170, %v2965
        %v3025 = vadd.f32 %v2172, %v2967
        %v3026 = vadd.f32 %v2174, %v2969
        %v3027 = vadd.f32 %v2178, %v2973
        %v3028 = vadd.f32 %v2180, %v2975
        %v3029 = vadd.f32 %v2182, %v2977
        %v3030 = vadd.f32 %v2184, %v2979
        %v3031 = vadd.f32 %v2188, %v2983
        %v3032 = vadd.f32 %v2190, %v2985
        %v3033 = vadd.f32 %v2192, %v2987
        %v3034 = vadd.f32 %v2194, %v2989
        %v3035 = vadd.f32 %v2198, %v2993
        %v3036 = vadd.f32 %v2200, %v2995
        %v3037 = vadd.f32 %v2202, %v2997
        %v3038 = vadd.f32 %v2204, %v2999
        %v3039 = vadd.f32 %v2208, %v3003
        %v3040 = vadd.f32 %v2210, %v3005
        %v3041 = vadd.f32 %v2212, %v3007
        %v3042 = vadd.f32 %v2214, %v3009
        %v3043 = vld [vmem:[%s3 + $0xc] sm:$0xf]
        %v3044 = vld [vmem:[%s3 + $0x1c] sm:$0xf]
        %v3045 = vld [vmem:[%s3 + $0x2c] sm:$0xf]
        %v3046 = vld [vmem:[%s3 + $0x3c] sm:$0xf]
        %v3047 = vld [vmem:[%s3 + $0x4c] sm:$0xf]
        %v3048 = vld [vmem:[%s3 + $0x5c] sm:$0xf]
        %v3049 = vld [vmem:[%s3 + $0x6c] sm:$0xf]
        %v3050 = vld [vmem:[%s3 + $0x7c] sm:$0xf]
        %v3051 = vld [vmem:[%s3 + $0x8c] sm:$0xf]
        %v3052 = vld [vmem:[%s3 + $0x9c] sm:$0xf]
        %v3053 = vld [vmem:[%s3 + $0xac] sm:$0xf]
        %v3054 = vld [vmem:[%s3 + $0xbc] sm:$0xf]
        %v3055 = vld [vmem:[%s3 + $0xcc] sm:$0xf]
        %v3056 = vld [vmem:[%s3 + $0xdc] sm:$0xf]
        %v3057 = vld [vmem:[%s3 + $0xec] sm:$0xf]
        %v3058 = vld [vmem:[%s3 + $0xfc] sm:$0xf]
        %v3059 = vld [vmem:[%s3 + $0x10c] sm:$0xf]
        %v3060 = vld [vmem:[%s3 + $0x11c] sm:$0xf]
        %v3061 = vld [vmem:[%s3 + $0x12c] sm:$0xf]
        %v3062 = vld [vmem:[%s3 + $0x13c] sm:$0xf]
        %v3063 = vld [vmem:[%s3 + $0x14c] sm:$0xf]
        %v3064 = vld [vmem:[%s3 + $0x15c] sm:$0xf]
        %v3065 = vld [vmem:[%s3 + $0x16c] sm:$0xf]
        %v3066 = vld [vmem:[%s3 + $0x17c] sm:$0xf]
        %v3067 = vld [vmem:[%s3 + $0x18c] sm:$0xf]
        %v3068 = vld [vmem:[%s3 + $0x19c] sm:$0xf]
        %v3069 = vld [vmem:[%s3 + $0x1ac] sm:$0xf]
        %v3070 = vld [vmem:[%s3 + $0x1bc] sm:$0xf]
        %v3071 = vld [vmem:[%s3 + $0x1cc] sm:$0xf]
        %v3072 = vld [vmem:[%s3 + $0x1dc] sm:$0xf]
        %v3073 = vld [vmem:[%s3 + $0x1ec] sm:$0xf]
        %v3074 = vld [vmem:[%s3 + $0x1fc] sm:$0xf]
        %v3107 = vunpack.c.l.b16 %v3043
        %v3108 = vunpack.c.l.b16 %v3044
        %v3109 = vunpack.c.l.b16 %v3045
        %v3110 = vunpack.c.l.b16 %v3046
        %v3111 = vunpack.c.l.b16 %v3047
        %v3112 = vunpack.c.l.b16 %v3048
        %v3113 = vunpack.c.l.b16 %v3049
        %v3114 = vunpack.c.l.b16 %v3050
        %v3115 = vunpack.c.l.b16 %v3051
        %v3116 = vunpack.c.l.b16 %v3052
        %v3117 = vunpack.c.l.b16 %v3053
        %v3118 = vunpack.c.l.b16 %v3054
        %v3119 = vunpack.c.l.b16 %v3055
        %v3120 = vunpack.c.l.b16 %v3056
        %v3121 = vunpack.c.l.b16 %v3057
        %v3122 = vunpack.c.l.b16 %v3058
        %v3123 = vunpack.c.l.b16 %v3059
        %v3124 = vunpack.c.l.b16 %v3060
        %v3125 = vunpack.c.l.b16 %v3061
        %v3126 = vunpack.c.l.b16 %v3062
        %v3127 = vunpack.c.l.b16 %v3063
        %v3128 = vunpack.c.l.b16 %v3064
        %v3129 = vunpack.c.l.b16 %v3065
        %v3130 = vunpack.c.l.b16 %v3066
        %v3131 = vunpack.c.l.b16 %v3067
        %v3132 = vunpack.c.l.b16 %v3068
        %v3133 = vunpack.c.l.b16 %v3069
        %v3134 = vunpack.c.l.b16 %v3070
        %v3135 = vunpack.c.l.b16 %v3071
        %v3136 = vunpack.c.l.b16 %v3072
        %v3137 = vunpack.c.l.b16 %v3073
        %v3138 = vunpack.c.l.b16 %v3074
        %v3139 = vpack.c.b16 %v3108, %v3107
        %v3140 = vpack.c.b16 %v3110, %v3109
        %v3141 = vpack.c.b16 %v3112, %v3111
        %v3142 = vpack.c.b16 %v3114, %v3113
        %v3143 = vpack.c.b16 %v3116, %v3115
        %v3144 = vpack.c.b16 %v3118, %v3117
        %v3145 = vpack.c.b16 %v3120, %v3119
        %v3146 = vpack.c.b16 %v3122, %v3121
        %v3147 = vpack.c.b16 %v3124, %v3123
        %v3148 = vpack.c.b16 %v3126, %v3125
        %v3149 = vpack.c.b16 %v3128, %v3127
        %v3150 = vpack.c.b16 %v3130, %v3129
        %v3151 = vpack.c.b16 %v3132, %v3131
        %v3152 = vpack.c.b16 %v3134, %v3133
        %v3153 = vpack.c.b16 %v3136, %v3135
        %v3154 = vpack.c.b16 %v3138, %v3137
        %3171 = vmatprep.subr.bf16.mxu0 0
        %3172 = vmatpush1.bf16.msra.mxu0 %v3139
        %3173 = vmatprep.subr.bf16.mxu0 0
        %3174 = vmatpush1.bf16.msra.mxu0 %v3140
        %3175 = vmatprep.subr.bf16.mxu0 0
        %3176 = vmatpush1.bf16.msra.mxu0 %v3141
        %3177 = vmatprep.subr.bf16.mxu0 0
        %3178 = vmatpush1.bf16.msra.mxu0 %v3142
        %3179 = vmatprep.subr.bf16.mxu0 0
        %3180 = vmatpush1.bf16.msra.mxu0 %v3143
        %3181 = vmatprep.subr.bf16.mxu0 0
        %3182 = vmatpush1.bf16.msra.mxu0 %v3144
        %3183 = vmatprep.subr.bf16.mxu0 0
        %3184 = vmatpush1.bf16.msra.mxu0 %v3145
        %3185 = vmatprep.subr.bf16.mxu0 0
        %3186 = vmatpush1.bf16.msra.mxu0 %v3146
        %3187 = vmatprep.subr.bf16.mxu0 0
        %3188 = vmatpush1.bf16.msra.mxu0 %v3147
        %3189 = vmatprep.subr.bf16.mxu0 0
        %3190 = vmatpush1.bf16.msra.mxu0 %v3148
        %3191 = vmatprep.subr.bf16.mxu0 0
        %3192 = vmatpush1.bf16.msra.mxu0 %v3149
        %3193 = vmatprep.subr.bf16.mxu0 0
        %3194 = vmatpush1.bf16.msra.mxu0 %v3150
        %3195 = vmatprep.subr.bf16.mxu0 0
        %3196 = vmatpush1.bf16.msra.mxu0 %v3151
        %3197 = vmatprep.subr.bf16.mxu0 0
        %3198 = vmatpush1.bf16.msra.mxu0 %v3152
        %3199 = vmatprep.subr.bf16.mxu0 0
        %3200 = vmatpush1.bf16.msra.mxu0 %v3153
        %3201 = vmatprep.subr.bf16.mxu0 0
        %3202 = vmatpush1.bf16.msra.mxu0 %v3154
        %3203 = vmatprep.mubr.bf16.mxu0 %v611
        %3204 = vmatmul.mubr.bf16.gmra.mrb[0].mxu0 %v610
        %v3205 = vpop.f32.mrb[0].mxu0
        %v3206 = vadd.f32 0.0, %v3205
        %v3207 = vpop.f32.mrb[0].mxu0
        %v3208 = vpop.f32.mrb[0].mxu0
        %v3209 = vadd.f32 0.0, %v3208
        %v3210 = vpop.f32.mrb[0].mxu0
        %3211 = vmatprep.mubr.bf16.mxu0 %v613
        %3212 = vmatmul.mubr.bf16.gmra.mrb[0].mxu0 %v612
        %v3213 = vpop.f32.mrb[0].mxu0
        %v3214 = vadd.f32 0.0, %v3213
        %v3215 = vpop.f32.mrb[0].mxu0
        %v3216 = vpop.f32.mrb[0].mxu0
        %v3217 = vadd.f32 0.0, %v3216
        %v3218 = vpop.f32.mrb[0].mxu0
        %3219 = vmatprep.mubr.bf16.mxu0 %v615
        %3220 = vmatmul.mubr.bf16.gmra.mrb[0].mxu0 %v614
        %v3221 = vpop.f32.mrb[0].mxu0
        %v3222 = vadd.f32 0.0, %v3221
        %v3223 = vpop.f32.mrb[0].mxu0
        %v3224 = vpop.f32.mrb[0].mxu0
        %v3225 = vadd.f32 0.0, %v3224
        %v3226 = vpop.f32.mrb[0].mxu0
        %3227 = vmatprep.mubr.bf16.mxu0 %v617
        %3228 = vmatmul.mubr.bf16.gmra.mrb[0].mxu0 %v616
        %v3229 = vpop.f32.mrb[0].mxu0
        %v3230 = vadd.f32 0.0, %v3229
        %v3231 = vpop.f32.mrb[0].mxu0
        %v3232 = vpop.f32.mrb[0].mxu0
        %v3233 = vadd.f32 0.0, %v3232
        %v3234 = vpop.f32.mrb[0].mxu0
        %3235 = vmatprep.mubr.bf16.mxu0 %v619
        %3236 = vmatmul.mubr.bf16.gmra.mrb[0].mxu0 %v618
        %v3237 = vpop.f32.mrb[0].mxu0
        %v3238 = vadd.f32 0.0, %v3237
        %v3239 = vpop.f32.mrb[0].mxu0
        %v3240 = vpop.f32.mrb[0].mxu0
        %v3241 = vadd.f32 0.0, %v3240
        %v3242 = vpop.f32.mrb[0].mxu0
        %3243 = vmatprep.mubr.bf16.mxu0 %v621
        %3244 = vmatmul.mubr.bf16.gmra.mrb[0].mxu0 %v620
        %v3245 = vpop.f32.mrb[0].mxu0
        %v3246 = vadd.f32 0.0, %v3245
        %v3247 = vpop.f32.mrb[0].mxu0
        %v3248 = vpop.f32.mrb[0].mxu0
        %v3249 = vadd.f32 0.0, %v3248
        %v3250 = vpop.f32.mrb[0].mxu0
        %3251 = vmatprep.mubr.bf16.mxu0 %v623
        %3252 = vmatmul.mubr.bf16.gmra.mrb[0].mxu0 %v622
        %v3253 = vpop.f32.mrb[0].mxu0
        %v3254 = vadd.f32 0.0, %v3253
        %v3255 = vpop.f32.mrb[0].mxu0
        %v3256 = vpop.f32.mrb[0].mxu0
        %v3257 = vadd.f32 0.0, %v3256
        %v3258 = vpop.f32.mrb[0].mxu0
        %3259 = vmatprep.mubr.bf16.mxu0 %v625
        %3260 = vmatmul.mubr.bf16.gmra.mrb[0].mxu0 %v624
        %v3261 = vpop.f32.mrb[0].mxu0
        %v3262 = vadd.f32 0.0, %v3261
        %v3263 = vpop.f32.mrb[0].mxu0
        %v3264 = vpop.f32.mrb[0].mxu0
        %v3265 = vadd.f32 0.0, %v3264
        %v3266 = vpop.f32.mrb[0].mxu0
        %3267 = vdwg.mxu0
        %v3268 = vld [vmem:[%s4 + $0xc] sm:$0xf]
        %v3269 = vld [vmem:[%s4 + $0x1c] sm:$0xf]
        %v3270 = vld [vmem:[%s4 + $0x2c] sm:$0xf]
        %v3271 = vld [vmem:[%s4 + $0x3c] sm:$0xf]
        %v3272 = vld [vmem:[%s4 + $0x4c] sm:$0xf]
        %v3273 = vld [vmem:[%s4 + $0x5c] sm:$0xf]
        %v3274 = vld [vmem:[%s4 + $0x6c] sm:$0xf]
        %v3275 = vld [vmem:[%s4 + $0x7c] sm:$0xf]
        %v3276 = vld [vmem:[%s4 + $0x8c] sm:$0xf]
        %v3277 = vld [vmem:[%s4 + $0x9c] sm:$0xf]
        %v3278 = vld [vmem:[%s4 + $0xac] sm:$0xf]
        %v3279 = vld [vmem:[%s4 + $0xbc] sm:$0xf]
        %v3280 = vld [vmem:[%s4 + $0xcc] sm:$0xf]
        %v3281 = vld [vmem:[%s4 + $0xdc] sm:$0xf]
        %v3282 = vld [vmem:[%s4 + $0xec] sm:$0xf]
        %v3283 = vld [vmem:[%s4 + $0xfc] sm:$0xf]
        %v3284 = vld [vmem:[%s4 + $0x10c] sm:$0xf]
        %v3285 = vld [vmem:[%s4 + $0x11c] sm:$0xf]
        %v3286 = vld [vmem:[%s4 + $0x12c] sm:$0xf]
        %v3287 = vld [vmem:[%s4 + $0x13c] sm:$0xf]
        %v3288 = vld [vmem:[%s4 + $0x14c] sm:$0xf]
        %v3289 = vld [vmem:[%s4 + $0x15c] sm:$0xf]
        %v3290 = vld [vmem:[%s4 + $0x16c] sm:$0xf]
        %v3291 = vld [vmem:[%s4 + $0x17c] sm:$0xf]
        %v3292 = vld [vmem:[%s4 + $0x18c] sm:$0xf]
        %v3293 = vld [vmem:[%s4 + $0x19c] sm:$0xf]
        %v3294 = vld [vmem:[%s4 + $0x1ac] sm:$0xf]
        %v3295 = vld [vmem:[%s4 + $0x1bc] sm:$0xf]
        %v3296 = vld [vmem:[%s4 + $0x1cc] sm:$0xf]
        %v3297 = vld [vmem:[%s4 + $0x1dc] sm:$0xf]
        %v3298 = vld [vmem:[%s4 + $0x1ec] sm:$0xf]
        %v3299 = vld [vmem:[%s4 + $0x1fc] sm:$0xf]
        %v3332 = vunpack.c.l.b16 %v3268
        %v3333 = vunpack.c.l.b16 %v3269
        %v3334 = vunpack.c.l.b16 %v3270
        %v3335 = vunpack.c.l.b16 %v3271
        %v3336 = vunpack.c.l.b16 %v3272
        %v3337 = vunpack.c.l.b16 %v3273
        %v3338 = vunpack.c.l.b16 %v3274
        %v3339 = vunpack.c.l.b16 %v3275
        %v3340 = vunpack.c.l.b16 %v3276
        %v3341 = vunpack.c.l.b16 %v3277
        %v3342 = vunpack.c.l.b16 %v3278
        %v3343 = vunpack.c.l.b16 %v3279
        %v3344 = vunpack.c.l.b16 %v3280
        %v3345 = vunpack.c.l.b16 %v3281
        %v3346 = vunpack.c.l.b16 %v3282
        %v3347 = vunpack.c.l.b16 %v3283
        %v3348 = vunpack.c.l.b16 %v3284
        %v3349 = vunpack.c.l.b16 %v3285
        %v3350 = vunpack.c.l.b16 %v3286
        %v3351 = vunpack.c.l.b16 %v3287
        %v3352 = vunpack.c.l.b16 %v3288
        %v3353 = vunpack.c.l.b16 %v3289
        %v3354 = vunpack.c.l.b16 %v3290
        %v3355 = vunpack.c.l.b16 %v3291
        %v3356 = vunpack.c.l.b16 %v3292
        %v3357 = vunpack.c.l.b16 %v3293
        %v3358 = vunpack.c.l.b16 %v3294
        %v3359 = vunpack.c.l.b16 %v3295
        %v3360 = vunpack.c.l.b16 %v3296
        %v3361 = vunpack.c.l.b16 %v3297
        %v3362 = vunpack.c.l.b16 %v3298
        %v3363 = vunpack.c.l.b16 %v3299
        %v3364 = vpack.c.b16 %v3333, %v3332
        %v3365 = vpack.c.b16 %v3335, %v3334
        %v3366 = vpack.c.b16 %v3337, %v3336
        %v3367 = vpack.c.b16 %v3339, %v3338
        %v3368 = vpack.c.b16 %v3341, %v3340
        %v3369 = vpack.c.b16 %v3343, %v3342
        %v3370 = vpack.c.b16 %v3345, %v3344
        %v3371 = vpack.c.b16 %v3347, %v3346
        %v3372 = vpack.c.b16 %v3349, %v3348
        %v3373 = vpack.c.b16 %v3351, %v3350
        %v3374 = vpack.c.b16 %v3353, %v3352
        %v3375 = vpack.c.b16 %v3355, %v3354
        %v3376 = vpack.c.b16 %v3357, %v3356
        %v3377 = vpack.c.b16 %v3359, %v3358
        %v3378 = vpack.c.b16 %v3361, %v3360
        %v3379 = vpack.c.b16 %v3363, %v3362
        %3396 = vmatprep.subr.bf16.mxu0 0
        %3397 = vmatpush1.bf16.msra.mxu0 %v3364
        %3398 = vmatprep.subr.bf16.mxu0 0
        %3399 = vmatpush1.bf16.msra.mxu0 %v3365
        %3400 = vmatprep.subr.bf16.mxu0 0
        %3401 = vmatpush1.bf16.msra.mxu0 %v3366
        %3402 = vmatprep.subr.bf16.mxu0 0
        %3403 = vmatpush1.bf16.msra.mxu0 %v3367
        %3404 = vmatprep.subr.bf16.mxu0 0
        %3405 = vmatpush1.bf16.msra.mxu0 %v3368
        %3406 = vmatprep.subr.bf16.mxu0 0
        %3407 = vmatpush1.bf16.msra.mxu0 %v3369
        %3408 = vmatprep.subr.bf16.mxu0 0
        %3409 = vmatpush1.bf16.msra.mxu0 %v3370
        %3410 = vmatprep.subr.bf16.mxu0 0
        %3411 = vmatpush1.bf16.msra.mxu0 %v3371
        %3412 = vmatprep.subr.bf16.mxu0 0
        %3413 = vmatpush1.bf16.msra.mxu0 %v3372
        %3414 = vmatprep.subr.bf16.mxu0 0
        %3415 = vmatpush1.bf16.msra.mxu0 %v3373
        %3416 = vmatprep.subr.bf16.mxu0 0
        %3417 = vmatpush1.bf16.msra.mxu0 %v3374
        %3418 = vmatprep.subr.bf16.mxu0 0
        %3419 = vmatpush1.bf16.msra.mxu0 %v3375
        %3420 = vmatprep.subr.bf16.mxu0 0
        %3421 = vmatpush1.bf16.msra.mxu0 %v3376
        %3422 = vmatprep.subr.bf16.mxu0 0
        %3423 = vmatpush1.bf16.msra.mxu0 %v3377
        %3424 = vmatprep.subr.bf16.mxu0 0
        %3425 = vmatpush1.bf16.msra.mxu0 %v3378
        %3426 = vmatprep.subr.bf16.mxu0 0
        %3427 = vmatpush1.bf16.msra.mxu0 %v3379
        %3428 = vmatprep.mubr.bf16.mxu0 %v611
        %3429 = vmatmul.mubr.bf16.gmra.mrb[0].mxu0 %v610
        %v3430 = vpop.f32.mrb[0].mxu0
        %v3431 = vadd.f32 0.0, %v3430
        %v3432 = vpop.f32.mrb[0].mxu0
        %v3433 = vpop.f32.mrb[0].mxu0
        %v3434 = vadd.f32 0.0, %v3433
        %v3435 = vpop.f32.mrb[0].mxu0
        %3436 = vmatprep.mubr.bf16.mxu0 %v613
        %3437 = vmatmul.mubr.bf16.gmra.mrb[0].mxu0 %v612
        %v3438 = vpop.f32.mrb[0].mxu0
        %v3439 = vadd.f32 0.0, %v3438
        %v3440 = vpop.f32.mrb[0].mxu0
        %v3441 = vpop.f32.mrb[0].mxu0
        %v3442 = vadd.f32 0.0, %v3441
        %v3443 = vpop.f32.mrb[0].mxu0
        %3444 = vmatprep.mubr.bf16.mxu0 %v615
        %3445 = vmatmul.mubr.bf16.gmra.mrb[0].mxu0 %v614
        %v3446 = vpop.f32.mrb[0].mxu0
        %v3447 = vadd.f32 0.0, %v3446
        %v3448 = vpop.f32.mrb[0].mxu0
        %v3449 = vpop.f32.mrb[0].mxu0
        %v3450 = vadd.f32 0.0, %v3449
        %v3451 = vpop.f32.mrb[0].mxu0
        %3452 = vmatprep.mubr.bf16.mxu0 %v617
        %3453 = vmatmul.mubr.bf16.gmra.mrb[0].mxu0 %v616
        %v3454 = vpop.f32.mrb[0].mxu0
        %v3455 = vadd.f32 0.0, %v3454
        %v3456 = vpop.f32.mrb[0].mxu0
        %v3457 = vpop.f32.mrb[0].mxu0
        %v3458 = vadd.f32 0.0, %v3457
        %v3459 = vpop.f32.mrb[0].mxu0
        %3460 = vmatprep.mubr.bf16.mxu0 %v619
        %3461 = vmatmul.mubr.bf16.gmra.mrb[0].mxu0 %v618
        %v3462 = vpop.f32.mrb[0].mxu0
        %v3463 = vadd.f32 0.0, %v3462
        %v3464 = vpop.f32.mrb[0].mxu0
        %v3465 = vpop.f32.mrb[0].mxu0
        %v3466 = vadd.f32 0.0, %v3465
        %v3467 = vpop.f32.mrb[0].mxu0
        %3468 = vmatprep.mubr.bf16.mxu0 %v621
        %3469 = vmatmul.mubr.bf16.gmra.mrb[0].mxu0 %v620
        %v3470 = vpop.f32.mrb[0].mxu0
        %v3471 = vadd.f32 0.0, %v3470
        %v3472 = vpop.f32.mrb[0].mxu0
        %v3473 = vpop.f32.mrb[0].mxu0
        %v3474 = vadd.f32 0.0, %v3473
        %v3475 = vpop.f32.mrb[0].mxu0
        %3476 = vmatprep.mubr.bf16.mxu0 %v623
        %3477 = vmatmul.mubr.bf16.gmra.mrb[0].mxu0 %v622
        %v3478 = vpop.f32.mrb[0].mxu0
        %v3479 = vadd.f32 0.0, %v3478
        %v3480 = vpop.f32.mrb[0].mxu0
        %v3481 = vpop.f32.mrb[0].mxu0
        %v3482 = vadd.f32 0.0, %v3481
        %v3483 = vpop.f32.mrb[0].mxu0
        %3484 = vmatprep.mubr.bf16.mxu0 %v625
        %3485 = vmatmul.mubr.bf16.gmra.mrb[0].mxu0 %v624
        %v3486 = vpop.f32.mrb[0].mxu0
        %v3487 = vadd.f32 0.0, %v3486
        %v3488 = vpop.f32.mrb[0].mxu0
        %v3489 = vpop.f32.mrb[0].mxu0
        %v3490 = vadd.f32 0.0, %v3489
        %v3491 = vpop.f32.mrb[0].mxu0
        %3492 = vdwg.mxu0
        %v3493 = vxor.u32 %v3206, 2147483648
        %v3494 = vxor.u32 %v3209, 2147483648
        %v3495 = vxor.u32 %v3214, 2147483648
        %v3496 = vxor.u32 %v3217, 2147483648
        %v3497 = vxor.u32 %v3222, 2147483648
        %v3498 = vxor.u32 %v3225, 2147483648
        %v3499 = vxor.u32 %v3230, 2147483648
        %v3500 = vxor.u32 %v3233, 2147483648
        %v3501 = vxor.u32 %v3238, 2147483648
        %v3502 = vxor.u32 %v3241, 2147483648
        %v3503 = vxor.u32 %v3246, 2147483648
        %v3504 = vxor.u32 %v3249, 2147483648
        %v3505 = vxor.u32 %v3254, 2147483648
        %v3506 = vxor.u32 %v3257, 2147483648
        %v3507 = vxor.u32 %v3262, 2147483648
        %v3508 = vxor.u32 %v3265, 2147483648
        %v3509 = vmul.f32 %v3493, 1.442695
        %v3510 = vpow.pop %v3509
        %v3511 = vmul.f32 %v3494, 1.442695
        %v3512 = vpow.pop %v3511
        %v3513 = vmul.f32 %v3495, 1.442695
        %v3514 = vpow.pop %v3513
        %v3515 = vmul.f32 %v3496, 1.442695
        %v3516 = vpow.pop %v3515
        %v3517 = vmul.f32 %v3497, 1.442695
        %v3518 = vpow.pop %v3517
        %v3519 = vmul.f32 %v3498, 1.442695
        %v3520 = vpow.pop %v3519
        %v3521 = vmul.f32 %v3499, 1.442695
        %v3522 = vpow.pop %v3521
        %v3523 = vmul.f32 %v3500, 1.442695
        %v3524 = vpow.pop %v3523
        %v3525 = vmul.f32 %v3501, 1.442695
        %v3526 = vpow.pop %v3525
        %v3527 = vmul.f32 %v3502, 1.442695
        %v3528 = vpow.pop %v3527
        %v3529 = vmul.f32 %v3503, 1.442695
        %v3530 = vpow.pop %v3529
        %v3531 = vmul.f32 %v3504, 1.442695
        %v3532 = vpow.pop %v3531
        %v3533 = vmul.f32 %v3505, 1.442695
        %v3534 = vpow.pop %v3533
        %v3535 = vmul.f32 %v3506, 1.442695
        %v3536 = vpow.pop %v3535
        %v3537 = vmul.f32 %v3507, 1.442695
        %v3538 = vpow.pop %v3537
        %v3539 = vmul.f32 %v3508, 1.442695
        %v3540 = vpow.pop %v3539
        %v3541 = vadd.f32 %v3510, 1.0
        %v3542 = vadd.f32 %v3512, 1.0
        %v3543 = vadd.f32 %v3514, 1.0
        %v3544 = vadd.f32 %v3516, 1.0
        %v3545 = vadd.f32 %v3518, 1.0
        %v3546 = vadd.f32 %v3520, 1.0
        %v3547 = vadd.f32 %v3522, 1.0
        %v3548 = vadd.f32 %v3524, 1.0
        %v3549 = vadd.f32 %v3526, 1.0
        %v3550 = vadd.f32 %v3528, 1.0
        %v3551 = vadd.f32 %v3530, 1.0
        %v3552 = vadd.f32 %v3532, 1.0
        %v3553 = vadd.f32 %v3534, 1.0
        %v3554 = vadd.f32 %v3536, 1.0
        %v3555 = vadd.f32 %v3538, 1.0
        %v3556 = vadd.f32 %v3540, 1.0
        %v3557 = vrcp.pop %v3541
        %v3558 = vmul.f32 1.0, %v3557
        %v3559 = vrcp.pop %v3542
        %v3560 = vmul.f32 1.0, %v3559
        %v3561 = vrcp.pop %v3543
        %v3562 = vmul.f32 1.0, %v3561
        %v3563 = vrcp.pop %v3544
        %v3564 = vmul.f32 1.0, %v3563
        %v3565 = vrcp.pop %v3545
        %v3566 = vmul.f32 1.0, %v3565
        %v3567 = vrcp.pop %v3546
        %v3568 = vmul.f32 1.0, %v3567
        %v3569 = vrcp.pop %v3547
        %v3570 = vmul.f32 1.0, %v3569
        %v3571 = vrcp.pop %v3548
        %v3572 = vmul.f32 1.0, %v3571
        %v3573 = vrcp.pop %v3549
        %v3574 = vmul.f32 1.0, %v3573
        %v3575 = vrcp.pop %v3550
        %v3576 = vmul.f32 1.0, %v3575
        %v3577 = vrcp.pop %v3551
        %v3578 = vmul.f32 1.0, %v3577
        %v3579 = vrcp.pop %v3552
        %v3580 = vmul.f32 1.0, %v3579
        %v3581 = vrcp.pop %v3553
        %v3582 = vmul.f32 1.0, %v3581
        %v3583 = vrcp.pop %v3554
        %v3584 = vmul.f32 1.0, %v3583
        %v3585 = vrcp.pop %v3555
        %v3586 = vmul.f32 1.0, %v3585
        %v3587 = vrcp.pop %v3556
        %v3588 = vmul.f32 1.0, %v3587
        %v3589 = vmul.f32 %v3206, %v3558
        %v3590 = vmul.f32 %v3209, %v3560
        %v3591 = vmul.f32 %v3214, %v3562
        %v3592 = vmul.f32 %v3217, %v3564
        %v3593 = vmul.f32 %v3222, %v3566
        %v3594 = vmul.f32 %v3225, %v3568
        %v3595 = vmul.f32 %v3230, %v3570
        %v3596 = vmul.f32 %v3233, %v3572
        %v3597 = vmul.f32 %v3238, %v3574
        %v3598 = vmul.f32 %v3241, %v3576
        %v3599 = vmul.f32 %v3246, %v3578
        %v3600 = vmul.f32 %v3249, %v3580
        %v3601 = vmul.f32 %v3254, %v3582
        %v3602 = vmul.f32 %v3257, %v3584
        %v3603 = vmul.f32 %v3262, %v3586
        %v3604 = vmul.f32 %v3265, %v3588
        %v3605 = vmul.f32 %v3589, %v3431
        %v3606 = vmul.f32 %v3590, %v3434
        %v3607 = vmul.f32 %v3591, %v3439
        %v3608 = vmul.f32 %v3592, %v3442
        %v3609 = vmul.f32 %v3593, %v3447
        %v3610 = vmul.f32 %v3594, %v3450
        %v3611 = vmul.f32 %v3595, %v3455
        %v3612 = vmul.f32 %v3596, %v3458
        %v3613 = vmul.f32 %v3597, %v3463
        %v3614 = vmul.f32 %v3598, %v3466
        %v3615 = vmul.f32 %v3599, %v3471
        %v3616 = vmul.f32 %v3600, %v3474
        %v3617 = vmul.f32 %v3601, %v3479
        %v3618 = vmul.f32 %v3602, %v3482
        %v3619 = vmul.f32 %v3603, %v3487
        %v3620 = vmul.f32 %v3604, %v3490
        %v3621 = vpack.c.bf16 %v3606, %v3605
        %v3622 = vpack.c.bf16 %v3608, %v3607
        %v3623 = vpack.c.bf16 %v3610, %v3609
        %v3624 = vpack.c.bf16 %v3612, %v3611
        %v3625 = vpack.c.bf16 %v3614, %v3613
        %v3626 = vpack.c.bf16 %v3616, %v3615
        %v3627 = vpack.c.bf16 %v3618, %v3617
        %v3628 = vpack.c.bf16 %v3620, %v3619
        %v3629 = vld [vmem:[%s5 + $0x180] sm:$0xff]
        %v3630 = vld [vmem:[%s5 + $0x188] sm:$0xff]
        %v3631 = vld [vmem:[%s5 + $0x190] sm:$0xff]
        %v3632 = vld [vmem:[%s5 + $0x198] sm:$0xff]
        %v3633 = vld [vmem:[%s5 + $0x1a0] sm:$0xff]
        %v3634 = vld [vmem:[%s5 + $0x1a8] sm:$0xff]
        %v3635 = vld [vmem:[%s5 + $0x1b0] sm:$0xff]
        %v3636 = vld [vmem:[%s5 + $0x1b8] sm:$0xff]
        %v3637 = vld [vmem:[%s5 + $0x1c0] sm:$0xff]
        %v3638 = vld [vmem:[%s5 + $0x1c8] sm:$0xff]
        %v3639 = vld [vmem:[%s5 + $0x1d0] sm:$0xff]
        %v3640 = vld [vmem:[%s5 + $0x1d8] sm:$0xff]
        %v3641 = vld [vmem:[%s5 + $0x1e0] sm:$0xff]
        %v3642 = vld [vmem:[%s5 + $0x1e8] sm:$0xff]
        %v3643 = vld [vmem:[%s5 + $0x1f0] sm:$0xff]
        %v3644 = vld [vmem:[%s5 + $0x1f8] sm:$0xff]
        %v3661 = vunpack.c.l.b16 %v3629
        %v3662 = vunpack.c.h.b16 %v3629
        %v3663 = vunpack.c.l.b16 %v3630
        %v3664 = vunpack.c.h.b16 %v3630
        %v3665 = vunpack.c.l.b16 %v3631
        %v3666 = vunpack.c.h.b16 %v3631
        %v3667 = vunpack.c.l.b16 %v3632
        %v3668 = vunpack.c.h.b16 %v3632
        %v3669 = vunpack.c.l.b16 %v3633
        %v3670 = vunpack.c.h.b16 %v3633
        %v3671 = vunpack.c.l.b16 %v3634
        %v3672 = vunpack.c.h.b16 %v3634
        %v3673 = vunpack.c.l.b16 %v3635
        %v3674 = vunpack.c.h.b16 %v3635
        %v3675 = vunpack.c.l.b16 %v3636
        %v3676 = vunpack.c.h.b16 %v3636
        %v3677 = vunpack.c.l.b16 %v3637
        %v3678 = vunpack.c.h.b16 %v3637
        %v3679 = vunpack.c.l.b16 %v3638
        %v3680 = vunpack.c.h.b16 %v3638
        %v3681 = vunpack.c.l.b16 %v3639
        %v3682 = vunpack.c.h.b16 %v3639
        %v3683 = vunpack.c.l.b16 %v3640
        %v3684 = vunpack.c.h.b16 %v3640
        %v3685 = vunpack.c.l.b16 %v3641
        %v3686 = vunpack.c.h.b16 %v3641
        %v3687 = vunpack.c.l.b16 %v3642
        %v3688 = vunpack.c.h.b16 %v3642
        %v3689 = vunpack.c.l.b16 %v3643
        %v3690 = vunpack.c.h.b16 %v3643
        %v3691 = vunpack.c.l.b16 %v3644
        %v3692 = vunpack.c.h.b16 %v3644
        %v3693 = vpack.c.b16 %v3663, %v3661
        %v3694 = vpack.c.b16 %v3664, %v3662
        %v3695 = vpack.c.b16 %v3667, %v3665
        %v3696 = vpack.c.b16 %v3668, %v3666
        %v3697 = vpack.c.b16 %v3671, %v3669
        %v3698 = vpack.c.b16 %v3672, %v3670
        %v3699 = vpack.c.b16 %v3675, %v3673
        %v3700 = vpack.c.b16 %v3676, %v3674
        %v3701 = vpack.c.b16 %v3679, %v3677
        %v3702 = vpack.c.b16 %v3680, %v3678
        %v3703 = vpack.c.b16 %v3683, %v3681
        %v3704 = vpack.c.b16 %v3684, %v3682
        %v3705 = vpack.c.b16 %v3687, %v3685
        %v3706 = vpack.c.b16 %v3688, %v3686
        %v3707 = vpack.c.b16 %v3691, %v3689
        %v3708 = vpack.c.b16 %v3692, %v3690
        %3725 = vmatprep.subr.bf16.mxu0 %v3694
        %3726 = vmatpush1.bf16.msra.mxu0 %v3693
        %3727 = vmatprep.subr.bf16.mxu0 %v3696
        %3728 = vmatpush1.bf16.msra.mxu0 %v3695
        %3729 = vmatprep.subr.bf16.mxu0 %v3698
        %3730 = vmatpush1.bf16.msra.mxu0 %v3697
        %3731 = vmatprep.subr.bf16.mxu0 %v3700
        %3732 = vmatpush1.bf16.msra.mxu0 %v3699
        %3733 = vmatprep.subr.bf16.mxu0 %v3702
        %3734 = vmatpush1.bf16.msra.mxu0 %v3701
        %3735 = vmatprep.subr.bf16.mxu0 %v3704
        %3736 = vmatpush1.bf16.msra.mxu0 %v3703
        %3737 = vmatprep.subr.bf16.mxu0 %v3706
        %3738 = vmatpush1.bf16.msra.mxu0 %v3705
        %3739 = vmatprep.subr.bf16.mxu0 %v3708
        %3740 = vmatpush1.bf16.msra.mxu0 %v3707
        %3741 = vmatprep.subr.bf16.mxu0 0
        %3742 = vmatpush1.bf16.msra.mxu0 0
        %3743 = vmatprep.subr.bf16.mxu0 0
        %3744 = vmatpush1.bf16.msra.mxu0 0
        %3745 = vmatprep.subr.bf16.mxu0 0
        %3746 = vmatpush1.bf16.msra.mxu0 0
        %3747 = vmatprep.subr.bf16.mxu0 0
        %3748 = vmatpush1.bf16.msra.mxu0 0
        %3749 = vmatprep.subr.bf16.mxu0 0
        %3750 = vmatpush1.bf16.msra.mxu0 0
        %3751 = vmatprep.subr.bf16.mxu0 0
        %3752 = vmatpush1.bf16.msra.mxu0 0
        %3753 = vmatprep.subr.bf16.mxu0 0
        %3754 = vmatpush1.bf16.msra.mxu0 0
        %3755 = vmatprep.subr.bf16.mxu0 0
        %3756 = vmatpush1.bf16.msra.mxu0 0
        %3757 = vmatprep.mubr.bf16.mxu0 0
        %3758 = vmatmul.mubr.bf16.gmra.mrb[0].mxu0 %v3621
        %v3759 = vpop.f32.mrb[0].mxu0
        %v3760 = vadd.f32 0.0, %v3759
        %v3761 = vpop.f32.mrb[0].mxu0
        %v3762 = vadd.f32 0.0, %v3761
        %v3763 = vpop.f32.mrb[0].mxu0
        %v3764 = vadd.f32 0.0, %v3763
        %v3765 = vpop.f32.mrb[0].mxu0
        %v3766 = vadd.f32 0.0, %v3765
        %3767 = vmatprep.mubr.bf16.mxu0 0
        %3768 = vmatmul.mubr.bf16.gmra.mrb[0].mxu0 %v3622
        %v3769 = vpop.f32.mrb[0].mxu0
        %v3770 = vadd.f32 0.0, %v3769
        %v3771 = vpop.f32.mrb[0].mxu0
        %v3772 = vadd.f32 0.0, %v3771
        %v3773 = vpop.f32.mrb[0].mxu0
        %v3774 = vadd.f32 0.0, %v3773
        %v3775 = vpop.f32.mrb[0].mxu0
        %v3776 = vadd.f32 0.0, %v3775
        %3777 = vmatprep.mubr.bf16.mxu0 0
        %3778 = vmatmul.mubr.bf16.gmra.mrb[0].mxu0 %v3623
        %v3779 = vpop.f32.mrb[0].mxu0
        %v3780 = vadd.f32 0.0, %v3779
        %v3781 = vpop.f32.mrb[0].mxu0
        %v3782 = vadd.f32 0.0, %v3781
        %v3783 = vpop.f32.mrb[0].mxu0
        %v3784 = vadd.f32 0.0, %v3783
        %v3785 = vpop.f32.mrb[0].mxu0
        %v3786 = vadd.f32 0.0, %v3785
        %3787 = vmatprep.mubr.bf16.mxu0 0
        %3788 = vmatmul.mubr.bf16.gmra.mrb[0].mxu0 %v3624
        %v3789 = vpop.f32.mrb[0].mxu0
        %v3790 = vadd.f32 0.0, %v3789
        %v3791 = vpop.f32.mrb[0].mxu0
        %v3792 = vadd.f32 0.0, %v3791
        %v3793 = vpop.f32.mrb[0].mxu0
        %v3794 = vadd.f32 0.0, %v3793
        %v3795 = vpop.f32.mrb[0].mxu0
        %v3796 = vadd.f32 0.0, %v3795
        %3797 = vmatprep.mubr.bf16.mxu0 0
        %3798 = vmatmul.mubr.bf16.gmra.mrb[0].mxu0 %v3625
        %v3799 = vpop.f32.mrb[0].mxu0
        %v3800 = vadd.f32 0.0, %v3799
        %v3801 = vpop.f32.mrb[0].mxu0
        %v3802 = vadd.f32 0.0, %v3801
        %v3803 = vpop.f32.mrb[0].mxu0
        %v3804 = vadd.f32 0.0, %v3803
        %v3805 = vpop.f32.mrb[0].mxu0
        %v3806 = vadd.f32 0.0, %v3805
        %3807 = vmatprep.mubr.bf16.mxu0 0
        %3808 = vmatmul.mubr.bf16.gmra.mrb[0].mxu0 %v3626
        %v3809 = vpop.f32.mrb[0].mxu0
        %v3810 = vadd.f32 0.0, %v3809
        %v3811 = vpop.f32.mrb[0].mxu0
        %v3812 = vadd.f32 0.0, %v3811
        %v3813 = vpop.f32.mrb[0].mxu0
        %v3814 = vadd.f32 0.0, %v3813
        %v3815 = vpop.f32.mrb[0].mxu0
        %v3816 = vadd.f32 0.0, %v3815
        %3817 = vmatprep.mubr.bf16.mxu0 0
        %3818 = vmatmul.mubr.bf16.gmra.mrb[0].mxu0 %v3627
        %v3819 = vpop.f32.mrb[0].mxu0
        %v3820 = vadd.f32 0.0, %v3819
        %v3821 = vpop.f32.mrb[0].mxu0
        %v3822 = vadd.f32 0.0, %v3821
        %v3823 = vpop.f32.mrb[0].mxu0
        %v3824 = vadd.f32 0.0, %v3823
        %v3825 = vpop.f32.mrb[0].mxu0
        %v3826 = vadd.f32 0.0, %v3825
        %3827 = vmatprep.mubr.bf16.mxu0 0
        %3828 = vmatmul.mubr.bf16.gmra.mrb[0].mxu0 %v3628
        %v3829 = vpop.f32.mrb[0].mxu0
        %v3830 = vadd.f32 0.0, %v3829
        %v3831 = vpop.f32.mrb[0].mxu0
        %v3832 = vadd.f32 0.0, %v3831
        %v3833 = vpop.f32.mrb[0].mxu0
        %v3834 = vadd.f32 0.0, %v3833
        %v3835 = vpop.f32.mrb[0].mxu0
        %v3836 = vadd.f32 0.0, %v3835
        %3837 = vdwg.mxu0
        %v3838 = vadd.f32 %v3011, %v3760
        %v3839 = vadd.f32 %v3012, %v3762
        %v3840 = vadd.f32 %v3013, %v3764
        %v3841 = vadd.f32 %v3014, %v3766
        %v3842 = vadd.f32 %v3015, %v3770
        %v3843 = vadd.f32 %v3016, %v3772
        %v3844 = vadd.f32 %v3017, %v3774
        %v3845 = vadd.f32 %v3018, %v3776
        %v3846 = vadd.f32 %v3019, %v3780
        %v3847 = vadd.f32 %v3020, %v3782
        %v3848 = vadd.f32 %v3021, %v3784
        %v3849 = vadd.f32 %v3022, %v3786
        %v3850 = vadd.f32 %v3023, %v3790
        %v3851 = vadd.f32 %v3024, %v3792
        %v3852 = vadd.f32 %v3025, %v3794
        %v3853 = vadd.f32 %v3026, %v3796
        %v3854 = vadd.f32 %v3027, %v3800
        %v3855 = vadd.f32 %v3028, %v3802
        %v3856 = vadd.f32 %v3029, %v3804
        %v3857 = vadd.f32 %v3030, %v3806
        %v3858 = vadd.f32 %v3031, %v3810
        %v3859 = vadd.f32 %v3032, %v3812
        %v3860 = vadd.f32 %v3033, %v3814
        %v3861 = vadd.f32 %v3034, %v3816
        %v3862 = vadd.f32 %v3035, %v3820
        %v3863 = vadd.f32 %v3036, %v3822
        %v3864 = vadd.f32 %v3037, %v3824
        %v3865 = vadd.f32 %v3038, %v3826
        %v3866 = vadd.f32 %v3039, %v3830
        %v3867 = vadd.f32 %v3040, %v3832
        %v3868 = vadd.f32 %v3041, %v3834
        %v3869 = vadd.f32 %v3042, %v3836
        %v3870 = vadd.f32 %v3838, %v373
        %v3871 = vadd.f32 %v3839, %v374
        %v3872 = vadd.f32 %v3840, %v375
        %v3873 = vadd.f32 %v3841, %v376
        %v3874 = vadd.f32 %v3842, %v377
        %v3875 = vadd.f32 %v3843, %v378
        %v3876 = vadd.f32 %v3844, %v379
        %v3877 = vadd.f32 %v3845, %v380
        %v3878 = vadd.f32 %v3846, %v381
        %v3879 = vadd.f32 %v3847, %v382
        %v3880 = vadd.f32 %v3848, %v383
        %v3881 = vadd.f32 %v3849, %v384
        %v3882 = vadd.f32 %v3850, %v385
        %v3883 = vadd.f32 %v3851, %v386
        %v3884 = vadd.f32 %v3852, %v387
        %v3885 = vadd.f32 %v3853, %v388
        %v3886 = vadd.f32 %v3854, %v389
        %v3887 = vadd.f32 %v3855, %v390
        %v3888 = vadd.f32 %v3856, %v391
        %v3889 = vadd.f32 %v3857, %v392
        %v3890 = vadd.f32 %v3858, %v393
        %v3891 = vadd.f32 %v3859, %v394
        %v3892 = vadd.f32 %v3860, %v395
        %v3893 = vadd.f32 %v3861, %v396
        %v3894 = vadd.f32 %v3862, %v397
        %v3895 = vadd.f32 %v3863, %v398
        %v3896 = vadd.f32 %v3864, %v399
        %v3897 = vadd.f32 %v3865, %v400
        %v3898 = vadd.f32 %v3866, %v401
        %v3899 = vadd.f32 %v3867, %v402
        %v3900 = vadd.f32 %v3868, %v403
        %v3901 = vadd.f32 %v3869, %v404
        %v3902 = vmul.f32 %v3870, %v3870
        %v3903 = vmul.f32 %v3871, %v3871
        %v3904 = vmul.f32 %v3872, %v3872
        %v3905 = vmul.f32 %v3873, %v3873
        %v3906 = vmul.f32 %v3874, %v3874
        %v3907 = vmul.f32 %v3875, %v3875
        %v3908 = vmul.f32 %v3876, %v3876
        %v3909 = vmul.f32 %v3877, %v3877
        %v3910 = vmul.f32 %v3878, %v3878
        %v3911 = vmul.f32 %v3879, %v3879
        %v3912 = vmul.f32 %v3880, %v3880
        %v3913 = vmul.f32 %v3881, %v3881
        %v3914 = vmul.f32 %v3882, %v3882
        %v3915 = vmul.f32 %v3883, %v3883
        %v3916 = vmul.f32 %v3884, %v3884
        %v3917 = vmul.f32 %v3885, %v3885
        %v3918 = vmul.f32 %v3886, %v3886
        %v3919 = vmul.f32 %v3887, %v3887
        %v3920 = vmul.f32 %v3888, %v3888
        %v3921 = vmul.f32 %v3889, %v3889
        %v3922 = vmul.f32 %v3890, %v3890
        %v3923 = vmul.f32 %v3891, %v3891
        %v3924 = vmul.f32 %v3892, %v3892
        %v3925 = vmul.f32 %v3893, %v3893
        %v3926 = vmul.f32 %v3894, %v3894
        %v3927 = vmul.f32 %v3895, %v3895
        %v3928 = vmul.f32 %v3896, %v3896
        %v3929 = vmul.f32 %v3897, %v3897
        %v3930 = vmul.f32 %v3898, %v3898
        %v3931 = vmul.f32 %v3899, %v3899
        %v3932 = vmul.f32 %v3900, %v3900
        %v3933 = vmul.f32 %v3901, %v3901
        %v3934 = vadd.f32 %v3902, %v3903
        %3935 = vadd.xlane.f32.xlu0 %v3934
        %v3936 = vpop.xlane.xlu0 %3935
        %v3937 = vadd.f32 %v3904, %v3905
        %3938 = vadd.xlane.f32.xlu0 %v3937
        %v3939 = vpop.xlane.xlu0 %3938
        %v3940 = vadd.f32 %v3906, %v3907
        %3941 = vadd.xlane.f32.xlu0 %v3940
        %v3942 = vpop.xlane.xlu0 %3941
        %v3943 = vadd.f32 %v3908, %v3909
        %3944 = vadd.xlane.f32.xlu0 %v3943
        %v3945 = vpop.xlane.xlu0 %3944
        %v3946 = vadd.f32 %v3910, %v3911
        %3947 = vadd.xlane.f32.xlu0 %v3946
        %v3948 = vpop.xlane.xlu0 %3947
        %v3949 = vadd.f32 %v3912, %v3913
        %3950 = vadd.xlane.f32.xlu0 %v3949
        %v3951 = vpop.xlane.xlu0 %3950
        %v3952 = vadd.f32 %v3914, %v3915
        %3953 = vadd.xlane.f32.xlu0 %v3952
        %v3954 = vpop.xlane.xlu0 %3953
        %v3955 = vadd.f32 %v3916, %v3917
        %3956 = vadd.xlane.f32.xlu0 %v3955
        %v3957 = vpop.xlane.xlu0 %3956
        %v3958 = vadd.f32 %v3918, %v3919
        %3959 = vadd.xlane.f32.xlu0 %v3958
        %v3960 = vpop.xlane.xlu0 %3959
        %v3961 = vadd.f32 %v3920, %v3921
        %3962 = vadd.xlane.f32.xlu0 %v3961
        %v3963 = vpop.xlane.xlu0 %3962
        %v3964 = vadd.f32 %v3922, %v3923
        %3965 = vadd.xlane.f32.xlu0 %v3964
        %v3966 = vpop.xlane.xlu0 %3965
        %v3967 = vadd.f32 %v3924, %v3925
        %3968 = vadd.xlane.f32.xlu0 %v3967
        %v3969 = vpop.xlane.xlu0 %3968
        %v3970 = vadd.f32 %v3926, %v3927
        %3971 = vadd.xlane.f32.xlu0 %v3970
        %v3972 = vpop.xlane.xlu0 %3971
        %v3973 = vadd.f32 %v3928, %v3929
        %3974 = vadd.xlane.f32.xlu0 %v3973
        %v3975 = vpop.xlane.xlu0 %3974
        %v3976 = vadd.f32 %v3930, %v3931
        %3977 = vadd.xlane.f32.xlu0 %v3976
        %v3978 = vpop.xlane.xlu0 %3977
        %v3979 = vadd.f32 %v3932, %v3933
        %3980 = vadd.xlane.f32.xlu0 %v3979
        %v3981 = vpop.xlane.xlu0 %3980
        %v3982 = vmul.f32 %v3936, %v485
        %v3983 = vmul.f32 %v3939, %v485
        %v3984 = vmul.f32 %v3942, %v485
        %v3985 = vmul.f32 %v3945, %v485
        %v3986 = vmul.f32 %v3948, %v485
        %v3987 = vmul.f32 %v3951, %v485
        %v3988 = vmul.f32 %v3954, %v485
        %v3989 = vmul.f32 %v3957, %v485
        %v3990 = vmul.f32 %v3960, %v485
        %v3991 = vmul.f32 %v3963, %v485
        %v3992 = vmul.f32 %v3966, %v485
        %v3993 = vmul.f32 %v3969, %v485
        %v3994 = vmul.f32 %v3972, %v485
        %v3995 = vmul.f32 %v3975, %v485
        %v3996 = vmul.f32 %v3978, %v485
        %v3997 = vmul.f32 %v3981, %v485
        %v3998 = vadd.f32 %v3982, 1e-06
        %v3999 = vadd.f32 %v3983, 1e-06
        %v4000 = vadd.f32 %v3984, 1e-06
        %v4001 = vadd.f32 %v3985, 1e-06
        %v4002 = vadd.f32 %v3986, 1e-06
        %v4003 = vadd.f32 %v3987, 1e-06
        %v4004 = vadd.f32 %v3988, 1e-06
        %v4005 = vadd.f32 %v3989, 1e-06
        %v4006 = vadd.f32 %v3990, 1e-06
        %v4007 = vadd.f32 %v3991, 1e-06
        %v4008 = vadd.f32 %v3992, 1e-06
        %v4009 = vadd.f32 %v3993, 1e-06
        %v4010 = vadd.f32 %v3994, 1e-06
        %v4011 = vadd.f32 %v3995, 1e-06
        %v4012 = vadd.f32 %v3996, 1e-06
        %v4013 = vadd.f32 %v3997, 1e-06
        %v4014 = vrsqrt.pop %v3998
        %v4015 = vrsqrt.pop %v3999
        %v4016 = vrsqrt.pop %v4000
        %v4017 = vrsqrt.pop %v4001
        %v4018 = vrsqrt.pop %v4002
        %v4019 = vrsqrt.pop %v4003
        %v4020 = vrsqrt.pop %v4004
        %v4021 = vrsqrt.pop %v4005
        %v4022 = vrsqrt.pop %v4006
        %v4023 = vrsqrt.pop %v4007
        %v4024 = vrsqrt.pop %v4008
        %v4025 = vrsqrt.pop %v4009
        %v4026 = vrsqrt.pop %v4010
        %v4027 = vrsqrt.pop %v4011
        %v4028 = vrsqrt.pop %v4012
        %v4029 = vrsqrt.pop %v4013
        %v4030 = vmul.f32 %v3870, %v4014
        %v4031 = vmul.f32 %v3871, %v4014
        %v4032 = vmul.f32 %v3872, %v4015
        %v4033 = vmul.f32 %v3873, %v4015
        %v4034 = vmul.f32 %v3874, %v4016
        %v4035 = vmul.f32 %v3875, %v4016
        %v4036 = vmul.f32 %v3876, %v4017
        %v4037 = vmul.f32 %v3877, %v4017
        %v4038 = vmul.f32 %v3878, %v4018
        %v4039 = vmul.f32 %v3879, %v4018
        %v4040 = vmul.f32 %v3880, %v4019
        %v4041 = vmul.f32 %v3881, %v4019
        %v4042 = vmul.f32 %v3882, %v4020
        %v4043 = vmul.f32 %v3883, %v4020
        %v4044 = vmul.f32 %v3884, %v4021
        %v4045 = vmul.f32 %v3885, %v4021
        %v4046 = vmul.f32 %v3886, %v4022
        %v4047 = vmul.f32 %v3887, %v4022
        %v4048 = vmul.f32 %v3888, %v4023
        %v4049 = vmul.f32 %v3889, %v4023
        %v4050 = vmul.f32 %v3890, %v4024
        %v4051 = vmul.f32 %v3891, %v4024
        %v4052 = vmul.f32 %v3892, %v4025
        %v4053 = vmul.f32 %v3893, %v4025
        %v4054 = vmul.f32 %v3894, %v4026
        %v4055 = vmul.f32 %v3895, %v4026
        %v4056 = vmul.f32 %v3896, %v4027
        %v4057 = vmul.f32 %v3897, %v4027
        %v4058 = vmul.f32 %v3898, %v4028
        %v4059 = vmul.f32 %v3899, %v4028
        %v4060 = vmul.f32 %v3900, %v4029
        %v4061 = vmul.f32 %v3901, %v4029
        %v4062 = vld [vmem:[%s6] sm:$0x3]
        %v4064 = vlaneseq
        %v4065 = vshrl.u32 %v4064, 7
        %v4066 = vsub.s32 0, %v4065
        %v4067 = vrot.slane %v4062, %v4066
        %v4068 = vlaneseq
        %v4069 = vshrl.u32 %v4068, 7
        %v4070 = vsub.s32 1, %v4069
        %v4071 = vrot.slane %v4062, %v4070
        %v4074 = vmul.f32 %v4030, %v4067
        %v4075 = vmul.f32 %v4031, %v4071
        %v4076 = vmul.f32 %v4032, %v4067
        %v4077 = vmul.f32 %v4033, %v4071
        %v4078 = vmul.f32 %v4034, %v4067
        %v4079 = vmul.f32 %v4035, %v4071
        %v4080 = vmul.f32 %v4036, %v4067
        %v4081 = vmul.f32 %v4037, %v4071
        %v4082 = vmul.f32 %v4038, %v4067
        %v4083 = vmul.f32 %v4039, %v4071
        %v4084 = vmul.f32 %v4040, %v4067
        %v4085 = vmul.f32 %v4041, %v4071
        %v4086 = vmul.f32 %v4042, %v4067
        %v4087 = vmul.f32 %v4043, %v4071
        %v4088 = vmul.f32 %v4044, %v4067
        %v4089 = vmul.f32 %v4045, %v4071
        %v4090 = vmul.f32 %v4046, %v4067
        %v4091 = vmul.f32 %v4047, %v4071
        %v4092 = vmul.f32 %v4048, %v4067
        %v4093 = vmul.f32 %v4049, %v4071
        %v4094 = vmul.f32 %v4050, %v4067
        %v4095 = vmul.f32 %v4051, %v4071
        %v4096 = vmul.f32 %v4052, %v4067
        %v4097 = vmul.f32 %v4053, %v4071
        %v4098 = vmul.f32 %v4054, %v4067
        %v4099 = vmul.f32 %v4055, %v4071
        %v4100 = vmul.f32 %v4056, %v4067
        %v4101 = vmul.f32 %v4057, %v4071
        %v4102 = vmul.f32 %v4058, %v4067
        %v4103 = vmul.f32 %v4059, %v4071
        %v4104 = vmul.f32 %v4060, %v4067
        %v4105 = vmul.f32 %v4061, %v4071
        %4106 = vst [vmem:[%s292] sm:$0xff] %v4074
        %4107 = vst [vmem:[%s292 + $0x8] sm:$0xff] %v4075
        %4108 = vst [vmem:[%s292 + $0x10] sm:$0xff] %v4076
        %4109 = vst [vmem:[%s292 + $0x18] sm:$0xff] %v4077
        %4110 = vst [vmem:[%s292 + $0x20] sm:$0xff] %v4078
        %4111 = vst [vmem:[%s292 + $0x28] sm:$0xff] %v4079
        %4112 = vst [vmem:[%s292 + $0x30] sm:$0xff] %v4080
        %4113 = vst [vmem:[%s292 + $0x38] sm:$0xff] %v4081
        %4114 = vst [vmem:[%s292 + $0x40] sm:$0xff] %v4082
        %4115 = vst [vmem:[%s292 + $0x48] sm:$0xff] %v4083
        %4116 = vst [vmem:[%s292 + $0x50] sm:$0xff] %v4084
        %4117 = vst [vmem:[%s292 + $0x58] sm:$0xff] %v4085
        %4118 = vst [vmem:[%s292 + $0x60] sm:$0xff] %v4086
        %4119 = vst [vmem:[%s292 + $0x68] sm:$0xff] %v4087
        %4120 = vst [vmem:[%s292 + $0x70] sm:$0xff] %v4088
        %4121 = vst [vmem:[%s292 + $0x78] sm:$0xff] %v4089
        %4122 = vst [vmem:[%s292 + $0x80] sm:$0xff] %v4090
        %4123 = vst [vmem:[%s292 + $0x88] sm:$0xff] %v4091
        %4124 = vst [vmem:[%s292 + $0x90] sm:$0xff] %v4092
        %4125 = vst [vmem:[%s292 + $0x98] sm:$0xff] %v4093
        %4126 = vst [vmem:[%s292 + $0xa0] sm:$0xff] %v4094
        %4127 = vst [vmem:[%s292 + $0xa8] sm:$0xff] %v4095
        %4128 = vst [vmem:[%s292 + $0xb0] sm:$0xff] %v4096
        %4129 = vst [vmem:[%s292 + $0xb8] sm:$0xff] %v4097
        %4130 = vst [vmem:[%s292 + $0xc0] sm:$0xff] %v4098
        %4131 = vst [vmem:[%s292 + $0xc8] sm:$0xff] %v4099
        %4132 = vst [vmem:[%s292 + $0xd0] sm:$0xff] %v4100
        %4133 = vst [vmem:[%s292 + $0xd8] sm:$0xff] %v4101
        %4134 = vst [vmem:[%s292 + $0xe0] sm:$0xff] %v4102
        %4135 = vst [vmem:[%s292 + $0xe8] sm:$0xff] %v4103
        %4136 = vst [vmem:[%s292 + $0xf0] sm:$0xff] %v4104
        %4137 = vst [vmem:[%s292 + $0xf8] sm:$0xff] %v4105
        %s4138 = sand.u32 %s186, 1
        %s4139 = scalar_lea.sflag [#allocation3], %s4138
        %s4140 = sand.u32 %s186, 1
        %s4141 = smul.addr %s4140, 256
        %s4142 = scalar_lea.vmem [#allocation2], %s4141
        // Predicated region
        $region49: #{internlm2_forward.7} parent=47 // pred_check
          %p4143 = pneg %p196
        $region50: #{internlm2_forward.7} parent=47 // pred_check_branch
          %4145 = sbr.rel (%p4143) target = $region52
        $region51: #{internlm2_forward.7} parent=47 // pred_region
          %s4146 = smul.u32 16, %s21
          %s4148 = ssub.s32 4096, 4096
          %4149 = vsyncadd %s4139, %s4148
          %s4150 = smul.addr %s4146, 2
          %s4151 = smul.addr %s4150, 128
          %s4152 = scalar_lea.hbm %s7, %s4151
          %s4153 = sshll.u32 %s4142, 4
          %s4154 = int_to_ptr.vmem [resolvable:$true] %s4153
          %4159 = dma.vmem_to_hbm [thread:$0]  %s4154, 4096, %s4152, %s4139, 256, 256, 16
        $region52: #{internlm2_forward.7} parent=47 // pred_fallthru
          _
      $region48: #{internlm2_forward.7} parent=5 // pred_fallthru
        _
      %p4160 = scmp.le.s32.totalorder 2, %s16
      // Predicated region
      $region53: #{internlm2_forward.7} parent=5 // pred_check
        %p4161 = pneg %p4160
      $region54: #{internlm2_forward.7} parent=5 // pred_check_branch
        %4163 = sbr.rel (%p4161) target = $region56
      $region55: #{internlm2_forward.7} parent=5 // pred_region
        %s4164 = ssub.s32 %s16, 2
        // Predicated region
        $region57: #{internlm2_forward.7} parent=55 // pred_check
          %p4165 = pneg %p202
        $region58: #{internlm2_forward.7} parent=55 // pred_check_branch
          %4167 = sbr.rel (%p4165) target = $region60
        $region59: #{internlm2_forward.7} parent=55 // pred_region
          %s4168 = sand.u32 %s187, 1
          %s4169 = scalar_lea.sflag [#allocation3], %s4168
          %s4170 = sand.u32 %s187, 1
          %s4171 = smul.addr %s4170, 256
          %s4172 = scalar_lea.vmem [#allocation2], %s4171
          %4173 = dma.done %s4169, 4096
        $region60: #{internlm2_forward.7} parent=55 // pred_fallthru
          _
      $region56: #{internlm2_forward.7} parent=5 // pred_fallthru
        _
    $region6: #{internlm2_forward.7} parent=1 // loop_footer
      %s20 = sadd.s32 1, %s16
    $region7: #{internlm2_forward.7} parent=1 // loop_footer_branch
      %15 = sbr.rel target = $region3
    $region8: #{internlm2_forward.7} parent=1 // loop_exit
      _
    %4174 = vsyncpa [#allocation3], 1
    %s4175 = scalar_lea.sflag [#allocation3], 1
    %4176 = vsyncpa %s4175, 1

</llo_original>
